<compile_context>
chip_gen: v7x
topology: tpu7x:2x2x1
jax: 0.10.0
libtpu: 0.0.40
codegen_flags: <defaults>
</compile_context>

<pallas_src>
import functools

import jax
import jax.numpy as jnp
import numpy as np
from jax.experimental import pallas as pl
from jax.experimental.pallas import tpu as pltpu

K = 7          # depthwise kernel size
PAD = 3        # spatial padding
LANES = 128    # TPU lane width
GELU_C0 = 0.7978845608028654   # sqrt(2/pi)
GELU_C1 = 0.044715


def _round_up(x, m):
    return (x + m - 1) // m * m


def _vmem_capacity_bytes():
    """Per-core VMEM capacity; conservative fallback (v7x = 64 MiB) if the
    query is unavailable."""
    try:
        return int(pltpu.get_tpu_info().vmem_capacity_bytes)
    except Exception:
        return 64 * 1024 * 1024


def _choose_tile_h(H, W, Cp, hid_p, budget_bytes):
    """Rows per grid step (a divisor of H).

    Byte-budget aware (h1 f32 + bf16 copy, conv accumulators, yn) and
    MXU-alignment aware: prefer TH*W that is a multiple of 256 (clean cadence
    on the 256-wide MXU of v6e/v7x), then a multiple of 8, and among those the
    smallest one giving >= 256 matmul rows.
    """
    divisors = [d for d in range(1, H + 1) if H % d == 0]

    def step_bytes(th):
        rows = th * W
        hidden = rows * hid_p * (4 + 2)   # h1 f32 + bf16 copy for pwconv2
        conv = 4 * rows * Cp * 4          # 2 accumulators + tap product + conv
        act = rows * Cp * (4 + 2)         # yn f32 + bf16 copy for pwconv1
        return hidden + conv + act

    fitting = [d for d in divisors if step_bytes(d) <= budget_bytes]
    if not fitting:
        return 1
    for align in (256, 8):
        aligned = [d for d in fitting if (d * W) % align == 0]
        if aligned:
            big = [d for d in aligned if d * W >= 256]
            return big[0] if big else aligned[-1]
    return fitting[-1]


def convnext_block_kernel(xpad_ref, wdw_ref, bdw_ref, lnw_ref, lnb_ref,
                          w1_ref, b1_ref, w2_ref, b2_ref, gamma_ref,
                          out_ref, *, eps, c_real):
    _, TH, W, Cp = out_ref.shape
    t = pl.program_id(1)
    row0 = pl.multiple_of(t * TH, TH)

    # ---- 7x7 depthwise conv --------------------------------------------------
    # Each (kh, kw) tap is sliced directly from the resident padded-input ref at
    # use time (no shifted copies kept live) and folded into one of two
    # accumulator chains (VALU ILP without extra live tiles).
    acc = [None, None]
    n = 0
    for kh in range(K):
        for kw in range(K):
            tap = xpad_ref[0, pl.ds(row0 + kh, TH), pl.ds(kw, W), :]
            prod = tap * wdw_ref[kh * K + kw, :][None, None, :]
            j = n & 1
            acc[j] = prod if acc[j] is None else acc[j] + prod
            n += 1
    conv = acc[0] + acc[1] + bdw_ref[0][None, None, :]

    y = conv.reshape(TH * W, Cp)

    # ---- LayerNorm over the real `c_real` channels ---------------------------
    # The padded channel lanes are exactly zero after the conv (input pad, wdw
    # pad, bdw pad are all zero), so full-lane sums only need a 1/c_real scale
    # and a (Cp - c_real) * mu^2 correction on the sum of squares.
    inv_c = 1.0 / c_real
    mu = jnp.sum(y, axis=-1, keepdims=True) * inv_c
    d = y - mu
    ssq = jnp.sum(d * d, axis=-1, keepdims=True) - (Cp - c_real) * (mu * mu)
    var = ssq * inv_c
    yn = d * jax.lax.rsqrt(var + eps)
    yn = yn * lnw_ref[0][None, :] + lnb_ref[0][None, :]     # padded lanes -> 0

    # ---- pwconv1 (C -> 4C) on the MXU (bf16 operands, f32 accumulation) ------
    h1 = jnp.dot(yn.astype(jnp.bfloat16), w1_ref[...],
                 preferred_element_type=jnp.float32) + b1_ref[0][None, :]
    # tanh-approximate GELU: tanh goes to the EUP, ~5 VALU ops/element.
    h1 = 0.5 * h1 * (1.0 + jnp.tanh(GELU_C0 * (h1 + GELU_C1 * (h1 * h1 * h1))))

    # ---- pwconv2 (4C -> C) + layer scale --------------------------------------
    h2 = jnp.dot(h1.astype(jnp.bfloat16), w2_ref[...],
                 preferred_element_type=jnp.float32) + b2_ref[0][None, :]
    h2 = h2 * gamma_ref[0][None, :]

    # ---- residual, taken from the interior of the resident padded tile -------
    xin = xpad_ref[0, pl.ds(row0 + PAD, TH), pl.ds(PAD, W), :]
    out_ref[0] = xin + h2.reshape(TH, W, Cp)


def _convnext_block_impl(x_nchw, params, eps=1e-6):
    wdw, bdw, lnw, lnb, w1, b1, w2, b2, gamma = params
    N, C, H, W = x_nchw.shape
    hid = 4 * C
    Cp = _round_up(C, LANES)
    hid_p = _round_up(hid, LANES)

    # NCHW -> NHWC, zero-pad channels to Cp, spatial halo of 3 for the 7x7 conv.
    # NOTE: the padded channel lanes must stay exactly zero through the conv
    # (input pad, wdw pad, bdw pad all zero) — the kernel's LayerNorm statistics
    # correction relies on it.
    x = jnp.transpose(x_nchw, (0, 2, 3, 1))
    xpad = jnp.pad(x, ((0, 0), (PAD, PAD), (PAD, PAD), (0, Cp - C)))

    def pad1(a, n):
        return jnp.pad(a, (0, n - a.shape[0])).reshape(1, n)

    param_arrays = [
        jnp.pad(wdw.reshape(K * K, C), ((0, 0), (0, Cp - C))),          # (49, Cp)
        pad1(bdw, Cp),
        pad1(lnw, Cp),        # zero pad -> padded lanes stay exactly 0 after LN
        pad1(lnb, Cp),
        jnp.pad(w1, ((0, Cp - C), (0, hid_p - hid))).astype(jnp.bfloat16),
        pad1(b1, hid_p),
        jnp.pad(w2, ((0, hid_p - hid), (0, Cp - C))).astype(jnp.bfloat16),
        pad1(b2, Cp),
        pad1(gamma, Cp),
    ]

    vmem_cap = _vmem_capacity_bytes()
    TH = _choose_tile_h(H, W, Cp, hid_p, vmem_cap // 8)
    n_th = H // TH

    def const_spec(a):
        zeros = (0,) * a.ndim
        return pl.BlockSpec(a.shape, lambda b, t, _z=zeros: _z)

    in_specs = [
        # Full padded image per batch element; the block index is constant along
        # the spatial-tile axis, so it is DMA'd once per batch element and stays
        # resident in VMEM while all TH-tiles of that image are produced.
        pl.BlockSpec((1, H + 2 * PAD, W + 2 * PAD, Cp), lambda b, t: (b, 0, 0, 0)),
    ] + [const_spec(a) for a in param_arrays]

    out_spec = pl.BlockSpec((1, TH, W, Cp), lambda b, t: (b, t, 0, 0))

    kernel = functools.partial(convnext_block_kernel, eps=eps, c_real=C)

    bytes_params = sum(int(a.size) * a.dtype.itemsize for a in param_arrays)
    cost = pl.CostEstimate(
        flops=int(N * H * W * (4 * C * hid + 2 * K * K * C)),
        transcendentals=int(N * H * W * hid),
        bytes_accessed=int(xpad.size) * 4 + int(N * H * W * Cp) * 4 + bytes_params,
    )

    out_nhwc = pl.pallas_call(
        kernel,
        out_shape=jax.ShapeDtypeStruct((N, H, W, Cp), x_nchw.dtype),
        grid=(N, n_th),
        in_specs=in_specs,
        out_specs=out_spec,
        compiler_params=pltpu.CompilerParams(
            # Batch axis parallel (megacore shards it on v7x without duplicating
            # the resident image); spatial-tile axis arbitrary.
            dimension_semantics=("parallel", "arbitrary"),
            vmem_limit_bytes=min(vmem_cap * 3 // 4, 96 * 1024 * 1024)),
        cost_estimate=cost,
    )(xpad, *param_arrays)

    # Back to NCHW; the channel de-pad fuses into the transpose under jit.
    # TODO(synk): if the surrounding model runs NHWC (TPU-native), return the
    # NHWC tensor directly and drop both transposes and the de-pad.
    return jnp.transpose(out_nhwc[..., :C], (0, 3, 1, 2))


# Public entry point: jitted so the layout plumbing around the kernel fuses.
convnext_block = jax.jit(_convnext_block_impl, static_argnames=("eps",))


def convnext_block_ref(x_nchw, params, eps=1e-6):
    """Pure-JAX f32 reference mirroring the PyTorch module (exact GELU)."""
    wdw, bdw, lnw, lnb, w1, b1, w2, b2, gamma = params
    N, C, H, W = x_nchw.shape
    kern = jnp.transpose(wdw, (2, 0, 1))[:, None, :, :]              # (C,1,7,7)
    y = jax.lax.conv_general_dilated(
        x_nchw, kern, window_strides=(1, 1), padding=((PAD, PAD), (PAD, PAD)),
        dimension_numbers=('NCHW', 'OIHW', 'NCHW'), feature_group_count=C)
    y = y + bdw[None, :, None, None]
    y = jnp.transpose(y, (0, 2, 3, 1))                               # NHWC
    mu = jnp.mean(y, axis=-1, keepdims=True)
    var = jnp.mean((y - mu) ** 2, axis=-1, keepdims=True)
    yn = (y - mu) / jnp.sqrt(var + eps) * lnw + lnb
    h1 = jnp.matmul(yn, w1, precision=jax.lax.Precision.HIGHEST) + b1
    h1 = jax.nn.gelu(h1, approximate=False)
    h2 = jnp.matmul(h1, w2, precision=jax.lax.Precision.HIGHEST) + b2
    h2 = gamma * h2
    return x_nchw + jnp.transpose(h2, (0, 3, 1, 2))


def make_params(key, dim, layer_scale_init_value=1e-6):
    ks = jax.random.split(key, 8)
    wdw = jax.random.normal(ks[0], (K, K, dim), jnp.float32) * 0.1
    bdw = jax.random.normal(ks[1], (dim,), jnp.float32) * 0.1
    lnw = jnp.ones((dim,), jnp.float32)
    lnb = jnp.zeros((dim,), jnp.float32)
    w1 = jax.random.normal(ks[2], (dim, 4 * dim), jnp.float32) / np.sqrt(dim)
    b1 = jax.random.normal(ks[3], (4 * dim,), jnp.float32) * 0.1
    w2 = jax.random.normal(ks[4], (4 * dim, dim), jnp.float32) / np.sqrt(4 * dim)
    b2 = jax.random.normal(ks[5], (dim,), jnp.float32) * 0.1
    gamma = layer_scale_init_value * jnp.ones((dim,), jnp.float32)
    return (wdw, bdw, lnw, lnb, w1, b1, w2, b2, gamma)


# TODO(synk): DropPath (stochastic depth) is nn.Identity at drop_path=0.0 and is
# therefore omitted; the training-time random drop is not implemented.

if __name__ == "__main__":
    key = jax.random.PRNGKey(0)
    N, C, H, W = 2, 32, 32, 16
    k_x, k_p = jax.random.split(key)
    x = jax.random.normal(k_x, (N, C, H, W), jnp.float32)

    # Faithful init: gamma = 1e-6 * ones (as in the module's __init__), so the
    # residual path dominates and the check is tight.
    params = make_params(k_p, C, layer_scale_init_value=1e-6)
    out = jax.block_until_ready(convnext_block(x, params))
    ref = convnext_block_ref(x, params)
    assert out.shape == x.shape and out.dtype == x.dtype
    np.testing.assert_allclose(np.asarray(out), np.asarray(ref), atol=1e-3, rtol=1e-3)

    # Stronger check with gamma = 1 so the non-residual path dominates.  The
    # kernel runs its matmuls with bf16 operands (f32 accumulation on the MXU)
    # and uses the tanh-approximate GELU, so it is compared to the full-f32,
    # exact-GELU reference at a bf16-appropriate tolerance.
    params_g1 = make_params(k_p, C, layer_scale_init_value=1.0)
    out1 = jax.block_until_ready(convnext_block(x, params_g1))
    ref1 = convnext_block_ref(x, params_g1)
    np.testing.assert_allclose(np.asarray(out1), np.asarray(ref1), atol=4e-2, rtol=4e-2)

    print("KERNEL_OK")
</pallas_src>

<mosaic_0001>
module attributes {stable_mosaic.version = 11 : i64} {
  func.func @convnext_block_kernel(%arg0: i32, %arg1: i32, %arg2: memref<1x38x22x128xf32, #tpu.memory_space<vmem>>, %arg3: memref<49x128xf32, #tpu.memory_space<vmem>>, %arg4: memref<1x128xf32, #tpu.memory_space<vmem>>, %arg5: memref<1x128xf32, #tpu.memory_space<vmem>>, %arg6: memref<1x128xf32, #tpu.memory_space<vmem>>, %arg7: memref<128x128xbf16, #tpu.memory_space<vmem>>, %arg8: memref<1x128xf32, #tpu.memory_space<vmem>>, %arg9: memref<128x128xbf16, #tpu.memory_space<vmem>>, %arg10: memref<1x128xf32, #tpu.memory_space<vmem>>, %arg11: memref<1x128xf32, #tpu.memory_space<vmem>>, %arg12: memref<1x16x16x128xf32, #tpu.memory_space<vmem>>) attributes {dimension_semantics = [#tpu.dimension_semantics<parallel>, #tpu.dimension_semantics<arbitrary>], iteration_bounds = array<i64: 2, 2>, scalar_prefetch = 0 : i64, scratch_operands = 0 : i64, tpu.core_type = #tpu.core_type<tc>, window_params = [{transform_indices = @transform_0, window_bounds = array<i64: 1, 38, 22, 128>}, {pipeline_mode = #tpu.pipeline_mode<synchronous>, transform_indices = @transform_1, window_bounds = array<i64: 49, 128>}, {pipeline_mode = #tpu.pipeline_mode<synchronous>, transform_indices = @transform_2, window_bounds = array<i64: 1, 128>}, {pipeline_mode = #tpu.pipeline_mode<synchronous>, transform_indices = @transform_3, window_bounds = array<i64: 1, 128>}, {pipeline_mode = #tpu.pipeline_mode<synchronous>, transform_indices = @transform_4, window_bounds = array<i64: 1, 128>}, {pipeline_mode = #tpu.pipeline_mode<synchronous>, transform_indices = @transform_5, window_bounds = array<i64: 128, 128>}, {pipeline_mode = #tpu.pipeline_mode<synchronous>, transform_indices = @transform_6, window_bounds = array<i64: 1, 128>}, {pipeline_mode = #tpu.pipeline_mode<synchronous>, transform_indices = @transform_7, window_bounds = array<i64: 128, 128>}, {pipeline_mode = #tpu.pipeline_mode<synchronous>, transform_indices = @transform_8, window_bounds = array<i64: 1, 128>}, {pipeline_mode = #tpu.pipeline_mode<synchronous>, transform_indices = @transform_9, window_bounds = array<i64: 1, 128>}, {transform_indices = @transform_10, window_bounds = array<i64: 1, 16, 16, 128>}]} {
    %c16_i32 = arith.constant 16 : i32
    %0 = arith.muli %arg1, %c16_i32 : i32
    %1 = tpu.assume_multiple %0, 16 : i32
    %c0_i32 = arith.constant 0 : i32
    %2 = arith.addi %1, %c0_i32 : i32
    %c0 = arith.constant 0 : index
    %3 = arith.index_cast %2 : i32 to index
    %c0_0 = arith.constant 0 : index
    %c0_1 = arith.constant 0 : index
    %4 = vector.load %arg2[%c0, %3, %c0_0, %c0_1] : memref<1x38x22x128xf32, #tpu.memory_space<vmem>>, vector<1x16x16x128xf32>
    %5 = vector.shape_cast %4 : vector<1x16x16x128xf32> to vector<16x16x128xf32>
    %c0_2 = arith.constant 0 : index
    %c0_3 = arith.constant 0 : index
    %6 = vector.load %arg3[%c0_2, %c0_3] : memref<49x128xf32, #tpu.memory_space<vmem>>, vector<1x128xf32>
    %7 = vector.shape_cast %6 : vector<1x128xf32> to vector<128xf32>
    %8 = vector.shape_cast %7 : vector<128xf32> to vector<1x1x128xf32>
    %9 = vector.broadcast %8 : vector<1x1x128xf32> to vector<16x16x128xf32>
    %10 = arith.mulf %5, %9 : vector<16x16x128xf32>
    %c0_i32_4 = arith.constant 0 : i32
    %11 = arith.addi %1, %c0_i32_4 : i32
    %c0_5 = arith.constant 0 : index
    %12 = arith.index_cast %11 : i32 to index
    %c1 = arith.constant 1 : index
    %c0_6 = arith.constant 0 : index
    %13 = vector.load %arg2[%c0_5, %12, %c1, %c0_6] : memref<1x38x22x128xf32, #tpu.memory_space<vmem>>, vector<1x16x16x128xf32>
    %14 = vector.shape_cast %13 : vector<1x16x16x128xf32> to vector<16x16x128xf32>
    %c1_7 = arith.constant 1 : index
    %c0_8 = arith.constant 0 : index
    %15 = vector.load %arg3[%c1_7, %c0_8] : memref<49x128xf32, #tpu.memory_space<vmem>>, vector<1x128xf32>
    %16 = vector.shape_cast %15 : vector<1x128xf32> to vector<128xf32>
    %17 = vector.shape_cast %16 : vector<128xf32> to vector<1x1x128xf32>
    %18 = vector.broadcast %17 : vector<1x1x128xf32> to vector<16x16x128xf32>
    %19 = arith.mulf %14, %18 : vector<16x16x128xf32>
    %c0_i32_9 = arith.constant 0 : i32
    %20 = arith.addi %1, %c0_i32_9 : i32
    %c0_10 = arith.constant 0 : index
    %21 = arith.index_cast %20 : i32 to index
    %c2 = arith.constant 2 : index
    %c0_11 = arith.constant 0 : index
    %22 = vector.load %arg2[%c0_10, %21, %c2, %c0_11] : memref<1x38x22x128xf32, #tpu.memory_space<vmem>>, vector<1x16x16x128xf32>
    %23 = vector.shape_cast %22 : vector<1x16x16x128xf32> to vector<16x16x128xf32>
    %c2_12 = arith.constant 2 : index
    %c0_13 = arith.constant 0 : index
    %24 = vector.load %arg3[%c2_12, %c0_13] : memref<49x128xf32, #tpu.memory_space<vmem>>, vector<1x128xf32>
    %25 = vector.shape_cast %24 : vector<1x128xf32> to vector<128xf32>
    %26 = vector.shape_cast %25 : vector<128xf32> to vector<1x1x128xf32>
    %27 = vector.broadcast %26 : vector<1x1x128xf32> to vector<16x16x128xf32>
    %28 = arith.mulf %23, %27 : vector<16x16x128xf32>
    %29 = arith.addf %10, %28 : vector<16x16x128xf32>
    %c0_i32_14 = arith.constant 0 : i32
    %30 = arith.addi %1, %c0_i32_14 : i32
    %c0_15 = arith.constant 0 : index
    %31 = arith.index_cast %30 : i32 to index
    %c3 = arith.constant 3 : index
    %c0_16 = arith.constant 0 : index
    %32 = vector.load %arg2[%c0_15, %31, %c3, %c0_16] : memref<1x38x22x128xf32, #tpu.memory_space<vmem>>, vector<1x16x16x128xf32>
    %33 = vector.shape_cast %32 : vector<1x16x16x128xf32> to vector<16x16x128xf32>
    %c3_17 = arith.constant 3 : index
    %c0_18 = arith.constant 0 : index
    %34 = vector.load %arg3[%c3_17, %c0_18] : memref<49x128xf32, #tpu.memory_space<vmem>>, vector<1x128xf32>
    %35 = vector.shape_cast %34 : vector<1x128xf32> to vector<128xf32>
    %36 = vector.shape_cast %35 : vector<128xf32> to vector<1x1x128xf32>
    %37 = vector.broadcast %36 : vector<1x1x128xf32> to vector<16x16x128xf32>
    %38 = arith.mulf %33, %37 : vector<16x16x128xf32>
    %39 = arith.addf %19, %38 : vector<16x16x128xf32>
    %c0_i32_19 = arith.constant 0 : i32
    %40 = arith.addi %1, %c0_i32_19 : i32
    %c0_20 = arith.constant 0 : index
    %41 = arith.index_cast %40 : i32 to index
    %c4 = arith.constant 4 : index
    %c0_21 = arith.constant 0 : index
    %42 = vector.load %arg2[%c0_20, %41, %c4, %c0_21] : memref<1x38x22x128xf32, #tpu.memory_space<vmem>>, vector<1x16x16x128xf32>
    %43 = vector.shape_cast %42 : vector<1x16x16x128xf32> to vector<16x16x128xf32>
    %c4_22 = arith.constant 4 : index
    %c0_23 = arith.constant 0 : index
    %44 = vector.load %arg3[%c4_22, %c0_23] : memref<49x128xf32, #tpu.memory_space<vmem>>, vector<1x128xf32>
    %45 = vector.shape_cast %44 : vector<1x128xf32> to vector<128xf32>
    %46 = vector.shape_cast %45 : vector<128xf32> to vector<1x1x128xf32>
    %47 = vector.broadcast %46 : vector<1x1x128xf32> to vector<16x16x128xf32>
    %48 = arith.mulf %43, %47 : vector<16x16x128xf32>
    %49 = arith.addf %29, %48 : vector<16x16x128xf32>
    %c0_i32_24 = arith.constant 0 : i32
    %50 = arith.addi %1, %c0_i32_24 : i32
    %c0_25 = arith.constant 0 : index
    %51 = arith.index_cast %50 : i32 to index
    %c5 = arith.constant 5 : index
    %c0_26 = arith.constant 0 : index
    %52 = vector.load %arg2[%c0_25, %51, %c5, %c0_26] : memref<1x38x22x128xf32, #tpu.memory_space<vmem>>, vector<1x16x16x128xf32>
    %53 = vector.shape_cast %52 : vector<1x16x16x128xf32> to vector<16x16x128xf32>
    %c5_27 = arith.constant 5 : index
    %c0_28 = arith.constant 0 : index
    %54 = vector.load %arg3[%c5_27, %c0_28] : memref<49x128xf32, #tpu.memory_space<vmem>>, vector<1x128xf32>
    %55 = vector.shape_cast %54 : vector<1x128xf32> to vector<128xf32>
    %56 = vector.shape_cast %55 : vector<128xf32> to vector<1x1x128xf32>
    %57 = vector.broadcast %56 : vector<1x1x128xf32> to vector<16x16x128xf32>
    %58 = arith.mulf %53, %57 : vector<16x16x128xf32>
    %59 = arith.addf %39, %58 : vector<16x16x128xf32>
    %c0_i32_29 = arith.constant 0 : i32
    %60 = arith.addi %1, %c0_i32_29 : i32
    %c0_30 = arith.constant 0 : index
    %61 = arith.index_cast %60 : i32 to index
    %c6 = arith.constant 6 : index
    %c0_31 = arith.constant 0 : index
    %62 = vector.load %arg2[%c0_30, %61, %c6, %c0_31] : memref<1x38x22x128xf32, #tpu.memory_space<vmem>>, vector<1x16x16x128xf32>
    %63 = vector.shape_cast %62 : vector<1x16x16x128xf32> to vector<16x16x128xf32>
    %c6_32 = arith.constant 6 : index
    %c0_33 = arith.constant 0 : index
    %64 = vector.load %arg3[%c6_32, %c0_33] : memref<49x128xf32, #tpu.memory_space<vmem>>, vector<1x128xf32>
    %65 = vector.shape_cast %64 : vector<1x128xf32> to vector<128xf32>
    %66 = vector.shape_cast %65 : vector<128xf32> to vector<1x1x128xf32>
    %67 = vector.broadcast %66 : vector<1x1x128xf32> to vector<16x16x128xf32>
    %68 = arith.mulf %63, %67 : vector<16x16x128xf32>
    %69 = arith.addf %49, %68 : vector<16x16x128xf32>
    %c1_i32 = arith.constant 1 : i32
    %70 = arith.addi %1, %c1_i32 : i32
    %c0_34 = arith.constant 0 : index
    %71 = arith.index_cast %70 : i32 to index
    %c0_35 = arith.constant 0 : index
    %c0_36 = arith.constant 0 : index
    %72 = vector.load %arg2[%c0_34, %71, %c0_35, %c0_36] : memref<1x38x22x128xf32, #tpu.memory_space<vmem>>, vector<1x16x16x128xf32>
    %73 = vector.shape_cast %72 : vector<1x16x16x128xf32> to vector<16x16x128xf32>
    %c7 = arith.constant 7 : index
    %c0_37 = arith.constant 0 : index
    %74 = vector.load %arg3[%c7, %c0_37] : memref<49x128xf32, #tpu.memory_space<vmem>>, vector<1x128xf32>
    %75 = vector.shape_cast %74 : vector<1x128xf32> to vector<128xf32>
    %76 = vector.shape_cast %75 : vector<128xf32> to vector<1x1x128xf32>
    %77 = vector.broadcast %76 : vector<1x1x128xf32> to vector<16x16x128xf32>
    %78 = arith.mulf %73, %77 : vector<16x16x128xf32>
    %79 = arith.addf %59, %78 : vector<16x16x128xf32>
    %c1_i32_38 = arith.constant 1 : i32
    %80 = arith.addi %1, %c1_i32_38 : i32
    %c0_39 = arith.constant 0 : index
    %81 = arith.index_cast %80 : i32 to index
    %c1_40 = arith.constant 1 : index
    %c0_41 = arith.constant 0 : index
    %82 = vector.load %arg2[%c0_39, %81, %c1_40, %c0_41] : memref<1x38x22x128xf32, #tpu.memory_space<vmem>>, vector<1x16x16x128xf32>
    %83 = vector.shape_cast %82 : vector<1x16x16x128xf32> to vector<16x16x128xf32>
    %c8 = arith.constant 8 : index
    %c0_42 = arith.constant 0 : index
    %84 = vector.load %arg3[%c8, %c0_42] : memref<49x128xf32, #tpu.memory_space<vmem>>, vector<1x128xf32>
    %85 = vector.shape_cast %84 : vector<1x128xf32> to vector<128xf32>
    %86 = vector.shape_cast %85 : vector<128xf32> to vector<1x1x128xf32>
    %87 = vector.broadcast %86 : vector<1x1x128xf32> to vector<16x16x128xf32>
    %88 = arith.mulf %83, %87 : vector<16x16x128xf32>
    %89 = arith.addf %69, %88 : vector<16x16x128xf32>
    %c1_i32_43 = arith.constant 1 : i32
    %90 = arith.addi %1, %c1_i32_43 : i32
    %c0_44 = arith.constant 0 : index
    %91 = arith.index_cast %90 : i32 to index
    %c2_45 = arith.constant 2 : index
    %c0_46 = arith.constant 0 : index
    %92 = vector.load %arg2[%c0_44, %91, %c2_45, %c0_46] : memref<1x38x22x128xf32, #tpu.memory_space<vmem>>, vector<1x16x16x128xf32>
    %93 = vector.shape_cast %92 : vector<1x16x16x128xf32> to vector<16x16x128xf32>
    %c9 = arith.constant 9 : index
    %c0_47 = arith.constant 0 : index
    %94 = vector.load %arg3[%c9, %c0_47] : memref<49x128xf32, #tpu.memory_space<vmem>>, vector<1x128xf32>
    %95 = vector.shape_cast %94 : vector<1x128xf32> to vector<128xf32>
    %96 = vector.shape_cast %95 : vector<128xf32> to vector<1x1x128xf32>
    %97 = vector.broadcast %96 : vector<1x1x128xf32> to vector<16x16x128xf32>
    %98 = arith.mulf %93, %97 : vector<16x16x128xf32>
    %99 = arith.addf %79, %98 : vector<16x16x128xf32>
    %c1_i32_48 = arith.constant 1 : i32
    %100 = arith.addi %1, %c1_i32_48 : i32
    %c0_49 = arith.constant 0 : index
    %101 = arith.index_cast %100 : i32 to index
    %c3_50 = arith.constant 3 : index
    %c0_51 = arith.constant 0 : index
    %102 = vector.load %arg2[%c0_49, %101, %c3_50, %c0_51] : memref<1x38x22x128xf32, #tpu.memory_space<vmem>>, vector<1x16x16x128xf32>
    %103 = vector.shape_cast %102 : vector<1x16x16x128xf32> to vector<16x16x128xf32>
    %c10 = arith.constant 10 : index
    %c0_52 = arith.constant 0 : index
    %104 = vector.load %arg3[%c10, %c0_52] : memref<49x128xf32, #tpu.memory_space<vmem>>, vector<1x128xf32>
    %105 = vector.shape_cast %104 : vector<1x128xf32> to vector<128xf32>
    %106 = vector.shape_cast %105 : vector<128xf32> to vector<1x1x128xf32>
    %107 = vector.broadcast %106 : vector<1x1x128xf32> to vector<16x16x128xf32>
    %108 = arith.mulf %103, %107 : vector<16x16x128xf32>
    %109 = arith.addf %89, %108 : vector<16x16x128xf32>
    %c1_i32_53 = arith.constant 1 : i32
    %110 = arith.addi %1, %c1_i32_53 : i32
    %c0_54 = arith.constant 0 : index
    %111 = arith.index_cast %110 : i32 to index
    %c4_55 = arith.constant 4 : index
    %c0_56 = arith.constant 0 : index
    %112 = vector.load %arg2[%c0_54, %111, %c4_55, %c0_56] : memref<1x38x22x128xf32, #tpu.memory_space<vmem>>, vector<1x16x16x128xf32>
    %113 = vector.shape_cast %112 : vector<1x16x16x128xf32> to vector<16x16x128xf32>
    %c11 = arith.constant 11 : index
    %c0_57 = arith.constant 0 : index
    %114 = vector.load %arg3[%c11, %c0_57] : memref<49x128xf32, #tpu.memory_space<vmem>>, vector<1x128xf32>
    %115 = vector.shape_cast %114 : vector<1x128xf32> to vector<128xf32>
    %116 = vector.shape_cast %115 : vector<128xf32> to vector<1x1x128xf32>
    %117 = vector.broadcast %116 : vector<1x1x128xf32> to vector<16x16x128xf32>
    %118 = arith.mulf %113, %117 : vector<16x16x128xf32>
    %119 = arith.addf %99, %118 : vector<16x16x128xf32>
    %c1_i32_58 = arith.constant 1 : i32
    %120 = arith.addi %1, %c1_i32_58 : i32
    %c0_59 = arith.constant 0 : index
    %121 = arith.index_cast %120 : i32 to index
    %c5_60 = arith.constant 5 : index
    %c0_61 = arith.constant 0 : index
    %122 = vector.load %arg2[%c0_59, %121, %c5_60, %c0_61] : memref<1x38x22x128xf32, #tpu.memory_space<vmem>>, vector<1x16x16x128xf32>
    %123 = vector.shape_cast %122 : vector<1x16x16x128xf32> to vector<16x16x128xf32>
    %c12 = arith.constant 12 : index
    %c0_62 = arith.constant 0 : index
    %124 = vector.load %arg3[%c12, %c0_62] : memref<49x128xf32, #tpu.memory_space<vmem>>, vector<1x128xf32>
    %125 = vector.shape_cast %124 : vector<1x128xf32> to vector<128xf32>
    %126 = vector.shape_cast %125 : vector<128xf32> to vector<1x1x128xf32>
    %127 = vector.broadcast %126 : vector<1x1x128xf32> to vector<16x16x128xf32>
    %128 = arith.mulf %123, %127 : vector<16x16x128xf32>
    %129 = arith.addf %109, %128 : vector<16x16x128xf32>
    %c1_i32_63 = arith.constant 1 : i32
    %130 = arith.addi %1, %c1_i32_63 : i32
    %c0_64 = arith.constant 0 : index
    %131 = arith.index_cast %130 : i32 to index
    %c6_65 = arith.constant 6 : index
    %c0_66 = arith.constant 0 : index
    %132 = vector.load %arg2[%c0_64, %131, %c6_65, %c0_66] : memref<1x38x22x128xf32, #tpu.memory_space<vmem>>, vector<1x16x16x128xf32>
    %133 = vector.shape_cast %132 : vector<1x16x16x128xf32> to vector<16x16x128xf32>
    %c13 = arith.constant 13 : index
    %c0_67 = arith.constant 0 : index
    %134 = vector.load %arg3[%c13, %c0_67] : memref<49x128xf32, #tpu.memory_space<vmem>>, vector<1x128xf32>
    %135 = vector.shape_cast %134 : vector<1x128xf32> to vector<128xf32>
    %136 = vector.shape_cast %135 : vector<128xf32> to vector<1x1x128xf32>
    %137 = vector.broadcast %136 : vector<1x1x128xf32> to vector<16x16x128xf32>
    %138 = arith.mulf %133, %137 : vector<16x16x128xf32>
    %139 = arith.addf %119, %138 : vector<16x16x128xf32>
    %c2_i32 = arith.constant 2 : i32
    %140 = arith.addi %1, %c2_i32 : i32
    %c0_68 = arith.constant 0 : index
    %141 = arith.index_cast %140 : i32 to index
    %c0_69 = arith.constant 0 : index
    %c0_70 = arith.constant 0 : index
    %142 = vector.load %arg2[%c0_68, %141, %c0_69, %c0_70] : memref<1x38x22x128xf32, #tpu.memory_space<vmem>>, vector<1x16x16x128xf32>
    %143 = vector.shape_cast %142 : vector<1x16x16x128xf32> to vector<16x16x128xf32>
    %c14 = arith.constant 14 : index
    %c0_71 = arith.constant 0 : index
    %144 = vector.load %arg3[%c14, %c0_71] : memref<49x128xf32, #tpu.memory_space<vmem>>, vector<1x128xf32>
    %145 = vector.shape_cast %144 : vector<1x128xf32> to vector<128xf32>
    %146 = vector.shape_cast %145 : vector<128xf32> to vector<1x1x128xf32>
    %147 = vector.broadcast %146 : vector<1x1x128xf32> to vector<16x16x128xf32>
    %148 = arith.mulf %143, %147 : vector<16x16x128xf32>
    %149 = arith.addf %129, %148 : vector<16x16x128xf32>
    %c2_i32_72 = arith.constant 2 : i32
    %150 = arith.addi %1, %c2_i32_72 : i32
    %c0_73 = arith.constant 0 : index
    %151 = arith.index_cast %150 : i32 to index
    %c1_74 = arith.constant 1 : index
    %c0_75 = arith.constant 0 : index
    %152 = vector.load %arg2[%c0_73, %151, %c1_74, %c0_75] : memref<1x38x22x128xf32, #tpu.memory_space<vmem>>, vector<1x16x16x128xf32>
    %153 = vector.shape_cast %152 : vector<1x16x16x128xf32> to vector<16x16x128xf32>
    %c15 = arith.constant 15 : index
    %c0_76 = arith.constant 0 : index
    %154 = vector.load %arg3[%c15, %c0_76] : memref<49x128xf32, #tpu.memory_space<vmem>>, vector<1x128xf32>
    %155 = vector.shape_cast %154 : vector<1x128xf32> to vector<128xf32>
    %156 = vector.shape_cast %155 : vector<128xf32> to vector<1x1x128xf32>
    %157 = vector.broadcast %156 : vector<1x1x128xf32> to vector<16x16x128xf32>
    %158 = arith.mulf %153, %157 : vector<16x16x128xf32>
    %159 = arith.addf %139, %158 : vector<16x16x128xf32>
    %c2_i32_77 = arith.constant 2 : i32
    %160 = arith.addi %1, %c2_i32_77 : i32
    %c0_78 = arith.constant 0 : index
    %161 = arith.index_cast %160 : i32 to index
    %c2_79 = arith.constant 2 : index
    %c0_80 = arith.constant 0 : index
    %162 = vector.load %arg2[%c0_78, %161, %c2_79, %c0_80] : memref<1x38x22x128xf32, #tpu.memory_space<vmem>>, vector<1x16x16x128xf32>
    %163 = vector.shape_cast %162 : vector<1x16x16x128xf32> to vector<16x16x128xf32>
    %c16 = arith.constant 16 : index
    %c0_81 = arith.constant 0 : index
    %164 = vector.load %arg3[%c16, %c0_81] : memref<49x128xf32, #tpu.memory_space<vmem>>, vector<1x128xf32>
    %165 = vector.shape_cast %164 : vector<1x128xf32> to vector<128xf32>
    %166 = vector.shape_cast %165 : vector<128xf32> to vector<1x1x128xf32>
    %167 = vector.broadcast %166 : vector<1x1x128xf32> to vector<16x16x128xf32>
    %168 = arith.mulf %163, %167 : vector<16x16x128xf32>
    %169 = arith.addf %149, %168 : vector<16x16x128xf32>
    %c2_i32_82 = arith.constant 2 : i32
    %170 = arith.addi %1, %c2_i32_82 : i32
    %c0_83 = arith.constant 0 : index
    %171 = arith.index_cast %170 : i32 to index
    %c3_84 = arith.constant 3 : index
    %c0_85 = arith.constant 0 : index
    %172 = vector.load %arg2[%c0_83, %171, %c3_84, %c0_85] : memref<1x38x22x128xf32, #tpu.memory_space<vmem>>, vector<1x16x16x128xf32>
    %173 = vector.shape_cast %172 : vector<1x16x16x128xf32> to vector<16x16x128xf32>
    %c17 = arith.constant 17 : index
    %c0_86 = arith.constant 0 : index
    %174 = vector.load %arg3[%c17, %c0_86] : memref<49x128xf32, #tpu.memory_space<vmem>>, vector<1x128xf32>
    %175 = vector.shape_cast %174 : vector<1x128xf32> to vector<128xf32>
    %176 = vector.shape_cast %175 : vector<128xf32> to vector<1x1x128xf32>
    %177 = vector.broadcast %176 : vector<1x1x128xf32> to vector<16x16x128xf32>
    %178 = arith.mulf %173, %177 : vector<16x16x128xf32>
    %179 = arith.addf %159, %178 : vector<16x16x128xf32>
    %c2_i32_87 = arith.constant 2 : i32
    %180 = arith.addi %1, %c2_i32_87 : i32
    %c0_88 = arith.constant 0 : index
    %181 = arith.index_cast %180 : i32 to index
    %c4_89 = arith.constant 4 : index
    %c0_90 = arith.constant 0 : index
    %182 = vector.load %arg2[%c0_88, %181, %c4_89, %c0_90] : memref<1x38x22x128xf32, #tpu.memory_space<vmem>>, vector<1x16x16x128xf32>
    %183 = vector.shape_cast %182 : vector<1x16x16x128xf32> to vector<16x16x128xf32>
    %c18 = arith.constant 18 : index
    %c0_91 = arith.constant 0 : index
    %184 = vector.load %arg3[%c18, %c0_91] : memref<49x128xf32, #tpu.memory_space<vmem>>, vector<1x128xf32>
    %185 = vector.shape_cast %184 : vector<1x128xf32> to vector<128xf32>
    %186 = vector.shape_cast %185 : vector<128xf32> to vector<1x1x128xf32>
    %187 = vector.broadcast %186 : vector<1x1x128xf32> to vector<16x16x128xf32>
    %188 = arith.mulf %183, %187 : vector<16x16x128xf32>
    %189 = arith.addf %169, %188 : vector<16x16x128xf32>
    %c2_i32_92 = arith.constant 2 : i32
    %190 = arith.addi %1, %c2_i32_92 : i32
    %c0_93 = arith.constant 0 : index
    %191 = arith.index_cast %190 : i32 to index
    %c5_94 = arith.constant 5 : index
    %c0_95 = arith.constant 0 : index
    %192 = vector.load %arg2[%c0_93, %191, %c5_94, %c0_95] : memref<1x38x22x128xf32, #tpu.memory_space<vmem>>, vector<1x16x16x128xf32>
    %193 = vector.shape_cast %192 : vector<1x16x16x128xf32> to vector<16x16x128xf32>
    %c19 = arith.constant 19 : index
    %c0_96 = arith.constant 0 : index
    %194 = vector.load %arg3[%c19, %c0_96] : memref<49x128xf32, #tpu.memory_space<vmem>>, vector<1x128xf32>
    %195 = vector.shape_cast %194 : vector<1x128xf32> to vector<128xf32>
    %196 = vector.shape_cast %195 : vector<128xf32> to vector<1x1x128xf32>
    %197 = vector.broadcast %196 : vector<1x1x128xf32> to vector<16x16x128xf32>
    %198 = arith.mulf %193, %197 : vector<16x16x128xf32>
    %199 = arith.addf %179, %198 : vector<16x16x128xf32>
    %c2_i32_97 = arith.constant 2 : i32
    %200 = arith.addi %1, %c2_i32_97 : i32
    %c0_98 = arith.constant 0 : index
    %201 = arith.index_cast %200 : i32 to index
    %c6_99 = arith.constant 6 : index
    %c0_100 = arith.constant 0 : index
    %202 = vector.load %arg2[%c0_98, %201, %c6_99, %c0_100] : memref<1x38x22x128xf32, #tpu.memory_space<vmem>>, vector<1x16x16x128xf32>
    %203 = vector.shape_cast %202 : vector<1x16x16x128xf32> to vector<16x16x128xf32>
    %c20 = arith.constant 20 : index
    %c0_101 = arith.constant 0 : index
    %204 = vector.load %arg3[%c20, %c0_101] : memref<49x128xf32, #tpu.memory_space<vmem>>, vector<1x128xf32>
    %205 = vector.shape_cast %204 : vector<1x128xf32> to vector<128xf32>
    %206 = vector.shape_cast %205 : vector<128xf32> to vector<1x1x128xf32>
    %207 = vector.broadcast %206 : vector<1x1x128xf32> to vector<16x16x128xf32>
    %208 = arith.mulf %203, %207 : vector<16x16x128xf32>
    %209 = arith.addf %189, %208 : vector<16x16x128xf32>
    %c3_i32 = arith.constant 3 : i32
    %210 = arith.addi %1, %c3_i32 : i32
    %c0_102 = arith.constant 0 : index
    %211 = arith.index_cast %210 : i32 to index
    %c0_103 = arith.constant 0 : index
    %c0_104 = arith.constant 0 : index
    %212 = vector.load %arg2[%c0_102, %211, %c0_103, %c0_104] : memref<1x38x22x128xf32, #tpu.memory_space<vmem>>, vector<1x16x16x128xf32>
    %213 = vector.shape_cast %212 : vector<1x16x16x128xf32> to vector<16x16x128xf32>
    %c21 = arith.constant 21 : index
    %c0_105 = arith.constant 0 : index
    %214 = vector.load %arg3[%c21, %c0_105] : memref<49x128xf32, #tpu.memory_space<vmem>>, vector<1x128xf32>
    %215 = vector.shape_cast %214 : vector<1x128xf32> to vector<128xf32>
    %216 = vector.shape_cast %215 : vector<128xf32> to vector<1x1x128xf32>
    %217 = vector.broadcast %216 : vector<1x1x128xf32> to vector<16x16x128xf32>
    %218 = arith.mulf %213, %217 : vector<16x16x128xf32>
    %219 = arith.addf %199, %218 : vector<16x16x128xf32>
    %c3_i32_106 = arith.constant 3 : i32
    %220 = arith.addi %1, %c3_i32_106 : i32
    %c0_107 = arith.constant 0 : index
    %221 = arith.index_cast %220 : i32 to index
    %c1_108 = arith.constant 1 : index
    %c0_109 = arith.constant 0 : index
    %222 = vector.load %arg2[%c0_107, %221, %c1_108, %c0_109] : memref<1x38x22x128xf32, #tpu.memory_space<vmem>>, vector<1x16x16x128xf32>
    %223 = vector.shape_cast %222 : vector<1x16x16x128xf32> to vector<16x16x128xf32>
    %c22 = arith.constant 22 : index
    %c0_110 = arith.constant 0 : index
    %224 = vector.load %arg3[%c22, %c0_110] : memref<49x128xf32, #tpu.memory_space<vmem>>, vector<1x128xf32>
    %225 = vector.shape_cast %224 : vector<1x128xf32> to vector<128xf32>
    %226 = vector.shape_cast %225 : vector<128xf32> to vector<1x1x128xf32>
    %227 = vector.broadcast %226 : vector<1x1x128xf32> to vector<16x16x128xf32>
    %228 = arith.mulf %223, %227 : vector<16x16x128xf32>
    %229 = arith.addf %209, %228 : vector<16x16x128xf32>
    %c3_i32_111 = arith.constant 3 : i32
    %230 = arith.addi %1, %c3_i32_111 : i32
    %c0_112 = arith.constant 0 : index
    %231 = arith.index_cast %230 : i32 to index
    %c2_113 = arith.constant 2 : index
    %c0_114 = arith.constant 0 : index
    %232 = vector.load %arg2[%c0_112, %231, %c2_113, %c0_114] : memref<1x38x22x128xf32, #tpu.memory_space<vmem>>, vector<1x16x16x128xf32>
    %233 = vector.shape_cast %232 : vector<1x16x16x128xf32> to vector<16x16x128xf32>
    %c23 = arith.constant 23 : index
    %c0_115 = arith.constant 0 : index
    %234 = vector.load %arg3[%c23, %c0_115] : memref<49x128xf32, #tpu.memory_space<vmem>>, vector<1x128xf32>
    %235 = vector.shape_cast %234 : vector<1x128xf32> to vector<128xf32>
    %236 = vector.shape_cast %235 : vector<128xf32> to vector<1x1x128xf32>
    %237 = vector.broadcast %236 : vector<1x1x128xf32> to vector<16x16x128xf32>
    %238 = arith.mulf %233, %237 : vector<16x16x128xf32>
    %239 = arith.addf %219, %238 : vector<16x16x128xf32>
    %c3_i32_116 = arith.constant 3 : i32
    %240 = arith.addi %1, %c3_i32_116 : i32
    %c0_117 = arith.constant 0 : index
    %241 = arith.index_cast %240 : i32 to index
    %c3_118 = arith.constant 3 : index
    %c0_119 = arith.constant 0 : index
    %242 = vector.load %arg2[%c0_117, %241, %c3_118, %c0_119] : memref<1x38x22x128xf32, #tpu.memory_space<vmem>>, vector<1x16x16x128xf32>
    %243 = vector.shape_cast %242 : vector<1x16x16x128xf32> to vector<16x16x128xf32>
    %c24 = arith.constant 24 : index
    %c0_120 = arith.constant 0 : index
    %244 = vector.load %arg3[%c24, %c0_120] : memref<49x128xf32, #tpu.memory_space<vmem>>, vector<1x128xf32>
    %245 = vector.shape_cast %244 : vector<1x128xf32> to vector<128xf32>
    %246 = vector.shape_cast %245 : vector<128xf32> to vector<1x1x128xf32>
    %247 = vector.broadcast %246 : vector<1x1x128xf32> to vector<16x16x128xf32>
    %248 = arith.mulf %243, %247 : vector<16x16x128xf32>
    %249 = arith.addf %229, %248 : vector<16x16x128xf32>
    %c3_i32_121 = arith.constant 3 : i32
    %250 = arith.addi %1, %c3_i32_121 : i32
    %c0_122 = arith.constant 0 : index
    %251 = arith.index_cast %250 : i32 to index
    %c4_123 = arith.constant 4 : index
    %c0_124 = arith.constant 0 : index
    %252 = vector.load %arg2[%c0_122, %251, %c4_123, %c0_124] : memref<1x38x22x128xf32, #tpu.memory_space<vmem>>, vector<1x16x16x128xf32>
    %253 = vector.shape_cast %252 : vector<1x16x16x128xf32> to vector<16x16x128xf32>
    %c25 = arith.constant 25 : index
    %c0_125 = arith.constant 0 : index
    %254 = vector.load %arg3[%c25, %c0_125] : memref<49x128xf32, #tpu.memory_space<vmem>>, vector<1x128xf32>
    %255 = vector.shape_cast %254 : vector<1x128xf32> to vector<128xf32>
    %256 = vector.shape_cast %255 : vector<128xf32> to vector<1x1x128xf32>
    %257 = vector.broadcast %256 : vector<1x1x128xf32> to vector<16x16x128xf32>
    %258 = arith.mulf %253, %257 : vector<16x16x128xf32>
    %259 = arith.addf %239, %258 : vector<16x16x128xf32>
    %c3_i32_126 = arith.constant 3 : i32
    %260 = arith.addi %1, %c3_i32_126 : i32
    %c0_127 = arith.constant 0 : index
    %261 = arith.index_cast %260 : i32 to index
    %c5_128 = arith.constant 5 : index
    %c0_129 = arith.constant 0 : index
    %262 = vector.load %arg2[%c0_127, %261, %c5_128, %c0_129] : memref<1x38x22x128xf32, #tpu.memory_space<vmem>>, vector<1x16x16x128xf32>
    %263 = vector.shape_cast %262 : vector<1x16x16x128xf32> to vector<16x16x128xf32>
    %c26 = arith.constant 26 : index
    %c0_130 = arith.constant 0 : index
    %264 = vector.load %arg3[%c26, %c0_130] : memref<49x128xf32, #tpu.memory_space<vmem>>, vector<1x128xf32>
    %265 = vector.shape_cast %264 : vector<1x128xf32> to vector<128xf32>
    %266 = vector.shape_cast %265 : vector<128xf32> to vector<1x1x128xf32>
    %267 = vector.broadcast %266 : vector<1x1x128xf32> to vector<16x16x128xf32>
    %268 = arith.mulf %263, %267 : vector<16x16x128xf32>
    %269 = arith.addf %249, %268 : vector<16x16x128xf32>
    %c3_i32_131 = arith.constant 3 : i32
    %270 = arith.addi %1, %c3_i32_131 : i32
    %c0_132 = arith.constant 0 : index
    %271 = arith.index_cast %270 : i32 to index
    %c6_133 = arith.constant 6 : index
    %c0_134 = arith.constant 0 : index
    %272 = vector.load %arg2[%c0_132, %271, %c6_133, %c0_134] : memref<1x38x22x128xf32, #tpu.memory_space<vmem>>, vector<1x16x16x128xf32>
    %273 = vector.shape_cast %272 : vector<1x16x16x128xf32> to vector<16x16x128xf32>
    %c27 = arith.constant 27 : index
    %c0_135 = arith.constant 0 : index
    %274 = vector.load %arg3[%c27, %c0_135] : memref<49x128xf32, #tpu.memory_space<vmem>>, vector<1x128xf32>
    %275 = vector.shape_cast %274 : vector<1x128xf32> to vector<128xf32>
    %276 = vector.shape_cast %275 : vector<128xf32> to vector<1x1x128xf32>
    %277 = vector.broadcast %276 : vector<1x1x128xf32> to vector<16x16x128xf32>
    %278 = arith.mulf %273, %277 : vector<16x16x128xf32>
    %279 = arith.addf %259, %278 : vector<16x16x128xf32>
    %c4_i32 = arith.constant 4 : i32
    %280 = arith.addi %1, %c4_i32 : i32
    %c0_136 = arith.constant 0 : index
    %281 = arith.index_cast %280 : i32 to index
    %c0_137 = arith.constant 0 : index
    %c0_138 = arith.constant 0 : index
    %282 = vector.load %arg2[%c0_136, %281, %c0_137, %c0_138] : memref<1x38x22x128xf32, #tpu.memory_space<vmem>>, vector<1x16x16x128xf32>
    %283 = vector.shape_cast %282 : vector<1x16x16x128xf32> to vector<16x16x128xf32>
    %c28 = arith.constant 28 : index
    %c0_139 = arith.constant 0 : index
    %284 = vector.load %arg3[%c28, %c0_139] : memref<49x128xf32, #tpu.memory_space<vmem>>, vector<1x128xf32>
    %285 = vector.shape_cast %284 : vector<1x128xf32> to vector<128xf32>
    %286 = vector.shape_cast %285 : vector<128xf32> to vector<1x1x128xf32>
    %287 = vector.broadcast %286 : vector<1x1x128xf32> to vector<16x16x128xf32>
    %288 = arith.mulf %283, %287 : vector<16x16x128xf32>
    %289 = arith.addf %269, %288 : vector<16x16x128xf32>
    %c4_i32_140 = arith.constant 4 : i32
    %290 = arith.addi %1, %c4_i32_140 : i32
    %c0_141 = arith.constant 0 : index
    %291 = arith.index_cast %290 : i32 to index
    %c1_142 = arith.constant 1 : index
    %c0_143 = arith.constant 0 : index
    %292 = vector.load %arg2[%c0_141, %291, %c1_142, %c0_143] : memref<1x38x22x128xf32, #tpu.memory_space<vmem>>, vector<1x16x16x128xf32>
    %293 = vector.shape_cast %292 : vector<1x16x16x128xf32> to vector<16x16x128xf32>
    %c29 = arith.constant 29 : index
    %c0_144 = arith.constant 0 : index
    %294 = vector.load %arg3[%c29, %c0_144] : memref<49x128xf32, #tpu.memory_space<vmem>>, vector<1x128xf32>
    %295 = vector.shape_cast %294 : vector<1x128xf32> to vector<128xf32>
    %296 = vector.shape_cast %295 : vector<128xf32> to vector<1x1x128xf32>
    %297 = vector.broadcast %296 : vector<1x1x128xf32> to vector<16x16x128xf32>
    %298 = arith.mulf %293, %297 : vector<16x16x128xf32>
    %299 = arith.addf %279, %298 : vector<16x16x128xf32>
    %c4_i32_145 = arith.constant 4 : i32
    %300 = arith.addi %1, %c4_i32_145 : i32
    %c0_146 = arith.constant 0 : index
    %301 = arith.index_cast %300 : i32 to index
    %c2_147 = arith.constant 2 : index
    %c0_148 = arith.constant 0 : index
    %302 = vector.load %arg2[%c0_146, %301, %c2_147, %c0_148] : memref<1x38x22x128xf32, #tpu.memory_space<vmem>>, vector<1x16x16x128xf32>
    %303 = vector.shape_cast %302 : vector<1x16x16x128xf32> to vector<16x16x128xf32>
    %c30 = arith.constant 30 : index
    %c0_149 = arith.constant 0 : index
    %304 = vector.load %arg3[%c30, %c0_149] : memref<49x128xf32, #tpu.memory_space<vmem>>, vector<1x128xf32>
    %305 = vector.shape_cast %304 : vector<1x128xf32> to vector<128xf32>
    %306 = vector.shape_cast %305 : vector<128xf32> to vector<1x1x128xf32>
    %307 = vector.broadcast %306 : vector<1x1x128xf32> to vector<16x16x128xf32>
    %308 = arith.mulf %303, %307 : vector<16x16x128xf32>
    %309 = arith.addf %289, %308 : vector<16x16x128xf32>
    %c4_i32_150 = arith.constant 4 : i32
    %310 = arith.addi %1, %c4_i32_150 : i32
    %c0_151 = arith.constant 0 : index
    %311 = arith.index_cast %310 : i32 to index
    %c3_152 = arith.constant 3 : index
    %c0_153 = arith.constant 0 : index
    %312 = vector.load %arg2[%c0_151, %311, %c3_152, %c0_153] : memref<1x38x22x128xf32, #tpu.memory_space<vmem>>, vector<1x16x16x128xf32>
    %313 = vector.shape_cast %312 : vector<1x16x16x128xf32> to vector<16x16x128xf32>
    %c31 = arith.constant 31 : index
    %c0_154 = arith.constant 0 : index
    %314 = vector.load %arg3[%c31, %c0_154] : memref<49x128xf32, #tpu.memory_space<vmem>>, vector<1x128xf32>
    %315 = vector.shape_cast %314 : vector<1x128xf32> to vector<128xf32>
    %316 = vector.shape_cast %315 : vector<128xf32> to vector<1x1x128xf32>
    %317 = vector.broadcast %316 : vector<1x1x128xf32> to vector<16x16x128xf32>
    %318 = arith.mulf %313, %317 : vector<16x16x128xf32>
    %319 = arith.addf %299, %318 : vector<16x16x128xf32>
    %c4_i32_155 = arith.constant 4 : i32
    %320 = arith.addi %1, %c4_i32_155 : i32
    %c0_156 = arith.constant 0 : index
    %321 = arith.index_cast %320 : i32 to index
    %c4_157 = arith.constant 4 : index
    %c0_158 = arith.constant 0 : index
    %322 = vector.load %arg2[%c0_156, %321, %c4_157, %c0_158] : memref<1x38x22x128xf32, #tpu.memory_space<vmem>>, vector<1x16x16x128xf32>
    %323 = vector.shape_cast %322 : vector<1x16x16x128xf32> to vector<16x16x128xf32>
    %c32 = arith.constant 32 : index
    %c0_159 = arith.constant 0 : index
    %324 = vector.load %arg3[%c32, %c0_159] : memref<49x128xf32, #tpu.memory_space<vmem>>, vector<1x128xf32>
    %325 = vector.shape_cast %324 : vector<1x128xf32> to vector<128xf32>
    %326 = vector.shape_cast %325 : vector<128xf32> to vector<1x1x128xf32>
    %327 = vector.broadcast %326 : vector<1x1x128xf32> to vector<16x16x128xf32>
    %328 = arith.mulf %323, %327 : vector<16x16x128xf32>
    %329 = arith.addf %309, %328 : vector<16x16x128xf32>
    %c4_i32_160 = arith.constant 4 : i32
    %330 = arith.addi %1, %c4_i32_160 : i32
    %c0_161 = arith.constant 0 : index
    %331 = arith.index_cast %330 : i32 to index
    %c5_162 = arith.constant 5 : index
    %c0_163 = arith.constant 0 : index
    %332 = vector.load %arg2[%c0_161, %331, %c5_162, %c0_163] : memref<1x38x22x128xf32, #tpu.memory_space<vmem>>, vector<1x16x16x128xf32>
    %333 = vector.shape_cast %332 : vector<1x16x16x128xf32> to vector<16x16x128xf32>
    %c33 = arith.constant 33 : index
    %c0_164 = arith.constant 0 : index
    %334 = vector.load %arg3[%c33, %c0_164] : memref<49x128xf32, #tpu.memory_space<vmem>>, vector<1x128xf32>
    %335 = vector.shape_cast %334 : vector<1x128xf32> to vector<128xf32>
    %336 = vector.shape_cast %335 : vector<128xf32> to vector<1x1x128xf32>
    %337 = vector.broadcast %336 : vector<1x1x128xf32> to vector<16x16x128xf32>
    %338 = arith.mulf %333, %337 : vector<16x16x128xf32>
    %339 = arith.addf %319, %338 : vector<16x16x128xf32>
    %c4_i32_165 = arith.constant 4 : i32
    %340 = arith.addi %1, %c4_i32_165 : i32
    %c0_166 = arith.constant 0 : index
    %341 = arith.index_cast %340 : i32 to index
    %c6_167 = arith.constant 6 : index
    %c0_168 = arith.constant 0 : index
    %342 = vector.load %arg2[%c0_166, %341, %c6_167, %c0_168] : memref<1x38x22x128xf32, #tpu.memory_space<vmem>>, vector<1x16x16x128xf32>
    %343 = vector.shape_cast %342 : vector<1x16x16x128xf32> to vector<16x16x128xf32>
    %c34 = arith.constant 34 : index
    %c0_169 = arith.constant 0 : index
    %344 = vector.load %arg3[%c34, %c0_169] : memref<49x128xf32, #tpu.memory_space<vmem>>, vector<1x128xf32>
    %345 = vector.shape_cast %344 : vector<1x128xf32> to vector<128xf32>
    %346 = vector.shape_cast %345 : vector<128xf32> to vector<1x1x128xf32>
    %347 = vector.broadcast %346 : vector<1x1x128xf32> to vector<16x16x128xf32>
    %348 = arith.mulf %343, %347 : vector<16x16x128xf32>
    %349 = arith.addf %329, %348 : vector<16x16x128xf32>
    %c5_i32 = arith.constant 5 : i32
    %350 = arith.addi %1, %c5_i32 : i32
    %c0_170 = arith.constant 0 : index
    %351 = arith.index_cast %350 : i32 to index
    %c0_171 = arith.constant 0 : index
    %c0_172 = arith.constant 0 : index
    %352 = vector.load %arg2[%c0_170, %351, %c0_171, %c0_172] : memref<1x38x22x128xf32, #tpu.memory_space<vmem>>, vector<1x16x16x128xf32>
    %353 = vector.shape_cast %352 : vector<1x16x16x128xf32> to vector<16x16x128xf32>
    %c35 = arith.constant 35 : index
    %c0_173 = arith.constant 0 : index
    %354 = vector.load %arg3[%c35, %c0_173] : memref<49x128xf32, #tpu.memory_space<vmem>>, vector<1x128xf32>
    %355 = vector.shape_cast %354 : vector<1x128xf32> to vector<128xf32>
    %356 = vector.shape_cast %355 : vector<128xf32> to vector<1x1x128xf32>
    %357 = vector.broadcast %356 : vector<1x1x128xf32> to vector<16x16x128xf32>
    %358 = arith.mulf %353, %357 : vector<16x16x128xf32>
    %359 = arith.addf %339, %358 : vector<16x16x128xf32>
    %c5_i32_174 = arith.constant 5 : i32
    %360 = arith.addi %1, %c5_i32_174 : i32
    %c0_175 = arith.constant 0 : index
    %361 = arith.index_cast %360 : i32 to index
    %c1_176 = arith.constant 1 : index
    %c0_177 = arith.constant 0 : index
    %362 = vector.load %arg2[%c0_175, %361, %c1_176, %c0_177] : memref<1x38x22x128xf32, #tpu.memory_space<vmem>>, vector<1x16x16x128xf32>
    %363 = vector.shape_cast %362 : vector<1x16x16x128xf32> to vector<16x16x128xf32>
    %c36 = arith.constant 36 : index
    %c0_178 = arith.constant 0 : index
    %364 = vector.load %arg3[%c36, %c0_178] : memref<49x128xf32, #tpu.memory_space<vmem>>, vector<1x128xf32>
    %365 = vector.shape_cast %364 : vector<1x128xf32> to vector<128xf32>
    %366 = vector.shape_cast %365 : vector<128xf32> to vector<1x1x128xf32>
    %367 = vector.broadcast %366 : vector<1x1x128xf32> to vector<16x16x128xf32>
    %368 = arith.mulf %363, %367 : vector<16x16x128xf32>
    %369 = arith.addf %349, %368 : vector<16x16x128xf32>
    %c5_i32_179 = arith.constant 5 : i32
    %370 = arith.addi %1, %c5_i32_179 : i32
    %c0_180 = arith.constant 0 : index
    %371 = arith.index_cast %370 : i32 to index
    %c2_181 = arith.constant 2 : index
    %c0_182 = arith.constant 0 : index
    %372 = vector.load %arg2[%c0_180, %371, %c2_181, %c0_182] : memref<1x38x22x128xf32, #tpu.memory_space<vmem>>, vector<1x16x16x128xf32>
    %373 = vector.shape_cast %372 : vector<1x16x16x128xf32> to vector<16x16x128xf32>
    %c37 = arith.constant 37 : index
    %c0_183 = arith.constant 0 : index
    %374 = vector.load %arg3[%c37, %c0_183] : memref<49x128xf32, #tpu.memory_space<vmem>>, vector<1x128xf32>
    %375 = vector.shape_cast %374 : vector<1x128xf32> to vector<128xf32>
    %376 = vector.shape_cast %375 : vector<128xf32> to vector<1x1x128xf32>
    %377 = vector.broadcast %376 : vector<1x1x128xf32> to vector<16x16x128xf32>
    %378 = arith.mulf %373, %377 : vector<16x16x128xf32>
    %379 = arith.addf %359, %378 : vector<16x16x128xf32>
    %c5_i32_184 = arith.constant 5 : i32
    %380 = arith.addi %1, %c5_i32_184 : i32
    %c0_185 = arith.constant 0 : index
    %381 = arith.index_cast %380 : i32 to index
    %c3_186 = arith.constant 3 : index
    %c0_187 = arith.constant 0 : index
    %382 = vector.load %arg2[%c0_185, %381, %c3_186, %c0_187] : memref<1x38x22x128xf32, #tpu.memory_space<vmem>>, vector<1x16x16x128xf32>
    %383 = vector.shape_cast %382 : vector<1x16x16x128xf32> to vector<16x16x128xf32>
    %c38 = arith.constant 38 : index
    %c0_188 = arith.constant 0 : index
    %384 = vector.load %arg3[%c38, %c0_188] : memref<49x128xf32, #tpu.memory_space<vmem>>, vector<1x128xf32>
    %385 = vector.shape_cast %384 : vector<1x128xf32> to vector<128xf32>
    %386 = vector.shape_cast %385 : vector<128xf32> to vector<1x1x128xf32>
    %387 = vector.broadcast %386 : vector<1x1x128xf32> to vector<16x16x128xf32>
    %388 = arith.mulf %383, %387 : vector<16x16x128xf32>
    %389 = arith.addf %369, %388 : vector<16x16x128xf32>
    %c5_i32_189 = arith.constant 5 : i32
    %390 = arith.addi %1, %c5_i32_189 : i32
    %c0_190 = arith.constant 0 : index
    %391 = arith.index_cast %390 : i32 to index
    %c4_191 = arith.constant 4 : index
    %c0_192 = arith.constant 0 : index
    %392 = vector.load %arg2[%c0_190, %391, %c4_191, %c0_192] : memref<1x38x22x128xf32, #tpu.memory_space<vmem>>, vector<1x16x16x128xf32>
    %393 = vector.shape_cast %392 : vector<1x16x16x128xf32> to vector<16x16x128xf32>
    %c39 = arith.constant 39 : index
    %c0_193 = arith.constant 0 : index
    %394 = vector.load %arg3[%c39, %c0_193] : memref<49x128xf32, #tpu.memory_space<vmem>>, vector<1x128xf32>
    %395 = vector.shape_cast %394 : vector<1x128xf32> to vector<128xf32>
    %396 = vector.shape_cast %395 : vector<128xf32> to vector<1x1x128xf32>
    %397 = vector.broadcast %396 : vector<1x1x128xf32> to vector<16x16x128xf32>
    %398 = arith.mulf %393, %397 : vector<16x16x128xf32>
    %399 = arith.addf %379, %398 : vector<16x16x128xf32>
    %c5_i32_194 = arith.constant 5 : i32
    %400 = arith.addi %1, %c5_i32_194 : i32
    %c0_195 = arith.constant 0 : index
    %401 = arith.index_cast %400 : i32 to index
    %c5_196 = arith.constant 5 : index
    %c0_197 = arith.constant 0 : index
    %402 = vector.load %arg2[%c0_195, %401, %c5_196, %c0_197] : memref<1x38x22x128xf32, #tpu.memory_space<vmem>>, vector<1x16x16x128xf32>
    %403 = vector.shape_cast %402 : vector<1x16x16x128xf32> to vector<16x16x128xf32>
    %c40 = arith.constant 40 : index
    %c0_198 = arith.constant 0 : index
    %404 = vector.load %arg3[%c40, %c0_198] : memref<49x128xf32, #tpu.memory_space<vmem>>, vector<1x128xf32>
    %405 = vector.shape_cast %404 : vector<1x128xf32> to vector<128xf32>
    %406 = vector.shape_cast %405 : vector<128xf32> to vector<1x1x128xf32>
    %407 = vector.broadcast %406 : vector<1x1x128xf32> to vector<16x16x128xf32>
    %408 = arith.mulf %403, %407 : vector<16x16x128xf32>
    %409 = arith.addf %389, %408 : vector<16x16x128xf32>
    %c5_i32_199 = arith.constant 5 : i32
    %410 = arith.addi %1, %c5_i32_199 : i32
    %c0_200 = arith.constant 0 : index
    %411 = arith.index_cast %410 : i32 to index
    %c6_201 = arith.constant 6 : index
    %c0_202 = arith.constant 0 : index
    %412 = vector.load %arg2[%c0_200, %411, %c6_201, %c0_202] : memref<1x38x22x128xf32, #tpu.memory_space<vmem>>, vector<1x16x16x128xf32>
    %413 = vector.shape_cast %412 : vector<1x16x16x128xf32> to vector<16x16x128xf32>
    %c41 = arith.constant 41 : index
    %c0_203 = arith.constant 0 : index
    %414 = vector.load %arg3[%c41, %c0_203] : memref<49x128xf32, #tpu.memory_space<vmem>>, vector<1x128xf32>
    %415 = vector.shape_cast %414 : vector<1x128xf32> to vector<128xf32>
    %416 = vector.shape_cast %415 : vector<128xf32> to vector<1x1x128xf32>
    %417 = vector.broadcast %416 : vector<1x1x128xf32> to vector<16x16x128xf32>
    %418 = arith.mulf %413, %417 : vector<16x16x128xf32>
    %419 = arith.addf %399, %418 : vector<16x16x128xf32>
    %c6_i32 = arith.constant 6 : i32
    %420 = arith.addi %1, %c6_i32 : i32
    %c0_204 = arith.constant 0 : index
    %421 = arith.index_cast %420 : i32 to index
    %c0_205 = arith.constant 0 : index
    %c0_206 = arith.constant 0 : index
    %422 = vector.load %arg2[%c0_204, %421, %c0_205, %c0_206] : memref<1x38x22x128xf32, #tpu.memory_space<vmem>>, vector<1x16x16x128xf32>
    %423 = vector.shape_cast %422 : vector<1x16x16x128xf32> to vector<16x16x128xf32>
    %c42 = arith.constant 42 : index
    %c0_207 = arith.constant 0 : index
    %424 = vector.load %arg3[%c42, %c0_207] : memref<49x128xf32, #tpu.memory_space<vmem>>, vector<1x128xf32>
    %425 = vector.shape_cast %424 : vector<1x128xf32> to vector<128xf32>
    %426 = vector.shape_cast %425 : vector<128xf32> to vector<1x1x128xf32>
    %427 = vector.broadcast %426 : vector<1x1x128xf32> to vector<16x16x128xf32>
    %428 = arith.mulf %423, %427 : vector<16x16x128xf32>
    %429 = arith.addf %409, %428 : vector<16x16x128xf32>
    %c6_i32_208 = arith.constant 6 : i32
    %430 = arith.addi %1, %c6_i32_208 : i32
    %c0_209 = arith.constant 0 : index
    %431 = arith.index_cast %430 : i32 to index
    %c1_210 = arith.constant 1 : index
    %c0_211 = arith.constant 0 : index
    %432 = vector.load %arg2[%c0_209, %431, %c1_210, %c0_211] : memref<1x38x22x128xf32, #tpu.memory_space<vmem>>, vector<1x16x16x128xf32>
    %433 = vector.shape_cast %432 : vector<1x16x16x128xf32> to vector<16x16x128xf32>
    %c43 = arith.constant 43 : index
    %c0_212 = arith.constant 0 : index
    %434 = vector.load %arg3[%c43, %c0_212] : memref<49x128xf32, #tpu.memory_space<vmem>>, vector<1x128xf32>
    %435 = vector.shape_cast %434 : vector<1x128xf32> to vector<128xf32>
    %436 = vector.shape_cast %435 : vector<128xf32> to vector<1x1x128xf32>
    %437 = vector.broadcast %436 : vector<1x1x128xf32> to vector<16x16x128xf32>
    %438 = arith.mulf %433, %437 : vector<16x16x128xf32>
    %439 = arith.addf %419, %438 : vector<16x16x128xf32>
    %c6_i32_213 = arith.constant 6 : i32
    %440 = arith.addi %1, %c6_i32_213 : i32
    %c0_214 = arith.constant 0 : index
    %441 = arith.index_cast %440 : i32 to index
    %c2_215 = arith.constant 2 : index
    %c0_216 = arith.constant 0 : index
    %442 = vector.load %arg2[%c0_214, %441, %c2_215, %c0_216] : memref<1x38x22x128xf32, #tpu.memory_space<vmem>>, vector<1x16x16x128xf32>
    %443 = vector.shape_cast %442 : vector<1x16x16x128xf32> to vector<16x16x128xf32>
    %c44 = arith.constant 44 : index
    %c0_217 = arith.constant 0 : index
    %444 = vector.load %arg3[%c44, %c0_217] : memref<49x128xf32, #tpu.memory_space<vmem>>, vector<1x128xf32>
    %445 = vector.shape_cast %444 : vector<1x128xf32> to vector<128xf32>
    %446 = vector.shape_cast %445 : vector<128xf32> to vector<1x1x128xf32>
    %447 = vector.broadcast %446 : vector<1x1x128xf32> to vector<16x16x128xf32>
    %448 = arith.mulf %443, %447 : vector<16x16x128xf32>
    %449 = arith.addf %429, %448 : vector<16x16x128xf32>
    %c6_i32_218 = arith.constant 6 : i32
    %450 = arith.addi %1, %c6_i32_218 : i32
    %c0_219 = arith.constant 0 : index
    %451 = arith.index_cast %450 : i32 to index
    %c3_220 = arith.constant 3 : index
    %c0_221 = arith.constant 0 : index
    %452 = vector.load %arg2[%c0_219, %451, %c3_220, %c0_221] : memref<1x38x22x128xf32, #tpu.memory_space<vmem>>, vector<1x16x16x128xf32>
    %453 = vector.shape_cast %452 : vector<1x16x16x128xf32> to vector<16x16x128xf32>
    %c45 = arith.constant 45 : index
    %c0_222 = arith.constant 0 : index
    %454 = vector.load %arg3[%c45, %c0_222] : memref<49x128xf32, #tpu.memory_space<vmem>>, vector<1x128xf32>
    %455 = vector.shape_cast %454 : vector<1x128xf32> to vector<128xf32>
    %456 = vector.shape_cast %455 : vector<128xf32> to vector<1x1x128xf32>
    %457 = vector.broadcast %456 : vector<1x1x128xf32> to vector<16x16x128xf32>
    %458 = arith.mulf %453, %457 : vector<16x16x128xf32>
    %459 = arith.addf %439, %458 : vector<16x16x128xf32>
    %c6_i32_223 = arith.constant 6 : i32
    %460 = arith.addi %1, %c6_i32_223 : i32
    %c0_224 = arith.constant 0 : index
    %461 = arith.index_cast %460 : i32 to index
    %c4_225 = arith.constant 4 : index
    %c0_226 = arith.constant 0 : index
    %462 = vector.load %arg2[%c0_224, %461, %c4_225, %c0_226] : memref<1x38x22x128xf32, #tpu.memory_space<vmem>>, vector<1x16x16x128xf32>
    %463 = vector.shape_cast %462 : vector<1x16x16x128xf32> to vector<16x16x128xf32>
    %c46 = arith.constant 46 : index
    %c0_227 = arith.constant 0 : index
    %464 = vector.load %arg3[%c46, %c0_227] : memref<49x128xf32, #tpu.memory_space<vmem>>, vector<1x128xf32>
    %465 = vector.shape_cast %464 : vector<1x128xf32> to vector<128xf32>
    %466 = vector.shape_cast %465 : vector<128xf32> to vector<1x1x128xf32>
    %467 = vector.broadcast %466 : vector<1x1x128xf32> to vector<16x16x128xf32>
    %468 = arith.mulf %463, %467 : vector<16x16x128xf32>
    %469 = arith.addf %449, %468 : vector<16x16x128xf32>
    %c6_i32_228 = arith.constant 6 : i32
    %470 = arith.addi %1, %c6_i32_228 : i32
    %c0_229 = arith.constant 0 : index
    %471 = arith.index_cast %470 : i32 to index
    %c5_230 = arith.constant 5 : index
    %c0_231 = arith.constant 0 : index
    %472 = vector.load %arg2[%c0_229, %471, %c5_230, %c0_231] : memref<1x38x22x128xf32, #tpu.memory_space<vmem>>, vector<1x16x16x128xf32>
    %473 = vector.shape_cast %472 : vector<1x16x16x128xf32> to vector<16x16x128xf32>
    %c47 = arith.constant 47 : index
    %c0_232 = arith.constant 0 : index
    %474 = vector.load %arg3[%c47, %c0_232] : memref<49x128xf32, #tpu.memory_space<vmem>>, vector<1x128xf32>
    %475 = vector.shape_cast %474 : vector<1x128xf32> to vector<128xf32>
    %476 = vector.shape_cast %475 : vector<128xf32> to vector<1x1x128xf32>
    %477 = vector.broadcast %476 : vector<1x1x128xf32> to vector<16x16x128xf32>
    %478 = arith.mulf %473, %477 : vector<16x16x128xf32>
    %479 = arith.addf %459, %478 : vector<16x16x128xf32>
    %c6_i32_233 = arith.constant 6 : i32
    %480 = arith.addi %1, %c6_i32_233 : i32
    %c0_234 = arith.constant 0 : index
    %481 = arith.index_cast %480 : i32 to index
    %c6_235 = arith.constant 6 : index
    %c0_236 = arith.constant 0 : index
    %482 = vector.load %arg2[%c0_234, %481, %c6_235, %c0_236] : memref<1x38x22x128xf32, #tpu.memory_space<vmem>>, vector<1x16x16x128xf32>
    %483 = vector.shape_cast %482 : vector<1x16x16x128xf32> to vector<16x16x128xf32>
    %c48 = arith.constant 48 : index
    %c0_237 = arith.constant 0 : index
    %484 = vector.load %arg3[%c48, %c0_237] : memref<49x128xf32, #tpu.memory_space<vmem>>, vector<1x128xf32>
    %485 = vector.shape_cast %484 : vector<1x128xf32> to vector<128xf32>
    %486 = vector.shape_cast %485 : vector<128xf32> to vector<1x1x128xf32>
    %487 = vector.broadcast %486 : vector<1x1x128xf32> to vector<16x16x128xf32>
    %488 = arith.mulf %483, %487 : vector<16x16x128xf32>
    %489 = arith.addf %469, %488 : vector<16x16x128xf32>
    %490 = arith.addf %489, %479 : vector<16x16x128xf32>
    %c0_238 = arith.constant 0 : index
    %c0_239 = arith.constant 0 : index
    %491 = vector.load %arg4[%c0_238, %c0_239] : memref<1x128xf32, #tpu.memory_space<vmem>>, vector<1x128xf32>
    %492 = vector.shape_cast %491 : vector<1x128xf32> to vector<128xf32>
    %493 = vector.shape_cast %492 : vector<128xf32> to vector<1x1x128xf32>
    %494 = vector.broadcast %493 : vector<1x1x128xf32> to vector<16x16x128xf32>
    %495 = arith.addf %490, %494 : vector<16x16x128xf32>
    %496 = vector.shape_cast %495 : vector<16x16x128xf32> to vector<256x128xf32>
    %cst = arith.constant dense<0.000000e+00> : vector<256xf32>
    %497 = vector.multi_reduction <add>, %496, %cst [1] : vector<256x128xf32> to vector<256xf32>
    %498 = vector.shape_cast %497 : vector<256xf32> to vector<256x1xf32>
    %cst_240 = arith.constant 3.125000e-02 : f32
    %499 = vector.broadcast %cst_240 : f32 to vector<256x1xf32>
    %500 = arith.mulf %498, %499 : vector<256x1xf32>
    %501 = vector.broadcast %500 : vector<256x1xf32> to vector<256x128xf32>
    %502 = arith.subf %496, %501 : vector<256x128xf32>
    %503 = arith.mulf %502, %502 : vector<256x128xf32>
    %cst_241 = arith.constant dense<0.000000e+00> : vector<256xf32>
    %504 = vector.multi_reduction <add>, %503, %cst_241 [1] : vector<256x128xf32> to vector<256xf32>
    %505 = vector.shape_cast %504 : vector<256xf32> to vector<256x1xf32>
    %506 = arith.mulf %500, %500 : vector<256x1xf32>
    %cst_242 = arith.constant 9.600000e+01 : f32
    %507 = vector.broadcast %cst_242 : f32 to vector<256x1xf32>
    %508 = arith.mulf %507, %506 : vector<256x1xf32>
    %509 = arith.subf %505, %508 : vector<256x1xf32>
    %cst_243 = arith.constant 3.125000e-02 : f32
    %510 = vector.broadcast %cst_243 : f32 to vector<256x1xf32>
    %511 = arith.mulf %509, %510 : vector<256x1xf32>
    %cst_244 = arith.constant 9.99999997E-7 : f32
    %512 = vector.broadcast %cst_244 : f32 to vector<256x1xf32>
    %513 = arith.addf %511, %512 : vector<256x1xf32>
    %514 = math.rsqrt %513 : vector<256x1xf32>
    %515 = vector.broadcast %514 : vector<256x1xf32> to vector<256x128xf32>
    %516 = arith.mulf %502, %515 : vector<256x128xf32>
    %c0_245 = arith.constant 0 : index
    %c0_246 = arith.constant 0 : index
    %517 = vector.load %arg5[%c0_245, %c0_246] : memref<1x128xf32, #tpu.memory_space<vmem>>, vector<1x128xf32>
    %518 = vector.shape_cast %517 : vector<1x128xf32> to vector<128xf32>
    %519 = vector.shape_cast %518 : vector<128xf32> to vector<1x128xf32>
    %520 = vector.broadcast %519 : vector<1x128xf32> to vector<256x128xf32>
    %521 = arith.mulf %516, %520 : vector<256x128xf32>
    %c0_247 = arith.constant 0 : index
    %c0_248 = arith.constant 0 : index
    %522 = vector.load %arg6[%c0_247, %c0_248] : memref<1x128xf32, #tpu.memory_space<vmem>>, vector<1x128xf32>
    %523 = vector.shape_cast %522 : vector<1x128xf32> to vector<128xf32>
    %524 = vector.shape_cast %523 : vector<128xf32> to vector<1x128xf32>
    %525 = vector.broadcast %524 : vector<1x128xf32> to vector<256x128xf32>
    %526 = arith.addf %521, %525 : vector<256x128xf32>
    %527 = arith.truncf %526 : vector<256x128xf32> to vector<256x128xbf16>
    %c0_249 = arith.constant 0 : index
    %c0_250 = arith.constant 0 : index
    %528 = vector.load %arg7[%c0_249, %c0_250] : memref<128x128xbf16, #tpu.memory_space<vmem>>, vector<128x128xbf16>
    %cst_251 = arith.constant dense<0.000000e+00> : vector<256x128xf32>
    %529 = tpu.matmul %527, %528, %cst_251 {dimension_numbers = #tpu.dot_dimension_numbers<[1], [0], [0], [1], [0, 0, 1, 1], [], []>} : vector<256x128xbf16>, vector<128x128xbf16>, vector<256x128xf32> -> vector<256x128xf32>
    %c0_252 = arith.constant 0 : index
    %c0_253 = arith.constant 0 : index
    %530 = vector.load %arg8[%c0_252, %c0_253] : memref<1x128xf32, #tpu.memory_space<vmem>>, vector<1x128xf32>
    %531 = vector.shape_cast %530 : vector<1x128xf32> to vector<128xf32>
    %532 = vector.shape_cast %531 : vector<128xf32> to vector<1x128xf32>
    %533 = vector.broadcast %532 : vector<1x128xf32> to vector<256x128xf32>
    %534 = arith.addf %529, %533 : vector<256x128xf32>
    %cst_254 = arith.constant 5.000000e-01 : f32
    %535 = vector.broadcast %cst_254 : f32 to vector<256x128xf32>
    %536 = arith.mulf %535, %534 : vector<256x128xf32>
    %537 = arith.mulf %534, %534 : vector<256x128xf32>
    %538 = arith.mulf %537, %534 : vector<256x128xf32>
    %cst_255 = arith.constant 4.471500e-02 : f32
    %539 = vector.broadcast %cst_255 : f32 to vector<256x128xf32>
    %540 = arith.mulf %539, %538 : vector<256x128xf32>
    %541 = arith.addf %534, %540 : vector<256x128xf32>
    %cst_256 = arith.constant 0.797884583 : f32
    %542 = vector.broadcast %cst_256 : f32 to vector<256x128xf32>
    %543 = arith.mulf %542, %541 : vector<256x128xf32>
    %544 = math.tanh %543 : vector<256x128xf32>
    %cst_257 = arith.constant 1.000000e+00 : f32
    %545 = vector.broadcast %cst_257 : f32 to vector<256x128xf32>
    %546 = arith.addf %545, %544 : vector<256x128xf32>
    %547 = arith.mulf %536, %546 : vector<256x128xf32>
    %548 = arith.truncf %547 : vector<256x128xf32> to vector<256x128xbf16>
    %c0_258 = arith.constant 0 : index
    %c0_259 = arith.constant 0 : index
    %549 = vector.load %arg9[%c0_258, %c0_259] : memref<128x128xbf16, #tpu.memory_space<vmem>>, vector<128x128xbf16>
    %cst_260 = arith.constant dense<0.000000e+00> : vector<256x128xf32>
    %550 = tpu.matmul %548, %549, %cst_260 {dimension_numbers = #tpu.dot_dimension_numbers<[1], [0], [0], [1], [0, 0, 1, 1], [], []>} : vector<256x128xbf16>, vector<128x128xbf16>, vector<256x128xf32> -> vector<256x128xf32>
    %c0_261 = arith.constant 0 : index
    %c0_262 = arith.constant 0 : index
    %551 = vector.load %arg10[%c0_261, %c0_262] : memref<1x128xf32, #tpu.memory_space<vmem>>, vector<1x128xf32>
    %552 = vector.shape_cast %551 : vector<1x128xf32> to vector<128xf32>
    %553 = vector.shape_cast %552 : vector<128xf32> to vector<1x128xf32>
    %554 = vector.broadcast %553 : vector<1x128xf32> to vector<256x128xf32>
    %555 = arith.addf %550, %554 : vector<256x128xf32>
    %c0_263 = arith.constant 0 : index
    %c0_264 = arith.constant 0 : index
    %556 = vector.load %arg11[%c0_263, %c0_264] : memref<1x128xf32, #tpu.memory_space<vmem>>, vector<1x128xf32>
    %557 = vector.shape_cast %556 : vector<1x128xf32> to vector<128xf32>
    %558 = vector.shape_cast %557 : vector<128xf32> to vector<1x128xf32>
    %559 = vector.broadcast %558 : vector<1x128xf32> to vector<256x128xf32>
    %560 = arith.mulf %555, %559 : vector<256x128xf32>
    %c3_i32_265 = arith.constant 3 : i32
    %561 = arith.addi %1, %c3_i32_265 : i32
    %c0_266 = arith.constant 0 : index
    %562 = arith.index_cast %561 : i32 to index
    %c3_267 = arith.constant 3 : index
    %c0_268 = arith.constant 0 : index
    %563 = vector.load %arg2[%c0_266, %562, %c3_267, %c0_268] : memref<1x38x22x128xf32, #tpu.memory_space<vmem>>, vector<1x16x16x128xf32>
    %564 = vector.shape_cast %563 : vector<1x16x16x128xf32> to vector<16x16x128xf32>
    %565 = vector.shape_cast %560 : vector<256x128xf32> to vector<16x16x128xf32>
    %566 = arith.addf %564, %565 : vector<16x16x128xf32>
    %c0_269 = arith.constant 0 : index
    %c0_270 = arith.constant 0 : index
    %c0_271 = arith.constant 0 : index
    %c0_272 = arith.constant 0 : index
    %567 = vector.load %arg12[%c0_269, %c0_270, %c0_271, %c0_272] : memref<1x16x16x128xf32, #tpu.memory_space<vmem>>, vector<1x16x16x128xf32>
    %568 = vector.shape_cast %567 : vector<1x16x16x128xf32> to vector<16x16x128xf32>
    %569 = vector.shape_cast %566 : vector<16x16x128xf32> to vector<1x16x16x128xf32>
    tpu.vector_store %arg12[%c0_269, %c0_270, %c0_271, %c0_272], %569 {strides = array<i32>} : memref<1x16x16x128xf32, #tpu.memory_space<vmem>>, vector<1x16x16x128xf32>,
    return
  }
  func.func @transform_0(%arg0: i32, %arg1: i32) -> (i32, i32, i32, i32) {
    %c0_i32 = arith.constant 0 : i32
    %c0_i32_0 = arith.constant 0 : i32
    %c0_i32_1 = arith.constant 0 : i32
    %c0_i32_2 = arith.constant 0 : i32
    return %arg0, %c0_i32, %c0_i32_0, %c0_i32_1 : i32, i32, i32, i32
  }
  func.func @transform_1(%arg0: i32, %arg1: i32) -> (i32, i32) {
    %c0_i32 = arith.constant 0 : i32
    %c0_i32_0 = arith.constant 0 : i32
    %c0_i32_1 = arith.constant 0 : i32
    return %c0_i32, %c0_i32_0 : i32, i32
  }
  func.func @transform_2(%arg0: i32, %arg1: i32) -> (i32, i32) {
    %c0_i32 = arith.constant 0 : i32
    %c0_i32_0 = arith.constant 0 : i32
    %c0_i32_1 = arith.constant 0 : i32
    return %c0_i32, %c0_i32_0 : i32, i32
  }
  func.func @transform_3(%arg0: i32, %arg1: i32) -> (i32, i32) {
    %c0_i32 = arith.constant 0 : i32
    %c0_i32_0 = arith.constant 0 : i32
    %c0_i32_1 = arith.constant 0 : i32
    return %c0_i32, %c0_i32_0 : i32, i32
  }
  func.func @transform_4(%arg0: i32, %arg1: i32) -> (i32, i32) {
    %c0_i32 = arith.constant 0 : i32
    %c0_i32_0 = arith.constant 0 : i32
    %c0_i32_1 = arith.constant 0 : i32
    return %c0_i32, %c0_i32_0 : i32, i32
  }
  func.func @transform_5(%arg0: i32, %arg1: i32) -> (i32, i32) {
    %c0_i32 = arith.constant 0 : i32
    %c0_i32_0 = arith.constant 0 : i32
    %c0_i32_1 = arith.constant 0 : i32
    return %c0_i32, %c0_i32_0 : i32, i32
  }
  func.func @transform_6(%arg0: i32, %arg1: i32) -> (i32, i32) {
    %c0_i32 = arith.constant 0 : i32
    %c0_i32_0 = arith.constant 0 : i32
    %c0_i32_1 = arith.constant 0 : i32
    return %c0_i32, %c0_i32_0 : i32, i32
  }
  func.func @transform_7(%arg0: i32, %arg1: i32) -> (i32, i32) {
    %c0_i32 = arith.constant 0 : i32
    %c0_i32_0 = arith.constant 0 : i32
    %c0_i32_1 = arith.constant 0 : i32
    return %c0_i32, %c0_i32_0 : i32, i32
  }
  func.func @transform_8(%arg0: i32, %arg1: i32) -> (i32, i32) {
    %c0_i32 = arith.constant 0 : i32
    %c0_i32_0 = arith.constant 0 : i32
    %c0_i32_1 = arith.constant 0 : i32
    return %c0_i32, %c0_i32_0 : i32, i32
  }
  func.func @transform_9(%arg0: i32, %arg1: i32) -> (i32, i32) {
    %c0_i32 = arith.constant 0 : i32
    %c0_i32_0 = arith.constant 0 : i32
    %c0_i32_1 = arith.constant 0 : i32
    return %c0_i32, %c0_i32_0 : i32, i32
  }
  func.func @transform_10(%arg0: i32, %arg1: i32) -> (i32, i32, i32, i32) {
    %c0_i32 = arith.constant 0 : i32
    %c0_i32_0 = arith.constant 0 : i32
    %c0_i32_1 = arith.constant 0 : i32
    return %arg0, %arg1, %c0_i32, %c0_i32_0 : i32, i32, i32, i32
  }
}

</mosaic_0001>

<llo_original>
// kernel: _convnext_block_impl.1
$region0: #{_convnext_block_impl.1}
  #allocation0 [shape = 'u32[]', space=smem, size = 0x4, offset = 0x4, fixed_abs, tag = 'smem constant byte address 0x4 - core index']
  #allocation1 [shape = 'u32[144,128]{1,0:T(1,128)}', space=vmem, size = 0x12000, scoped, tag = 'internal scratch']
  %s0 = inlined_call_operand.vmem [shape: f32[2,38,22,128], index: 0, kind: input, shape index: {}]
  %s1 = inlined_call_operand.vmem [shape: f32[49,128], index: 1, kind: input, shape index: {}]
  %s2 = inlined_call_operand.vmem [shape: f32[1,128], index: 2, kind: input, shape index: {}]
  %s3 = inlined_call_operand.vmem [shape: f32[1,128], index: 3, kind: input, shape index: {}]
  %s4 = inlined_call_operand.vmem [shape: f32[1,128], index: 4, kind: input, shape index: {}]
  %s5 = inlined_call_operand.vmem [shape: bf16[128,128], index: 5, kind: input, shape index: {}]
  %s6 = inlined_call_operand.vmem [shape: f32[1,128], index: 6, kind: input, shape index: {}]
  %s7 = inlined_call_operand.vmem [shape: bf16[128,128], index: 7, kind: input, shape index: {}]
  %s8 = inlined_call_operand.vmem [shape: f32[1,128], index: 8, kind: input, shape index: {}]
  %s9 = inlined_call_operand.vmem [shape: f32[1,128], index: 9, kind: input, shape index: {}]
  %s10 = inlined_call_operand.vmem [shape: f32[2,32,16,128], index: 10, kind: output, shape index: {}]
  %s11 = sld [smem:[#allocation0]]
  $region73: #{_convnext_block_impl.1} parent=0
    _
  %s13 = ssub.s32 1, %s11
  %s14 = scalar_select 0, %s13, %s11
  loop: start=0, step=1, limit=6
  $region2: #{_convnext_block_impl.1} parent=0 // loop_pre_header
    _
  $region3: #{_convnext_block_impl.1} parent=0 // loop_header
    %s16 = sphi 0, %s20
    %p17 = scmp.ge.s32.totalorder %s16, 6
    %s23 = sphi 0, %s35
    %s24 = sphi 0, %s31
    %s25 = sphi 0, %s23
    %s26 = sphi 0, %s24
    %s27 = sphi 0, %s25
    %s28 = sphi 0, %s26
    %s38 = sphi 0, %s40
    %s41 = sphi 0, %s38
    %s42 = sphi 0, %s41
    %s58 = sphi 0, %s42
    %s62 = sphi 0, %s62
    %s64 = sphi 0, %s62
    %s65 = sphi 0, %s64
    %s79 = sphi 0, %s65
    %s83 = sphi 0, %s83
    %s85 = sphi 0, %s83
    %s86 = sphi 0, %s85
    %s100 = sphi 0, %s86
    %s104 = sphi 0, %s104
    %s106 = sphi 0, %s104
    %s107 = sphi 0, %s106
    %s121 = sphi 0, %s107
    %s125 = sphi 0, %s125
    %s127 = sphi 0, %s125
    %s128 = sphi 0, %s127
    %s142 = sphi 0, %s128
    %s146 = sphi 0, %s146
    %s148 = sphi 0, %s146
    %s149 = sphi 0, %s148
    %s163 = sphi 0, %s149
    %s167 = sphi 0, %s167
    %s169 = sphi 0, %s167
    %s170 = sphi 0, %s169
    %s184 = sphi 0, %s170
    %s188 = sphi 0, %s188
    %s190 = sphi 0, %s188
    %s191 = sphi 0, %s190
    %s205 = sphi 0, %s191
    %s209 = sphi 0, %s209
    %s211 = sphi 0, %s209
    %s212 = sphi 0, %s211
    %s226 = sphi 0, %s212
    %s230 = sphi 0, %s230
    %s232 = sphi 0, %s230
    %s233 = sphi 0, %s232
    %s247 = sphi 0, %s233
    %s255 = sphi 0, %s257
    %s258 = sphi 0, %s255
    %s259 = sphi 0, %s258
    %s275 = sphi 0, %s259
  $region4: #{_convnext_block_impl.1} parent=0 // loop_header_branch
    %19 = sbr.rel (%p17) target = $region8
  $region5: #{_convnext_block_impl.1} parent=0 // loop_body
    %s21 = ssub.s32 %s16, 1
    %s22 = ssub.s32 %s16, 2
    %s29 = sadd.s32 1, %s24
    %p30 = scmp.ge.s32.totalorder %s29, 2
    %s31 = scalar_select %p30, 0, %s29
    %s32 = sadd.s32 1, %s23
    %s33 = scalar_select %p30, %s32, %s23
    %p34 = scmp.ge.s32.totalorder %s33, 2
    %s35 = scalar_select %p34, 0, %s33
    %s36 = ssub.s32 %s23, %s35
    %p37 = scmp.eq.s32.totalorder %s36, 0
    %s39 = sadd.s32 %s38, 1
    %s40 = scalar_select %p37, %s38, %s39
    %p43 = pneg %p37
    %p44 = scmp.eq.s32.totalorder %s16, 3
    %p45 = por %p43, %p44
    %p46 = scmp.ne.s32.totalorder %s38, %s41
    %p47 = scmp.eq.s32.totalorder %s16, 0
    %p48 = por %p46, %p47
    %p49 = scmp.ne.s32.totalorder %s38, %s41
    %p50 = scmp.eq.s32.totalorder %s21, 3
    %p51 = por %p49, %p50
    %p52 = scmp.ne.s32.totalorder %s41, %s42
    %p53 = scmp.eq.s32.totalorder %s21, 0
    %p54 = por %p52, %p53
    %p55 = scmp.ne.s32.totalorder %s41, %s42
    %p56 = scmp.eq.s32.totalorder %s22, 3
    %p57 = por %p55, %p56
    %p59 = scmp.ne.s32.totalorder %s42, %s58
    %p60 = scmp.eq.s32.totalorder %s22, 0
    %p61 = por %p59, %p60
    %s63 = sadd.s32 %s62, 1
    %p66 = scmp.eq.s32.totalorder %s16, 3
    %p67 = scmp.ne.s32.totalorder %s62, %s64
    %p68 = scmp.eq.s32.totalorder %s16, 0
    %p69 = por %p67, %p68
    %p70 = scmp.ne.s32.totalorder %s62, %s64
    %p71 = scmp.eq.s32.totalorder %s21, 3
    %p72 = por %p70, %p71
    %p73 = scmp.ne.s32.totalorder %s64, %s65
    %p74 = scmp.eq.s32.totalorder %s21, 0
    %p75 = por %p73, %p74
    %p76 = scmp.ne.s32.totalorder %s64, %s65
    %p77 = scmp.eq.s32.totalorder %s22, 3
    %p78 = por %p76, %p77
    %p80 = scmp.ne.s32.totalorder %s65, %s79
    %p81 = scmp.eq.s32.totalorder %s22, 0
    %p82 = por %p80, %p81
    %s84 = sadd.s32 %s83, 1
    %p87 = scmp.eq.s32.totalorder %s16, 3
    %p88 = scmp.ne.s32.totalorder %s83, %s85
    %p89 = scmp.eq.s32.totalorder %s16, 0
    %p90 = por %p88, %p89
    %p91 = scmp.ne.s32.totalorder %s83, %s85
    %p92 = scmp.eq.s32.totalorder %s21, 3
    %p93 = por %p91, %p92
    %p94 = scmp.ne.s32.totalorder %s85, %s86
    %p95 = scmp.eq.s32.totalorder %s21, 0
    %p96 = por %p94, %p95
    %p97 = scmp.ne.s32.totalorder %s85, %s86
    %p98 = scmp.eq.s32.totalorder %s22, 3
    %p99 = por %p97, %p98
    %p101 = scmp.ne.s32.totalorder %s86, %s100
    %p102 = scmp.eq.s32.totalorder %s22, 0
    %p103 = por %p101, %p102
    %s105 = sadd.s32 %s104, 1
    %p108 = scmp.eq.s32.totalorder %s16, 3
    %p109 = scmp.ne.s32.totalorder %s104, %s106
    %p110 = scmp.eq.s32.totalorder %s16, 0
    %p111 = por %p109, %p110
    %p112 = scmp.ne.s32.totalorder %s104, %s106
    %p113 = scmp.eq.s32.totalorder %s21, 3
    %p114 = por %p112, %p113
    %p115 = scmp.ne.s32.totalorder %s106, %s107
    %p116 = scmp.eq.s32.totalorder %s21, 0
    %p117 = por %p115, %p116
    %p118 = scmp.ne.s32.totalorder %s106, %s107
    %p119 = scmp.eq.s32.totalorder %s22, 3
    %p120 = por %p118, %p119
    %p122 = scmp.ne.s32.totalorder %s107, %s121
    %p123 = scmp.eq.s32.totalorder %s22, 0
    %p124 = por %p122, %p123
    %s126 = sadd.s32 %s125, 1
    %p129 = scmp.eq.s32.totalorder %s16, 3
    %p130 = scmp.ne.s32.totalorder %s125, %s127
    %p131 = scmp.eq.s32.totalorder %s16, 0
    %p132 = por %p130, %p131
    %p133 = scmp.ne.s32.totalorder %s125, %s127
    %p134 = scmp.eq.s32.totalorder %s21, 3
    %p135 = por %p133, %p134
    %p136 = scmp.ne.s32.totalorder %s127, %s128
    %p137 = scmp.eq.s32.totalorder %s21, 0
    %p138 = por %p136, %p137
    %p139 = scmp.ne.s32.totalorder %s127, %s128
    %p140 = scmp.eq.s32.totalorder %s22, 3
    %p141 = por %p139, %p140
    %p143 = scmp.ne.s32.totalorder %s128, %s142
    %p144 = scmp.eq.s32.totalorder %s22, 0
    %p145 = por %p143, %p144
    %s147 = sadd.s32 %s146, 1
    %p150 = scmp.eq.s32.totalorder %s16, 3
    %p151 = scmp.ne.s32.totalorder %s146, %s148
    %p152 = scmp.eq.s32.totalorder %s16, 0
    %p153 = por %p151, %p152
    %p154 = scmp.ne.s32.totalorder %s146, %s148
    %p155 = scmp.eq.s32.totalorder %s21, 3
    %p156 = por %p154, %p155
    %p157 = scmp.ne.s32.totalorder %s148, %s149
    %p158 = scmp.eq.s32.totalorder %s21, 0
    %p159 = por %p157, %p158
    %p160 = scmp.ne.s32.totalorder %s148, %s149
    %p161 = scmp.eq.s32.totalorder %s22, 3
    %p162 = por %p160, %p161
    %p164 = scmp.ne.s32.totalorder %s149, %s163
    %p165 = scmp.eq.s32.totalorder %s22, 0
    %p166 = por %p164, %p165
    %s168 = sadd.s32 %s167, 1
    %p171 = scmp.eq.s32.totalorder %s16, 3
    %p172 = scmp.ne.s32.totalorder %s167, %s169
    %p173 = scmp.eq.s32.totalorder %s16, 0
    %p174 = por %p172, %p173
    %p175 = scmp.ne.s32.totalorder %s167, %s169
    %p176 = scmp.eq.s32.totalorder %s21, 3
    %p177 = por %p175, %p176
    %p178 = scmp.ne.s32.totalorder %s169, %s170
    %p179 = scmp.eq.s32.totalorder %s21, 0
    %p180 = por %p178, %p179
    %p181 = scmp.ne.s32.totalorder %s169, %s170
    %p182 = scmp.eq.s32.totalorder %s22, 3
    %p183 = por %p181, %p182
    %p185 = scmp.ne.s32.totalorder %s170, %s184
    %p186 = scmp.eq.s32.totalorder %s22, 0
    %p187 = por %p185, %p186
    %s189 = sadd.s32 %s188, 1
    %p192 = scmp.eq.s32.totalorder %s16, 3
    %p193 = scmp.ne.s32.totalorder %s188, %s190
    %p194 = scmp.eq.s32.totalorder %s16, 0
    %p195 = por %p193, %p194
    %p196 = scmp.ne.s32.totalorder %s188, %s190
    %p197 = scmp.eq.s32.totalorder %s21, 3
    %p198 = por %p196, %p197
    %p199 = scmp.ne.s32.totalorder %s190, %s191
    %p200 = scmp.eq.s32.totalorder %s21, 0
    %p201 = por %p199, %p200
    %p202 = scmp.ne.s32.totalorder %s190, %s191
    %p203 = scmp.eq.s32.totalorder %s22, 3
    %p204 = por %p202, %p203
    %p206 = scmp.ne.s32.totalorder %s191, %s205
    %p207 = scmp.eq.s32.totalorder %s22, 0
    %p208 = por %p206, %p207
    %s210 = sadd.s32 %s209, 1
    %p213 = scmp.eq.s32.totalorder %s16, 3
    %p214 = scmp.ne.s32.totalorder %s209, %s211
    %p215 = scmp.eq.s32.totalorder %s16, 0
    %p216 = por %p214, %p215
    %p217 = scmp.ne.s32.totalorder %s209, %s211
    %p218 = scmp.eq.s32.totalorder %s21, 3
    %p219 = por %p217, %p218
    %p220 = scmp.ne.s32.totalorder %s211, %s212
    %p221 = scmp.eq.s32.totalorder %s21, 0
    %p222 = por %p220, %p221
    %p223 = scmp.ne.s32.totalorder %s211, %s212
    %p224 = scmp.eq.s32.totalorder %s22, 3
    %p225 = por %p223, %p224
    %p227 = scmp.ne.s32.totalorder %s212, %s226
    %p228 = scmp.eq.s32.totalorder %s22, 0
    %p229 = por %p227, %p228
    %s231 = sadd.s32 %s230, 1
    %p234 = scmp.eq.s32.totalorder %s16, 3
    %p235 = scmp.ne.s32.totalorder %s230, %s232
    %p236 = scmp.eq.s32.totalorder %s16, 0
    %p237 = por %p235, %p236
    %p238 = scmp.ne.s32.totalorder %s230, %s232
    %p239 = scmp.eq.s32.totalorder %s21, 3
    %p240 = por %p238, %p239
    %p241 = scmp.ne.s32.totalorder %s232, %s233
    %p242 = scmp.eq.s32.totalorder %s21, 0
    %p243 = por %p241, %p242
    %p244 = scmp.ne.s32.totalorder %s232, %s233
    %p245 = scmp.eq.s32.totalorder %s22, 3
    %p246 = por %p244, %p245
    %p248 = scmp.ne.s32.totalorder %s233, %s247
    %p249 = scmp.eq.s32.totalorder %s22, 0
    %p250 = por %p248, %p249
    %s251 = ssub.s32 %s23, %s35
    %s252 = ssub.s32 %s24, %s31
    %s253 = sor.u32 %s251, %s252
    %p254 = scmp.eq.s32.totalorder %s253, 0
    %s256 = sadd.s32 %s255, 1
    %s257 = scalar_select %p254, %s255, %s256
    %p260 = pneg %p254
    %p261 = scmp.eq.s32.totalorder %s16, 3
    %p262 = por %p260, %p261
    %p263 = scmp.ne.s32.totalorder %s255, %s258
    %p264 = scmp.eq.s32.totalorder %s16, 0
    %p265 = por %p263, %p264
    %p266 = scmp.ne.s32.totalorder %s255, %s258
    %p267 = scmp.eq.s32.totalorder %s21, 3
    %p268 = por %p266, %p267
    %p269 = scmp.ne.s32.totalorder %s258, %s259
    %p270 = scmp.eq.s32.totalorder %s21, 0
    %p271 = por %p269, %p270
    %p272 = scmp.ne.s32.totalorder %s258, %s259
    %p273 = scmp.eq.s32.totalorder %s22, 3
    %p274 = por %p272, %p273
    %p276 = scmp.ne.s32.totalorder %s259, %s275
    %p277 = scmp.eq.s32.totalorder %s22, 0
    %p278 = por %p276, %p277
    %p279 = scmp.le.s32.totalorder 1, %s16
    %p280 = scmp.lt.s32.totalorder %s16, 5
    %p281 = pnand %p279, %p280
    %p282 = pneg %p281
    // Predicated region
    $region9: #{_convnext_block_impl.1} parent=5 // pred_check
      _
    $region10: #{_convnext_block_impl.1} parent=5 // pred_check_branch
      %284 = sbr.rel (%p281) target = $region12
    $region11: #{_convnext_block_impl.1} parent=5 // pred_region
      %s285 = ssub.s32 %s16, 1
      // Predicated region
      $region13: #{_convnext_block_impl.1} parent=11 // pred_check
        %p286 = pneg %p75
      $region14: #{_convnext_block_impl.1} parent=11 // pred_check_branch
        %288 = sbr.rel (%p286) target = $region16
      $region15: #{_convnext_block_impl.1} parent=11 // pred_region
        _
      $region16: #{_convnext_block_impl.1} parent=11 // pred_fallthru
        _
      // Predicated region
      $region17: #{_convnext_block_impl.1} parent=11 // pred_check
        %p289 = pneg %p96
      $region18: #{_convnext_block_impl.1} parent=11 // pred_check_branch
        %291 = sbr.rel (%p289) target = $region20
      $region19: #{_convnext_block_impl.1} parent=11 // pred_region
        _
      $region20: #{_convnext_block_impl.1} parent=11 // pred_fallthru
        _
      // Predicated region
      $region21: #{_convnext_block_impl.1} parent=11 // pred_check
        %p292 = pneg %p117
      $region22: #{_convnext_block_impl.1} parent=11 // pred_check_branch
        %294 = sbr.rel (%p292) target = $region24
      $region23: #{_convnext_block_impl.1} parent=11 // pred_region
        _
      $region24: #{_convnext_block_impl.1} parent=11 // pred_fallthru
        _
      // Predicated region
      $region25: #{_convnext_block_impl.1} parent=11 // pred_check
        %p295 = pneg %p138
      $region26: #{_convnext_block_impl.1} parent=11 // pred_check_branch
        %297 = sbr.rel (%p295) target = $region28
      $region27: #{_convnext_block_impl.1} parent=11 // pred_region
        _
      $region28: #{_convnext_block_impl.1} parent=11 // pred_fallthru
        _
      // Predicated region
      $region29: #{_convnext_block_impl.1} parent=11 // pred_check
        %p298 = pneg %p159
      $region30: #{_convnext_block_impl.1} parent=11 // pred_check_branch
        %300 = sbr.rel (%p298) target = $region32
      $region31: #{_convnext_block_impl.1} parent=11 // pred_region
        _
      $region32: #{_convnext_block_impl.1} parent=11 // pred_fallthru
        _
      // Predicated region
      $region33: #{_convnext_block_impl.1} parent=11 // pred_check
        %p301 = pneg %p180
      $region34: #{_convnext_block_impl.1} parent=11 // pred_check_branch
        %303 = sbr.rel (%p301) target = $region36
      $region35: #{_convnext_block_impl.1} parent=11 // pred_region
        _
      $region36: #{_convnext_block_impl.1} parent=11 // pred_fallthru
        _
      // Predicated region
      $region37: #{_convnext_block_impl.1} parent=11 // pred_check
        %p304 = pneg %p201
      $region38: #{_convnext_block_impl.1} parent=11 // pred_check_branch
        %306 = sbr.rel (%p304) target = $region40
      $region39: #{_convnext_block_impl.1} parent=11 // pred_region
        _
      $region40: #{_convnext_block_impl.1} parent=11 // pred_fallthru
        _
      // Predicated region
      $region41: #{_convnext_block_impl.1} parent=11 // pred_check
        %p307 = pneg %p222
      $region42: #{_convnext_block_impl.1} parent=11 // pred_check_branch
        %309 = sbr.rel (%p307) target = $region44
      $region43: #{_convnext_block_impl.1} parent=11 // pred_region
        _
      $region44: #{_convnext_block_impl.1} parent=11 // pred_fallthru
        _
      // Predicated region
      $region45: #{_convnext_block_impl.1} parent=11 // pred_check
        %p310 = pneg %p243
      $region46: #{_convnext_block_impl.1} parent=11 // pred_check_branch
        %312 = sbr.rel (%p310) target = $region48
      $region47: #{_convnext_block_impl.1} parent=11 // pred_region
        _
      $region48: #{_convnext_block_impl.1} parent=11 // pred_fallthru
        _
    $region12: #{_convnext_block_impl.1} parent=5 // pred_fallthru
      _
    %p313 = scmp.lt.s32.totalorder %s16, 4
    // Predicated region
    $region49: #{_convnext_block_impl.1} parent=5 // pred_check
      %p314 = pneg %p313
    $region50: #{_convnext_block_impl.1} parent=5 // pred_check_branch
      %316 = sbr.rel (%p314) target = $region52
    $region51: #{_convnext_block_impl.1} parent=5 // pred_region
      // Predicated region
      $region53: #{_convnext_block_impl.1} parent=51 // pred_check
        %p317 = pneg %p48
      $region54: #{_convnext_block_impl.1} parent=51 // pred_check_branch
        %319 = sbr.rel (%p317) target = $region56
      $region55: #{_convnext_block_impl.1} parent=51 // pred_region
        %p320 = scmp.lt.s32.totalorder %s23, 1
        %s321 = scalar_select %p320, %s23, 1
        %s322 = smul.addr %s321, 114
        %s323 = smul.addr %s322, 8
        %s324 = scalar_lea.vmem %s0, %s323
      $region56: #{_convnext_block_impl.1} parent=51 // pred_fallthru
        _
    $region52: #{_convnext_block_impl.1} parent=5 // pred_fallthru
      _
    %p325 = scmp.le.s32.totalorder 1, %s16
    %p326 = scmp.lt.s32.totalorder %s16, 5
    %p327 = pnand %p325, %p326
    %p328 = pneg %p327
    // Predicated region
    $region57: #{_convnext_block_impl.1} parent=5 // pred_check
      _
    $region58: #{_convnext_block_impl.1} parent=5 // pred_check_branch
      %330 = sbr.rel (%p327) target = $region60
    $region59: #{_convnext_block_impl.1} parent=5 // pred_region
      %s331 = ssub.s32 %s16, 1
      %p332 = scmp.lt.s32.totalorder %s25, 1
      %s333 = scalar_select %p332, %s25, 1
      %s334 = smul.addr %s333, 114
      %s335 = smul.addr %s334, 8
      %s336 = scalar_lea.vmem %s0, %s335
      %p337 = pneg %p54
      %p338 = pneg %p51
      %p339 = pneg %p75
      %p340 = pneg %p72
      %p341 = pneg %p96
      %p342 = pneg %p93
      %p343 = pneg %p117
      %p344 = pneg %p114
      %p345 = pneg %p138
      %p346 = pneg %p135
      %p347 = pneg %p159
      %p348 = pneg %p156
      %p349 = pneg %p180
      %p350 = pneg %p177
      %p351 = pneg %p201
      %p352 = pneg %p198
      %p353 = pneg %p222
      %p354 = pneg %p219
      %p355 = pneg %p243
      %p356 = pneg %p240
      %p357 = pneg %p271
      %p358 = pneg %p268
      %s359 = smul.u32 16, %s26
      %p360 = scmp.lt.s32.totalorder %s25, 1
      %s361 = scalar_select %p360, %s25, 1
      %p362 = scmp.lt.s32.totalorder %s359, 31
      %s363 = scalar_select %p362, %s359, 31
      %s364 = smul.addr %s363, 2
      %s365 = smul.addr %s361, 64
      %s366 = sadd.s32 %s364, %s365
      %s367 = smul.addr %s366, 8
      %s368 = scalar_lea.vmem %s10, %s367
      %p369 = scmp.lt.s32.totalorder %s25, 1
      %s370 = scalar_select %p369, %s25, 1
      %s371 = smul.addr %s370, 114
      %s372 = smul.addr %s371, 8
      %s373 = scalar_lea.vmem %s0, %s372
      %s374 = smul.u32 16, %s26
      %p375 = scmp.lt.s32.totalorder %s25, 1
      %s376 = scalar_select %p375, %s25, 1
      %p377 = scmp.lt.s32.totalorder %s374, 31
      %s378 = scalar_select %p377, %s374, 31
      %s379 = smul.addr %s378, 2
      %s380 = smul.addr %s376, 64
      %s381 = sadd.s32 %s379, %s380
      %s382 = smul.addr %s381, 8
      %s383 = scalar_lea.vmem %s10, %s382
      %s384 = smul.u32 16, %s26
      %s386 = smul.u32 %s26, 16
      %s387 = smul.u32 %s386, 24
      %s388 = scalar_lea.vmem %s373, %s387
      %v389 = vld [vmem:[%s388] sm:$0xff]
      %v390 = vld [vmem:[%s388 + $0x8] sm:$0xff]
      %v391 = vld [vmem:[%s388 + $0x18] sm:$0xff]
      %v392 = vld [vmem:[%s388 + $0x20] sm:$0xff]
      %v393 = vld [vmem:[%s388 + $0x30] sm:$0xff]
      %v394 = vld [vmem:[%s388 + $0x38] sm:$0xff]
      %v395 = vld [vmem:[%s388 + $0x48] sm:$0xff]
      %v396 = vld [vmem:[%s388 + $0x50] sm:$0xff]
      %v397 = vld [vmem:[%s388 + $0x60] sm:$0xff]
      %v398 = vld [vmem:[%s388 + $0x68] sm:$0xff]
      %v399 = vld [vmem:[%s388 + $0x78] sm:$0xff]
      %v400 = vld [vmem:[%s388 + $0x80] sm:$0xff]
      %v401 = vld [vmem:[%s388 + $0x90] sm:$0xff]
      %v402 = vld [vmem:[%s388 + $0x98] sm:$0xff]
      %v403 = vld [vmem:[%s388 + $0xa8] sm:$0xff]
      %v404 = vld [vmem:[%s388 + $0xb0] sm:$0xff]
      %v405 = vld [vmem:[%s388 + $0xc0] sm:$0xff]
      %v406 = vld [vmem:[%s388 + $0xc8] sm:$0xff]
      %v407 = vld [vmem:[%s388 + $0xd8] sm:$0xff]
      %v408 = vld [vmem:[%s388 + $0xe0] sm:$0xff]
      %v409 = vld [vmem:[%s388 + $0xf0] sm:$0xff]
      %v410 = vld [vmem:[%s388 + $0xf8] sm:$0xff]
      %v411 = vld [vmem:[%s388 + $0x108] sm:$0xff]
      %v412 = vld [vmem:[%s388 + $0x110] sm:$0xff]
      %v413 = vld [vmem:[%s388 + $0x120] sm:$0xff]
      %v414 = vld [vmem:[%s388 + $0x128] sm:$0xff]
      %v415 = vld [vmem:[%s388 + $0x138] sm:$0xff]
      %v416 = vld [vmem:[%s388 + $0x140] sm:$0xff]
      %v417 = vld [vmem:[%s388 + $0x150] sm:$0xff]
      %v418 = vld [vmem:[%s388 + $0x158] sm:$0xff]
      %v419 = vld [vmem:[%s388 + $0x168] sm:$0xff]
      %v420 = vld [vmem:[%s388 + $0x170] sm:$0xff]
      %v421 = vld [vmem:[%s1] sm:$0x1]
      %v422 = vlaneseq
      %v423 = vshrl.u32 %v422, 7
      %v424 = vsub.s32 0, %v423
      %v425 = vrot.slane %v421, %v424
      %v426 = vmul.f32 %v389, %v425
      %v427 = vmul.f32 %v390, %v425
      %v428 = vmul.f32 %v391, %v425
      %v429 = vmul.f32 %v392, %v425
      %v430 = vmul.f32 %v393, %v425
      %v431 = vmul.f32 %v394, %v425
      %v432 = vmul.f32 %v395, %v425
      %v433 = vmul.f32 %v396, %v425
      %v434 = vmul.f32 %v397, %v425
      %v435 = vmul.f32 %v398, %v425
      %v436 = vmul.f32 %v399, %v425
      %v437 = vmul.f32 %v400, %v425
      %v438 = vmul.f32 %v401, %v425
      %v439 = vmul.f32 %v402, %v425
      %v440 = vmul.f32 %v403, %v425
      %v441 = vmul.f32 %v404, %v425
      %v442 = vmul.f32 %v405, %v425
      %v443 = vmul.f32 %v406, %v425
      %v444 = vmul.f32 %v407, %v425
      %v445 = vmul.f32 %v408, %v425
      %v446 = vmul.f32 %v409, %v425
      %v447 = vmul.f32 %v410, %v425
      %v448 = vmul.f32 %v411, %v425
      %v449 = vmul.f32 %v412, %v425
      %v450 = vmul.f32 %v413, %v425
      %v451 = vmul.f32 %v414, %v425
      %v452 = vmul.f32 %v415, %v425
      %v453 = vmul.f32 %v416, %v425
      %v454 = vmul.f32 %v417, %v425
      %v455 = vmul.f32 %v418, %v425
      %v456 = vmul.f32 %v419, %v425
      %v457 = vmul.f32 %v420, %v425
      %v458 = vld [vmem:[%s388 + $0x1] sm:$0xff]
      %v459 = vld [vmem:[%s388 + $0x9] sm:$0xff]
      %v460 = vld [vmem:[%s388 + $0x19] sm:$0xff]
      %v461 = vld [vmem:[%s388 + $0x21] sm:$0xff]
      %v462 = vld [vmem:[%s388 + $0x31] sm:$0xff]
      %v463 = vld [vmem:[%s388 + $0x39] sm:$0xff]
      %v464 = vld [vmem:[%s388 + $0x49] sm:$0xff]
      %v465 = vld [vmem:[%s388 + $0x51] sm:$0xff]
      %v466 = vld [vmem:[%s388 + $0x61] sm:$0xff]
      %v467 = vld [vmem:[%s388 + $0x69] sm:$0xff]
      %v468 = vld [vmem:[%s388 + $0x79] sm:$0xff]
      %v469 = vld [vmem:[%s388 + $0x81] sm:$0xff]
      %v470 = vld [vmem:[%s388 + $0x91] sm:$0xff]
      %v471 = vld [vmem:[%s388 + $0x99] sm:$0xff]
      %v472 = vld [vmem:[%s388 + $0xa9] sm:$0xff]
      %v473 = vld [vmem:[%s388 + $0xb1] sm:$0xff]
      %v474 = vld [vmem:[%s388 + $0xc1] sm:$0xff]
      %v475 = vld [vmem:[%s388 + $0xc9] sm:$0xff]
      %v476 = vld [vmem:[%s388 + $0xd9] sm:$0xff]
      %v477 = vld [vmem:[%s388 + $0xe1] sm:$0xff]
      %v478 = vld [vmem:[%s388 + $0xf1] sm:$0xff]
      %v479 = vld [vmem:[%s388 + $0xf9] sm:$0xff]
      %v480 = vld [vmem:[%s388 + $0x109] sm:$0xff]
      %v481 = vld [vmem:[%s388 + $0x111] sm:$0xff]
      %v482 = vld [vmem:[%s388 + $0x121] sm:$0xff]
      %v483 = vld [vmem:[%s388 + $0x129] sm:$0xff]
      %v484 = vld [vmem:[%s388 + $0x139] sm:$0xff]
      %v485 = vld [vmem:[%s388 + $0x141] sm:$0xff]
      %v486 = vld [vmem:[%s388 + $0x151] sm:$0xff]
      %v487 = vld [vmem:[%s388 + $0x159] sm:$0xff]
      %v488 = vld [vmem:[%s388 + $0x169] sm:$0xff]
      %v489 = vld [vmem:[%s388 + $0x171] sm:$0xff]
      %v490 = vld [vmem:[%s1 + $0x1] sm:$0x1]
      %v491 = vlaneseq
      %v492 = vshrl.u32 %v491, 7
      %v493 = vsub.s32 0, %v492
      %v494 = vrot.slane %v490, %v493
      %v495 = vmul.f32 %v458, %v494
      %v496 = vmul.f32 %v459, %v494
      %v497 = vmul.f32 %v460, %v494
      %v498 = vmul.f32 %v461, %v494
      %v499 = vmul.f32 %v462, %v494
      %v500 = vmul.f32 %v463, %v494
      %v501 = vmul.f32 %v464, %v494
      %v502 = vmul.f32 %v465, %v494
      %v503 = vmul.f32 %v466, %v494
      %v504 = vmul.f32 %v467, %v494
      %v505 = vmul.f32 %v468, %v494
      %v506 = vmul.f32 %v469, %v494
      %v507 = vmul.f32 %v470, %v494
      %v508 = vmul.f32 %v471, %v494
      %v509 = vmul.f32 %v472, %v494
      %v510 = vmul.f32 %v473, %v494
      %v511 = vmul.f32 %v474, %v494
      %v512 = vmul.f32 %v475, %v494
      %v513 = vmul.f32 %v476, %v494
      %v514 = vmul.f32 %v477, %v494
      %v515 = vmul.f32 %v478, %v494
      %v516 = vmul.f32 %v479, %v494
      %v517 = vmul.f32 %v480, %v494
      %v518 = vmul.f32 %v481, %v494
      %v519 = vmul.f32 %v482, %v494
      %v520 = vmul.f32 %v483, %v494
      %v521 = vmul.f32 %v484, %v494
      %v522 = vmul.f32 %v485, %v494
      %v523 = vmul.f32 %v486, %v494
      %v524 = vmul.f32 %v487, %v494
      %v525 = vmul.f32 %v488, %v494
      %v526 = vmul.f32 %v489, %v494
      %v527 = vld [vmem:[%s388 + $0x2] sm:$0xff]
      %v528 = vld [vmem:[%s388 + $0xa] sm:$0xff]
      %v529 = vld [vmem:[%s388 + $0x1a] sm:$0xff]
      %v530 = vld [vmem:[%s388 + $0x22] sm:$0xff]
      %v531 = vld [vmem:[%s388 + $0x32] sm:$0xff]
      %v532 = vld [vmem:[%s388 + $0x3a] sm:$0xff]
      %v533 = vld [vmem:[%s388 + $0x4a] sm:$0xff]
      %v534 = vld [vmem:[%s388 + $0x52] sm:$0xff]
      %v535 = vld [vmem:[%s388 + $0x62] sm:$0xff]
      %v536 = vld [vmem:[%s388 + $0x6a] sm:$0xff]
      %v537 = vld [vmem:[%s388 + $0x7a] sm:$0xff]
      %v538 = vld [vmem:[%s388 + $0x82] sm:$0xff]
      %v539 = vld [vmem:[%s388 + $0x92] sm:$0xff]
      %v540 = vld [vmem:[%s388 + $0x9a] sm:$0xff]
      %v541 = vld [vmem:[%s388 + $0xaa] sm:$0xff]
      %v542 = vld [vmem:[%s388 + $0xb2] sm:$0xff]
      %v543 = vld [vmem:[%s388 + $0xc2] sm:$0xff]
      %v544 = vld [vmem:[%s388 + $0xca] sm:$0xff]
      %v545 = vld [vmem:[%s388 + $0xda] sm:$0xff]
      %v546 = vld [vmem:[%s388 + $0xe2] sm:$0xff]
      %v547 = vld [vmem:[%s388 + $0xf2] sm:$0xff]
      %v548 = vld [vmem:[%s388 + $0xfa] sm:$0xff]
      %v549 = vld [vmem:[%s388 + $0x10a] sm:$0xff]
      %v550 = vld [vmem:[%s388 + $0x112] sm:$0xff]
      %v551 = vld [vmem:[%s388 + $0x122] sm:$0xff]
      %v552 = vld [vmem:[%s388 + $0x12a] sm:$0xff]
      %v553 = vld [vmem:[%s388 + $0x13a] sm:$0xff]
      %v554 = vld [vmem:[%s388 + $0x142] sm:$0xff]
      %v555 = vld [vmem:[%s388 + $0x152] sm:$0xff]
      %v556 = vld [vmem:[%s388 + $0x15a] sm:$0xff]
      %v557 = vld [vmem:[%s388 + $0x16a] sm:$0xff]
      %v558 = vld [vmem:[%s388 + $0x172] sm:$0xff]
      %v559 = vld [vmem:[%s1 + $0x2] sm:$0x1]
      %v560 = vlaneseq
      %v561 = vshrl.u32 %v560, 7
      %v562 = vsub.s32 0, %v561
      %v563 = vrot.slane %v559, %v562
      %v564 = vmul.f32 %v527, %v563
      %v565 = vmul.f32 %v528, %v563
      %v566 = vmul.f32 %v529, %v563
      %v567 = vmul.f32 %v530, %v563
      %v568 = vmul.f32 %v531, %v563
      %v569 = vmul.f32 %v532, %v563
      %v570 = vmul.f32 %v533, %v563
      %v571 = vmul.f32 %v534, %v563
      %v572 = vmul.f32 %v535, %v563
      %v573 = vmul.f32 %v536, %v563
      %v574 = vmul.f32 %v537, %v563
      %v575 = vmul.f32 %v538, %v563
      %v576 = vmul.f32 %v539, %v563
      %v577 = vmul.f32 %v540, %v563
      %v578 = vmul.f32 %v541, %v563
      %v579 = vmul.f32 %v542, %v563
      %v580 = vmul.f32 %v543, %v563
      %v581 = vmul.f32 %v544, %v563
      %v582 = vmul.f32 %v545, %v563
      %v583 = vmul.f32 %v546, %v563
      %v584 = vmul.f32 %v547, %v563
      %v585 = vmul.f32 %v548, %v563
      %v586 = vmul.f32 %v549, %v563
      %v587 = vmul.f32 %v550, %v563
      %v588 = vmul.f32 %v551, %v563
      %v589 = vmul.f32 %v552, %v563
      %v590 = vmul.f32 %v553, %v563
      %v591 = vmul.f32 %v554, %v563
      %v592 = vmul.f32 %v555, %v563
      %v593 = vmul.f32 %v556, %v563
      %v594 = vmul.f32 %v557, %v563
      %v595 = vmul.f32 %v558, %v563
      %v596 = vadd.f32 %v426, %v564
      %v597 = vadd.f32 %v427, %v565
      %v598 = vadd.f32 %v428, %v566
      %v599 = vadd.f32 %v429, %v567
      %v600 = vadd.f32 %v430, %v568
      %v601 = vadd.f32 %v431, %v569
      %v602 = vadd.f32 %v432, %v570
      %v603 = vadd.f32 %v433, %v571
      %v604 = vadd.f32 %v434, %v572
      %v605 = vadd.f32 %v435, %v573
      %v606 = vadd.f32 %v436, %v574
      %v607 = vadd.f32 %v437, %v575
      %v608 = vadd.f32 %v438, %v576
      %v609 = vadd.f32 %v439, %v577
      %v610 = vadd.f32 %v440, %v578
      %v611 = vadd.f32 %v441, %v579
      %v612 = vadd.f32 %v442, %v580
      %v613 = vadd.f32 %v443, %v581
      %v614 = vadd.f32 %v444, %v582
      %v615 = vadd.f32 %v445, %v583
      %v616 = vadd.f32 %v446, %v584
      %v617 = vadd.f32 %v447, %v585
      %v618 = vadd.f32 %v448, %v586
      %v619 = vadd.f32 %v449, %v587
      %v620 = vadd.f32 %v450, %v588
      %v621 = vadd.f32 %v451, %v589
      %v622 = vadd.f32 %v452, %v590
      %v623 = vadd.f32 %v453, %v591
      %v624 = vadd.f32 %v454, %v592
      %v625 = vadd.f32 %v455, %v593
      %v626 = vadd.f32 %v456, %v594
      %v627 = vadd.f32 %v457, %v595
      %v628 = vld [vmem:[%s388 + $0x3] sm:$0xff]
      %v629 = vld [vmem:[%s388 + $0xb] sm:$0xff]
      %v630 = vld [vmem:[%s388 + $0x1b] sm:$0xff]
      %v631 = vld [vmem:[%s388 + $0x23] sm:$0xff]
      %v632 = vld [vmem:[%s388 + $0x33] sm:$0xff]
      %v633 = vld [vmem:[%s388 + $0x3b] sm:$0xff]
      %v634 = vld [vmem:[%s388 + $0x4b] sm:$0xff]
      %v635 = vld [vmem:[%s388 + $0x53] sm:$0xff]
      %v636 = vld [vmem:[%s388 + $0x63] sm:$0xff]
      %v637 = vld [vmem:[%s388 + $0x6b] sm:$0xff]
      %v638 = vld [vmem:[%s388 + $0x7b] sm:$0xff]
      %v639 = vld [vmem:[%s388 + $0x83] sm:$0xff]
      %v640 = vld [vmem:[%s388 + $0x93] sm:$0xff]
      %v641 = vld [vmem:[%s388 + $0x9b] sm:$0xff]
      %v642 = vld [vmem:[%s388 + $0xab] sm:$0xff]
      %v643 = vld [vmem:[%s388 + $0xb3] sm:$0xff]
      %v644 = vld [vmem:[%s388 + $0xc3] sm:$0xff]
      %v645 = vld [vmem:[%s388 + $0xcb] sm:$0xff]
      %v646 = vld [vmem:[%s388 + $0xdb] sm:$0xff]
      %v647 = vld [vmem:[%s388 + $0xe3] sm:$0xff]
      %v648 = vld [vmem:[%s388 + $0xf3] sm:$0xff]
      %v649 = vld [vmem:[%s388 + $0xfb] sm:$0xff]
      %v650 = vld [vmem:[%s388 + $0x10b] sm:$0xff]
      %v651 = vld [vmem:[%s388 + $0x113] sm:$0xff]
      %v652 = vld [vmem:[%s388 + $0x123] sm:$0xff]
      %v653 = vld [vmem:[%s388 + $0x12b] sm:$0xff]
      %v654 = vld [vmem:[%s388 + $0x13b] sm:$0xff]
      %v655 = vld [vmem:[%s388 + $0x143] sm:$0xff]
      %v656 = vld [vmem:[%s388 + $0x153] sm:$0xff]
      %v657 = vld [vmem:[%s388 + $0x15b] sm:$0xff]
      %v658 = vld [vmem:[%s388 + $0x16b] sm:$0xff]
      %v659 = vld [vmem:[%s388 + $0x173] sm:$0xff]
      %v660 = vld [vmem:[%s1 + $0x3] sm:$0x1]
      %v661 = vlaneseq
      %v662 = vshrl.u32 %v661, 7
      %v663 = vsub.s32 0, %v662
      %v664 = vrot.slane %v660, %v663
      %v665 = vmul.f32 %v628, %v664
      %v666 = vmul.f32 %v629, %v664
      %v667 = vmul.f32 %v630, %v664
      %v668 = vmul.f32 %v631, %v664
      %v669 = vmul.f32 %v632, %v664
      %v670 = vmul.f32 %v633, %v664
      %v671 = vmul.f32 %v634, %v664
      %v672 = vmul.f32 %v635, %v664
      %v673 = vmul.f32 %v636, %v664
      %v674 = vmul.f32 %v637, %v664
      %v675 = vmul.f32 %v638, %v664
      %v676 = vmul.f32 %v639, %v664
      %v677 = vmul.f32 %v640, %v664
      %v678 = vmul.f32 %v641, %v664
      %v679 = vmul.f32 %v642, %v664
      %v680 = vmul.f32 %v643, %v664
      %v681 = vmul.f32 %v644, %v664
      %v682 = vmul.f32 %v645, %v664
      %v683 = vmul.f32 %v646, %v664
      %v684 = vmul.f32 %v647, %v664
      %v685 = vmul.f32 %v648, %v664
      %v686 = vmul.f32 %v649, %v664
      %v687 = vmul.f32 %v650, %v664
      %v688 = vmul.f32 %v651, %v664
      %v689 = vmul.f32 %v652, %v664
      %v690 = vmul.f32 %v653, %v664
      %v691 = vmul.f32 %v654, %v664
      %v692 = vmul.f32 %v655, %v664
      %v693 = vmul.f32 %v656, %v664
      %v694 = vmul.f32 %v657, %v664
      %v695 = vmul.f32 %v658, %v664
      %v696 = vmul.f32 %v659, %v664
      %v697 = vadd.f32 %v495, %v665
      %v698 = vadd.f32 %v496, %v666
      %v699 = vadd.f32 %v497, %v667
      %v700 = vadd.f32 %v498, %v668
      %v701 = vadd.f32 %v499, %v669
      %v702 = vadd.f32 %v500, %v670
      %v703 = vadd.f32 %v501, %v671
      %v704 = vadd.f32 %v502, %v672
      %v705 = vadd.f32 %v503, %v673
      %v706 = vadd.f32 %v504, %v674
      %v707 = vadd.f32 %v505, %v675
      %v708 = vadd.f32 %v506, %v676
      %v709 = vadd.f32 %v507, %v677
      %v710 = vadd.f32 %v508, %v678
      %v711 = vadd.f32 %v509, %v679
      %v712 = vadd.f32 %v510, %v680
      %v713 = vadd.f32 %v511, %v681
      %v714 = vadd.f32 %v512, %v682
      %v715 = vadd.f32 %v513, %v683
      %v716 = vadd.f32 %v514, %v684
      %v717 = vadd.f32 %v515, %v685
      %v718 = vadd.f32 %v516, %v686
      %v719 = vadd.f32 %v517, %v687
      %v720 = vadd.f32 %v518, %v688
      %v721 = vadd.f32 %v519, %v689
      %v722 = vadd.f32 %v520, %v690
      %v723 = vadd.f32 %v521, %v691
      %v724 = vadd.f32 %v522, %v692
      %v725 = vadd.f32 %v523, %v693
      %v726 = vadd.f32 %v524, %v694
      %v727 = vadd.f32 %v525, %v695
      %v728 = vadd.f32 %v526, %v696
      %v729 = vld [vmem:[%s388 + $0x4] sm:$0xff]
      %v730 = vld [vmem:[%s388 + $0xc] sm:$0xff]
      %v731 = vld [vmem:[%s388 + $0x1c] sm:$0xff]
      %v732 = vld [vmem:[%s388 + $0x24] sm:$0xff]
      %v733 = vld [vmem:[%s388 + $0x34] sm:$0xff]
      %v734 = vld [vmem:[%s388 + $0x3c] sm:$0xff]
      %v735 = vld [vmem:[%s388 + $0x4c] sm:$0xff]
      %v736 = vld [vmem:[%s388 + $0x54] sm:$0xff]
      %v737 = vld [vmem:[%s388 + $0x64] sm:$0xff]
      %v738 = vld [vmem:[%s388 + $0x6c] sm:$0xff]
      %v739 = vld [vmem:[%s388 + $0x7c] sm:$0xff]
      %v740 = vld [vmem:[%s388 + $0x84] sm:$0xff]
      %v741 = vld [vmem:[%s388 + $0x94] sm:$0xff]
      %v742 = vld [vmem:[%s388 + $0x9c] sm:$0xff]
      %v743 = vld [vmem:[%s388 + $0xac] sm:$0xff]
      %v744 = vld [vmem:[%s388 + $0xb4] sm:$0xff]
      %v745 = vld [vmem:[%s388 + $0xc4] sm:$0xff]
      %v746 = vld [vmem:[%s388 + $0xcc] sm:$0xff]
      %v747 = vld [vmem:[%s388 + $0xdc] sm:$0xff]
      %v748 = vld [vmem:[%s388 + $0xe4] sm:$0xff]
      %v749 = vld [vmem:[%s388 + $0xf4] sm:$0xff]
      %v750 = vld [vmem:[%s388 + $0xfc] sm:$0xff]
      %v751 = vld [vmem:[%s388 + $0x10c] sm:$0xff]
      %v752 = vld [vmem:[%s388 + $0x114] sm:$0xff]
      %v753 = vld [vmem:[%s388 + $0x124] sm:$0xff]
      %v754 = vld [vmem:[%s388 + $0x12c] sm:$0xff]
      %v755 = vld [vmem:[%s388 + $0x13c] sm:$0xff]
      %v756 = vld [vmem:[%s388 + $0x144] sm:$0xff]
      %v757 = vld [vmem:[%s388 + $0x154] sm:$0xff]
      %v758 = vld [vmem:[%s388 + $0x15c] sm:$0xff]
      %v759 = vld [vmem:[%s388 + $0x16c] sm:$0xff]
      %v760 = vld [vmem:[%s388 + $0x174] sm:$0xff]
      %v761 = vld [vmem:[%s1 + $0x4] sm:$0x1]
      %v762 = vlaneseq
      %v763 = vshrl.u32 %v762, 7
      %v764 = vsub.s32 0, %v763
      %v765 = vrot.slane %v761, %v764
      %v766 = vmul.f32 %v729, %v765
      %v767 = vmul.f32 %v730, %v765
      %v768 = vmul.f32 %v731, %v765
      %v769 = vmul.f32 %v732, %v765
      %v770 = vmul.f32 %v733, %v765
      %v771 = vmul.f32 %v734, %v765
      %v772 = vmul.f32 %v735, %v765
      %v773 = vmul.f32 %v736, %v765
      %v774 = vmul.f32 %v737, %v765
      %v775 = vmul.f32 %v738, %v765
      %v776 = vmul.f32 %v739, %v765
      %v777 = vmul.f32 %v740, %v765
      %v778 = vmul.f32 %v741, %v765
      %v779 = vmul.f32 %v742, %v765
      %v780 = vmul.f32 %v743, %v765
      %v781 = vmul.f32 %v744, %v765
      %v782 = vmul.f32 %v745, %v765
      %v783 = vmul.f32 %v746, %v765
      %v784 = vmul.f32 %v747, %v765
      %v785 = vmul.f32 %v748, %v765
      %v786 = vmul.f32 %v749, %v765
      %v787 = vmul.f32 %v750, %v765
      %v788 = vmul.f32 %v751, %v765
      %v789 = vmul.f32 %v752, %v765
      %v790 = vmul.f32 %v753, %v765
      %v791 = vmul.f32 %v754, %v765
      %v792 = vmul.f32 %v755, %v765
      %v793 = vmul.f32 %v756, %v765
      %v794 = vmul.f32 %v757, %v765
      %v795 = vmul.f32 %v758, %v765
      %v796 = vmul.f32 %v759, %v765
      %v797 = vmul.f32 %v760, %v765
      %v798 = vadd.f32 %v596, %v766
      %v799 = vadd.f32 %v597, %v767
      %v800 = vadd.f32 %v598, %v768
      %v801 = vadd.f32 %v599, %v769
      %v802 = vadd.f32 %v600, %v770
      %v803 = vadd.f32 %v601, %v771
      %v804 = vadd.f32 %v602, %v772
      %v805 = vadd.f32 %v603, %v773
      %v806 = vadd.f32 %v604, %v774
      %v807 = vadd.f32 %v605, %v775
      %v808 = vadd.f32 %v606, %v776
      %v809 = vadd.f32 %v607, %v777
      %v810 = vadd.f32 %v608, %v778
      %v811 = vadd.f32 %v609, %v779
      %v812 = vadd.f32 %v610, %v780
      %v813 = vadd.f32 %v611, %v781
      %v814 = vadd.f32 %v612, %v782
      %v815 = vadd.f32 %v613, %v783
      %v816 = vadd.f32 %v614, %v784
      %v817 = vadd.f32 %v615, %v785
      %v818 = vadd.f32 %v616, %v786
      %v819 = vadd.f32 %v617, %v787
      %v820 = vadd.f32 %v618, %v788
      %v821 = vadd.f32 %v619, %v789
      %v822 = vadd.f32 %v620, %v790
      %v823 = vadd.f32 %v621, %v791
      %v824 = vadd.f32 %v622, %v792
      %v825 = vadd.f32 %v623, %v793
      %v826 = vadd.f32 %v624, %v794
      %v827 = vadd.f32 %v625, %v795
      %v828 = vadd.f32 %v626, %v796
      %v829 = vadd.f32 %v627, %v797
      %v830 = vld [vmem:[%s388 + $0x5] sm:$0xff]
      %v831 = vld [vmem:[%s388 + $0xd] sm:$0xff]
      %v832 = vld [vmem:[%s388 + $0x1d] sm:$0xff]
      %v833 = vld [vmem:[%s388 + $0x25] sm:$0xff]
      %v834 = vld [vmem:[%s388 + $0x35] sm:$0xff]
      %v835 = vld [vmem:[%s388 + $0x3d] sm:$0xff]
      %v836 = vld [vmem:[%s388 + $0x4d] sm:$0xff]
      %v837 = vld [vmem:[%s388 + $0x55] sm:$0xff]
      %v838 = vld [vmem:[%s388 + $0x65] sm:$0xff]
      %v839 = vld [vmem:[%s388 + $0x6d] sm:$0xff]
      %v840 = vld [vmem:[%s388 + $0x7d] sm:$0xff]
      %v841 = vld [vmem:[%s388 + $0x85] sm:$0xff]
      %v842 = vld [vmem:[%s388 + $0x95] sm:$0xff]
      %v843 = vld [vmem:[%s388 + $0x9d] sm:$0xff]
      %v844 = vld [vmem:[%s388 + $0xad] sm:$0xff]
      %v845 = vld [vmem:[%s388 + $0xb5] sm:$0xff]
      %v846 = vld [vmem:[%s388 + $0xc5] sm:$0xff]
      %v847 = vld [vmem:[%s388 + $0xcd] sm:$0xff]
      %v848 = vld [vmem:[%s388 + $0xdd] sm:$0xff]
      %v849 = vld [vmem:[%s388 + $0xe5] sm:$0xff]
      %v850 = vld [vmem:[%s388 + $0xf5] sm:$0xff]
      %v851 = vld [vmem:[%s388 + $0xfd] sm:$0xff]
      %v852 = vld [vmem:[%s388 + $0x10d] sm:$0xff]
      %v853 = vld [vmem:[%s388 + $0x115] sm:$0xff]
      %v854 = vld [vmem:[%s388 + $0x125] sm:$0xff]
      %v855 = vld [vmem:[%s388 + $0x12d] sm:$0xff]
      %v856 = vld [vmem:[%s388 + $0x13d] sm:$0xff]
      %v857 = vld [vmem:[%s388 + $0x145] sm:$0xff]
      %v858 = vld [vmem:[%s388 + $0x155] sm:$0xff]
      %v859 = vld [vmem:[%s388 + $0x15d] sm:$0xff]
      %v860 = vld [vmem:[%s388 + $0x16d] sm:$0xff]
      %v861 = vld [vmem:[%s388 + $0x175] sm:$0xff]
      %v862 = vld [vmem:[%s1 + $0x5] sm:$0x1]
      %v863 = vlaneseq
      %v864 = vshrl.u32 %v863, 7
      %v865 = vsub.s32 0, %v864
      %v866 = vrot.slane %v862, %v865
      %v867 = vmul.f32 %v830, %v866
      %v868 = vmul.f32 %v831, %v866
      %v869 = vmul.f32 %v832, %v866
      %v870 = vmul.f32 %v833, %v866
      %v871 = vmul.f32 %v834, %v866
      %v872 = vmul.f32 %v835, %v866
      %v873 = vmul.f32 %v836, %v866
      %v874 = vmul.f32 %v837, %v866
      %v875 = vmul.f32 %v838, %v866
      %v876 = vmul.f32 %v839, %v866
      %v877 = vmul.f32 %v840, %v866
      %v878 = vmul.f32 %v841, %v866
      %v879 = vmul.f32 %v842, %v866
      %v880 = vmul.f32 %v843, %v866
      %v881 = vmul.f32 %v844, %v866
      %v882 = vmul.f32 %v845, %v866
      %v883 = vmul.f32 %v846, %v866
      %v884 = vmul.f32 %v847, %v866
      %v885 = vmul.f32 %v848, %v866
      %v886 = vmul.f32 %v849, %v866
      %v887 = vmul.f32 %v850, %v866
      %v888 = vmul.f32 %v851, %v866
      %v889 = vmul.f32 %v852, %v866
      %v890 = vmul.f32 %v853, %v866
      %v891 = vmul.f32 %v854, %v866
      %v892 = vmul.f32 %v855, %v866
      %v893 = vmul.f32 %v856, %v866
      %v894 = vmul.f32 %v857, %v866
      %v895 = vmul.f32 %v858, %v866
      %v896 = vmul.f32 %v859, %v866
      %v897 = vmul.f32 %v860, %v866
      %v898 = vmul.f32 %v861, %v866
      %v899 = vadd.f32 %v697, %v867
      %v900 = vadd.f32 %v698, %v868
      %v901 = vadd.f32 %v699, %v869
      %v902 = vadd.f32 %v700, %v870
      %v903 = vadd.f32 %v701, %v871
      %v904 = vadd.f32 %v702, %v872
      %v905 = vadd.f32 %v703, %v873
      %v906 = vadd.f32 %v704, %v874
      %v907 = vadd.f32 %v705, %v875
      %v908 = vadd.f32 %v706, %v876
      %v909 = vadd.f32 %v707, %v877
      %v910 = vadd.f32 %v708, %v878
      %v911 = vadd.f32 %v709, %v879
      %v912 = vadd.f32 %v710, %v880
      %v913 = vadd.f32 %v711, %v881
      %v914 = vadd.f32 %v712, %v882
      %v915 = vadd.f32 %v713, %v883
      %v916 = vadd.f32 %v714, %v884
      %v917 = vadd.f32 %v715, %v885
      %v918 = vadd.f32 %v716, %v886
      %v919 = vadd.f32 %v717, %v887
      %v920 = vadd.f32 %v718, %v888
      %v921 = vadd.f32 %v719, %v889
      %v922 = vadd.f32 %v720, %v890
      %v923 = vadd.f32 %v721, %v891
      %v924 = vadd.f32 %v722, %v892
      %v925 = vadd.f32 %v723, %v893
      %v926 = vadd.f32 %v724, %v894
      %v927 = vadd.f32 %v725, %v895
      %v928 = vadd.f32 %v726, %v896
      %v929 = vadd.f32 %v727, %v897
      %v930 = vadd.f32 %v728, %v898
      %v931 = vld [vmem:[%s388 + $0x6] sm:$0xff]
      %v932 = vld [vmem:[%s388 + $0xe] sm:$0xff]
      %v933 = vld [vmem:[%s388 + $0x1e] sm:$0xff]
      %v934 = vld [vmem:[%s388 + $0x26] sm:$0xff]
      %v935 = vld [vmem:[%s388 + $0x36] sm:$0xff]
      %v936 = vld [vmem:[%s388 + $0x3e] sm:$0xff]
      %v937 = vld [vmem:[%s388 + $0x4e] sm:$0xff]
      %v938 = vld [vmem:[%s388 + $0x56] sm:$0xff]
      %v939 = vld [vmem:[%s388 + $0x66] sm:$0xff]
      %v940 = vld [vmem:[%s388 + $0x6e] sm:$0xff]
      %v941 = vld [vmem:[%s388 + $0x7e] sm:$0xff]
      %v942 = vld [vmem:[%s388 + $0x86] sm:$0xff]
      %v943 = vld [vmem:[%s388 + $0x96] sm:$0xff]
      %v944 = vld [vmem:[%s388 + $0x9e] sm:$0xff]
      %v945 = vld [vmem:[%s388 + $0xae] sm:$0xff]
      %v946 = vld [vmem:[%s388 + $0xb6] sm:$0xff]
      %v947 = vld [vmem:[%s388 + $0xc6] sm:$0xff]
      %v948 = vld [vmem:[%s388 + $0xce] sm:$0xff]
      %v949 = vld [vmem:[%s388 + $0xde] sm:$0xff]
      %v950 = vld [vmem:[%s388 + $0xe6] sm:$0xff]
      %v951 = vld [vmem:[%s388 + $0xf6] sm:$0xff]
      %v952 = vld [vmem:[%s388 + $0xfe] sm:$0xff]
      %v953 = vld [vmem:[%s388 + $0x10e] sm:$0xff]
      %v954 = vld [vmem:[%s388 + $0x116] sm:$0xff]
      %v955 = vld [vmem:[%s388 + $0x126] sm:$0xff]
      %v956 = vld [vmem:[%s388 + $0x12e] sm:$0xff]
      %v957 = vld [vmem:[%s388 + $0x13e] sm:$0xff]
      %v958 = vld [vmem:[%s388 + $0x146] sm:$0xff]
      %v959 = vld [vmem:[%s388 + $0x156] sm:$0xff]
      %v960 = vld [vmem:[%s388 + $0x15e] sm:$0xff]
      %v961 = vld [vmem:[%s388 + $0x16e] sm:$0xff]
      %v962 = vld [vmem:[%s388 + $0x176] sm:$0xff]
      %v963 = vld [vmem:[%s1 + $0x6] sm:$0x1]
      %v964 = vlaneseq
      %v965 = vshrl.u32 %v964, 7
      %v966 = vsub.s32 0, %v965
      %v967 = vrot.slane %v963, %v966
      %v968 = vmul.f32 %v931, %v967
      %v969 = vmul.f32 %v932, %v967
      %v970 = vmul.f32 %v933, %v967
      %v971 = vmul.f32 %v934, %v967
      %v972 = vmul.f32 %v935, %v967
      %v973 = vmul.f32 %v936, %v967
      %v974 = vmul.f32 %v937, %v967
      %v975 = vmul.f32 %v938, %v967
      %v976 = vmul.f32 %v939, %v967
      %v977 = vmul.f32 %v940, %v967
      %v978 = vmul.f32 %v941, %v967
      %v979 = vmul.f32 %v942, %v967
      %v980 = vmul.f32 %v943, %v967
      %v981 = vmul.f32 %v944, %v967
      %v982 = vmul.f32 %v945, %v967
      %v983 = vmul.f32 %v946, %v967
      %v984 = vmul.f32 %v947, %v967
      %v985 = vmul.f32 %v948, %v967
      %v986 = vmul.f32 %v949, %v967
      %v987 = vmul.f32 %v950, %v967
      %v988 = vmul.f32 %v951, %v967
      %v989 = vmul.f32 %v952, %v967
      %v990 = vmul.f32 %v953, %v967
      %v991 = vmul.f32 %v954, %v967
      %v992 = vmul.f32 %v955, %v967
      %v993 = vmul.f32 %v956, %v967
      %v994 = vmul.f32 %v957, %v967
      %v995 = vmul.f32 %v958, %v967
      %v996 = vmul.f32 %v959, %v967
      %v997 = vmul.f32 %v960, %v967
      %v998 = vmul.f32 %v961, %v967
      %v999 = vmul.f32 %v962, %v967
      %v1000 = vadd.f32 %v798, %v968
      %v1001 = vadd.f32 %v799, %v969
      %v1002 = vadd.f32 %v800, %v970
      %v1003 = vadd.f32 %v801, %v971
      %v1004 = vadd.f32 %v802, %v972
      %v1005 = vadd.f32 %v803, %v973
      %v1006 = vadd.f32 %v804, %v974
      %v1007 = vadd.f32 %v805, %v975
      %v1008 = vadd.f32 %v806, %v976
      %v1009 = vadd.f32 %v807, %v977
      %v1010 = vadd.f32 %v808, %v978
      %v1011 = vadd.f32 %v809, %v979
      %v1012 = vadd.f32 %v810, %v980
      %v1013 = vadd.f32 %v811, %v981
      %v1014 = vadd.f32 %v812, %v982
      %v1015 = vadd.f32 %v813, %v983
      %v1016 = vadd.f32 %v814, %v984
      %v1017 = vadd.f32 %v815, %v985
      %v1018 = vadd.f32 %v816, %v986
      %v1019 = vadd.f32 %v817, %v987
      %v1020 = vadd.f32 %v818, %v988
      %v1021 = vadd.f32 %v819, %v989
      %v1022 = vadd.f32 %v820, %v990
      %v1023 = vadd.f32 %v821, %v991
      %v1024 = vadd.f32 %v822, %v992
      %v1025 = vadd.f32 %v823, %v993
      %v1026 = vadd.f32 %v824, %v994
      %v1027 = vadd.f32 %v825, %v995
      %v1028 = vadd.f32 %v826, %v996
      %v1029 = vadd.f32 %v827, %v997
      %v1030 = vadd.f32 %v828, %v998
      %v1031 = vadd.f32 %v829, %v999
      %s1032 = sadd.s32 %s386, 1
      %s1033 = smul.u32 %s1032, 24
      %s1034 = scalar_lea.vmem %s373, %s1033
      %v1035 = vld [vmem:[%s1034] sm:$0xff]
      %v1036 = vld [vmem:[%s1034 + $0x8] sm:$0xff]
      %v1037 = vld [vmem:[%s1034 + $0x18] sm:$0xff]
      %v1038 = vld [vmem:[%s1034 + $0x20] sm:$0xff]
      %v1039 = vld [vmem:[%s1034 + $0x30] sm:$0xff]
      %v1040 = vld [vmem:[%s1034 + $0x38] sm:$0xff]
      %v1041 = vld [vmem:[%s1034 + $0x48] sm:$0xff]
      %v1042 = vld [vmem:[%s1034 + $0x50] sm:$0xff]
      %v1043 = vld [vmem:[%s1034 + $0x60] sm:$0xff]
      %v1044 = vld [vmem:[%s1034 + $0x68] sm:$0xff]
      %v1045 = vld [vmem:[%s1034 + $0x78] sm:$0xff]
      %v1046 = vld [vmem:[%s1034 + $0x80] sm:$0xff]
      %v1047 = vld [vmem:[%s1034 + $0x90] sm:$0xff]
      %v1048 = vld [vmem:[%s1034 + $0x98] sm:$0xff]
      %v1049 = vld [vmem:[%s1034 + $0xa8] sm:$0xff]
      %v1050 = vld [vmem:[%s1034 + $0xb0] sm:$0xff]
      %v1051 = vld [vmem:[%s1034 + $0xc0] sm:$0xff]
      %v1052 = vld [vmem:[%s1034 + $0xc8] sm:$0xff]
      %v1053 = vld [vmem:[%s1034 + $0xd8] sm:$0xff]
      %v1054 = vld [vmem:[%s1034 + $0xe0] sm:$0xff]
      %v1055 = vld [vmem:[%s1034 + $0xf0] sm:$0xff]
      %v1056 = vld [vmem:[%s1034 + $0xf8] sm:$0xff]
      %v1057 = vld [vmem:[%s1034 + $0x108] sm:$0xff]
      %v1058 = vld [vmem:[%s1034 + $0x110] sm:$0xff]
      %v1059 = vld [vmem:[%s1034 + $0x120] sm:$0xff]
      %v1060 = vld [vmem:[%s1034 + $0x128] sm:$0xff]
      %v1061 = vld [vmem:[%s1034 + $0x138] sm:$0xff]
      %v1062 = vld [vmem:[%s1034 + $0x140] sm:$0xff]
      %v1063 = vld [vmem:[%s1034 + $0x150] sm:$0xff]
      %v1064 = vld [vmem:[%s1034 + $0x158] sm:$0xff]
      %v1065 = vld [vmem:[%s1034 + $0x168] sm:$0xff]
      %v1066 = vld [vmem:[%s1034 + $0x170] sm:$0xff]
      %v1067 = vld [vmem:[%s1 + $0x7] sm:$0x1]
      %v1068 = vlaneseq
      %v1069 = vshrl.u32 %v1068, 7
      %v1070 = vsub.s32 0, %v1069
      %v1071 = vrot.slane %v1067, %v1070
      %v1072 = vmul.f32 %v1035, %v1071
      %v1073 = vmul.f32 %v1036, %v1071
      %v1074 = vmul.f32 %v1037, %v1071
      %v1075 = vmul.f32 %v1038, %v1071
      %v1076 = vmul.f32 %v1039, %v1071
      %v1077 = vmul.f32 %v1040, %v1071
      %v1078 = vmul.f32 %v1041, %v1071
      %v1079 = vmul.f32 %v1042, %v1071
      %v1080 = vmul.f32 %v1043, %v1071
      %v1081 = vmul.f32 %v1044, %v1071
      %v1082 = vmul.f32 %v1045, %v1071
      %v1083 = vmul.f32 %v1046, %v1071
      %v1084 = vmul.f32 %v1047, %v1071
      %v1085 = vmul.f32 %v1048, %v1071
      %v1086 = vmul.f32 %v1049, %v1071
      %v1087 = vmul.f32 %v1050, %v1071
      %v1088 = vmul.f32 %v1051, %v1071
      %v1089 = vmul.f32 %v1052, %v1071
      %v1090 = vmul.f32 %v1053, %v1071
      %v1091 = vmul.f32 %v1054, %v1071
      %v1092 = vmul.f32 %v1055, %v1071
      %v1093 = vmul.f32 %v1056, %v1071
      %v1094 = vmul.f32 %v1057, %v1071
      %v1095 = vmul.f32 %v1058, %v1071
      %v1096 = vmul.f32 %v1059, %v1071
      %v1097 = vmul.f32 %v1060, %v1071
      %v1098 = vmul.f32 %v1061, %v1071
      %v1099 = vmul.f32 %v1062, %v1071
      %v1100 = vmul.f32 %v1063, %v1071
      %v1101 = vmul.f32 %v1064, %v1071
      %v1102 = vmul.f32 %v1065, %v1071
      %v1103 = vmul.f32 %v1066, %v1071
      %v1104 = vadd.f32 %v899, %v1072
      %v1105 = vadd.f32 %v900, %v1073
      %v1106 = vadd.f32 %v901, %v1074
      %v1107 = vadd.f32 %v902, %v1075
      %v1108 = vadd.f32 %v903, %v1076
      %v1109 = vadd.f32 %v904, %v1077
      %v1110 = vadd.f32 %v905, %v1078
      %v1111 = vadd.f32 %v906, %v1079
      %v1112 = vadd.f32 %v907, %v1080
      %v1113 = vadd.f32 %v908, %v1081
      %v1114 = vadd.f32 %v909, %v1082
      %v1115 = vadd.f32 %v910, %v1083
      %v1116 = vadd.f32 %v911, %v1084
      %v1117 = vadd.f32 %v912, %v1085
      %v1118 = vadd.f32 %v913, %v1086
      %v1119 = vadd.f32 %v914, %v1087
      %v1120 = vadd.f32 %v915, %v1088
      %v1121 = vadd.f32 %v916, %v1089
      %v1122 = vadd.f32 %v917, %v1090
      %v1123 = vadd.f32 %v918, %v1091
      %v1124 = vadd.f32 %v919, %v1092
      %v1125 = vadd.f32 %v920, %v1093
      %v1126 = vadd.f32 %v921, %v1094
      %v1127 = vadd.f32 %v922, %v1095
      %v1128 = vadd.f32 %v923, %v1096
      %v1129 = vadd.f32 %v924, %v1097
      %v1130 = vadd.f32 %v925, %v1098
      %v1131 = vadd.f32 %v926, %v1099
      %v1132 = vadd.f32 %v927, %v1100
      %v1133 = vadd.f32 %v928, %v1101
      %v1134 = vadd.f32 %v929, %v1102
      %v1135 = vadd.f32 %v930, %v1103
      %v1136 = vld [vmem:[%s1034 + $0x1] sm:$0xff]
      %v1137 = vld [vmem:[%s1034 + $0x9] sm:$0xff]
      %v1138 = vld [vmem:[%s1034 + $0x19] sm:$0xff]
      %v1139 = vld [vmem:[%s1034 + $0x21] sm:$0xff]
      %v1140 = vld [vmem:[%s1034 + $0x31] sm:$0xff]
      %v1141 = vld [vmem:[%s1034 + $0x39] sm:$0xff]
      %v1142 = vld [vmem:[%s1034 + $0x49] sm:$0xff]
      %v1143 = vld [vmem:[%s1034 + $0x51] sm:$0xff]
      %v1144 = vld [vmem:[%s1034 + $0x61] sm:$0xff]
      %v1145 = vld [vmem:[%s1034 + $0x69] sm:$0xff]
      %v1146 = vld [vmem:[%s1034 + $0x79] sm:$0xff]
      %v1147 = vld [vmem:[%s1034 + $0x81] sm:$0xff]
      %v1148 = vld [vmem:[%s1034 + $0x91] sm:$0xff]
      %v1149 = vld [vmem:[%s1034 + $0x99] sm:$0xff]
      %v1150 = vld [vmem:[%s1034 + $0xa9] sm:$0xff]
      %v1151 = vld [vmem:[%s1034 + $0xb1] sm:$0xff]
      %v1152 = vld [vmem:[%s1034 + $0xc1] sm:$0xff]
      %v1153 = vld [vmem:[%s1034 + $0xc9] sm:$0xff]
      %v1154 = vld [vmem:[%s1034 + $0xd9] sm:$0xff]
      %v1155 = vld [vmem:[%s1034 + $0xe1] sm:$0xff]
      %v1156 = vld [vmem:[%s1034 + $0xf1] sm:$0xff]
      %v1157 = vld [vmem:[%s1034 + $0xf9] sm:$0xff]
      %v1158 = vld [vmem:[%s1034 + $0x109] sm:$0xff]
      %v1159 = vld [vmem:[%s1034 + $0x111] sm:$0xff]
      %v1160 = vld [vmem:[%s1034 + $0x121] sm:$0xff]
      %v1161 = vld [vmem:[%s1034 + $0x129] sm:$0xff]
      %v1162 = vld [vmem:[%s1034 + $0x139] sm:$0xff]
      %v1163 = vld [vmem:[%s1034 + $0x141] sm:$0xff]
      %v1164 = vld [vmem:[%s1034 + $0x151] sm:$0xff]
      %v1165 = vld [vmem:[%s1034 + $0x159] sm:$0xff]
      %v1166 = vld [vmem:[%s1034 + $0x169] sm:$0xff]
      %v1167 = vld [vmem:[%s1034 + $0x171] sm:$0xff]
      %v1168 = vld [vmem:[%s1 + $0x8] sm:$0x1]
      %v1169 = vlaneseq
      %v1170 = vshrl.u32 %v1169, 7
      %v1171 = vsub.s32 0, %v1170
      %v1172 = vrot.slane %v1168, %v1171
      %v1173 = vmul.f32 %v1136, %v1172
      %v1174 = vmul.f32 %v1137, %v1172
      %v1175 = vmul.f32 %v1138, %v1172
      %v1176 = vmul.f32 %v1139, %v1172
      %v1177 = vmul.f32 %v1140, %v1172
      %v1178 = vmul.f32 %v1141, %v1172
      %v1179 = vmul.f32 %v1142, %v1172
      %v1180 = vmul.f32 %v1143, %v1172
      %v1181 = vmul.f32 %v1144, %v1172
      %v1182 = vmul.f32 %v1145, %v1172
      %v1183 = vmul.f32 %v1146, %v1172
      %v1184 = vmul.f32 %v1147, %v1172
      %v1185 = vmul.f32 %v1148, %v1172
      %v1186 = vmul.f32 %v1149, %v1172
      %v1187 = vmul.f32 %v1150, %v1172
      %v1188 = vmul.f32 %v1151, %v1172
      %v1189 = vmul.f32 %v1152, %v1172
      %v1190 = vmul.f32 %v1153, %v1172
      %v1191 = vmul.f32 %v1154, %v1172
      %v1192 = vmul.f32 %v1155, %v1172
      %v1193 = vmul.f32 %v1156, %v1172
      %v1194 = vmul.f32 %v1157, %v1172
      %v1195 = vmul.f32 %v1158, %v1172
      %v1196 = vmul.f32 %v1159, %v1172
      %v1197 = vmul.f32 %v1160, %v1172
      %v1198 = vmul.f32 %v1161, %v1172
      %v1199 = vmul.f32 %v1162, %v1172
      %v1200 = vmul.f32 %v1163, %v1172
      %v1201 = vmul.f32 %v1164, %v1172
      %v1202 = vmul.f32 %v1165, %v1172
      %v1203 = vmul.f32 %v1166, %v1172
      %v1204 = vmul.f32 %v1167, %v1172
      %v1205 = vadd.f32 %v1000, %v1173
      %v1206 = vadd.f32 %v1001, %v1174
      %v1207 = vadd.f32 %v1002, %v1175
      %v1208 = vadd.f32 %v1003, %v1176
      %v1209 = vadd.f32 %v1004, %v1177
      %v1210 = vadd.f32 %v1005, %v1178
      %v1211 = vadd.f32 %v1006, %v1179
      %v1212 = vadd.f32 %v1007, %v1180
      %v1213 = vadd.f32 %v1008, %v1181
      %v1214 = vadd.f32 %v1009, %v1182
      %v1215 = vadd.f32 %v1010, %v1183
      %v1216 = vadd.f32 %v1011, %v1184
      %v1217 = vadd.f32 %v1012, %v1185
      %v1218 = vadd.f32 %v1013, %v1186
      %v1219 = vadd.f32 %v1014, %v1187
      %v1220 = vadd.f32 %v1015, %v1188
      %v1221 = vadd.f32 %v1016, %v1189
      %v1222 = vadd.f32 %v1017, %v1190
      %v1223 = vadd.f32 %v1018, %v1191
      %v1224 = vadd.f32 %v1019, %v1192
      %v1225 = vadd.f32 %v1020, %v1193
      %v1226 = vadd.f32 %v1021, %v1194
      %v1227 = vadd.f32 %v1022, %v1195
      %v1228 = vadd.f32 %v1023, %v1196
      %v1229 = vadd.f32 %v1024, %v1197
      %v1230 = vadd.f32 %v1025, %v1198
      %v1231 = vadd.f32 %v1026, %v1199
      %v1232 = vadd.f32 %v1027, %v1200
      %v1233 = vadd.f32 %v1028, %v1201
      %v1234 = vadd.f32 %v1029, %v1202
      %v1235 = vadd.f32 %v1030, %v1203
      %v1236 = vadd.f32 %v1031, %v1204
      %v1237 = vld [vmem:[%s1034 + $0x2] sm:$0xff]
      %v1238 = vld [vmem:[%s1034 + $0xa] sm:$0xff]
      %v1239 = vld [vmem:[%s1034 + $0x1a] sm:$0xff]
      %v1240 = vld [vmem:[%s1034 + $0x22] sm:$0xff]
      %v1241 = vld [vmem:[%s1034 + $0x32] sm:$0xff]
      %v1242 = vld [vmem:[%s1034 + $0x3a] sm:$0xff]
      %v1243 = vld [vmem:[%s1034 + $0x4a] sm:$0xff]
      %v1244 = vld [vmem:[%s1034 + $0x52] sm:$0xff]
      %v1245 = vld [vmem:[%s1034 + $0x62] sm:$0xff]
      %v1246 = vld [vmem:[%s1034 + $0x6a] sm:$0xff]
      %v1247 = vld [vmem:[%s1034 + $0x7a] sm:$0xff]
      %v1248 = vld [vmem:[%s1034 + $0x82] sm:$0xff]
      %v1249 = vld [vmem:[%s1034 + $0x92] sm:$0xff]
      %v1250 = vld [vmem:[%s1034 + $0x9a] sm:$0xff]
      %v1251 = vld [vmem:[%s1034 + $0xaa] sm:$0xff]
      %v1252 = vld [vmem:[%s1034 + $0xb2] sm:$0xff]
      %v1253 = vld [vmem:[%s1034 + $0xc2] sm:$0xff]
      %v1254 = vld [vmem:[%s1034 + $0xca] sm:$0xff]
      %v1255 = vld [vmem:[%s1034 + $0xda] sm:$0xff]
      %v1256 = vld [vmem:[%s1034 + $0xe2] sm:$0xff]
      %v1257 = vld [vmem:[%s1034 + $0xf2] sm:$0xff]
      %v1258 = vld [vmem:[%s1034 + $0xfa] sm:$0xff]
      %v1259 = vld [vmem:[%s1034 + $0x10a] sm:$0xff]
      %v1260 = vld [vmem:[%s1034 + $0x112] sm:$0xff]
      %v1261 = vld [vmem:[%s1034 + $0x122] sm:$0xff]
      %v1262 = vld [vmem:[%s1034 + $0x12a] sm:$0xff]
      %v1263 = vld [vmem:[%s1034 + $0x13a] sm:$0xff]
      %v1264 = vld [vmem:[%s1034 + $0x142] sm:$0xff]
      %v1265 = vld [vmem:[%s1034 + $0x152] sm:$0xff]
      %v1266 = vld [vmem:[%s1034 + $0x15a] sm:$0xff]
      %v1267 = vld [vmem:[%s1034 + $0x16a] sm:$0xff]
      %v1268 = vld [vmem:[%s1034 + $0x172] sm:$0xff]
      %v1269 = vld [vmem:[%s1 + $0x9] sm:$0x1]
      %v1270 = vlaneseq
      %v1271 = vshrl.u32 %v1270, 7
      %v1272 = vsub.s32 0, %v1271
      %v1273 = vrot.slane %v1269, %v1272
      %v1274 = vmul.f32 %v1237, %v1273
      %v1275 = vmul.f32 %v1238, %v1273
      %v1276 = vmul.f32 %v1239, %v1273
      %v1277 = vmul.f32 %v1240, %v1273
      %v1278 = vmul.f32 %v1241, %v1273
      %v1279 = vmul.f32 %v1242, %v1273
      %v1280 = vmul.f32 %v1243, %v1273
      %v1281 = vmul.f32 %v1244, %v1273
      %v1282 = vmul.f32 %v1245, %v1273
      %v1283 = vmul.f32 %v1246, %v1273
      %v1284 = vmul.f32 %v1247, %v1273
      %v1285 = vmul.f32 %v1248, %v1273
      %v1286 = vmul.f32 %v1249, %v1273
      %v1287 = vmul.f32 %v1250, %v1273
      %v1288 = vmul.f32 %v1251, %v1273
      %v1289 = vmul.f32 %v1252, %v1273
      %v1290 = vmul.f32 %v1253, %v1273
      %v1291 = vmul.f32 %v1254, %v1273
      %v1292 = vmul.f32 %v1255, %v1273
      %v1293 = vmul.f32 %v1256, %v1273
      %v1294 = vmul.f32 %v1257, %v1273
      %v1295 = vmul.f32 %v1258, %v1273
      %v1296 = vmul.f32 %v1259, %v1273
      %v1297 = vmul.f32 %v1260, %v1273
      %v1298 = vmul.f32 %v1261, %v1273
      %v1299 = vmul.f32 %v1262, %v1273
      %v1300 = vmul.f32 %v1263, %v1273
      %v1301 = vmul.f32 %v1264, %v1273
      %v1302 = vmul.f32 %v1265, %v1273
      %v1303 = vmul.f32 %v1266, %v1273
      %v1304 = vmul.f32 %v1267, %v1273
      %v1305 = vmul.f32 %v1268, %v1273
      %v1306 = vadd.f32 %v1104, %v1274
      %v1307 = vadd.f32 %v1105, %v1275
      %v1308 = vadd.f32 %v1106, %v1276
      %v1309 = vadd.f32 %v1107, %v1277
      %v1310 = vadd.f32 %v1108, %v1278
      %v1311 = vadd.f32 %v1109, %v1279
      %v1312 = vadd.f32 %v1110, %v1280
      %v1313 = vadd.f32 %v1111, %v1281
      %v1314 = vadd.f32 %v1112, %v1282
      %v1315 = vadd.f32 %v1113, %v1283
      %v1316 = vadd.f32 %v1114, %v1284
      %v1317 = vadd.f32 %v1115, %v1285
      %v1318 = vadd.f32 %v1116, %v1286
      %v1319 = vadd.f32 %v1117, %v1287
      %v1320 = vadd.f32 %v1118, %v1288
      %v1321 = vadd.f32 %v1119, %v1289
      %v1322 = vadd.f32 %v1120, %v1290
      %v1323 = vadd.f32 %v1121, %v1291
      %v1324 = vadd.f32 %v1122, %v1292
      %v1325 = vadd.f32 %v1123, %v1293
      %v1326 = vadd.f32 %v1124, %v1294
      %v1327 = vadd.f32 %v1125, %v1295
      %v1328 = vadd.f32 %v1126, %v1296
      %v1329 = vadd.f32 %v1127, %v1297
      %v1330 = vadd.f32 %v1128, %v1298
      %v1331 = vadd.f32 %v1129, %v1299
      %v1332 = vadd.f32 %v1130, %v1300
      %v1333 = vadd.f32 %v1131, %v1301
      %v1334 = vadd.f32 %v1132, %v1302
      %v1335 = vadd.f32 %v1133, %v1303
      %v1336 = vadd.f32 %v1134, %v1304
      %v1337 = vadd.f32 %v1135, %v1305
      %v1338 = vld [vmem:[%s1034 + $0x3] sm:$0xff]
      %v1339 = vld [vmem:[%s1034 + $0xb] sm:$0xff]
      %v1340 = vld [vmem:[%s1034 + $0x1b] sm:$0xff]
      %v1341 = vld [vmem:[%s1034 + $0x23] sm:$0xff]
      %v1342 = vld [vmem:[%s1034 + $0x33] sm:$0xff]
      %v1343 = vld [vmem:[%s1034 + $0x3b] sm:$0xff]
      %v1344 = vld [vmem:[%s1034 + $0x4b] sm:$0xff]
      %v1345 = vld [vmem:[%s1034 + $0x53] sm:$0xff]
      %v1346 = vld [vmem:[%s1034 + $0x63] sm:$0xff]
      %v1347 = vld [vmem:[%s1034 + $0x6b] sm:$0xff]
      %v1348 = vld [vmem:[%s1034 + $0x7b] sm:$0xff]
      %v1349 = vld [vmem:[%s1034 + $0x83] sm:$0xff]
      %v1350 = vld [vmem:[%s1034 + $0x93] sm:$0xff]
      %v1351 = vld [vmem:[%s1034 + $0x9b] sm:$0xff]
      %v1352 = vld [vmem:[%s1034 + $0xab] sm:$0xff]
      %v1353 = vld [vmem:[%s1034 + $0xb3] sm:$0xff]
      %v1354 = vld [vmem:[%s1034 + $0xc3] sm:$0xff]
      %v1355 = vld [vmem:[%s1034 + $0xcb] sm:$0xff]
      %v1356 = vld [vmem:[%s1034 + $0xdb] sm:$0xff]
      %v1357 = vld [vmem:[%s1034 + $0xe3] sm:$0xff]
      %v1358 = vld [vmem:[%s1034 + $0xf3] sm:$0xff]
      %v1359 = vld [vmem:[%s1034 + $0xfb] sm:$0xff]
      %v1360 = vld [vmem:[%s1034 + $0x10b] sm:$0xff]
      %v1361 = vld [vmem:[%s1034 + $0x113] sm:$0xff]
      %v1362 = vld [vmem:[%s1034 + $0x123] sm:$0xff]
      %v1363 = vld [vmem:[%s1034 + $0x12b] sm:$0xff]
      %v1364 = vld [vmem:[%s1034 + $0x13b] sm:$0xff]
      %v1365 = vld [vmem:[%s1034 + $0x143] sm:$0xff]
      %v1366 = vld [vmem:[%s1034 + $0x153] sm:$0xff]
      %v1367 = vld [vmem:[%s1034 + $0x15b] sm:$0xff]
      %v1368 = vld [vmem:[%s1034 + $0x16b] sm:$0xff]
      %v1369 = vld [vmem:[%s1034 + $0x173] sm:$0xff]
      %v1370 = vld [vmem:[%s1 + $0xa] sm:$0x1]
      %v1371 = vlaneseq
      %v1372 = vshrl.u32 %v1371, 7
      %v1373 = vsub.s32 0, %v1372
      %v1374 = vrot.slane %v1370, %v1373
      %v1375 = vmul.f32 %v1338, %v1374
      %v1376 = vmul.f32 %v1339, %v1374
      %v1377 = vmul.f32 %v1340, %v1374
      %v1378 = vmul.f32 %v1341, %v1374
      %v1379 = vmul.f32 %v1342, %v1374
      %v1380 = vmul.f32 %v1343, %v1374
      %v1381 = vmul.f32 %v1344, %v1374
      %v1382 = vmul.f32 %v1345, %v1374
      %v1383 = vmul.f32 %v1346, %v1374
      %v1384 = vmul.f32 %v1347, %v1374
      %v1385 = vmul.f32 %v1348, %v1374
      %v1386 = vmul.f32 %v1349, %v1374
      %v1387 = vmul.f32 %v1350, %v1374
      %v1388 = vmul.f32 %v1351, %v1374
      %v1389 = vmul.f32 %v1352, %v1374
      %v1390 = vmul.f32 %v1353, %v1374
      %v1391 = vmul.f32 %v1354, %v1374
      %v1392 = vmul.f32 %v1355, %v1374
      %v1393 = vmul.f32 %v1356, %v1374
      %v1394 = vmul.f32 %v1357, %v1374
      %v1395 = vmul.f32 %v1358, %v1374
      %v1396 = vmul.f32 %v1359, %v1374
      %v1397 = vmul.f32 %v1360, %v1374
      %v1398 = vmul.f32 %v1361, %v1374
      %v1399 = vmul.f32 %v1362, %v1374
      %v1400 = vmul.f32 %v1363, %v1374
      %v1401 = vmul.f32 %v1364, %v1374
      %v1402 = vmul.f32 %v1365, %v1374
      %v1403 = vmul.f32 %v1366, %v1374
      %v1404 = vmul.f32 %v1367, %v1374
      %v1405 = vmul.f32 %v1368, %v1374
      %v1406 = vmul.f32 %v1369, %v1374
      %v1407 = vadd.f32 %v1205, %v1375
      %v1408 = vadd.f32 %v1206, %v1376
      %v1409 = vadd.f32 %v1207, %v1377
      %v1410 = vadd.f32 %v1208, %v1378
      %v1411 = vadd.f32 %v1209, %v1379
      %v1412 = vadd.f32 %v1210, %v1380
      %v1413 = vadd.f32 %v1211, %v1381
      %v1414 = vadd.f32 %v1212, %v1382
      %v1415 = vadd.f32 %v1213, %v1383
      %v1416 = vadd.f32 %v1214, %v1384
      %v1417 = vadd.f32 %v1215, %v1385
      %v1418 = vadd.f32 %v1216, %v1386
      %v1419 = vadd.f32 %v1217, %v1387
      %v1420 = vadd.f32 %v1218, %v1388
      %v1421 = vadd.f32 %v1219, %v1389
      %v1422 = vadd.f32 %v1220, %v1390
      %v1423 = vadd.f32 %v1221, %v1391
      %v1424 = vadd.f32 %v1222, %v1392
      %v1425 = vadd.f32 %v1223, %v1393
      %v1426 = vadd.f32 %v1224, %v1394
      %v1427 = vadd.f32 %v1225, %v1395
      %v1428 = vadd.f32 %v1226, %v1396
      %v1429 = vadd.f32 %v1227, %v1397
      %v1430 = vadd.f32 %v1228, %v1398
      %v1431 = vadd.f32 %v1229, %v1399
      %v1432 = vadd.f32 %v1230, %v1400
      %v1433 = vadd.f32 %v1231, %v1401
      %v1434 = vadd.f32 %v1232, %v1402
      %v1435 = vadd.f32 %v1233, %v1403
      %v1436 = vadd.f32 %v1234, %v1404
      %v1437 = vadd.f32 %v1235, %v1405
      %v1438 = vadd.f32 %v1236, %v1406
      %v1439 = vld [vmem:[%s1034 + $0x4] sm:$0xff]
      %v1440 = vld [vmem:[%s1034 + $0xc] sm:$0xff]
      %v1441 = vld [vmem:[%s1034 + $0x1c] sm:$0xff]
      %v1442 = vld [vmem:[%s1034 + $0x24] sm:$0xff]
      %v1443 = vld [vmem:[%s1034 + $0x34] sm:$0xff]
      %v1444 = vld [vmem:[%s1034 + $0x3c] sm:$0xff]
      %v1445 = vld [vmem:[%s1034 + $0x4c] sm:$0xff]
      %v1446 = vld [vmem:[%s1034 + $0x54] sm:$0xff]
      %v1447 = vld [vmem:[%s1034 + $0x64] sm:$0xff]
      %v1448 = vld [vmem:[%s1034 + $0x6c] sm:$0xff]
      %v1449 = vld [vmem:[%s1034 + $0x7c] sm:$0xff]
      %v1450 = vld [vmem:[%s1034 + $0x84] sm:$0xff]
      %v1451 = vld [vmem:[%s1034 + $0x94] sm:$0xff]
      %v1452 = vld [vmem:[%s1034 + $0x9c] sm:$0xff]
      %v1453 = vld [vmem:[%s1034 + $0xac] sm:$0xff]
      %v1454 = vld [vmem:[%s1034 + $0xb4] sm:$0xff]
      %v1455 = vld [vmem:[%s1034 + $0xc4] sm:$0xff]
      %v1456 = vld [vmem:[%s1034 + $0xcc] sm:$0xff]
      %v1457 = vld [vmem:[%s1034 + $0xdc] sm:$0xff]
      %v1458 = vld [vmem:[%s1034 + $0xe4] sm:$0xff]
      %v1459 = vld [vmem:[%s1034 + $0xf4] sm:$0xff]
      %v1460 = vld [vmem:[%s1034 + $0xfc] sm:$0xff]
      %v1461 = vld [vmem:[%s1034 + $0x10c] sm:$0xff]
      %v1462 = vld [vmem:[%s1034 + $0x114] sm:$0xff]
      %v1463 = vld [vmem:[%s1034 + $0x124] sm:$0xff]
      %v1464 = vld [vmem:[%s1034 + $0x12c] sm:$0xff]
      %v1465 = vld [vmem:[%s1034 + $0x13c] sm:$0xff]
      %v1466 = vld [vmem:[%s1034 + $0x144] sm:$0xff]
      %v1467 = vld [vmem:[%s1034 + $0x154] sm:$0xff]
      %v1468 = vld [vmem:[%s1034 + $0x15c] sm:$0xff]
      %v1469 = vld [vmem:[%s1034 + $0x16c] sm:$0xff]
      %v1470 = vld [vmem:[%s1034 + $0x174] sm:$0xff]
      %v1471 = vld [vmem:[%s1 + $0xb] sm:$0x1]
      %v1472 = vlaneseq
      %v1473 = vshrl.u32 %v1472, 7
      %v1474 = vsub.s32 0, %v1473
      %v1475 = vrot.slane %v1471, %v1474
      %v1476 = vmul.f32 %v1439, %v1475
      %v1477 = vmul.f32 %v1440, %v1475
      %v1478 = vmul.f32 %v1441, %v1475
      %v1479 = vmul.f32 %v1442, %v1475
      %v1480 = vmul.f32 %v1443, %v1475
      %v1481 = vmul.f32 %v1444, %v1475
      %v1482 = vmul.f32 %v1445, %v1475
      %v1483 = vmul.f32 %v1446, %v1475
      %v1484 = vmul.f32 %v1447, %v1475
      %v1485 = vmul.f32 %v1448, %v1475
      %v1486 = vmul.f32 %v1449, %v1475
      %v1487 = vmul.f32 %v1450, %v1475
      %v1488 = vmul.f32 %v1451, %v1475
      %v1489 = vmul.f32 %v1452, %v1475
      %v1490 = vmul.f32 %v1453, %v1475
      %v1491 = vmul.f32 %v1454, %v1475
      %v1492 = vmul.f32 %v1455, %v1475
      %v1493 = vmul.f32 %v1456, %v1475
      %v1494 = vmul.f32 %v1457, %v1475
      %v1495 = vmul.f32 %v1458, %v1475
      %v1496 = vmul.f32 %v1459, %v1475
      %v1497 = vmul.f32 %v1460, %v1475
      %v1498 = vmul.f32 %v1461, %v1475
      %v1499 = vmul.f32 %v1462, %v1475
      %v1500 = vmul.f32 %v1463, %v1475
      %v1501 = vmul.f32 %v1464, %v1475
      %v1502 = vmul.f32 %v1465, %v1475
      %v1503 = vmul.f32 %v1466, %v1475
      %v1504 = vmul.f32 %v1467, %v1475
      %v1505 = vmul.f32 %v1468, %v1475
      %v1506 = vmul.f32 %v1469, %v1475
      %v1507 = vmul.f32 %v1470, %v1475
      %v1508 = vadd.f32 %v1306, %v1476
      %v1509 = vadd.f32 %v1307, %v1477
      %v1510 = vadd.f32 %v1308, %v1478
      %v1511 = vadd.f32 %v1309, %v1479
      %v1512 = vadd.f32 %v1310, %v1480
      %v1513 = vadd.f32 %v1311, %v1481
      %v1514 = vadd.f32 %v1312, %v1482
      %v1515 = vadd.f32 %v1313, %v1483
      %v1516 = vadd.f32 %v1314, %v1484
      %v1517 = vadd.f32 %v1315, %v1485
      %v1518 = vadd.f32 %v1316, %v1486
      %v1519 = vadd.f32 %v1317, %v1487
      %v1520 = vadd.f32 %v1318, %v1488
      %v1521 = vadd.f32 %v1319, %v1489
      %v1522 = vadd.f32 %v1320, %v1490
      %v1523 = vadd.f32 %v1321, %v1491
      %v1524 = vadd.f32 %v1322, %v1492
      %v1525 = vadd.f32 %v1323, %v1493
      %v1526 = vadd.f32 %v1324, %v1494
      %v1527 = vadd.f32 %v1325, %v1495
      %v1528 = vadd.f32 %v1326, %v1496
      %v1529 = vadd.f32 %v1327, %v1497
      %v1530 = vadd.f32 %v1328, %v1498
      %v1531 = vadd.f32 %v1329, %v1499
      %v1532 = vadd.f32 %v1330, %v1500
      %v1533 = vadd.f32 %v1331, %v1501
      %v1534 = vadd.f32 %v1332, %v1502
      %v1535 = vadd.f32 %v1333, %v1503
      %v1536 = vadd.f32 %v1334, %v1504
      %v1537 = vadd.f32 %v1335, %v1505
      %v1538 = vadd.f32 %v1336, %v1506
      %v1539 = vadd.f32 %v1337, %v1507
      %v1540 = vld [vmem:[%s1034 + $0x5] sm:$0xff]
      %v1541 = vld [vmem:[%s1034 + $0xd] sm:$0xff]
      %v1542 = vld [vmem:[%s1034 + $0x1d] sm:$0xff]
      %v1543 = vld [vmem:[%s1034 + $0x25] sm:$0xff]
      %v1544 = vld [vmem:[%s1034 + $0x35] sm:$0xff]
      %v1545 = vld [vmem:[%s1034 + $0x3d] sm:$0xff]
      %v1546 = vld [vmem:[%s1034 + $0x4d] sm:$0xff]
      %v1547 = vld [vmem:[%s1034 + $0x55] sm:$0xff]
      %v1548 = vld [vmem:[%s1034 + $0x65] sm:$0xff]
      %v1549 = vld [vmem:[%s1034 + $0x6d] sm:$0xff]
      %v1550 = vld [vmem:[%s1034 + $0x7d] sm:$0xff]
      %v1551 = vld [vmem:[%s1034 + $0x85] sm:$0xff]
      %v1552 = vld [vmem:[%s1034 + $0x95] sm:$0xff]
      %v1553 = vld [vmem:[%s1034 + $0x9d] sm:$0xff]
      %v1554 = vld [vmem:[%s1034 + $0xad] sm:$0xff]
      %v1555 = vld [vmem:[%s1034 + $0xb5] sm:$0xff]
      %v1556 = vld [vmem:[%s1034 + $0xc5] sm:$0xff]
      %v1557 = vld [vmem:[%s1034 + $0xcd] sm:$0xff]
      %v1558 = vld [vmem:[%s1034 + $0xdd] sm:$0xff]
      %v1559 = vld [vmem:[%s1034 + $0xe5] sm:$0xff]
      %v1560 = vld [vmem:[%s1034 + $0xf5] sm:$0xff]
      %v1561 = vld [vmem:[%s1034 + $0xfd] sm:$0xff]
      %v1562 = vld [vmem:[%s1034 + $0x10d] sm:$0xff]
      %v1563 = vld [vmem:[%s1034 + $0x115] sm:$0xff]
      %v1564 = vld [vmem:[%s1034 + $0x125] sm:$0xff]
      %v1565 = vld [vmem:[%s1034 + $0x12d] sm:$0xff]
      %v1566 = vld [vmem:[%s1034 + $0x13d] sm:$0xff]
      %v1567 = vld [vmem:[%s1034 + $0x145] sm:$0xff]
      %v1568 = vld [vmem:[%s1034 + $0x155] sm:$0xff]
      %v1569 = vld [vmem:[%s1034 + $0x15d] sm:$0xff]
      %v1570 = vld [vmem:[%s1034 + $0x16d] sm:$0xff]
      %v1571 = vld [vmem:[%s1034 + $0x175] sm:$0xff]
      %v1572 = vld [vmem:[%s1 + $0xc] sm:$0x1]
      %v1573 = vlaneseq
      %v1574 = vshrl.u32 %v1573, 7
      %v1575 = vsub.s32 0, %v1574
      %v1576 = vrot.slane %v1572, %v1575
      %v1577 = vmul.f32 %v1540, %v1576
      %v1578 = vmul.f32 %v1541, %v1576
      %v1579 = vmul.f32 %v1542, %v1576
      %v1580 = vmul.f32 %v1543, %v1576
      %v1581 = vmul.f32 %v1544, %v1576
      %v1582 = vmul.f32 %v1545, %v1576
      %v1583 = vmul.f32 %v1546, %v1576
      %v1584 = vmul.f32 %v1547, %v1576
      %v1585 = vmul.f32 %v1548, %v1576
      %v1586 = vmul.f32 %v1549, %v1576
      %v1587 = vmul.f32 %v1550, %v1576
      %v1588 = vmul.f32 %v1551, %v1576
      %v1589 = vmul.f32 %v1552, %v1576
      %v1590 = vmul.f32 %v1553, %v1576
      %v1591 = vmul.f32 %v1554, %v1576
      %v1592 = vmul.f32 %v1555, %v1576
      %v1593 = vmul.f32 %v1556, %v1576
      %v1594 = vmul.f32 %v1557, %v1576
      %v1595 = vmul.f32 %v1558, %v1576
      %v1596 = vmul.f32 %v1559, %v1576
      %v1597 = vmul.f32 %v1560, %v1576
      %v1598 = vmul.f32 %v1561, %v1576
      %v1599 = vmul.f32 %v1562, %v1576
      %v1600 = vmul.f32 %v1563, %v1576
      %v1601 = vmul.f32 %v1564, %v1576
      %v1602 = vmul.f32 %v1565, %v1576
      %v1603 = vmul.f32 %v1566, %v1576
      %v1604 = vmul.f32 %v1567, %v1576
      %v1605 = vmul.f32 %v1568, %v1576
      %v1606 = vmul.f32 %v1569, %v1576
      %v1607 = vmul.f32 %v1570, %v1576
      %v1608 = vmul.f32 %v1571, %v1576
      %v1609 = vadd.f32 %v1407, %v1577
      %v1610 = vadd.f32 %v1408, %v1578
      %v1611 = vadd.f32 %v1409, %v1579
      %v1612 = vadd.f32 %v1410, %v1580
      %v1613 = vadd.f32 %v1411, %v1581
      %v1614 = vadd.f32 %v1412, %v1582
      %v1615 = vadd.f32 %v1413, %v1583
      %v1616 = vadd.f32 %v1414, %v1584
      %v1617 = vadd.f32 %v1415, %v1585
      %v1618 = vadd.f32 %v1416, %v1586
      %v1619 = vadd.f32 %v1417, %v1587
      %v1620 = vadd.f32 %v1418, %v1588
      %v1621 = vadd.f32 %v1419, %v1589
      %v1622 = vadd.f32 %v1420, %v1590
      %v1623 = vadd.f32 %v1421, %v1591
      %v1624 = vadd.f32 %v1422, %v1592
      %v1625 = vadd.f32 %v1423, %v1593
      %v1626 = vadd.f32 %v1424, %v1594
      %v1627 = vadd.f32 %v1425, %v1595
      %v1628 = vadd.f32 %v1426, %v1596
      %v1629 = vadd.f32 %v1427, %v1597
      %v1630 = vadd.f32 %v1428, %v1598
      %v1631 = vadd.f32 %v1429, %v1599
      %v1632 = vadd.f32 %v1430, %v1600
      %v1633 = vadd.f32 %v1431, %v1601
      %v1634 = vadd.f32 %v1432, %v1602
      %v1635 = vadd.f32 %v1433, %v1603
      %v1636 = vadd.f32 %v1434, %v1604
      %v1637 = vadd.f32 %v1435, %v1605
      %v1638 = vadd.f32 %v1436, %v1606
      %v1639 = vadd.f32 %v1437, %v1607
      %v1640 = vadd.f32 %v1438, %v1608
      %v1641 = vld [vmem:[%s1034 + $0x6] sm:$0xff]
      %v1642 = vld [vmem:[%s1034 + $0xe] sm:$0xff]
      %v1643 = vld [vmem:[%s1034 + $0x1e] sm:$0xff]
      %v1644 = vld [vmem:[%s1034 + $0x26] sm:$0xff]
      %v1645 = vld [vmem:[%s1034 + $0x36] sm:$0xff]
      %v1646 = vld [vmem:[%s1034 + $0x3e] sm:$0xff]
      %v1647 = vld [vmem:[%s1034 + $0x4e] sm:$0xff]
      %v1648 = vld [vmem:[%s1034 + $0x56] sm:$0xff]
      %v1649 = vld [vmem:[%s1034 + $0x66] sm:$0xff]
      %v1650 = vld [vmem:[%s1034 + $0x6e] sm:$0xff]
      %v1651 = vld [vmem:[%s1034 + $0x7e] sm:$0xff]
      %v1652 = vld [vmem:[%s1034 + $0x86] sm:$0xff]
      %v1653 = vld [vmem:[%s1034 + $0x96] sm:$0xff]
      %v1654 = vld [vmem:[%s1034 + $0x9e] sm:$0xff]
      %v1655 = vld [vmem:[%s1034 + $0xae] sm:$0xff]
      %v1656 = vld [vmem:[%s1034 + $0xb6] sm:$0xff]
      %v1657 = vld [vmem:[%s1034 + $0xc6] sm:$0xff]
      %v1658 = vld [vmem:[%s1034 + $0xce] sm:$0xff]
      %v1659 = vld [vmem:[%s1034 + $0xde] sm:$0xff]
      %v1660 = vld [vmem:[%s1034 + $0xe6] sm:$0xff]
      %v1661 = vld [vmem:[%s1034 + $0xf6] sm:$0xff]
      %v1662 = vld [vmem:[%s1034 + $0xfe] sm:$0xff]
      %v1663 = vld [vmem:[%s1034 + $0x10e] sm:$0xff]
      %v1664 = vld [vmem:[%s1034 + $0x116] sm:$0xff]
      %v1665 = vld [vmem:[%s1034 + $0x126] sm:$0xff]
      %v1666 = vld [vmem:[%s1034 + $0x12e] sm:$0xff]
      %v1667 = vld [vmem:[%s1034 + $0x13e] sm:$0xff]
      %v1668 = vld [vmem:[%s1034 + $0x146] sm:$0xff]
      %v1669 = vld [vmem:[%s1034 + $0x156] sm:$0xff]
      %v1670 = vld [vmem:[%s1034 + $0x15e] sm:$0xff]
      %v1671 = vld [vmem:[%s1034 + $0x16e] sm:$0xff]
      %v1672 = vld [vmem:[%s1034 + $0x176] sm:$0xff]
      %v1673 = vld [vmem:[%s1 + $0xd] sm:$0x1]
      %v1674 = vlaneseq
      %v1675 = vshrl.u32 %v1674, 7
      %v1676 = vsub.s32 0, %v1675
      %v1677 = vrot.slane %v1673, %v1676
      %v1678 = vmul.f32 %v1641, %v1677
      %v1679 = vmul.f32 %v1642, %v1677
      %v1680 = vmul.f32 %v1643, %v1677
      %v1681 = vmul.f32 %v1644, %v1677
      %v1682 = vmul.f32 %v1645, %v1677
      %v1683 = vmul.f32 %v1646, %v1677
      %v1684 = vmul.f32 %v1647, %v1677
      %v1685 = vmul.f32 %v1648, %v1677
      %v1686 = vmul.f32 %v1649, %v1677
      %v1687 = vmul.f32 %v1650, %v1677
      %v1688 = vmul.f32 %v1651, %v1677
      %v1689 = vmul.f32 %v1652, %v1677
      %v1690 = vmul.f32 %v1653, %v1677
      %v1691 = vmul.f32 %v1654, %v1677
      %v1692 = vmul.f32 %v1655, %v1677
      %v1693 = vmul.f32 %v1656, %v1677
      %v1694 = vmul.f32 %v1657, %v1677
      %v1695 = vmul.f32 %v1658, %v1677
      %v1696 = vmul.f32 %v1659, %v1677
      %v1697 = vmul.f32 %v1660, %v1677
      %v1698 = vmul.f32 %v1661, %v1677
      %v1699 = vmul.f32 %v1662, %v1677
      %v1700 = vmul.f32 %v1663, %v1677
      %v1701 = vmul.f32 %v1664, %v1677
      %v1702 = vmul.f32 %v1665, %v1677
      %v1703 = vmul.f32 %v1666, %v1677
      %v1704 = vmul.f32 %v1667, %v1677
      %v1705 = vmul.f32 %v1668, %v1677
      %v1706 = vmul.f32 %v1669, %v1677
      %v1707 = vmul.f32 %v1670, %v1677
      %v1708 = vmul.f32 %v1671, %v1677
      %v1709 = vmul.f32 %v1672, %v1677
      %v1710 = vadd.f32 %v1508, %v1678
      %v1711 = vadd.f32 %v1509, %v1679
      %v1712 = vadd.f32 %v1510, %v1680
      %v1713 = vadd.f32 %v1511, %v1681
      %v1714 = vadd.f32 %v1512, %v1682
      %v1715 = vadd.f32 %v1513, %v1683
      %v1716 = vadd.f32 %v1514, %v1684
      %v1717 = vadd.f32 %v1515, %v1685
      %v1718 = vadd.f32 %v1516, %v1686
      %v1719 = vadd.f32 %v1517, %v1687
      %v1720 = vadd.f32 %v1518, %v1688
      %v1721 = vadd.f32 %v1519, %v1689
      %v1722 = vadd.f32 %v1520, %v1690
      %v1723 = vadd.f32 %v1521, %v1691
      %v1724 = vadd.f32 %v1522, %v1692
      %v1725 = vadd.f32 %v1523, %v1693
      %v1726 = vadd.f32 %v1524, %v1694
      %v1727 = vadd.f32 %v1525, %v1695
      %v1728 = vadd.f32 %v1526, %v1696
      %v1729 = vadd.f32 %v1527, %v1697
      %v1730 = vadd.f32 %v1528, %v1698
      %v1731 = vadd.f32 %v1529, %v1699
      %v1732 = vadd.f32 %v1530, %v1700
      %v1733 = vadd.f32 %v1531, %v1701
      %v1734 = vadd.f32 %v1532, %v1702
      %v1735 = vadd.f32 %v1533, %v1703
      %v1736 = vadd.f32 %v1534, %v1704
      %v1737 = vadd.f32 %v1535, %v1705
      %v1738 = vadd.f32 %v1536, %v1706
      %v1739 = vadd.f32 %v1537, %v1707
      %v1740 = vadd.f32 %v1538, %v1708
      %v1741 = vadd.f32 %v1539, %v1709
      %s1742 = sadd.s32 %s386, 2
      %s1743 = smul.u32 %s1742, 24
      %s1744 = scalar_lea.vmem %s373, %s1743
      %v1745 = vld [vmem:[%s1744] sm:$0xff]
      %v1746 = vld [vmem:[%s1744 + $0x8] sm:$0xff]
      %v1747 = vld [vmem:[%s1744 + $0x18] sm:$0xff]
      %v1748 = vld [vmem:[%s1744 + $0x20] sm:$0xff]
      %v1749 = vld [vmem:[%s1744 + $0x30] sm:$0xff]
      %v1750 = vld [vmem:[%s1744 + $0x38] sm:$0xff]
      %v1751 = vld [vmem:[%s1744 + $0x48] sm:$0xff]
      %v1752 = vld [vmem:[%s1744 + $0x50] sm:$0xff]
      %v1753 = vld [vmem:[%s1744 + $0x60] sm:$0xff]
      %v1754 = vld [vmem:[%s1744 + $0x68] sm:$0xff]
      %v1755 = vld [vmem:[%s1744 + $0x78] sm:$0xff]
      %v1756 = vld [vmem:[%s1744 + $0x80] sm:$0xff]
      %v1757 = vld [vmem:[%s1744 + $0x90] sm:$0xff]
      %v1758 = vld [vmem:[%s1744 + $0x98] sm:$0xff]
      %v1759 = vld [vmem:[%s1744 + $0xa8] sm:$0xff]
      %v1760 = vld [vmem:[%s1744 + $0xb0] sm:$0xff]
      %v1761 = vld [vmem:[%s1744 + $0xc0] sm:$0xff]
      %v1762 = vld [vmem:[%s1744 + $0xc8] sm:$0xff]
      %v1763 = vld [vmem:[%s1744 + $0xd8] sm:$0xff]
      %v1764 = vld [vmem:[%s1744 + $0xe0] sm:$0xff]
      %v1765 = vld [vmem:[%s1744 + $0xf0] sm:$0xff]
      %v1766 = vld [vmem:[%s1744 + $0xf8] sm:$0xff]
      %v1767 = vld [vmem:[%s1744 + $0x108] sm:$0xff]
      %v1768 = vld [vmem:[%s1744 + $0x110] sm:$0xff]
      %v1769 = vld [vmem:[%s1744 + $0x120] sm:$0xff]
      %v1770 = vld [vmem:[%s1744 + $0x128] sm:$0xff]
      %v1771 = vld [vmem:[%s1744 + $0x138] sm:$0xff]
      %v1772 = vld [vmem:[%s1744 + $0x140] sm:$0xff]
      %v1773 = vld [vmem:[%s1744 + $0x150] sm:$0xff]
      %v1774 = vld [vmem:[%s1744 + $0x158] sm:$0xff]
      %v1775 = vld [vmem:[%s1744 + $0x168] sm:$0xff]
      %v1776 = vld [vmem:[%s1744 + $0x170] sm:$0xff]
      %v1777 = vld [vmem:[%s1 + $0xe] sm:$0x1]
      %v1778 = vlaneseq
      %v1779 = vshrl.u32 %v1778, 7
      %v1780 = vsub.s32 0, %v1779
      %v1781 = vrot.slane %v1777, %v1780
      %v1782 = vmul.f32 %v1745, %v1781
      %v1783 = vmul.f32 %v1746, %v1781
      %v1784 = vmul.f32 %v1747, %v1781
      %v1785 = vmul.f32 %v1748, %v1781
      %v1786 = vmul.f32 %v1749, %v1781
      %v1787 = vmul.f32 %v1750, %v1781
      %v1788 = vmul.f32 %v1751, %v1781
      %v1789 = vmul.f32 %v1752, %v1781
      %v1790 = vmul.f32 %v1753, %v1781
      %v1791 = vmul.f32 %v1754, %v1781
      %v1792 = vmul.f32 %v1755, %v1781
      %v1793 = vmul.f32 %v1756, %v1781
      %v1794 = vmul.f32 %v1757, %v1781
      %v1795 = vmul.f32 %v1758, %v1781
      %v1796 = vmul.f32 %v1759, %v1781
      %v1797 = vmul.f32 %v1760, %v1781
      %v1798 = vmul.f32 %v1761, %v1781
      %v1799 = vmul.f32 %v1762, %v1781
      %v1800 = vmul.f32 %v1763, %v1781
      %v1801 = vmul.f32 %v1764, %v1781
      %v1802 = vmul.f32 %v1765, %v1781
      %v1803 = vmul.f32 %v1766, %v1781
      %v1804 = vmul.f32 %v1767, %v1781
      %v1805 = vmul.f32 %v1768, %v1781
      %v1806 = vmul.f32 %v1769, %v1781
      %v1807 = vmul.f32 %v1770, %v1781
      %v1808 = vmul.f32 %v1771, %v1781
      %v1809 = vmul.f32 %v1772, %v1781
      %v1810 = vmul.f32 %v1773, %v1781
      %v1811 = vmul.f32 %v1774, %v1781
      %v1812 = vmul.f32 %v1775, %v1781
      %v1813 = vmul.f32 %v1776, %v1781
      %v1814 = vadd.f32 %v1609, %v1782
      %v1815 = vadd.f32 %v1610, %v1783
      %v1816 = vadd.f32 %v1611, %v1784
      %v1817 = vadd.f32 %v1612, %v1785
      %v1818 = vadd.f32 %v1613, %v1786
      %v1819 = vadd.f32 %v1614, %v1787
      %v1820 = vadd.f32 %v1615, %v1788
      %v1821 = vadd.f32 %v1616, %v1789
      %v1822 = vadd.f32 %v1617, %v1790
      %v1823 = vadd.f32 %v1618, %v1791
      %v1824 = vadd.f32 %v1619, %v1792
      %v1825 = vadd.f32 %v1620, %v1793
      %v1826 = vadd.f32 %v1621, %v1794
      %v1827 = vadd.f32 %v1622, %v1795
      %v1828 = vadd.f32 %v1623, %v1796
      %v1829 = vadd.f32 %v1624, %v1797
      %v1830 = vadd.f32 %v1625, %v1798
      %v1831 = vadd.f32 %v1626, %v1799
      %v1832 = vadd.f32 %v1627, %v1800
      %v1833 = vadd.f32 %v1628, %v1801
      %v1834 = vadd.f32 %v1629, %v1802
      %v1835 = vadd.f32 %v1630, %v1803
      %v1836 = vadd.f32 %v1631, %v1804
      %v1837 = vadd.f32 %v1632, %v1805
      %v1838 = vadd.f32 %v1633, %v1806
      %v1839 = vadd.f32 %v1634, %v1807
      %v1840 = vadd.f32 %v1635, %v1808
      %v1841 = vadd.f32 %v1636, %v1809
      %v1842 = vadd.f32 %v1637, %v1810
      %v1843 = vadd.f32 %v1638, %v1811
      %v1844 = vadd.f32 %v1639, %v1812
      %v1845 = vadd.f32 %v1640, %v1813
      %v1846 = vld [vmem:[%s1744 + $0x1] sm:$0xff]
      %v1847 = vld [vmem:[%s1744 + $0x9] sm:$0xff]
      %v1848 = vld [vmem:[%s1744 + $0x19] sm:$0xff]
      %v1849 = vld [vmem:[%s1744 + $0x21] sm:$0xff]
      %v1850 = vld [vmem:[%s1744 + $0x31] sm:$0xff]
      %v1851 = vld [vmem:[%s1744 + $0x39] sm:$0xff]
      %v1852 = vld [vmem:[%s1744 + $0x49] sm:$0xff]
      %v1853 = vld [vmem:[%s1744 + $0x51] sm:$0xff]
      %v1854 = vld [vmem:[%s1744 + $0x61] sm:$0xff]
      %v1855 = vld [vmem:[%s1744 + $0x69] sm:$0xff]
      %v1856 = vld [vmem:[%s1744 + $0x79] sm:$0xff]
      %v1857 = vld [vmem:[%s1744 + $0x81] sm:$0xff]
      %v1858 = vld [vmem:[%s1744 + $0x91] sm:$0xff]
      %v1859 = vld [vmem:[%s1744 + $0x99] sm:$0xff]
      %v1860 = vld [vmem:[%s1744 + $0xa9] sm:$0xff]
      %v1861 = vld [vmem:[%s1744 + $0xb1] sm:$0xff]
      %v1862 = vld [vmem:[%s1744 + $0xc1] sm:$0xff]
      %v1863 = vld [vmem:[%s1744 + $0xc9] sm:$0xff]
      %v1864 = vld [vmem:[%s1744 + $0xd9] sm:$0xff]
      %v1865 = vld [vmem:[%s1744 + $0xe1] sm:$0xff]
      %v1866 = vld [vmem:[%s1744 + $0xf1] sm:$0xff]
      %v1867 = vld [vmem:[%s1744 + $0xf9] sm:$0xff]
      %v1868 = vld [vmem:[%s1744 + $0x109] sm:$0xff]
      %v1869 = vld [vmem:[%s1744 + $0x111] sm:$0xff]
      %v1870 = vld [vmem:[%s1744 + $0x121] sm:$0xff]
      %v1871 = vld [vmem:[%s1744 + $0x129] sm:$0xff]
      %v1872 = vld [vmem:[%s1744 + $0x139] sm:$0xff]
      %v1873 = vld [vmem:[%s1744 + $0x141] sm:$0xff]
      %v1874 = vld [vmem:[%s1744 + $0x151] sm:$0xff]
      %v1875 = vld [vmem:[%s1744 + $0x159] sm:$0xff]
      %v1876 = vld [vmem:[%s1744 + $0x169] sm:$0xff]
      %v1877 = vld [vmem:[%s1744 + $0x171] sm:$0xff]
      %v1878 = vld [vmem:[%s1 + $0xf] sm:$0x1]
      %v1879 = vlaneseq
      %v1880 = vshrl.u32 %v1879, 7
      %v1881 = vsub.s32 0, %v1880
      %v1882 = vrot.slane %v1878, %v1881
      %v1883 = vmul.f32 %v1846, %v1882
      %v1884 = vmul.f32 %v1847, %v1882
      %v1885 = vmul.f32 %v1848, %v1882
      %v1886 = vmul.f32 %v1849, %v1882
      %v1887 = vmul.f32 %v1850, %v1882
      %v1888 = vmul.f32 %v1851, %v1882
      %v1889 = vmul.f32 %v1852, %v1882
      %v1890 = vmul.f32 %v1853, %v1882
      %v1891 = vmul.f32 %v1854, %v1882
      %v1892 = vmul.f32 %v1855, %v1882
      %v1893 = vmul.f32 %v1856, %v1882
      %v1894 = vmul.f32 %v1857, %v1882
      %v1895 = vmul.f32 %v1858, %v1882
      %v1896 = vmul.f32 %v1859, %v1882
      %v1897 = vmul.f32 %v1860, %v1882
      %v1898 = vmul.f32 %v1861, %v1882
      %v1899 = vmul.f32 %v1862, %v1882
      %v1900 = vmul.f32 %v1863, %v1882
      %v1901 = vmul.f32 %v1864, %v1882
      %v1902 = vmul.f32 %v1865, %v1882
      %v1903 = vmul.f32 %v1866, %v1882
      %v1904 = vmul.f32 %v1867, %v1882
      %v1905 = vmul.f32 %v1868, %v1882
      %v1906 = vmul.f32 %v1869, %v1882
      %v1907 = vmul.f32 %v1870, %v1882
      %v1908 = vmul.f32 %v1871, %v1882
      %v1909 = vmul.f32 %v1872, %v1882
      %v1910 = vmul.f32 %v1873, %v1882
      %v1911 = vmul.f32 %v1874, %v1882
      %v1912 = vmul.f32 %v1875, %v1882
      %v1913 = vmul.f32 %v1876, %v1882
      %v1914 = vmul.f32 %v1877, %v1882
      %v1915 = vadd.f32 %v1710, %v1883
      %v1916 = vadd.f32 %v1711, %v1884
      %v1917 = vadd.f32 %v1712, %v1885
      %v1918 = vadd.f32 %v1713, %v1886
      %v1919 = vadd.f32 %v1714, %v1887
      %v1920 = vadd.f32 %v1715, %v1888
      %v1921 = vadd.f32 %v1716, %v1889
      %v1922 = vadd.f32 %v1717, %v1890
      %v1923 = vadd.f32 %v1718, %v1891
      %v1924 = vadd.f32 %v1719, %v1892
      %v1925 = vadd.f32 %v1720, %v1893
      %v1926 = vadd.f32 %v1721, %v1894
      %v1927 = vadd.f32 %v1722, %v1895
      %v1928 = vadd.f32 %v1723, %v1896
      %v1929 = vadd.f32 %v1724, %v1897
      %v1930 = vadd.f32 %v1725, %v1898
      %v1931 = vadd.f32 %v1726, %v1899
      %v1932 = vadd.f32 %v1727, %v1900
      %v1933 = vadd.f32 %v1728, %v1901
      %v1934 = vadd.f32 %v1729, %v1902
      %v1935 = vadd.f32 %v1730, %v1903
      %v1936 = vadd.f32 %v1731, %v1904
      %v1937 = vadd.f32 %v1732, %v1905
      %v1938 = vadd.f32 %v1733, %v1906
      %v1939 = vadd.f32 %v1734, %v1907
      %v1940 = vadd.f32 %v1735, %v1908
      %v1941 = vadd.f32 %v1736, %v1909
      %v1942 = vadd.f32 %v1737, %v1910
      %v1943 = vadd.f32 %v1738, %v1911
      %v1944 = vadd.f32 %v1739, %v1912
      %v1945 = vadd.f32 %v1740, %v1913
      %v1946 = vadd.f32 %v1741, %v1914
      %v1947 = vld [vmem:[%s1744 + $0x2] sm:$0xff]
      %v1948 = vld [vmem:[%s1744 + $0xa] sm:$0xff]
      %v1949 = vld [vmem:[%s1744 + $0x1a] sm:$0xff]
      %v1950 = vld [vmem:[%s1744 + $0x22] sm:$0xff]
      %v1951 = vld [vmem:[%s1744 + $0x32] sm:$0xff]
      %v1952 = vld [vmem:[%s1744 + $0x3a] sm:$0xff]
      %v1953 = vld [vmem:[%s1744 + $0x4a] sm:$0xff]
      %v1954 = vld [vmem:[%s1744 + $0x52] sm:$0xff]
      %v1955 = vld [vmem:[%s1744 + $0x62] sm:$0xff]
      %v1956 = vld [vmem:[%s1744 + $0x6a] sm:$0xff]
      %v1957 = vld [vmem:[%s1744 + $0x7a] sm:$0xff]
      %v1958 = vld [vmem:[%s1744 + $0x82] sm:$0xff]
      %v1959 = vld [vmem:[%s1744 + $0x92] sm:$0xff]
      %v1960 = vld [vmem:[%s1744 + $0x9a] sm:$0xff]
      %v1961 = vld [vmem:[%s1744 + $0xaa] sm:$0xff]
      %v1962 = vld [vmem:[%s1744 + $0xb2] sm:$0xff]
      %v1963 = vld [vmem:[%s1744 + $0xc2] sm:$0xff]
      %v1964 = vld [vmem:[%s1744 + $0xca] sm:$0xff]
      %v1965 = vld [vmem:[%s1744 + $0xda] sm:$0xff]
      %v1966 = vld [vmem:[%s1744 + $0xe2] sm:$0xff]
      %v1967 = vld [vmem:[%s1744 + $0xf2] sm:$0xff]
      %v1968 = vld [vmem:[%s1744 + $0xfa] sm:$0xff]
      %v1969 = vld [vmem:[%s1744 + $0x10a] sm:$0xff]
      %v1970 = vld [vmem:[%s1744 + $0x112] sm:$0xff]
      %v1971 = vld [vmem:[%s1744 + $0x122] sm:$0xff]
      %v1972 = vld [vmem:[%s1744 + $0x12a] sm:$0xff]
      %v1973 = vld [vmem:[%s1744 + $0x13a] sm:$0xff]
      %v1974 = vld [vmem:[%s1744 + $0x142] sm:$0xff]
      %v1975 = vld [vmem:[%s1744 + $0x152] sm:$0xff]
      %v1976 = vld [vmem:[%s1744 + $0x15a] sm:$0xff]
      %v1977 = vld [vmem:[%s1744 + $0x16a] sm:$0xff]
      %v1978 = vld [vmem:[%s1744 + $0x172] sm:$0xff]
      %v1979 = vld [vmem:[%s1 + $0x10] sm:$0x1]
      %v1980 = vlaneseq
      %v1981 = vshrl.u32 %v1980, 7
      %v1982 = vsub.s32 0, %v1981
      %v1983 = vrot.slane %v1979, %v1982
      %v1984 = vmul.f32 %v1947, %v1983
      %v1985 = vmul.f32 %v1948, %v1983
      %v1986 = vmul.f32 %v1949, %v1983
      %v1987 = vmul.f32 %v1950, %v1983
      %v1988 = vmul.f32 %v1951, %v1983
      %v1989 = vmul.f32 %v1952, %v1983
      %v1990 = vmul.f32 %v1953, %v1983
      %v1991 = vmul.f32 %v1954, %v1983
      %v1992 = vmul.f32 %v1955, %v1983
      %v1993 = vmul.f32 %v1956, %v1983
      %v1994 = vmul.f32 %v1957, %v1983
      %v1995 = vmul.f32 %v1958, %v1983
      %v1996 = vmul.f32 %v1959, %v1983
      %v1997 = vmul.f32 %v1960, %v1983
      %v1998 = vmul.f32 %v1961, %v1983
      %v1999 = vmul.f32 %v1962, %v1983
      %v2000 = vmul.f32 %v1963, %v1983
      %v2001 = vmul.f32 %v1964, %v1983
      %v2002 = vmul.f32 %v1965, %v1983
      %v2003 = vmul.f32 %v1966, %v1983
      %v2004 = vmul.f32 %v1967, %v1983
      %v2005 = vmul.f32 %v1968, %v1983
      %v2006 = vmul.f32 %v1969, %v1983
      %v2007 = vmul.f32 %v1970, %v1983
      %v2008 = vmul.f32 %v1971, %v1983
      %v2009 = vmul.f32 %v1972, %v1983
      %v2010 = vmul.f32 %v1973, %v1983
      %v2011 = vmul.f32 %v1974, %v1983
      %v2012 = vmul.f32 %v1975, %v1983
      %v2013 = vmul.f32 %v1976, %v1983
      %v2014 = vmul.f32 %v1977, %v1983
      %v2015 = vmul.f32 %v1978, %v1983
      %v2016 = vadd.f32 %v1814, %v1984
      %v2017 = vadd.f32 %v1815, %v1985
      %v2018 = vadd.f32 %v1816, %v1986
      %v2019 = vadd.f32 %v1817, %v1987
      %v2020 = vadd.f32 %v1818, %v1988
      %v2021 = vadd.f32 %v1819, %v1989
      %v2022 = vadd.f32 %v1820, %v1990
      %v2023 = vadd.f32 %v1821, %v1991
      %v2024 = vadd.f32 %v1822, %v1992
      %v2025 = vadd.f32 %v1823, %v1993
      %v2026 = vadd.f32 %v1824, %v1994
      %v2027 = vadd.f32 %v1825, %v1995
      %v2028 = vadd.f32 %v1826, %v1996
      %v2029 = vadd.f32 %v1827, %v1997
      %v2030 = vadd.f32 %v1828, %v1998
      %v2031 = vadd.f32 %v1829, %v1999
      %v2032 = vadd.f32 %v1830, %v2000
      %v2033 = vadd.f32 %v1831, %v2001
      %v2034 = vadd.f32 %v1832, %v2002
      %v2035 = vadd.f32 %v1833, %v2003
      %v2036 = vadd.f32 %v1834, %v2004
      %v2037 = vadd.f32 %v1835, %v2005
      %v2038 = vadd.f32 %v1836, %v2006
      %v2039 = vadd.f32 %v1837, %v2007
      %v2040 = vadd.f32 %v1838, %v2008
      %v2041 = vadd.f32 %v1839, %v2009
      %v2042 = vadd.f32 %v1840, %v2010
      %v2043 = vadd.f32 %v1841, %v2011
      %v2044 = vadd.f32 %v1842, %v2012
      %v2045 = vadd.f32 %v1843, %v2013
      %v2046 = vadd.f32 %v1844, %v2014
      %v2047 = vadd.f32 %v1845, %v2015
      %v2048 = vld [vmem:[%s1744 + $0x3] sm:$0xff]
      %v2049 = vld [vmem:[%s1744 + $0xb] sm:$0xff]
      %v2050 = vld [vmem:[%s1744 + $0x1b] sm:$0xff]
      %v2051 = vld [vmem:[%s1744 + $0x23] sm:$0xff]
      %v2052 = vld [vmem:[%s1744 + $0x33] sm:$0xff]
      %v2053 = vld [vmem:[%s1744 + $0x3b] sm:$0xff]
      %v2054 = vld [vmem:[%s1744 + $0x4b] sm:$0xff]
      %v2055 = vld [vmem:[%s1744 + $0x53] sm:$0xff]
      %v2056 = vld [vmem:[%s1744 + $0x63] sm:$0xff]
      %v2057 = vld [vmem:[%s1744 + $0x6b] sm:$0xff]
      %v2058 = vld [vmem:[%s1744 + $0x7b] sm:$0xff]
      %v2059 = vld [vmem:[%s1744 + $0x83] sm:$0xff]
      %v2060 = vld [vmem:[%s1744 + $0x93] sm:$0xff]
      %v2061 = vld [vmem:[%s1744 + $0x9b] sm:$0xff]
      %v2062 = vld [vmem:[%s1744 + $0xab] sm:$0xff]
      %v2063 = vld [vmem:[%s1744 + $0xb3] sm:$0xff]
      %v2064 = vld [vmem:[%s1744 + $0xc3] sm:$0xff]
      %v2065 = vld [vmem:[%s1744 + $0xcb] sm:$0xff]
      %v2066 = vld [vmem:[%s1744 + $0xdb] sm:$0xff]
      %v2067 = vld [vmem:[%s1744 + $0xe3] sm:$0xff]
      %v2068 = vld [vmem:[%s1744 + $0xf3] sm:$0xff]
      %v2069 = vld [vmem:[%s1744 + $0xfb] sm:$0xff]
      %v2070 = vld [vmem:[%s1744 + $0x10b] sm:$0xff]
      %v2071 = vld [vmem:[%s1744 + $0x113] sm:$0xff]
      %v2072 = vld [vmem:[%s1744 + $0x123] sm:$0xff]
      %v2073 = vld [vmem:[%s1744 + $0x12b] sm:$0xff]
      %v2074 = vld [vmem:[%s1744 + $0x13b] sm:$0xff]
      %v2075 = vld [vmem:[%s1744 + $0x143] sm:$0xff]
      %v2076 = vld [vmem:[%s1744 + $0x153] sm:$0xff]
      %v2077 = vld [vmem:[%s1744 + $0x15b] sm:$0xff]
      %v2078 = vld [vmem:[%s1744 + $0x16b] sm:$0xff]
      %v2079 = vld [vmem:[%s1744 + $0x173] sm:$0xff]
      %v2080 = vld [vmem:[%s1 + $0x11] sm:$0x1]
      %v2081 = vlaneseq
      %v2082 = vshrl.u32 %v2081, 7
      %v2083 = vsub.s32 0, %v2082
      %v2084 = vrot.slane %v2080, %v2083
      %v2085 = vmul.f32 %v2048, %v2084
      %v2086 = vmul.f32 %v2049, %v2084
      %v2087 = vmul.f32 %v2050, %v2084
      %v2088 = vmul.f32 %v2051, %v2084
      %v2089 = vmul.f32 %v2052, %v2084
      %v2090 = vmul.f32 %v2053, %v2084
      %v2091 = vmul.f32 %v2054, %v2084
      %v2092 = vmul.f32 %v2055, %v2084
      %v2093 = vmul.f32 %v2056, %v2084
      %v2094 = vmul.f32 %v2057, %v2084
      %v2095 = vmul.f32 %v2058, %v2084
      %v2096 = vmul.f32 %v2059, %v2084
      %v2097 = vmul.f32 %v2060, %v2084
      %v2098 = vmul.f32 %v2061, %v2084
      %v2099 = vmul.f32 %v2062, %v2084
      %v2100 = vmul.f32 %v2063, %v2084
      %v2101 = vmul.f32 %v2064, %v2084
      %v2102 = vmul.f32 %v2065, %v2084
      %v2103 = vmul.f32 %v2066, %v2084
      %v2104 = vmul.f32 %v2067, %v2084
      %v2105 = vmul.f32 %v2068, %v2084
      %v2106 = vmul.f32 %v2069, %v2084
      %v2107 = vmul.f32 %v2070, %v2084
      %v2108 = vmul.f32 %v2071, %v2084
      %v2109 = vmul.f32 %v2072, %v2084
      %v2110 = vmul.f32 %v2073, %v2084
      %v2111 = vmul.f32 %v2074, %v2084
      %v2112 = vmul.f32 %v2075, %v2084
      %v2113 = vmul.f32 %v2076, %v2084
      %v2114 = vmul.f32 %v2077, %v2084
      %v2115 = vmul.f32 %v2078, %v2084
      %v2116 = vmul.f32 %v2079, %v2084
      %v2117 = vadd.f32 %v1915, %v2085
      %v2118 = vadd.f32 %v1916, %v2086
      %v2119 = vadd.f32 %v1917, %v2087
      %v2120 = vadd.f32 %v1918, %v2088
      %v2121 = vadd.f32 %v1919, %v2089
      %v2122 = vadd.f32 %v1920, %v2090
      %v2123 = vadd.f32 %v1921, %v2091
      %v2124 = vadd.f32 %v1922, %v2092
      %v2125 = vadd.f32 %v1923, %v2093
      %v2126 = vadd.f32 %v1924, %v2094
      %v2127 = vadd.f32 %v1925, %v2095
      %v2128 = vadd.f32 %v1926, %v2096
      %v2129 = vadd.f32 %v1927, %v2097
      %v2130 = vadd.f32 %v1928, %v2098
      %v2131 = vadd.f32 %v1929, %v2099
      %v2132 = vadd.f32 %v1930, %v2100
      %v2133 = vadd.f32 %v1931, %v2101
      %v2134 = vadd.f32 %v1932, %v2102
      %v2135 = vadd.f32 %v1933, %v2103
      %v2136 = vadd.f32 %v1934, %v2104
      %v2137 = vadd.f32 %v1935, %v2105
      %v2138 = vadd.f32 %v1936, %v2106
      %v2139 = vadd.f32 %v1937, %v2107
      %v2140 = vadd.f32 %v1938, %v2108
      %v2141 = vadd.f32 %v1939, %v2109
      %v2142 = vadd.f32 %v1940, %v2110
      %v2143 = vadd.f32 %v1941, %v2111
      %v2144 = vadd.f32 %v1942, %v2112
      %v2145 = vadd.f32 %v1943, %v2113
      %v2146 = vadd.f32 %v1944, %v2114
      %v2147 = vadd.f32 %v1945, %v2115
      %v2148 = vadd.f32 %v1946, %v2116
      %v2149 = vld [vmem:[%s1744 + $0x4] sm:$0xff]
      %v2150 = vld [vmem:[%s1744 + $0xc] sm:$0xff]
      %v2151 = vld [vmem:[%s1744 + $0x1c] sm:$0xff]
      %v2152 = vld [vmem:[%s1744 + $0x24] sm:$0xff]
      %v2153 = vld [vmem:[%s1744 + $0x34] sm:$0xff]
      %v2154 = vld [vmem:[%s1744 + $0x3c] sm:$0xff]
      %v2155 = vld [vmem:[%s1744 + $0x4c] sm:$0xff]
      %v2156 = vld [vmem:[%s1744 + $0x54] sm:$0xff]
      %v2157 = vld [vmem:[%s1744 + $0x64] sm:$0xff]
      %v2158 = vld [vmem:[%s1744 + $0x6c] sm:$0xff]
      %v2159 = vld [vmem:[%s1744 + $0x7c] sm:$0xff]
      %v2160 = vld [vmem:[%s1744 + $0x84] sm:$0xff]
      %v2161 = vld [vmem:[%s1744 + $0x94] sm:$0xff]
      %v2162 = vld [vmem:[%s1744 + $0x9c] sm:$0xff]
      %v2163 = vld [vmem:[%s1744 + $0xac] sm:$0xff]
      %v2164 = vld [vmem:[%s1744 + $0xb4] sm:$0xff]
      %v2165 = vld [vmem:[%s1744 + $0xc4] sm:$0xff]
      %v2166 = vld [vmem:[%s1744 + $0xcc] sm:$0xff]
      %v2167 = vld [vmem:[%s1744 + $0xdc] sm:$0xff]
      %v2168 = vld [vmem:[%s1744 + $0xe4] sm:$0xff]
      %v2169 = vld [vmem:[%s1744 + $0xf4] sm:$0xff]
      %v2170 = vld [vmem:[%s1744 + $0xfc] sm:$0xff]
      %v2171 = vld [vmem:[%s1744 + $0x10c] sm:$0xff]
      %v2172 = vld [vmem:[%s1744 + $0x114] sm:$0xff]
      %v2173 = vld [vmem:[%s1744 + $0x124] sm:$0xff]
      %v2174 = vld [vmem:[%s1744 + $0x12c] sm:$0xff]
      %v2175 = vld [vmem:[%s1744 + $0x13c] sm:$0xff]
      %v2176 = vld [vmem:[%s1744 + $0x144] sm:$0xff]
      %v2177 = vld [vmem:[%s1744 + $0x154] sm:$0xff]
      %v2178 = vld [vmem:[%s1744 + $0x15c] sm:$0xff]
      %v2179 = vld [vmem:[%s1744 + $0x16c] sm:$0xff]
      %v2180 = vld [vmem:[%s1744 + $0x174] sm:$0xff]
      %v2181 = vld [vmem:[%s1 + $0x12] sm:$0x1]
      %v2182 = vlaneseq
      %v2183 = vshrl.u32 %v2182, 7
      %v2184 = vsub.s32 0, %v2183
      %v2185 = vrot.slane %v2181, %v2184
      %v2186 = vmul.f32 %v2149, %v2185
      %v2187 = vmul.f32 %v2150, %v2185
      %v2188 = vmul.f32 %v2151, %v2185
      %v2189 = vmul.f32 %v2152, %v2185
      %v2190 = vmul.f32 %v2153, %v2185
      %v2191 = vmul.f32 %v2154, %v2185
      %v2192 = vmul.f32 %v2155, %v2185
      %v2193 = vmul.f32 %v2156, %v2185
      %v2194 = vmul.f32 %v2157, %v2185
      %v2195 = vmul.f32 %v2158, %v2185
      %v2196 = vmul.f32 %v2159, %v2185
      %v2197 = vmul.f32 %v2160, %v2185
      %v2198 = vmul.f32 %v2161, %v2185
      %v2199 = vmul.f32 %v2162, %v2185
      %v2200 = vmul.f32 %v2163, %v2185
      %v2201 = vmul.f32 %v2164, %v2185
      %v2202 = vmul.f32 %v2165, %v2185
      %v2203 = vmul.f32 %v2166, %v2185
      %v2204 = vmul.f32 %v2167, %v2185
      %v2205 = vmul.f32 %v2168, %v2185
      %v2206 = vmul.f32 %v2169, %v2185
      %v2207 = vmul.f32 %v2170, %v2185
      %v2208 = vmul.f32 %v2171, %v2185
      %v2209 = vmul.f32 %v2172, %v2185
      %v2210 = vmul.f32 %v2173, %v2185
      %v2211 = vmul.f32 %v2174, %v2185
      %v2212 = vmul.f32 %v2175, %v2185
      %v2213 = vmul.f32 %v2176, %v2185
      %v2214 = vmul.f32 %v2177, %v2185
      %v2215 = vmul.f32 %v2178, %v2185
      %v2216 = vmul.f32 %v2179, %v2185
      %v2217 = vmul.f32 %v2180, %v2185
      %v2218 = vadd.f32 %v2016, %v2186
      %v2219 = vadd.f32 %v2017, %v2187
      %v2220 = vadd.f32 %v2018, %v2188
      %v2221 = vadd.f32 %v2019, %v2189
      %v2222 = vadd.f32 %v2020, %v2190
      %v2223 = vadd.f32 %v2021, %v2191
      %v2224 = vadd.f32 %v2022, %v2192
      %v2225 = vadd.f32 %v2023, %v2193
      %v2226 = vadd.f32 %v2024, %v2194
      %v2227 = vadd.f32 %v2025, %v2195
      %v2228 = vadd.f32 %v2026, %v2196
      %v2229 = vadd.f32 %v2027, %v2197
      %v2230 = vadd.f32 %v2028, %v2198
      %v2231 = vadd.f32 %v2029, %v2199
      %v2232 = vadd.f32 %v2030, %v2200
      %v2233 = vadd.f32 %v2031, %v2201
      %v2234 = vadd.f32 %v2032, %v2202
      %v2235 = vadd.f32 %v2033, %v2203
      %v2236 = vadd.f32 %v2034, %v2204
      %v2237 = vadd.f32 %v2035, %v2205
      %v2238 = vadd.f32 %v2036, %v2206
      %v2239 = vadd.f32 %v2037, %v2207
      %v2240 = vadd.f32 %v2038, %v2208
      %v2241 = vadd.f32 %v2039, %v2209
      %v2242 = vadd.f32 %v2040, %v2210
      %v2243 = vadd.f32 %v2041, %v2211
      %v2244 = vadd.f32 %v2042, %v2212
      %v2245 = vadd.f32 %v2043, %v2213
      %v2246 = vadd.f32 %v2044, %v2214
      %v2247 = vadd.f32 %v2045, %v2215
      %v2248 = vadd.f32 %v2046, %v2216
      %v2249 = vadd.f32 %v2047, %v2217
      %v2250 = vld [vmem:[%s1744 + $0x5] sm:$0xff]
      %v2251 = vld [vmem:[%s1744 + $0xd] sm:$0xff]
      %v2252 = vld [vmem:[%s1744 + $0x1d] sm:$0xff]
      %v2253 = vld [vmem:[%s1744 + $0x25] sm:$0xff]
      %v2254 = vld [vmem:[%s1744 + $0x35] sm:$0xff]
      %v2255 = vld [vmem:[%s1744 + $0x3d] sm:$0xff]
      %v2256 = vld [vmem:[%s1744 + $0x4d] sm:$0xff]
      %v2257 = vld [vmem:[%s1744 + $0x55] sm:$0xff]
      %v2258 = vld [vmem:[%s1744 + $0x65] sm:$0xff]
      %v2259 = vld [vmem:[%s1744 + $0x6d] sm:$0xff]
      %v2260 = vld [vmem:[%s1744 + $0x7d] sm:$0xff]
      %v2261 = vld [vmem:[%s1744 + $0x85] sm:$0xff]
      %v2262 = vld [vmem:[%s1744 + $0x95] sm:$0xff]
      %v2263 = vld [vmem:[%s1744 + $0x9d] sm:$0xff]
      %v2264 = vld [vmem:[%s1744 + $0xad] sm:$0xff]
      %v2265 = vld [vmem:[%s1744 + $0xb5] sm:$0xff]
      %v2266 = vld [vmem:[%s1744 + $0xc5] sm:$0xff]
      %v2267 = vld [vmem:[%s1744 + $0xcd] sm:$0xff]
      %v2268 = vld [vmem:[%s1744 + $0xdd] sm:$0xff]
      %v2269 = vld [vmem:[%s1744 + $0xe5] sm:$0xff]
      %v2270 = vld [vmem:[%s1744 + $0xf5] sm:$0xff]
      %v2271 = vld [vmem:[%s1744 + $0xfd] sm:$0xff]
      %v2272 = vld [vmem:[%s1744 + $0x10d] sm:$0xff]
      %v2273 = vld [vmem:[%s1744 + $0x115] sm:$0xff]
      %v2274 = vld [vmem:[%s1744 + $0x125] sm:$0xff]
      %v2275 = vld [vmem:[%s1744 + $0x12d] sm:$0xff]
      %v2276 = vld [vmem:[%s1744 + $0x13d] sm:$0xff]
      %v2277 = vld [vmem:[%s1744 + $0x145] sm:$0xff]
      %v2278 = vld [vmem:[%s1744 + $0x155] sm:$0xff]
      %v2279 = vld [vmem:[%s1744 + $0x15d] sm:$0xff]
      %v2280 = vld [vmem:[%s1744 + $0x16d] sm:$0xff]
      %v2281 = vld [vmem:[%s1744 + $0x175] sm:$0xff]
      %v2282 = vld [vmem:[%s1 + $0x13] sm:$0x1]
      %v2283 = vlaneseq
      %v2284 = vshrl.u32 %v2283, 7
      %v2285 = vsub.s32 0, %v2284
      %v2286 = vrot.slane %v2282, %v2285
      %v2287 = vmul.f32 %v2250, %v2286
      %v2288 = vmul.f32 %v2251, %v2286
      %v2289 = vmul.f32 %v2252, %v2286
      %v2290 = vmul.f32 %v2253, %v2286
      %v2291 = vmul.f32 %v2254, %v2286
      %v2292 = vmul.f32 %v2255, %v2286
      %v2293 = vmul.f32 %v2256, %v2286
      %v2294 = vmul.f32 %v2257, %v2286
      %v2295 = vmul.f32 %v2258, %v2286
      %v2296 = vmul.f32 %v2259, %v2286
      %v2297 = vmul.f32 %v2260, %v2286
      %v2298 = vmul.f32 %v2261, %v2286
      %v2299 = vmul.f32 %v2262, %v2286
      %v2300 = vmul.f32 %v2263, %v2286
      %v2301 = vmul.f32 %v2264, %v2286
      %v2302 = vmul.f32 %v2265, %v2286
      %v2303 = vmul.f32 %v2266, %v2286
      %v2304 = vmul.f32 %v2267, %v2286
      %v2305 = vmul.f32 %v2268, %v2286
      %v2306 = vmul.f32 %v2269, %v2286
      %v2307 = vmul.f32 %v2270, %v2286
      %v2308 = vmul.f32 %v2271, %v2286
      %v2309 = vmul.f32 %v2272, %v2286
      %v2310 = vmul.f32 %v2273, %v2286
      %v2311 = vmul.f32 %v2274, %v2286
      %v2312 = vmul.f32 %v2275, %v2286
      %v2313 = vmul.f32 %v2276, %v2286
      %v2314 = vmul.f32 %v2277, %v2286
      %v2315 = vmul.f32 %v2278, %v2286
      %v2316 = vmul.f32 %v2279, %v2286
      %v2317 = vmul.f32 %v2280, %v2286
      %v2318 = vmul.f32 %v2281, %v2286
      %v2319 = vadd.f32 %v2117, %v2287
      %v2320 = vadd.f32 %v2118, %v2288
      %v2321 = vadd.f32 %v2119, %v2289
      %v2322 = vadd.f32 %v2120, %v2290
      %v2323 = vadd.f32 %v2121, %v2291
      %v2324 = vadd.f32 %v2122, %v2292
      %v2325 = vadd.f32 %v2123, %v2293
      %v2326 = vadd.f32 %v2124, %v2294
      %v2327 = vadd.f32 %v2125, %v2295
      %v2328 = vadd.f32 %v2126, %v2296
      %v2329 = vadd.f32 %v2127, %v2297
      %v2330 = vadd.f32 %v2128, %v2298
      %v2331 = vadd.f32 %v2129, %v2299
      %v2332 = vadd.f32 %v2130, %v2300
      %v2333 = vadd.f32 %v2131, %v2301
      %v2334 = vadd.f32 %v2132, %v2302
      %v2335 = vadd.f32 %v2133, %v2303
      %v2336 = vadd.f32 %v2134, %v2304
      %v2337 = vadd.f32 %v2135, %v2305
      %v2338 = vadd.f32 %v2136, %v2306
      %v2339 = vadd.f32 %v2137, %v2307
      %v2340 = vadd.f32 %v2138, %v2308
      %v2341 = vadd.f32 %v2139, %v2309
      %v2342 = vadd.f32 %v2140, %v2310
      %v2343 = vadd.f32 %v2141, %v2311
      %v2344 = vadd.f32 %v2142, %v2312
      %v2345 = vadd.f32 %v2143, %v2313
      %v2346 = vadd.f32 %v2144, %v2314
      %v2347 = vadd.f32 %v2145, %v2315
      %v2348 = vadd.f32 %v2146, %v2316
      %v2349 = vadd.f32 %v2147, %v2317
      %v2350 = vadd.f32 %v2148, %v2318
      %v2351 = vld [vmem:[%s1744 + $0x6] sm:$0xff]
      %v2352 = vld [vmem:[%s1744 + $0xe] sm:$0xff]
      %v2353 = vld [vmem:[%s1744 + $0x1e] sm:$0xff]
      %v2354 = vld [vmem:[%s1744 + $0x26] sm:$0xff]
      %v2355 = vld [vmem:[%s1744 + $0x36] sm:$0xff]
      %v2356 = vld [vmem:[%s1744 + $0x3e] sm:$0xff]
      %v2357 = vld [vmem:[%s1744 + $0x4e] sm:$0xff]
      %v2358 = vld [vmem:[%s1744 + $0x56] sm:$0xff]
      %v2359 = vld [vmem:[%s1744 + $0x66] sm:$0xff]
      %v2360 = vld [vmem:[%s1744 + $0x6e] sm:$0xff]
      %v2361 = vld [vmem:[%s1744 + $0x7e] sm:$0xff]
      %v2362 = vld [vmem:[%s1744 + $0x86] sm:$0xff]
      %v2363 = vld [vmem:[%s1744 + $0x96] sm:$0xff]
      %v2364 = vld [vmem:[%s1744 + $0x9e] sm:$0xff]
      %v2365 = vld [vmem:[%s1744 + $0xae] sm:$0xff]
      %v2366 = vld [vmem:[%s1744 + $0xb6] sm:$0xff]
      %v2367 = vld [vmem:[%s1744 + $0xc6] sm:$0xff]
      %v2368 = vld [vmem:[%s1744 + $0xce] sm:$0xff]
      %v2369 = vld [vmem:[%s1744 + $0xde] sm:$0xff]
      %v2370 = vld [vmem:[%s1744 + $0xe6] sm:$0xff]
      %v2371 = vld [vmem:[%s1744 + $0xf6] sm:$0xff]
      %v2372 = vld [vmem:[%s1744 + $0xfe] sm:$0xff]
      %v2373 = vld [vmem:[%s1744 + $0x10e] sm:$0xff]
      %v2374 = vld [vmem:[%s1744 + $0x116] sm:$0xff]
      %v2375 = vld [vmem:[%s1744 + $0x126] sm:$0xff]
      %v2376 = vld [vmem:[%s1744 + $0x12e] sm:$0xff]
      %v2377 = vld [vmem:[%s1744 + $0x13e] sm:$0xff]
      %v2378 = vld [vmem:[%s1744 + $0x146] sm:$0xff]
      %v2379 = vld [vmem:[%s1744 + $0x156] sm:$0xff]
      %v2380 = vld [vmem:[%s1744 + $0x15e] sm:$0xff]
      %v2381 = vld [vmem:[%s1744 + $0x16e] sm:$0xff]
      %v2382 = vld [vmem:[%s1744 + $0x176] sm:$0xff]
      %v2383 = vld [vmem:[%s1 + $0x14] sm:$0x1]
      %v2384 = vlaneseq
      %v2385 = vshrl.u32 %v2384, 7
      %v2386 = vsub.s32 0, %v2385
      %v2387 = vrot.slane %v2383, %v2386
      %v2388 = vmul.f32 %v2351, %v2387
      %v2389 = vmul.f32 %v2352, %v2387
      %v2390 = vmul.f32 %v2353, %v2387
      %v2391 = vmul.f32 %v2354, %v2387
      %v2392 = vmul.f32 %v2355, %v2387
      %v2393 = vmul.f32 %v2356, %v2387
      %v2394 = vmul.f32 %v2357, %v2387
      %v2395 = vmul.f32 %v2358, %v2387
      %v2396 = vmul.f32 %v2359, %v2387
      %v2397 = vmul.f32 %v2360, %v2387
      %v2398 = vmul.f32 %v2361, %v2387
      %v2399 = vmul.f32 %v2362, %v2387
      %v2400 = vmul.f32 %v2363, %v2387
      %v2401 = vmul.f32 %v2364, %v2387
      %v2402 = vmul.f32 %v2365, %v2387
      %v2403 = vmul.f32 %v2366, %v2387
      %v2404 = vmul.f32 %v2367, %v2387
      %v2405 = vmul.f32 %v2368, %v2387
      %v2406 = vmul.f32 %v2369, %v2387
      %v2407 = vmul.f32 %v2370, %v2387
      %v2408 = vmul.f32 %v2371, %v2387
      %v2409 = vmul.f32 %v2372, %v2387
      %v2410 = vmul.f32 %v2373, %v2387
      %v2411 = vmul.f32 %v2374, %v2387
      %v2412 = vmul.f32 %v2375, %v2387
      %v2413 = vmul.f32 %v2376, %v2387
      %v2414 = vmul.f32 %v2377, %v2387
      %v2415 = vmul.f32 %v2378, %v2387
      %v2416 = vmul.f32 %v2379, %v2387
      %v2417 = vmul.f32 %v2380, %v2387
      %v2418 = vmul.f32 %v2381, %v2387
      %v2419 = vmul.f32 %v2382, %v2387
      %v2420 = vadd.f32 %v2218, %v2388
      %v2421 = vadd.f32 %v2219, %v2389
      %v2422 = vadd.f32 %v2220, %v2390
      %v2423 = vadd.f32 %v2221, %v2391
      %v2424 = vadd.f32 %v2222, %v2392
      %v2425 = vadd.f32 %v2223, %v2393
      %v2426 = vadd.f32 %v2224, %v2394
      %v2427 = vadd.f32 %v2225, %v2395
      %v2428 = vadd.f32 %v2226, %v2396
      %v2429 = vadd.f32 %v2227, %v2397
      %v2430 = vadd.f32 %v2228, %v2398
      %v2431 = vadd.f32 %v2229, %v2399
      %v2432 = vadd.f32 %v2230, %v2400
      %v2433 = vadd.f32 %v2231, %v2401
      %v2434 = vadd.f32 %v2232, %v2402
      %v2435 = vadd.f32 %v2233, %v2403
      %v2436 = vadd.f32 %v2234, %v2404
      %v2437 = vadd.f32 %v2235, %v2405
      %v2438 = vadd.f32 %v2236, %v2406
      %v2439 = vadd.f32 %v2237, %v2407
      %v2440 = vadd.f32 %v2238, %v2408
      %v2441 = vadd.f32 %v2239, %v2409
      %v2442 = vadd.f32 %v2240, %v2410
      %v2443 = vadd.f32 %v2241, %v2411
      %v2444 = vadd.f32 %v2242, %v2412
      %v2445 = vadd.f32 %v2243, %v2413
      %v2446 = vadd.f32 %v2244, %v2414
      %v2447 = vadd.f32 %v2245, %v2415
      %v2448 = vadd.f32 %v2246, %v2416
      %v2449 = vadd.f32 %v2247, %v2417
      %v2450 = vadd.f32 %v2248, %v2418
      %v2451 = vadd.f32 %v2249, %v2419
      %s2452 = sadd.s32 %s386, 3
      %s2453 = smul.u32 %s2452, 24
      %s2454 = scalar_lea.vmem %s373, %s2453
      %v2455 = vld [vmem:[%s2454] sm:$0xff]
      %v2456 = vld [vmem:[%s2454 + $0x8] sm:$0xff]
      %v2457 = vld [vmem:[%s2454 + $0x18] sm:$0xff]
      %v2458 = vld [vmem:[%s2454 + $0x20] sm:$0xff]
      %v2459 = vld [vmem:[%s2454 + $0x30] sm:$0xff]
      %v2460 = vld [vmem:[%s2454 + $0x38] sm:$0xff]
      %v2461 = vld [vmem:[%s2454 + $0x48] sm:$0xff]
      %v2462 = vld [vmem:[%s2454 + $0x50] sm:$0xff]
      %v2463 = vld [vmem:[%s2454 + $0x60] sm:$0xff]
      %v2464 = vld [vmem:[%s2454 + $0x68] sm:$0xff]
      %v2465 = vld [vmem:[%s2454 + $0x78] sm:$0xff]
      %v2466 = vld [vmem:[%s2454 + $0x80] sm:$0xff]
      %v2467 = vld [vmem:[%s2454 + $0x90] sm:$0xff]
      %v2468 = vld [vmem:[%s2454 + $0x98] sm:$0xff]
      %v2469 = vld [vmem:[%s2454 + $0xa8] sm:$0xff]
      %v2470 = vld [vmem:[%s2454 + $0xb0] sm:$0xff]
      %v2471 = vld [vmem:[%s2454 + $0xc0] sm:$0xff]
      %v2472 = vld [vmem:[%s2454 + $0xc8] sm:$0xff]
      %v2473 = vld [vmem:[%s2454 + $0xd8] sm:$0xff]
      %v2474 = vld [vmem:[%s2454 + $0xe0] sm:$0xff]
      %v2475 = vld [vmem:[%s2454 + $0xf0] sm:$0xff]
      %v2476 = vld [vmem:[%s2454 + $0xf8] sm:$0xff]
      %v2477 = vld [vmem:[%s2454 + $0x108] sm:$0xff]
      %v2478 = vld [vmem:[%s2454 + $0x110] sm:$0xff]
      %v2479 = vld [vmem:[%s2454 + $0x120] sm:$0xff]
      %v2480 = vld [vmem:[%s2454 + $0x128] sm:$0xff]
      %v2481 = vld [vmem:[%s2454 + $0x138] sm:$0xff]
      %v2482 = vld [vmem:[%s2454 + $0x140] sm:$0xff]
      %v2483 = vld [vmem:[%s2454 + $0x150] sm:$0xff]
      %v2484 = vld [vmem:[%s2454 + $0x158] sm:$0xff]
      %v2485 = vld [vmem:[%s2454 + $0x168] sm:$0xff]
      %v2486 = vld [vmem:[%s2454 + $0x170] sm:$0xff]
      %v2487 = vld [vmem:[%s1 + $0x15] sm:$0x1]
      %v2488 = vlaneseq
      %v2489 = vshrl.u32 %v2488, 7
      %v2490 = vsub.s32 0, %v2489
      %v2491 = vrot.slane %v2487, %v2490
      %v2492 = vmul.f32 %v2455, %v2491
      %v2493 = vmul.f32 %v2456, %v2491
      %v2494 = vmul.f32 %v2457, %v2491
      %v2495 = vmul.f32 %v2458, %v2491
      %v2496 = vmul.f32 %v2459, %v2491
      %v2497 = vmul.f32 %v2460, %v2491
      %v2498 = vmul.f32 %v2461, %v2491
      %v2499 = vmul.f32 %v2462, %v2491
      %v2500 = vmul.f32 %v2463, %v2491
      %v2501 = vmul.f32 %v2464, %v2491
      %v2502 = vmul.f32 %v2465, %v2491
      %v2503 = vmul.f32 %v2466, %v2491
      %v2504 = vmul.f32 %v2467, %v2491
      %v2505 = vmul.f32 %v2468, %v2491
      %v2506 = vmul.f32 %v2469, %v2491
      %v2507 = vmul.f32 %v2470, %v2491
      %v2508 = vmul.f32 %v2471, %v2491
      %v2509 = vmul.f32 %v2472, %v2491
      %v2510 = vmul.f32 %v2473, %v2491
      %v2511 = vmul.f32 %v2474, %v2491
      %v2512 = vmul.f32 %v2475, %v2491
      %v2513 = vmul.f32 %v2476, %v2491
      %v2514 = vmul.f32 %v2477, %v2491
      %v2515 = vmul.f32 %v2478, %v2491
      %v2516 = vmul.f32 %v2479, %v2491
      %v2517 = vmul.f32 %v2480, %v2491
      %v2518 = vmul.f32 %v2481, %v2491
      %v2519 = vmul.f32 %v2482, %v2491
      %v2520 = vmul.f32 %v2483, %v2491
      %v2521 = vmul.f32 %v2484, %v2491
      %v2522 = vmul.f32 %v2485, %v2491
      %v2523 = vmul.f32 %v2486, %v2491
      %v2524 = vadd.f32 %v2319, %v2492
      %v2525 = vadd.f32 %v2320, %v2493
      %v2526 = vadd.f32 %v2321, %v2494
      %v2527 = vadd.f32 %v2322, %v2495
      %v2528 = vadd.f32 %v2323, %v2496
      %v2529 = vadd.f32 %v2324, %v2497
      %v2530 = vadd.f32 %v2325, %v2498
      %v2531 = vadd.f32 %v2326, %v2499
      %v2532 = vadd.f32 %v2327, %v2500
      %v2533 = vadd.f32 %v2328, %v2501
      %v2534 = vadd.f32 %v2329, %v2502
      %v2535 = vadd.f32 %v2330, %v2503
      %v2536 = vadd.f32 %v2331, %v2504
      %v2537 = vadd.f32 %v2332, %v2505
      %v2538 = vadd.f32 %v2333, %v2506
      %v2539 = vadd.f32 %v2334, %v2507
      %v2540 = vadd.f32 %v2335, %v2508
      %v2541 = vadd.f32 %v2336, %v2509
      %v2542 = vadd.f32 %v2337, %v2510
      %v2543 = vadd.f32 %v2338, %v2511
      %v2544 = vadd.f32 %v2339, %v2512
      %v2545 = vadd.f32 %v2340, %v2513
      %v2546 = vadd.f32 %v2341, %v2514
      %v2547 = vadd.f32 %v2342, %v2515
      %v2548 = vadd.f32 %v2343, %v2516
      %v2549 = vadd.f32 %v2344, %v2517
      %v2550 = vadd.f32 %v2345, %v2518
      %v2551 = vadd.f32 %v2346, %v2519
      %v2552 = vadd.f32 %v2347, %v2520
      %v2553 = vadd.f32 %v2348, %v2521
      %v2554 = vadd.f32 %v2349, %v2522
      %v2555 = vadd.f32 %v2350, %v2523
      %v2556 = vld [vmem:[%s2454 + $0x1] sm:$0xff]
      %v2557 = vld [vmem:[%s2454 + $0x9] sm:$0xff]
      %v2558 = vld [vmem:[%s2454 + $0x19] sm:$0xff]
      %v2559 = vld [vmem:[%s2454 + $0x21] sm:$0xff]
      %v2560 = vld [vmem:[%s2454 + $0x31] sm:$0xff]
      %v2561 = vld [vmem:[%s2454 + $0x39] sm:$0xff]
      %v2562 = vld [vmem:[%s2454 + $0x49] sm:$0xff]
      %v2563 = vld [vmem:[%s2454 + $0x51] sm:$0xff]
      %v2564 = vld [vmem:[%s2454 + $0x61] sm:$0xff]
      %v2565 = vld [vmem:[%s2454 + $0x69] sm:$0xff]
      %v2566 = vld [vmem:[%s2454 + $0x79] sm:$0xff]
      %v2567 = vld [vmem:[%s2454 + $0x81] sm:$0xff]
      %v2568 = vld [vmem:[%s2454 + $0x91] sm:$0xff]
      %v2569 = vld [vmem:[%s2454 + $0x99] sm:$0xff]
      %v2570 = vld [vmem:[%s2454 + $0xa9] sm:$0xff]
      %v2571 = vld [vmem:[%s2454 + $0xb1] sm:$0xff]
      %v2572 = vld [vmem:[%s2454 + $0xc1] sm:$0xff]
      %v2573 = vld [vmem:[%s2454 + $0xc9] sm:$0xff]
      %v2574 = vld [vmem:[%s2454 + $0xd9] sm:$0xff]
      %v2575 = vld [vmem:[%s2454 + $0xe1] sm:$0xff]
      %v2576 = vld [vmem:[%s2454 + $0xf1] sm:$0xff]
      %v2577 = vld [vmem:[%s2454 + $0xf9] sm:$0xff]
      %v2578 = vld [vmem:[%s2454 + $0x109] sm:$0xff]
      %v2579 = vld [vmem:[%s2454 + $0x111] sm:$0xff]
      %v2580 = vld [vmem:[%s2454 + $0x121] sm:$0xff]
      %v2581 = vld [vmem:[%s2454 + $0x129] sm:$0xff]
      %v2582 = vld [vmem:[%s2454 + $0x139] sm:$0xff]
      %v2583 = vld [vmem:[%s2454 + $0x141] sm:$0xff]
      %v2584 = vld [vmem:[%s2454 + $0x151] sm:$0xff]
      %v2585 = vld [vmem:[%s2454 + $0x159] sm:$0xff]
      %v2586 = vld [vmem:[%s2454 + $0x169] sm:$0xff]
      %v2587 = vld [vmem:[%s2454 + $0x171] sm:$0xff]
      %v2588 = vld [vmem:[%s1 + $0x16] sm:$0x1]
      %v2589 = vlaneseq
      %v2590 = vshrl.u32 %v2589, 7
      %v2591 = vsub.s32 0, %v2590
      %v2592 = vrot.slane %v2588, %v2591
      %v2593 = vmul.f32 %v2556, %v2592
      %v2594 = vmul.f32 %v2557, %v2592
      %v2595 = vmul.f32 %v2558, %v2592
      %v2596 = vmul.f32 %v2559, %v2592
      %v2597 = vmul.f32 %v2560, %v2592
      %v2598 = vmul.f32 %v2561, %v2592
      %v2599 = vmul.f32 %v2562, %v2592
      %v2600 = vmul.f32 %v2563, %v2592
      %v2601 = vmul.f32 %v2564, %v2592
      %v2602 = vmul.f32 %v2565, %v2592
      %v2603 = vmul.f32 %v2566, %v2592
      %v2604 = vmul.f32 %v2567, %v2592
      %v2605 = vmul.f32 %v2568, %v2592
      %v2606 = vmul.f32 %v2569, %v2592
      %v2607 = vmul.f32 %v2570, %v2592
      %v2608 = vmul.f32 %v2571, %v2592
      %v2609 = vmul.f32 %v2572, %v2592
      %v2610 = vmul.f32 %v2573, %v2592
      %v2611 = vmul.f32 %v2574, %v2592
      %v2612 = vmul.f32 %v2575, %v2592
      %v2613 = vmul.f32 %v2576, %v2592
      %v2614 = vmul.f32 %v2577, %v2592
      %v2615 = vmul.f32 %v2578, %v2592
      %v2616 = vmul.f32 %v2579, %v2592
      %v2617 = vmul.f32 %v2580, %v2592
      %v2618 = vmul.f32 %v2581, %v2592
      %v2619 = vmul.f32 %v2582, %v2592
      %v2620 = vmul.f32 %v2583, %v2592
      %v2621 = vmul.f32 %v2584, %v2592
      %v2622 = vmul.f32 %v2585, %v2592
      %v2623 = vmul.f32 %v2586, %v2592
      %v2624 = vmul.f32 %v2587, %v2592
      %v2625 = vadd.f32 %v2420, %v2593
      %v2626 = vadd.f32 %v2421, %v2594
      %v2627 = vadd.f32 %v2422, %v2595
      %v2628 = vadd.f32 %v2423, %v2596
      %v2629 = vadd.f32 %v2424, %v2597
      %v2630 = vadd.f32 %v2425, %v2598
      %v2631 = vadd.f32 %v2426, %v2599
      %v2632 = vadd.f32 %v2427, %v2600
      %v2633 = vadd.f32 %v2428, %v2601
      %v2634 = vadd.f32 %v2429, %v2602
      %v2635 = vadd.f32 %v2430, %v2603
      %v2636 = vadd.f32 %v2431, %v2604
      %v2637 = vadd.f32 %v2432, %v2605
      %v2638 = vadd.f32 %v2433, %v2606
      %v2639 = vadd.f32 %v2434, %v2607
      %v2640 = vadd.f32 %v2435, %v2608
      %v2641 = vadd.f32 %v2436, %v2609
      %v2642 = vadd.f32 %v2437, %v2610
      %v2643 = vadd.f32 %v2438, %v2611
      %v2644 = vadd.f32 %v2439, %v2612
      %v2645 = vadd.f32 %v2440, %v2613
      %v2646 = vadd.f32 %v2441, %v2614
      %v2647 = vadd.f32 %v2442, %v2615
      %v2648 = vadd.f32 %v2443, %v2616
      %v2649 = vadd.f32 %v2444, %v2617
      %v2650 = vadd.f32 %v2445, %v2618
      %v2651 = vadd.f32 %v2446, %v2619
      %v2652 = vadd.f32 %v2447, %v2620
      %v2653 = vadd.f32 %v2448, %v2621
      %v2654 = vadd.f32 %v2449, %v2622
      %v2655 = vadd.f32 %v2450, %v2623
      %v2656 = vadd.f32 %v2451, %v2624
      %v2657 = vld [vmem:[%s2454 + $0x2] sm:$0xff]
      %v2658 = vld [vmem:[%s2454 + $0xa] sm:$0xff]
      %v2659 = vld [vmem:[%s2454 + $0x1a] sm:$0xff]
      %v2660 = vld [vmem:[%s2454 + $0x22] sm:$0xff]
      %v2661 = vld [vmem:[%s2454 + $0x32] sm:$0xff]
      %v2662 = vld [vmem:[%s2454 + $0x3a] sm:$0xff]
      %v2663 = vld [vmem:[%s2454 + $0x4a] sm:$0xff]
      %v2664 = vld [vmem:[%s2454 + $0x52] sm:$0xff]
      %v2665 = vld [vmem:[%s2454 + $0x62] sm:$0xff]
      %v2666 = vld [vmem:[%s2454 + $0x6a] sm:$0xff]
      %v2667 = vld [vmem:[%s2454 + $0x7a] sm:$0xff]
      %v2668 = vld [vmem:[%s2454 + $0x82] sm:$0xff]
      %v2669 = vld [vmem:[%s2454 + $0x92] sm:$0xff]
      %v2670 = vld [vmem:[%s2454 + $0x9a] sm:$0xff]
      %v2671 = vld [vmem:[%s2454 + $0xaa] sm:$0xff]
      %v2672 = vld [vmem:[%s2454 + $0xb2] sm:$0xff]
      %v2673 = vld [vmem:[%s2454 + $0xc2] sm:$0xff]
      %v2674 = vld [vmem:[%s2454 + $0xca] sm:$0xff]
      %v2675 = vld [vmem:[%s2454 + $0xda] sm:$0xff]
      %v2676 = vld [vmem:[%s2454 + $0xe2] sm:$0xff]
      %v2677 = vld [vmem:[%s2454 + $0xf2] sm:$0xff]
      %v2678 = vld [vmem:[%s2454 + $0xfa] sm:$0xff]
      %v2679 = vld [vmem:[%s2454 + $0x10a] sm:$0xff]
      %v2680 = vld [vmem:[%s2454 + $0x112] sm:$0xff]
      %v2681 = vld [vmem:[%s2454 + $0x122] sm:$0xff]
      %v2682 = vld [vmem:[%s2454 + $0x12a] sm:$0xff]
      %v2683 = vld [vmem:[%s2454 + $0x13a] sm:$0xff]
      %v2684 = vld [vmem:[%s2454 + $0x142] sm:$0xff]
      %v2685 = vld [vmem:[%s2454 + $0x152] sm:$0xff]
      %v2686 = vld [vmem:[%s2454 + $0x15a] sm:$0xff]
      %v2687 = vld [vmem:[%s2454 + $0x16a] sm:$0xff]
      %v2688 = vld [vmem:[%s2454 + $0x172] sm:$0xff]
      %v2689 = vld [vmem:[%s1 + $0x17] sm:$0x1]
      %v2690 = vlaneseq
      %v2691 = vshrl.u32 %v2690, 7
      %v2692 = vsub.s32 0, %v2691
      %v2693 = vrot.slane %v2689, %v2692
      %v2694 = vmul.f32 %v2657, %v2693
      %v2695 = vmul.f32 %v2658, %v2693
      %v2696 = vmul.f32 %v2659, %v2693
      %v2697 = vmul.f32 %v2660, %v2693
      %v2698 = vmul.f32 %v2661, %v2693
      %v2699 = vmul.f32 %v2662, %v2693
      %v2700 = vmul.f32 %v2663, %v2693
      %v2701 = vmul.f32 %v2664, %v2693
      %v2702 = vmul.f32 %v2665, %v2693
      %v2703 = vmul.f32 %v2666, %v2693
      %v2704 = vmul.f32 %v2667, %v2693
      %v2705 = vmul.f32 %v2668, %v2693
      %v2706 = vmul.f32 %v2669, %v2693
      %v2707 = vmul.f32 %v2670, %v2693
      %v2708 = vmul.f32 %v2671, %v2693
      %v2709 = vmul.f32 %v2672, %v2693
      %v2710 = vmul.f32 %v2673, %v2693
      %v2711 = vmul.f32 %v2674, %v2693
      %v2712 = vmul.f32 %v2675, %v2693
      %v2713 = vmul.f32 %v2676, %v2693
      %v2714 = vmul.f32 %v2677, %v2693
      %v2715 = vmul.f32 %v2678, %v2693
      %v2716 = vmul.f32 %v2679, %v2693
      %v2717 = vmul.f32 %v2680, %v2693
      %v2718 = vmul.f32 %v2681, %v2693
      %v2719 = vmul.f32 %v2682, %v2693
      %v2720 = vmul.f32 %v2683, %v2693
      %v2721 = vmul.f32 %v2684, %v2693
      %v2722 = vmul.f32 %v2685, %v2693
      %v2723 = vmul.f32 %v2686, %v2693
      %v2724 = vmul.f32 %v2687, %v2693
      %v2725 = vmul.f32 %v2688, %v2693
      %v2726 = vadd.f32 %v2524, %v2694
      %v2727 = vadd.f32 %v2525, %v2695
      %v2728 = vadd.f32 %v2526, %v2696
      %v2729 = vadd.f32 %v2527, %v2697
      %v2730 = vadd.f32 %v2528, %v2698
      %v2731 = vadd.f32 %v2529, %v2699
      %v2732 = vadd.f32 %v2530, %v2700
      %v2733 = vadd.f32 %v2531, %v2701
      %v2734 = vadd.f32 %v2532, %v2702
      %v2735 = vadd.f32 %v2533, %v2703
      %v2736 = vadd.f32 %v2534, %v2704
      %v2737 = vadd.f32 %v2535, %v2705
      %v2738 = vadd.f32 %v2536, %v2706
      %v2739 = vadd.f32 %v2537, %v2707
      %v2740 = vadd.f32 %v2538, %v2708
      %v2741 = vadd.f32 %v2539, %v2709
      %v2742 = vadd.f32 %v2540, %v2710
      %v2743 = vadd.f32 %v2541, %v2711
      %v2744 = vadd.f32 %v2542, %v2712
      %v2745 = vadd.f32 %v2543, %v2713
      %v2746 = vadd.f32 %v2544, %v2714
      %v2747 = vadd.f32 %v2545, %v2715
      %v2748 = vadd.f32 %v2546, %v2716
      %v2749 = vadd.f32 %v2547, %v2717
      %v2750 = vadd.f32 %v2548, %v2718
      %v2751 = vadd.f32 %v2549, %v2719
      %v2752 = vadd.f32 %v2550, %v2720
      %v2753 = vadd.f32 %v2551, %v2721
      %v2754 = vadd.f32 %v2552, %v2722
      %v2755 = vadd.f32 %v2553, %v2723
      %v2756 = vadd.f32 %v2554, %v2724
      %v2757 = vadd.f32 %v2555, %v2725
      %v2758 = vld [vmem:[%s2454 + $0x3] sm:$0xff]
      %v2759 = vld [vmem:[%s2454 + $0xb] sm:$0xff]
      %v2760 = vld [vmem:[%s2454 + $0x1b] sm:$0xff]
      %v2761 = vld [vmem:[%s2454 + $0x23] sm:$0xff]
      %v2762 = vld [vmem:[%s2454 + $0x33] sm:$0xff]
      %v2763 = vld [vmem:[%s2454 + $0x3b] sm:$0xff]
      %v2764 = vld [vmem:[%s2454 + $0x4b] sm:$0xff]
      %v2765 = vld [vmem:[%s2454 + $0x53] sm:$0xff]
      %v2766 = vld [vmem:[%s2454 + $0x63] sm:$0xff]
      %v2767 = vld [vmem:[%s2454 + $0x6b] sm:$0xff]
      %v2768 = vld [vmem:[%s2454 + $0x7b] sm:$0xff]
      %v2769 = vld [vmem:[%s2454 + $0x83] sm:$0xff]
      %v2770 = vld [vmem:[%s2454 + $0x93] sm:$0xff]
      %v2771 = vld [vmem:[%s2454 + $0x9b] sm:$0xff]
      %v2772 = vld [vmem:[%s2454 + $0xab] sm:$0xff]
      %v2773 = vld [vmem:[%s2454 + $0xb3] sm:$0xff]
      %v2774 = vld [vmem:[%s2454 + $0xc3] sm:$0xff]
      %v2775 = vld [vmem:[%s2454 + $0xcb] sm:$0xff]
      %v2776 = vld [vmem:[%s2454 + $0xdb] sm:$0xff]
      %v2777 = vld [vmem:[%s2454 + $0xe3] sm:$0xff]
      %v2778 = vld [vmem:[%s2454 + $0xf3] sm:$0xff]
      %v2779 = vld [vmem:[%s2454 + $0xfb] sm:$0xff]
      %v2780 = vld [vmem:[%s2454 + $0x10b] sm:$0xff]
      %v2781 = vld [vmem:[%s2454 + $0x113] sm:$0xff]
      %v2782 = vld [vmem:[%s2454 + $0x123] sm:$0xff]
      %v2783 = vld [vmem:[%s2454 + $0x12b] sm:$0xff]
      %v2784 = vld [vmem:[%s2454 + $0x13b] sm:$0xff]
      %v2785 = vld [vmem:[%s2454 + $0x143] sm:$0xff]
      %v2786 = vld [vmem:[%s2454 + $0x153] sm:$0xff]
      %v2787 = vld [vmem:[%s2454 + $0x15b] sm:$0xff]
      %v2788 = vld [vmem:[%s2454 + $0x16b] sm:$0xff]
      %v2789 = vld [vmem:[%s2454 + $0x173] sm:$0xff]
      %v2790 = vld [vmem:[%s1 + $0x18] sm:$0x1]
      %v2791 = vlaneseq
      %v2792 = vshrl.u32 %v2791, 7
      %v2793 = vsub.s32 0, %v2792
      %v2794 = vrot.slane %v2790, %v2793
      %v2795 = vmul.f32 %v2758, %v2794
      %v2796 = vmul.f32 %v2759, %v2794
      %v2797 = vmul.f32 %v2760, %v2794
      %v2798 = vmul.f32 %v2761, %v2794
      %v2799 = vmul.f32 %v2762, %v2794
      %v2800 = vmul.f32 %v2763, %v2794
      %v2801 = vmul.f32 %v2764, %v2794
      %v2802 = vmul.f32 %v2765, %v2794
      %v2803 = vmul.f32 %v2766, %v2794
      %v2804 = vmul.f32 %v2767, %v2794
      %v2805 = vmul.f32 %v2768, %v2794
      %v2806 = vmul.f32 %v2769, %v2794
      %v2807 = vmul.f32 %v2770, %v2794
      %v2808 = vmul.f32 %v2771, %v2794
      %v2809 = vmul.f32 %v2772, %v2794
      %v2810 = vmul.f32 %v2773, %v2794
      %v2811 = vmul.f32 %v2774, %v2794
      %v2812 = vmul.f32 %v2775, %v2794
      %v2813 = vmul.f32 %v2776, %v2794
      %v2814 = vmul.f32 %v2777, %v2794
      %v2815 = vmul.f32 %v2778, %v2794
      %v2816 = vmul.f32 %v2779, %v2794
      %v2817 = vmul.f32 %v2780, %v2794
      %v2818 = vmul.f32 %v2781, %v2794
      %v2819 = vmul.f32 %v2782, %v2794
      %v2820 = vmul.f32 %v2783, %v2794
      %v2821 = vmul.f32 %v2784, %v2794
      %v2822 = vmul.f32 %v2785, %v2794
      %v2823 = vmul.f32 %v2786, %v2794
      %v2824 = vmul.f32 %v2787, %v2794
      %v2825 = vmul.f32 %v2788, %v2794
      %v2826 = vmul.f32 %v2789, %v2794
      %v2827 = vadd.f32 %v2625, %v2795
      %v2828 = vadd.f32 %v2626, %v2796
      %v2829 = vadd.f32 %v2627, %v2797
      %v2830 = vadd.f32 %v2628, %v2798
      %v2831 = vadd.f32 %v2629, %v2799
      %v2832 = vadd.f32 %v2630, %v2800
      %v2833 = vadd.f32 %v2631, %v2801
      %v2834 = vadd.f32 %v2632, %v2802
      %v2835 = vadd.f32 %v2633, %v2803
      %v2836 = vadd.f32 %v2634, %v2804
      %v2837 = vadd.f32 %v2635, %v2805
      %v2838 = vadd.f32 %v2636, %v2806
      %v2839 = vadd.f32 %v2637, %v2807
      %v2840 = vadd.f32 %v2638, %v2808
      %v2841 = vadd.f32 %v2639, %v2809
      %v2842 = vadd.f32 %v2640, %v2810
      %v2843 = vadd.f32 %v2641, %v2811
      %v2844 = vadd.f32 %v2642, %v2812
      %v2845 = vadd.f32 %v2643, %v2813
      %v2846 = vadd.f32 %v2644, %v2814
      %v2847 = vadd.f32 %v2645, %v2815
      %v2848 = vadd.f32 %v2646, %v2816
      %v2849 = vadd.f32 %v2647, %v2817
      %v2850 = vadd.f32 %v2648, %v2818
      %v2851 = vadd.f32 %v2649, %v2819
      %v2852 = vadd.f32 %v2650, %v2820
      %v2853 = vadd.f32 %v2651, %v2821
      %v2854 = vadd.f32 %v2652, %v2822
      %v2855 = vadd.f32 %v2653, %v2823
      %v2856 = vadd.f32 %v2654, %v2824
      %v2857 = vadd.f32 %v2655, %v2825
      %v2858 = vadd.f32 %v2656, %v2826
      %v2859 = vld [vmem:[%s2454 + $0x4] sm:$0xff]
      %v2860 = vld [vmem:[%s2454 + $0xc] sm:$0xff]
      %v2861 = vld [vmem:[%s2454 + $0x1c] sm:$0xff]
      %v2862 = vld [vmem:[%s2454 + $0x24] sm:$0xff]
      %v2863 = vld [vmem:[%s2454 + $0x34] sm:$0xff]
      %v2864 = vld [vmem:[%s2454 + $0x3c] sm:$0xff]
      %v2865 = vld [vmem:[%s2454 + $0x4c] sm:$0xff]
      %v2866 = vld [vmem:[%s2454 + $0x54] sm:$0xff]
      %v2867 = vld [vmem:[%s2454 + $0x64] sm:$0xff]
      %v2868 = vld [vmem:[%s2454 + $0x6c] sm:$0xff]
      %v2869 = vld [vmem:[%s2454 + $0x7c] sm:$0xff]
      %v2870 = vld [vmem:[%s2454 + $0x84] sm:$0xff]
      %v2871 = vld [vmem:[%s2454 + $0x94] sm:$0xff]
      %v2872 = vld [vmem:[%s2454 + $0x9c] sm:$0xff]
      %v2873 = vld [vmem:[%s2454 + $0xac] sm:$0xff]
      %v2874 = vld [vmem:[%s2454 + $0xb4] sm:$0xff]
      %v2875 = vld [vmem:[%s2454 + $0xc4] sm:$0xff]
      %v2876 = vld [vmem:[%s2454 + $0xcc] sm:$0xff]
      %v2877 = vld [vmem:[%s2454 + $0xdc] sm:$0xff]
      %v2878 = vld [vmem:[%s2454 + $0xe4] sm:$0xff]
      %v2879 = vld [vmem:[%s2454 + $0xf4] sm:$0xff]
      %v2880 = vld [vmem:[%s2454 + $0xfc] sm:$0xff]
      %v2881 = vld [vmem:[%s2454 + $0x10c] sm:$0xff]
      %v2882 = vld [vmem:[%s2454 + $0x114] sm:$0xff]
      %v2883 = vld [vmem:[%s2454 + $0x124] sm:$0xff]
      %v2884 = vld [vmem:[%s2454 + $0x12c] sm:$0xff]
      %v2885 = vld [vmem:[%s2454 + $0x13c] sm:$0xff]
      %v2886 = vld [vmem:[%s2454 + $0x144] sm:$0xff]
      %v2887 = vld [vmem:[%s2454 + $0x154] sm:$0xff]
      %v2888 = vld [vmem:[%s2454 + $0x15c] sm:$0xff]
      %v2889 = vld [vmem:[%s2454 + $0x16c] sm:$0xff]
      %v2890 = vld [vmem:[%s2454 + $0x174] sm:$0xff]
      %v2891 = vld [vmem:[%s1 + $0x19] sm:$0x1]
      %v2892 = vlaneseq
      %v2893 = vshrl.u32 %v2892, 7
      %v2894 = vsub.s32 0, %v2893
      %v2895 = vrot.slane %v2891, %v2894
      %v2896 = vmul.f32 %v2859, %v2895
      %v2897 = vmul.f32 %v2860, %v2895
      %v2898 = vmul.f32 %v2861, %v2895
      %v2899 = vmul.f32 %v2862, %v2895
      %v2900 = vmul.f32 %v2863, %v2895
      %v2901 = vmul.f32 %v2864, %v2895
      %v2902 = vmul.f32 %v2865, %v2895
      %v2903 = vmul.f32 %v2866, %v2895
      %v2904 = vmul.f32 %v2867, %v2895
      %v2905 = vmul.f32 %v2868, %v2895
      %v2906 = vmul.f32 %v2869, %v2895
      %v2907 = vmul.f32 %v2870, %v2895
      %v2908 = vmul.f32 %v2871, %v2895
      %v2909 = vmul.f32 %v2872, %v2895
      %v2910 = vmul.f32 %v2873, %v2895
      %v2911 = vmul.f32 %v2874, %v2895
      %v2912 = vmul.f32 %v2875, %v2895
      %v2913 = vmul.f32 %v2876, %v2895
      %v2914 = vmul.f32 %v2877, %v2895
      %v2915 = vmul.f32 %v2878, %v2895
      %v2916 = vmul.f32 %v2879, %v2895
      %v2917 = vmul.f32 %v2880, %v2895
      %v2918 = vmul.f32 %v2881, %v2895
      %v2919 = vmul.f32 %v2882, %v2895
      %v2920 = vmul.f32 %v2883, %v2895
      %v2921 = vmul.f32 %v2884, %v2895
      %v2922 = vmul.f32 %v2885, %v2895
      %v2923 = vmul.f32 %v2886, %v2895
      %v2924 = vmul.f32 %v2887, %v2895
      %v2925 = vmul.f32 %v2888, %v2895
      %v2926 = vmul.f32 %v2889, %v2895
      %v2927 = vmul.f32 %v2890, %v2895
      %v2928 = vadd.f32 %v2726, %v2896
      %v2929 = vadd.f32 %v2727, %v2897
      %v2930 = vadd.f32 %v2728, %v2898
      %v2931 = vadd.f32 %v2729, %v2899
      %v2932 = vadd.f32 %v2730, %v2900
      %v2933 = vadd.f32 %v2731, %v2901
      %v2934 = vadd.f32 %v2732, %v2902
      %v2935 = vadd.f32 %v2733, %v2903
      %v2936 = vadd.f32 %v2734, %v2904
      %v2937 = vadd.f32 %v2735, %v2905
      %v2938 = vadd.f32 %v2736, %v2906
      %v2939 = vadd.f32 %v2737, %v2907
      %v2940 = vadd.f32 %v2738, %v2908
      %v2941 = vadd.f32 %v2739, %v2909
      %v2942 = vadd.f32 %v2740, %v2910
      %v2943 = vadd.f32 %v2741, %v2911
      %v2944 = vadd.f32 %v2742, %v2912
      %v2945 = vadd.f32 %v2743, %v2913
      %v2946 = vadd.f32 %v2744, %v2914
      %v2947 = vadd.f32 %v2745, %v2915
      %v2948 = vadd.f32 %v2746, %v2916
      %v2949 = vadd.f32 %v2747, %v2917
      %v2950 = vadd.f32 %v2748, %v2918
      %v2951 = vadd.f32 %v2749, %v2919
      %v2952 = vadd.f32 %v2750, %v2920
      %v2953 = vadd.f32 %v2751, %v2921
      %v2954 = vadd.f32 %v2752, %v2922
      %v2955 = vadd.f32 %v2753, %v2923
      %v2956 = vadd.f32 %v2754, %v2924
      %v2957 = vadd.f32 %v2755, %v2925
      %v2958 = vadd.f32 %v2756, %v2926
      %v2959 = vadd.f32 %v2757, %v2927
      %v2960 = vld [vmem:[%s2454 + $0x5] sm:$0xff]
      %v2961 = vld [vmem:[%s2454 + $0xd] sm:$0xff]
      %v2962 = vld [vmem:[%s2454 + $0x1d] sm:$0xff]
      %v2963 = vld [vmem:[%s2454 + $0x25] sm:$0xff]
      %v2964 = vld [vmem:[%s2454 + $0x35] sm:$0xff]
      %v2965 = vld [vmem:[%s2454 + $0x3d] sm:$0xff]
      %v2966 = vld [vmem:[%s2454 + $0x4d] sm:$0xff]
      %v2967 = vld [vmem:[%s2454 + $0x55] sm:$0xff]
      %v2968 = vld [vmem:[%s2454 + $0x65] sm:$0xff]
      %v2969 = vld [vmem:[%s2454 + $0x6d] sm:$0xff]
      %v2970 = vld [vmem:[%s2454 + $0x7d] sm:$0xff]
      %v2971 = vld [vmem:[%s2454 + $0x85] sm:$0xff]
      %v2972 = vld [vmem:[%s2454 + $0x95] sm:$0xff]
      %v2973 = vld [vmem:[%s2454 + $0x9d] sm:$0xff]
      %v2974 = vld [vmem:[%s2454 + $0xad] sm:$0xff]
      %v2975 = vld [vmem:[%s2454 + $0xb5] sm:$0xff]
      %v2976 = vld [vmem:[%s2454 + $0xc5] sm:$0xff]
      %v2977 = vld [vmem:[%s2454 + $0xcd] sm:$0xff]
      %v2978 = vld [vmem:[%s2454 + $0xdd] sm:$0xff]
      %v2979 = vld [vmem:[%s2454 + $0xe5] sm:$0xff]
      %v2980 = vld [vmem:[%s2454 + $0xf5] sm:$0xff]
      %v2981 = vld [vmem:[%s2454 + $0xfd] sm:$0xff]
      %v2982 = vld [vmem:[%s2454 + $0x10d] sm:$0xff]
      %v2983 = vld [vmem:[%s2454 + $0x115] sm:$0xff]
      %v2984 = vld [vmem:[%s2454 + $0x125] sm:$0xff]
      %v2985 = vld [vmem:[%s2454 + $0x12d] sm:$0xff]
      %v2986 = vld [vmem:[%s2454 + $0x13d] sm:$0xff]
      %v2987 = vld [vmem:[%s2454 + $0x145] sm:$0xff]
      %v2988 = vld [vmem:[%s2454 + $0x155] sm:$0xff]
      %v2989 = vld [vmem:[%s2454 + $0x15d] sm:$0xff]
      %v2990 = vld [vmem:[%s2454 + $0x16d] sm:$0xff]
      %v2991 = vld [vmem:[%s2454 + $0x175] sm:$0xff]
      %v2992 = vld [vmem:[%s1 + $0x1a] sm:$0x1]
      %v2993 = vlaneseq
      %v2994 = vshrl.u32 %v2993, 7
      %v2995 = vsub.s32 0, %v2994
      %v2996 = vrot.slane %v2992, %v2995
      %v2997 = vmul.f32 %v2960, %v2996
      %v2998 = vmul.f32 %v2961, %v2996
      %v2999 = vmul.f32 %v2962, %v2996
      %v3000 = vmul.f32 %v2963, %v2996
      %v3001 = vmul.f32 %v2964, %v2996
      %v3002 = vmul.f32 %v2965, %v2996
      %v3003 = vmul.f32 %v2966, %v2996
      %v3004 = vmul.f32 %v2967, %v2996
      %v3005 = vmul.f32 %v2968, %v2996
      %v3006 = vmul.f32 %v2969, %v2996
      %v3007 = vmul.f32 %v2970, %v2996
      %v3008 = vmul.f32 %v2971, %v2996
      %v3009 = vmul.f32 %v2972, %v2996
      %v3010 = vmul.f32 %v2973, %v2996
      %v3011 = vmul.f32 %v2974, %v2996
      %v3012 = vmul.f32 %v2975, %v2996
      %v3013 = vmul.f32 %v2976, %v2996
      %v3014 = vmul.f32 %v2977, %v2996
      %v3015 = vmul.f32 %v2978, %v2996
      %v3016 = vmul.f32 %v2979, %v2996
      %v3017 = vmul.f32 %v2980, %v2996
      %v3018 = vmul.f32 %v2981, %v2996
      %v3019 = vmul.f32 %v2982, %v2996
      %v3020 = vmul.f32 %v2983, %v2996
      %v3021 = vmul.f32 %v2984, %v2996
      %v3022 = vmul.f32 %v2985, %v2996
      %v3023 = vmul.f32 %v2986, %v2996
      %v3024 = vmul.f32 %v2987, %v2996
      %v3025 = vmul.f32 %v2988, %v2996
      %v3026 = vmul.f32 %v2989, %v2996
      %v3027 = vmul.f32 %v2990, %v2996
      %v3028 = vmul.f32 %v2991, %v2996
      %v3029 = vadd.f32 %v2827, %v2997
      %v3030 = vadd.f32 %v2828, %v2998
      %v3031 = vadd.f32 %v2829, %v2999
      %v3032 = vadd.f32 %v2830, %v3000
      %v3033 = vadd.f32 %v2831, %v3001
      %v3034 = vadd.f32 %v2832, %v3002
      %v3035 = vadd.f32 %v2833, %v3003
      %v3036 = vadd.f32 %v2834, %v3004
      %v3037 = vadd.f32 %v2835, %v3005
      %v3038 = vadd.f32 %v2836, %v3006
      %v3039 = vadd.f32 %v2837, %v3007
      %v3040 = vadd.f32 %v2838, %v3008
      %v3041 = vadd.f32 %v2839, %v3009
      %v3042 = vadd.f32 %v2840, %v3010
      %v3043 = vadd.f32 %v2841, %v3011
      %v3044 = vadd.f32 %v2842, %v3012
      %v3045 = vadd.f32 %v2843, %v3013
      %v3046 = vadd.f32 %v2844, %v3014
      %v3047 = vadd.f32 %v2845, %v3015
      %v3048 = vadd.f32 %v2846, %v3016
      %v3049 = vadd.f32 %v2847, %v3017
      %v3050 = vadd.f32 %v2848, %v3018
      %v3051 = vadd.f32 %v2849, %v3019
      %v3052 = vadd.f32 %v2850, %v3020
      %v3053 = vadd.f32 %v2851, %v3021
      %v3054 = vadd.f32 %v2852, %v3022
      %v3055 = vadd.f32 %v2853, %v3023
      %v3056 = vadd.f32 %v2854, %v3024
      %v3057 = vadd.f32 %v2855, %v3025
      %v3058 = vadd.f32 %v2856, %v3026
      %v3059 = vadd.f32 %v2857, %v3027
      %v3060 = vadd.f32 %v2858, %v3028
      %v3061 = vld [vmem:[%s2454 + $0x6] sm:$0xff]
      %v3062 = vld [vmem:[%s2454 + $0xe] sm:$0xff]
      %v3063 = vld [vmem:[%s2454 + $0x1e] sm:$0xff]
      %v3064 = vld [vmem:[%s2454 + $0x26] sm:$0xff]
      %v3065 = vld [vmem:[%s2454 + $0x36] sm:$0xff]
      %v3066 = vld [vmem:[%s2454 + $0x3e] sm:$0xff]
      %v3067 = vld [vmem:[%s2454 + $0x4e] sm:$0xff]
      %v3068 = vld [vmem:[%s2454 + $0x56] sm:$0xff]
      %v3069 = vld [vmem:[%s2454 + $0x66] sm:$0xff]
      %v3070 = vld [vmem:[%s2454 + $0x6e] sm:$0xff]
      %v3071 = vld [vmem:[%s2454 + $0x7e] sm:$0xff]
      %v3072 = vld [vmem:[%s2454 + $0x86] sm:$0xff]
      %v3073 = vld [vmem:[%s2454 + $0x96] sm:$0xff]
      %v3074 = vld [vmem:[%s2454 + $0x9e] sm:$0xff]
      %v3075 = vld [vmem:[%s2454 + $0xae] sm:$0xff]
      %v3076 = vld [vmem:[%s2454 + $0xb6] sm:$0xff]
      %v3077 = vld [vmem:[%s2454 + $0xc6] sm:$0xff]
      %v3078 = vld [vmem:[%s2454 + $0xce] sm:$0xff]
      %v3079 = vld [vmem:[%s2454 + $0xde] sm:$0xff]
      %v3080 = vld [vmem:[%s2454 + $0xe6] sm:$0xff]
      %v3081 = vld [vmem:[%s2454 + $0xf6] sm:$0xff]
      %v3082 = vld [vmem:[%s2454 + $0xfe] sm:$0xff]
      %v3083 = vld [vmem:[%s2454 + $0x10e] sm:$0xff]
      %v3084 = vld [vmem:[%s2454 + $0x116] sm:$0xff]
      %v3085 = vld [vmem:[%s2454 + $0x126] sm:$0xff]
      %v3086 = vld [vmem:[%s2454 + $0x12e] sm:$0xff]
      %v3087 = vld [vmem:[%s2454 + $0x13e] sm:$0xff]
      %v3088 = vld [vmem:[%s2454 + $0x146] sm:$0xff]
      %v3089 = vld [vmem:[%s2454 + $0x156] sm:$0xff]
      %v3090 = vld [vmem:[%s2454 + $0x15e] sm:$0xff]
      %v3091 = vld [vmem:[%s2454 + $0x16e] sm:$0xff]
      %v3092 = vld [vmem:[%s2454 + $0x176] sm:$0xff]
      %v3093 = vld [vmem:[%s1 + $0x1b] sm:$0x1]
      %v3094 = vlaneseq
      %v3095 = vshrl.u32 %v3094, 7
      %v3096 = vsub.s32 0, %v3095
      %v3097 = vrot.slane %v3093, %v3096
      %v3098 = vmul.f32 %v3061, %v3097
      %v3099 = vmul.f32 %v3062, %v3097
      %v3100 = vmul.f32 %v3063, %v3097
      %v3101 = vmul.f32 %v3064, %v3097
      %v3102 = vmul.f32 %v3065, %v3097
      %v3103 = vmul.f32 %v3066, %v3097
      %v3104 = vmul.f32 %v3067, %v3097
      %v3105 = vmul.f32 %v3068, %v3097
      %v3106 = vmul.f32 %v3069, %v3097
      %v3107 = vmul.f32 %v3070, %v3097
      %v3108 = vmul.f32 %v3071, %v3097
      %v3109 = vmul.f32 %v3072, %v3097
      %v3110 = vmul.f32 %v3073, %v3097
      %v3111 = vmul.f32 %v3074, %v3097
      %v3112 = vmul.f32 %v3075, %v3097
      %v3113 = vmul.f32 %v3076, %v3097
      %v3114 = vmul.f32 %v3077, %v3097
      %v3115 = vmul.f32 %v3078, %v3097
      %v3116 = vmul.f32 %v3079, %v3097
      %v3117 = vmul.f32 %v3080, %v3097
      %v3118 = vmul.f32 %v3081, %v3097
      %v3119 = vmul.f32 %v3082, %v3097
      %v3120 = vmul.f32 %v3083, %v3097
      %v3121 = vmul.f32 %v3084, %v3097
      %v3122 = vmul.f32 %v3085, %v3097
      %v3123 = vmul.f32 %v3086, %v3097
      %v3124 = vmul.f32 %v3087, %v3097
      %v3125 = vmul.f32 %v3088, %v3097
      %v3126 = vmul.f32 %v3089, %v3097
      %v3127 = vmul.f32 %v3090, %v3097
      %v3128 = vmul.f32 %v3091, %v3097
      %v3129 = vmul.f32 %v3092, %v3097
      %v3130 = vadd.f32 %v2928, %v3098
      %v3131 = vadd.f32 %v2929, %v3099
      %v3132 = vadd.f32 %v2930, %v3100
      %v3133 = vadd.f32 %v2931, %v3101
      %v3134 = vadd.f32 %v2932, %v3102
      %v3135 = vadd.f32 %v2933, %v3103
      %v3136 = vadd.f32 %v2934, %v3104
      %v3137 = vadd.f32 %v2935, %v3105
      %v3138 = vadd.f32 %v2936, %v3106
      %v3139 = vadd.f32 %v2937, %v3107
      %v3140 = vadd.f32 %v2938, %v3108
      %v3141 = vadd.f32 %v2939, %v3109
      %v3142 = vadd.f32 %v2940, %v3110
      %v3143 = vadd.f32 %v2941, %v3111
      %v3144 = vadd.f32 %v2942, %v3112
      %v3145 = vadd.f32 %v2943, %v3113
      %v3146 = vadd.f32 %v2944, %v3114
      %v3147 = vadd.f32 %v2945, %v3115
      %v3148 = vadd.f32 %v2946, %v3116
      %v3149 = vadd.f32 %v2947, %v3117
      %v3150 = vadd.f32 %v2948, %v3118
      %v3151 = vadd.f32 %v2949, %v3119
      %v3152 = vadd.f32 %v2950, %v3120
      %v3153 = vadd.f32 %v2951, %v3121
      %v3154 = vadd.f32 %v2952, %v3122
      %v3155 = vadd.f32 %v2953, %v3123
      %v3156 = vadd.f32 %v2954, %v3124
      %v3157 = vadd.f32 %v2955, %v3125
      %v3158 = vadd.f32 %v2956, %v3126
      %v3159 = vadd.f32 %v2957, %v3127
      %v3160 = vadd.f32 %v2958, %v3128
      %v3161 = vadd.f32 %v2959, %v3129
      %s3162 = sadd.s32 %s386, 4
      %s3163 = smul.u32 %s3162, 24
      %s3164 = scalar_lea.vmem %s373, %s3163
      %v3165 = vld [vmem:[%s3164] sm:$0xff]
      %v3166 = vld [vmem:[%s3164 + $0x8] sm:$0xff]
      %v3167 = vld [vmem:[%s3164 + $0x18] sm:$0xff]
      %v3168 = vld [vmem:[%s3164 + $0x20] sm:$0xff]
      %v3169 = vld [vmem:[%s3164 + $0x30] sm:$0xff]
      %v3170 = vld [vmem:[%s3164 + $0x38] sm:$0xff]
      %v3171 = vld [vmem:[%s3164 + $0x48] sm:$0xff]
      %v3172 = vld [vmem:[%s3164 + $0x50] sm:$0xff]
      %v3173 = vld [vmem:[%s3164 + $0x60] sm:$0xff]
      %v3174 = vld [vmem:[%s3164 + $0x68] sm:$0xff]
      %v3175 = vld [vmem:[%s3164 + $0x78] sm:$0xff]
      %v3176 = vld [vmem:[%s3164 + $0x80] sm:$0xff]
      %v3177 = vld [vmem:[%s3164 + $0x90] sm:$0xff]
      %v3178 = vld [vmem:[%s3164 + $0x98] sm:$0xff]
      %v3179 = vld [vmem:[%s3164 + $0xa8] sm:$0xff]
      %v3180 = vld [vmem:[%s3164 + $0xb0] sm:$0xff]
      %v3181 = vld [vmem:[%s3164 + $0xc0] sm:$0xff]
      %v3182 = vld [vmem:[%s3164 + $0xc8] sm:$0xff]
      %v3183 = vld [vmem:[%s3164 + $0xd8] sm:$0xff]
      %v3184 = vld [vmem:[%s3164 + $0xe0] sm:$0xff]
      %v3185 = vld [vmem:[%s3164 + $0xf0] sm:$0xff]
      %v3186 = vld [vmem:[%s3164 + $0xf8] sm:$0xff]
      %v3187 = vld [vmem:[%s3164 + $0x108] sm:$0xff]
      %v3188 = vld [vmem:[%s3164 + $0x110] sm:$0xff]
      %v3189 = vld [vmem:[%s3164 + $0x120] sm:$0xff]
      %v3190 = vld [vmem:[%s3164 + $0x128] sm:$0xff]
      %v3191 = vld [vmem:[%s3164 + $0x138] sm:$0xff]
      %v3192 = vld [vmem:[%s3164 + $0x140] sm:$0xff]
      %v3193 = vld [vmem:[%s3164 + $0x150] sm:$0xff]
      %v3194 = vld [vmem:[%s3164 + $0x158] sm:$0xff]
      %v3195 = vld [vmem:[%s3164 + $0x168] sm:$0xff]
      %v3196 = vld [vmem:[%s3164 + $0x170] sm:$0xff]
      %v3197 = vld [vmem:[%s1 + $0x1c] sm:$0x1]
      %v3198 = vlaneseq
      %v3199 = vshrl.u32 %v3198, 7
      %v3200 = vsub.s32 0, %v3199
      %v3201 = vrot.slane %v3197, %v3200
      %v3202 = vmul.f32 %v3165, %v3201
      %v3203 = vmul.f32 %v3166, %v3201
      %v3204 = vmul.f32 %v3167, %v3201
      %v3205 = vmul.f32 %v3168, %v3201
      %v3206 = vmul.f32 %v3169, %v3201
      %v3207 = vmul.f32 %v3170, %v3201
      %v3208 = vmul.f32 %v3171, %v3201
      %v3209 = vmul.f32 %v3172, %v3201
      %v3210 = vmul.f32 %v3173, %v3201
      %v3211 = vmul.f32 %v3174, %v3201
      %v3212 = vmul.f32 %v3175, %v3201
      %v3213 = vmul.f32 %v3176, %v3201
      %v3214 = vmul.f32 %v3177, %v3201
      %v3215 = vmul.f32 %v3178, %v3201
      %v3216 = vmul.f32 %v3179, %v3201
      %v3217 = vmul.f32 %v3180, %v3201
      %v3218 = vmul.f32 %v3181, %v3201
      %v3219 = vmul.f32 %v3182, %v3201
      %v3220 = vmul.f32 %v3183, %v3201
      %v3221 = vmul.f32 %v3184, %v3201
      %v3222 = vmul.f32 %v3185, %v3201
      %v3223 = vmul.f32 %v3186, %v3201
      %v3224 = vmul.f32 %v3187, %v3201
      %v3225 = vmul.f32 %v3188, %v3201
      %v3226 = vmul.f32 %v3189, %v3201
      %v3227 = vmul.f32 %v3190, %v3201
      %v3228 = vmul.f32 %v3191, %v3201
      %v3229 = vmul.f32 %v3192, %v3201
      %v3230 = vmul.f32 %v3193, %v3201
      %v3231 = vmul.f32 %v3194, %v3201
      %v3232 = vmul.f32 %v3195, %v3201
      %v3233 = vmul.f32 %v3196, %v3201
      %v3234 = vadd.f32 %v3029, %v3202
      %v3235 = vadd.f32 %v3030, %v3203
      %v3236 = vadd.f32 %v3031, %v3204
      %v3237 = vadd.f32 %v3032, %v3205
      %v3238 = vadd.f32 %v3033, %v3206
      %v3239 = vadd.f32 %v3034, %v3207
      %v3240 = vadd.f32 %v3035, %v3208
      %v3241 = vadd.f32 %v3036, %v3209
      %v3242 = vadd.f32 %v3037, %v3210
      %v3243 = vadd.f32 %v3038, %v3211
      %v3244 = vadd.f32 %v3039, %v3212
      %v3245 = vadd.f32 %v3040, %v3213
      %v3246 = vadd.f32 %v3041, %v3214
      %v3247 = vadd.f32 %v3042, %v3215
      %v3248 = vadd.f32 %v3043, %v3216
      %v3249 = vadd.f32 %v3044, %v3217
      %v3250 = vadd.f32 %v3045, %v3218
      %v3251 = vadd.f32 %v3046, %v3219
      %v3252 = vadd.f32 %v3047, %v3220
      %v3253 = vadd.f32 %v3048, %v3221
      %v3254 = vadd.f32 %v3049, %v3222
      %v3255 = vadd.f32 %v3050, %v3223
      %v3256 = vadd.f32 %v3051, %v3224
      %v3257 = vadd.f32 %v3052, %v3225
      %v3258 = vadd.f32 %v3053, %v3226
      %v3259 = vadd.f32 %v3054, %v3227
      %v3260 = vadd.f32 %v3055, %v3228
      %v3261 = vadd.f32 %v3056, %v3229
      %v3262 = vadd.f32 %v3057, %v3230
      %v3263 = vadd.f32 %v3058, %v3231
      %v3264 = vadd.f32 %v3059, %v3232
      %v3265 = vadd.f32 %v3060, %v3233
      %v3266 = vld [vmem:[%s3164 + $0x1] sm:$0xff]
      %v3267 = vld [vmem:[%s3164 + $0x9] sm:$0xff]
      %v3268 = vld [vmem:[%s3164 + $0x19] sm:$0xff]
      %v3269 = vld [vmem:[%s3164 + $0x21] sm:$0xff]
      %v3270 = vld [vmem:[%s3164 + $0x31] sm:$0xff]
      %v3271 = vld [vmem:[%s3164 + $0x39] sm:$0xff]
      %v3272 = vld [vmem:[%s3164 + $0x49] sm:$0xff]
      %v3273 = vld [vmem:[%s3164 + $0x51] sm:$0xff]
      %v3274 = vld [vmem:[%s3164 + $0x61] sm:$0xff]
      %v3275 = vld [vmem:[%s3164 + $0x69] sm:$0xff]
      %v3276 = vld [vmem:[%s3164 + $0x79] sm:$0xff]
      %v3277 = vld [vmem:[%s3164 + $0x81] sm:$0xff]
      %v3278 = vld [vmem:[%s3164 + $0x91] sm:$0xff]
      %v3279 = vld [vmem:[%s3164 + $0x99] sm:$0xff]
      %v3280 = vld [vmem:[%s3164 + $0xa9] sm:$0xff]
      %v3281 = vld [vmem:[%s3164 + $0xb1] sm:$0xff]
      %v3282 = vld [vmem:[%s3164 + $0xc1] sm:$0xff]
      %v3283 = vld [vmem:[%s3164 + $0xc9] sm:$0xff]
      %v3284 = vld [vmem:[%s3164 + $0xd9] sm:$0xff]
      %v3285 = vld [vmem:[%s3164 + $0xe1] sm:$0xff]
      %v3286 = vld [vmem:[%s3164 + $0xf1] sm:$0xff]
      %v3287 = vld [vmem:[%s3164 + $0xf9] sm:$0xff]
      %v3288 = vld [vmem:[%s3164 + $0x109] sm:$0xff]
      %v3289 = vld [vmem:[%s3164 + $0x111] sm:$0xff]
      %v3290 = vld [vmem:[%s3164 + $0x121] sm:$0xff]
      %v3291 = vld [vmem:[%s3164 + $0x129] sm:$0xff]
      %v3292 = vld [vmem:[%s3164 + $0x139] sm:$0xff]
      %v3293 = vld [vmem:[%s3164 + $0x141] sm:$0xff]
      %v3294 = vld [vmem:[%s3164 + $0x151] sm:$0xff]
      %v3295 = vld [vmem:[%s3164 + $0x159] sm:$0xff]
      %v3296 = vld [vmem:[%s3164 + $0x169] sm:$0xff]
      %v3297 = vld [vmem:[%s3164 + $0x171] sm:$0xff]
      %v3298 = vld [vmem:[%s1 + $0x1d] sm:$0x1]
      %v3299 = vlaneseq
      %v3300 = vshrl.u32 %v3299, 7
      %v3301 = vsub.s32 0, %v3300
      %v3302 = vrot.slane %v3298, %v3301
      %v3303 = vmul.f32 %v3266, %v3302
      %v3304 = vmul.f32 %v3267, %v3302
      %v3305 = vmul.f32 %v3268, %v3302
      %v3306 = vmul.f32 %v3269, %v3302
      %v3307 = vmul.f32 %v3270, %v3302
      %v3308 = vmul.f32 %v3271, %v3302
      %v3309 = vmul.f32 %v3272, %v3302
      %v3310 = vmul.f32 %v3273, %v3302
      %v3311 = vmul.f32 %v3274, %v3302
      %v3312 = vmul.f32 %v3275, %v3302
      %v3313 = vmul.f32 %v3276, %v3302
      %v3314 = vmul.f32 %v3277, %v3302
      %v3315 = vmul.f32 %v3278, %v3302
      %v3316 = vmul.f32 %v3279, %v3302
      %v3317 = vmul.f32 %v3280, %v3302
      %v3318 = vmul.f32 %v3281, %v3302
      %v3319 = vmul.f32 %v3282, %v3302
      %v3320 = vmul.f32 %v3283, %v3302
      %v3321 = vmul.f32 %v3284, %v3302
      %v3322 = vmul.f32 %v3285, %v3302
      %v3323 = vmul.f32 %v3286, %v3302
      %v3324 = vmul.f32 %v3287, %v3302
      %v3325 = vmul.f32 %v3288, %v3302
      %v3326 = vmul.f32 %v3289, %v3302
      %v3327 = vmul.f32 %v3290, %v3302
      %v3328 = vmul.f32 %v3291, %v3302
      %v3329 = vmul.f32 %v3292, %v3302
      %v3330 = vmul.f32 %v3293, %v3302
      %v3331 = vmul.f32 %v3294, %v3302
      %v3332 = vmul.f32 %v3295, %v3302
      %v3333 = vmul.f32 %v3296, %v3302
      %v3334 = vmul.f32 %v3297, %v3302
      %v3335 = vadd.f32 %v3130, %v3303
      %v3336 = vadd.f32 %v3131, %v3304
      %v3337 = vadd.f32 %v3132, %v3305
      %v3338 = vadd.f32 %v3133, %v3306
      %v3339 = vadd.f32 %v3134, %v3307
      %v3340 = vadd.f32 %v3135, %v3308
      %v3341 = vadd.f32 %v3136, %v3309
      %v3342 = vadd.f32 %v3137, %v3310
      %v3343 = vadd.f32 %v3138, %v3311
      %v3344 = vadd.f32 %v3139, %v3312
      %v3345 = vadd.f32 %v3140, %v3313
      %v3346 = vadd.f32 %v3141, %v3314
      %v3347 = vadd.f32 %v3142, %v3315
      %v3348 = vadd.f32 %v3143, %v3316
      %v3349 = vadd.f32 %v3144, %v3317
      %v3350 = vadd.f32 %v3145, %v3318
      %v3351 = vadd.f32 %v3146, %v3319
      %v3352 = vadd.f32 %v3147, %v3320
      %v3353 = vadd.f32 %v3148, %v3321
      %v3354 = vadd.f32 %v3149, %v3322
      %v3355 = vadd.f32 %v3150, %v3323
      %v3356 = vadd.f32 %v3151, %v3324
      %v3357 = vadd.f32 %v3152, %v3325
      %v3358 = vadd.f32 %v3153, %v3326
      %v3359 = vadd.f32 %v3154, %v3327
      %v3360 = vadd.f32 %v3155, %v3328
      %v3361 = vadd.f32 %v3156, %v3329
      %v3362 = vadd.f32 %v3157, %v3330
      %v3363 = vadd.f32 %v3158, %v3331
      %v3364 = vadd.f32 %v3159, %v3332
      %v3365 = vadd.f32 %v3160, %v3333
      %v3366 = vadd.f32 %v3161, %v3334
      %v3367 = vld [vmem:[%s3164 + $0x2] sm:$0xff]
      %v3368 = vld [vmem:[%s3164 + $0xa] sm:$0xff]
      %v3369 = vld [vmem:[%s3164 + $0x1a] sm:$0xff]
      %v3370 = vld [vmem:[%s3164 + $0x22] sm:$0xff]
      %v3371 = vld [vmem:[%s3164 + $0x32] sm:$0xff]
      %v3372 = vld [vmem:[%s3164 + $0x3a] sm:$0xff]
      %v3373 = vld [vmem:[%s3164 + $0x4a] sm:$0xff]
      %v3374 = vld [vmem:[%s3164 + $0x52] sm:$0xff]
      %v3375 = vld [vmem:[%s3164 + $0x62] sm:$0xff]
      %v3376 = vld [vmem:[%s3164 + $0x6a] sm:$0xff]
      %v3377 = vld [vmem:[%s3164 + $0x7a] sm:$0xff]
      %v3378 = vld [vmem:[%s3164 + $0x82] sm:$0xff]
      %v3379 = vld [vmem:[%s3164 + $0x92] sm:$0xff]
      %v3380 = vld [vmem:[%s3164 + $0x9a] sm:$0xff]
      %v3381 = vld [vmem:[%s3164 + $0xaa] sm:$0xff]
      %v3382 = vld [vmem:[%s3164 + $0xb2] sm:$0xff]
      %v3383 = vld [vmem:[%s3164 + $0xc2] sm:$0xff]
      %v3384 = vld [vmem:[%s3164 + $0xca] sm:$0xff]
      %v3385 = vld [vmem:[%s3164 + $0xda] sm:$0xff]
      %v3386 = vld [vmem:[%s3164 + $0xe2] sm:$0xff]
      %v3387 = vld [vmem:[%s3164 + $0xf2] sm:$0xff]
      %v3388 = vld [vmem:[%s3164 + $0xfa] sm:$0xff]
      %v3389 = vld [vmem:[%s3164 + $0x10a] sm:$0xff]
      %v3390 = vld [vmem:[%s3164 + $0x112] sm:$0xff]
      %v3391 = vld [vmem:[%s3164 + $0x122] sm:$0xff]
      %v3392 = vld [vmem:[%s3164 + $0x12a] sm:$0xff]
      %v3393 = vld [vmem:[%s3164 + $0x13a] sm:$0xff]
      %v3394 = vld [vmem:[%s3164 + $0x142] sm:$0xff]
      %v3395 = vld [vmem:[%s3164 + $0x152] sm:$0xff]
      %v3396 = vld [vmem:[%s3164 + $0x15a] sm:$0xff]
      %v3397 = vld [vmem:[%s3164 + $0x16a] sm:$0xff]
      %v3398 = vld [vmem:[%s3164 + $0x172] sm:$0xff]
      %v3399 = vld [vmem:[%s1 + $0x1e] sm:$0x1]
      %v3400 = vlaneseq
      %v3401 = vshrl.u32 %v3400, 7
      %v3402 = vsub.s32 0, %v3401
      %v3403 = vrot.slane %v3399, %v3402
      %v3404 = vmul.f32 %v3367, %v3403
      %v3405 = vmul.f32 %v3368, %v3403
      %v3406 = vmul.f32 %v3369, %v3403
      %v3407 = vmul.f32 %v3370, %v3403
      %v3408 = vmul.f32 %v3371, %v3403
      %v3409 = vmul.f32 %v3372, %v3403
      %v3410 = vmul.f32 %v3373, %v3403
      %v3411 = vmul.f32 %v3374, %v3403
      %v3412 = vmul.f32 %v3375, %v3403
      %v3413 = vmul.f32 %v3376, %v3403
      %v3414 = vmul.f32 %v3377, %v3403
      %v3415 = vmul.f32 %v3378, %v3403
      %v3416 = vmul.f32 %v3379, %v3403
      %v3417 = vmul.f32 %v3380, %v3403
      %v3418 = vmul.f32 %v3381, %v3403
      %v3419 = vmul.f32 %v3382, %v3403
      %v3420 = vmul.f32 %v3383, %v3403
      %v3421 = vmul.f32 %v3384, %v3403
      %v3422 = vmul.f32 %v3385, %v3403
      %v3423 = vmul.f32 %v3386, %v3403
      %v3424 = vmul.f32 %v3387, %v3403
      %v3425 = vmul.f32 %v3388, %v3403
      %v3426 = vmul.f32 %v3389, %v3403
      %v3427 = vmul.f32 %v3390, %v3403
      %v3428 = vmul.f32 %v3391, %v3403
      %v3429 = vmul.f32 %v3392, %v3403
      %v3430 = vmul.f32 %v3393, %v3403
      %v3431 = vmul.f32 %v3394, %v3403
      %v3432 = vmul.f32 %v3395, %v3403
      %v3433 = vmul.f32 %v3396, %v3403
      %v3434 = vmul.f32 %v3397, %v3403
      %v3435 = vmul.f32 %v3398, %v3403
      %v3436 = vadd.f32 %v3234, %v3404
      %v3437 = vadd.f32 %v3235, %v3405
      %v3438 = vadd.f32 %v3236, %v3406
      %v3439 = vadd.f32 %v3237, %v3407
      %v3440 = vadd.f32 %v3238, %v3408
      %v3441 = vadd.f32 %v3239, %v3409
      %v3442 = vadd.f32 %v3240, %v3410
      %v3443 = vadd.f32 %v3241, %v3411
      %v3444 = vadd.f32 %v3242, %v3412
      %v3445 = vadd.f32 %v3243, %v3413
      %v3446 = vadd.f32 %v3244, %v3414
      %v3447 = vadd.f32 %v3245, %v3415
      %v3448 = vadd.f32 %v3246, %v3416
      %v3449 = vadd.f32 %v3247, %v3417
      %v3450 = vadd.f32 %v3248, %v3418
      %v3451 = vadd.f32 %v3249, %v3419
      %v3452 = vadd.f32 %v3250, %v3420
      %v3453 = vadd.f32 %v3251, %v3421
      %v3454 = vadd.f32 %v3252, %v3422
      %v3455 = vadd.f32 %v3253, %v3423
      %v3456 = vadd.f32 %v3254, %v3424
      %v3457 = vadd.f32 %v3255, %v3425
      %v3458 = vadd.f32 %v3256, %v3426
      %v3459 = vadd.f32 %v3257, %v3427
      %v3460 = vadd.f32 %v3258, %v3428
      %v3461 = vadd.f32 %v3259, %v3429
      %v3462 = vadd.f32 %v3260, %v3430
      %v3463 = vadd.f32 %v3261, %v3431
      %v3464 = vadd.f32 %v3262, %v3432
      %v3465 = vadd.f32 %v3263, %v3433
      %v3466 = vadd.f32 %v3264, %v3434
      %v3467 = vadd.f32 %v3265, %v3435
      %v3468 = vld [vmem:[%s3164 + $0x3] sm:$0xff]
      %v3469 = vld [vmem:[%s3164 + $0xb] sm:$0xff]
      %v3470 = vld [vmem:[%s3164 + $0x1b] sm:$0xff]
      %v3471 = vld [vmem:[%s3164 + $0x23] sm:$0xff]
      %v3472 = vld [vmem:[%s3164 + $0x33] sm:$0xff]
      %v3473 = vld [vmem:[%s3164 + $0x3b] sm:$0xff]
      %v3474 = vld [vmem:[%s3164 + $0x4b] sm:$0xff]
      %v3475 = vld [vmem:[%s3164 + $0x53] sm:$0xff]
      %v3476 = vld [vmem:[%s3164 + $0x63] sm:$0xff]
      %v3477 = vld [vmem:[%s3164 + $0x6b] sm:$0xff]
      %v3478 = vld [vmem:[%s3164 + $0x7b] sm:$0xff]
      %v3479 = vld [vmem:[%s3164 + $0x83] sm:$0xff]
      %v3480 = vld [vmem:[%s3164 + $0x93] sm:$0xff]
      %v3481 = vld [vmem:[%s3164 + $0x9b] sm:$0xff]
      %v3482 = vld [vmem:[%s3164 + $0xab] sm:$0xff]
      %v3483 = vld [vmem:[%s3164 + $0xb3] sm:$0xff]
      %v3484 = vld [vmem:[%s3164 + $0xc3] sm:$0xff]
      %v3485 = vld [vmem:[%s3164 + $0xcb] sm:$0xff]
      %v3486 = vld [vmem:[%s3164 + $0xdb] sm:$0xff]
      %v3487 = vld [vmem:[%s3164 + $0xe3] sm:$0xff]
      %v3488 = vld [vmem:[%s3164 + $0xf3] sm:$0xff]
      %v3489 = vld [vmem:[%s3164 + $0xfb] sm:$0xff]
      %v3490 = vld [vmem:[%s3164 + $0x10b] sm:$0xff]
      %v3491 = vld [vmem:[%s3164 + $0x113] sm:$0xff]
      %v3492 = vld [vmem:[%s3164 + $0x123] sm:$0xff]
      %v3493 = vld [vmem:[%s3164 + $0x12b] sm:$0xff]
      %v3494 = vld [vmem:[%s3164 + $0x13b] sm:$0xff]
      %v3495 = vld [vmem:[%s3164 + $0x143] sm:$0xff]
      %v3496 = vld [vmem:[%s3164 + $0x153] sm:$0xff]
      %v3497 = vld [vmem:[%s3164 + $0x15b] sm:$0xff]
      %v3498 = vld [vmem:[%s3164 + $0x16b] sm:$0xff]
      %v3499 = vld [vmem:[%s3164 + $0x173] sm:$0xff]
      %v3500 = vld [vmem:[%s1 + $0x1f] sm:$0x1]
      %v3501 = vlaneseq
      %v3502 = vshrl.u32 %v3501, 7
      %v3503 = vsub.s32 0, %v3502
      %v3504 = vrot.slane %v3500, %v3503
      %v3505 = vmul.f32 %v3468, %v3504
      %v3506 = vmul.f32 %v3469, %v3504
      %v3507 = vmul.f32 %v3470, %v3504
      %v3508 = vmul.f32 %v3471, %v3504
      %v3509 = vmul.f32 %v3472, %v3504
      %v3510 = vmul.f32 %v3473, %v3504
      %v3511 = vmul.f32 %v3474, %v3504
      %v3512 = vmul.f32 %v3475, %v3504
      %v3513 = vmul.f32 %v3476, %v3504
      %v3514 = vmul.f32 %v3477, %v3504
      %v3515 = vmul.f32 %v3478, %v3504
      %v3516 = vmul.f32 %v3479, %v3504
      %v3517 = vmul.f32 %v3480, %v3504
      %v3518 = vmul.f32 %v3481, %v3504
      %v3519 = vmul.f32 %v3482, %v3504
      %v3520 = vmul.f32 %v3483, %v3504
      %v3521 = vmul.f32 %v3484, %v3504
      %v3522 = vmul.f32 %v3485, %v3504
      %v3523 = vmul.f32 %v3486, %v3504
      %v3524 = vmul.f32 %v3487, %v3504
      %v3525 = vmul.f32 %v3488, %v3504
      %v3526 = vmul.f32 %v3489, %v3504
      %v3527 = vmul.f32 %v3490, %v3504
      %v3528 = vmul.f32 %v3491, %v3504
      %v3529 = vmul.f32 %v3492, %v3504
      %v3530 = vmul.f32 %v3493, %v3504
      %v3531 = vmul.f32 %v3494, %v3504
      %v3532 = vmul.f32 %v3495, %v3504
      %v3533 = vmul.f32 %v3496, %v3504
      %v3534 = vmul.f32 %v3497, %v3504
      %v3535 = vmul.f32 %v3498, %v3504
      %v3536 = vmul.f32 %v3499, %v3504
      %v3537 = vadd.f32 %v3335, %v3505
      %v3538 = vadd.f32 %v3336, %v3506
      %v3539 = vadd.f32 %v3337, %v3507
      %v3540 = vadd.f32 %v3338, %v3508
      %v3541 = vadd.f32 %v3339, %v3509
      %v3542 = vadd.f32 %v3340, %v3510
      %v3543 = vadd.f32 %v3341, %v3511
      %v3544 = vadd.f32 %v3342, %v3512
      %v3545 = vadd.f32 %v3343, %v3513
      %v3546 = vadd.f32 %v3344, %v3514
      %v3547 = vadd.f32 %v3345, %v3515
      %v3548 = vadd.f32 %v3346, %v3516
      %v3549 = vadd.f32 %v3347, %v3517
      %v3550 = vadd.f32 %v3348, %v3518
      %v3551 = vadd.f32 %v3349, %v3519
      %v3552 = vadd.f32 %v3350, %v3520
      %v3553 = vadd.f32 %v3351, %v3521
      %v3554 = vadd.f32 %v3352, %v3522
      %v3555 = vadd.f32 %v3353, %v3523
      %v3556 = vadd.f32 %v3354, %v3524
      %v3557 = vadd.f32 %v3355, %v3525
      %v3558 = vadd.f32 %v3356, %v3526
      %v3559 = vadd.f32 %v3357, %v3527
      %v3560 = vadd.f32 %v3358, %v3528
      %v3561 = vadd.f32 %v3359, %v3529
      %v3562 = vadd.f32 %v3360, %v3530
      %v3563 = vadd.f32 %v3361, %v3531
      %v3564 = vadd.f32 %v3362, %v3532
      %v3565 = vadd.f32 %v3363, %v3533
      %v3566 = vadd.f32 %v3364, %v3534
      %v3567 = vadd.f32 %v3365, %v3535
      %v3568 = vadd.f32 %v3366, %v3536
      %v3569 = vld [vmem:[%s3164 + $0x4] sm:$0xff]
      %v3570 = vld [vmem:[%s3164 + $0xc] sm:$0xff]
      %v3571 = vld [vmem:[%s3164 + $0x1c] sm:$0xff]
      %v3572 = vld [vmem:[%s3164 + $0x24] sm:$0xff]
      %v3573 = vld [vmem:[%s3164 + $0x34] sm:$0xff]
      %v3574 = vld [vmem:[%s3164 + $0x3c] sm:$0xff]
      %v3575 = vld [vmem:[%s3164 + $0x4c] sm:$0xff]
      %v3576 = vld [vmem:[%s3164 + $0x54] sm:$0xff]
      %v3577 = vld [vmem:[%s3164 + $0x64] sm:$0xff]
      %v3578 = vld [vmem:[%s3164 + $0x6c] sm:$0xff]
      %v3579 = vld [vmem:[%s3164 + $0x7c] sm:$0xff]
      %v3580 = vld [vmem:[%s3164 + $0x84] sm:$0xff]
      %v3581 = vld [vmem:[%s3164 + $0x94] sm:$0xff]
      %v3582 = vld [vmem:[%s3164 + $0x9c] sm:$0xff]
      %v3583 = vld [vmem:[%s3164 + $0xac] sm:$0xff]
      %v3584 = vld [vmem:[%s3164 + $0xb4] sm:$0xff]
      %v3585 = vld [vmem:[%s3164 + $0xc4] sm:$0xff]
      %v3586 = vld [vmem:[%s3164 + $0xcc] sm:$0xff]
      %v3587 = vld [vmem:[%s3164 + $0xdc] sm:$0xff]
      %v3588 = vld [vmem:[%s3164 + $0xe4] sm:$0xff]
      %v3589 = vld [vmem:[%s3164 + $0xf4] sm:$0xff]
      %v3590 = vld [vmem:[%s3164 + $0xfc] sm:$0xff]
      %v3591 = vld [vmem:[%s3164 + $0x10c] sm:$0xff]
      %v3592 = vld [vmem:[%s3164 + $0x114] sm:$0xff]
      %v3593 = vld [vmem:[%s3164 + $0x124] sm:$0xff]
      %v3594 = vld [vmem:[%s3164 + $0x12c] sm:$0xff]
      %v3595 = vld [vmem:[%s3164 + $0x13c] sm:$0xff]
      %v3596 = vld [vmem:[%s3164 + $0x144] sm:$0xff]
      %v3597 = vld [vmem:[%s3164 + $0x154] sm:$0xff]
      %v3598 = vld [vmem:[%s3164 + $0x15c] sm:$0xff]
      %v3599 = vld [vmem:[%s3164 + $0x16c] sm:$0xff]
      %v3600 = vld [vmem:[%s3164 + $0x174] sm:$0xff]
      %v3601 = vld [vmem:[%s1 + $0x20] sm:$0x1]
      %v3602 = vlaneseq
      %v3603 = vshrl.u32 %v3602, 7
      %v3604 = vsub.s32 0, %v3603
      %v3605 = vrot.slane %v3601, %v3604
      %v3606 = vmul.f32 %v3569, %v3605
      %v3607 = vmul.f32 %v3570, %v3605
      %v3608 = vmul.f32 %v3571, %v3605
      %v3609 = vmul.f32 %v3572, %v3605
      %v3610 = vmul.f32 %v3573, %v3605
      %v3611 = vmul.f32 %v3574, %v3605
      %v3612 = vmul.f32 %v3575, %v3605
      %v3613 = vmul.f32 %v3576, %v3605
      %v3614 = vmul.f32 %v3577, %v3605
      %v3615 = vmul.f32 %v3578, %v3605
      %v3616 = vmul.f32 %v3579, %v3605
      %v3617 = vmul.f32 %v3580, %v3605
      %v3618 = vmul.f32 %v3581, %v3605
      %v3619 = vmul.f32 %v3582, %v3605
      %v3620 = vmul.f32 %v3583, %v3605
      %v3621 = vmul.f32 %v3584, %v3605
      %v3622 = vmul.f32 %v3585, %v3605
      %v3623 = vmul.f32 %v3586, %v3605
      %v3624 = vmul.f32 %v3587, %v3605
      %v3625 = vmul.f32 %v3588, %v3605
      %v3626 = vmul.f32 %v3589, %v3605
      %v3627 = vmul.f32 %v3590, %v3605
      %v3628 = vmul.f32 %v3591, %v3605
      %v3629 = vmul.f32 %v3592, %v3605
      %v3630 = vmul.f32 %v3593, %v3605
      %v3631 = vmul.f32 %v3594, %v3605
      %v3632 = vmul.f32 %v3595, %v3605
      %v3633 = vmul.f32 %v3596, %v3605
      %v3634 = vmul.f32 %v3597, %v3605
      %v3635 = vmul.f32 %v3598, %v3605
      %v3636 = vmul.f32 %v3599, %v3605
      %v3637 = vmul.f32 %v3600, %v3605
      %v3638 = vadd.f32 %v3436, %v3606
      %v3639 = vadd.f32 %v3437, %v3607
      %v3640 = vadd.f32 %v3438, %v3608
      %v3641 = vadd.f32 %v3439, %v3609
      %v3642 = vadd.f32 %v3440, %v3610
      %v3643 = vadd.f32 %v3441, %v3611
      %v3644 = vadd.f32 %v3442, %v3612
      %v3645 = vadd.f32 %v3443, %v3613
      %v3646 = vadd.f32 %v3444, %v3614
      %v3647 = vadd.f32 %v3445, %v3615
      %v3648 = vadd.f32 %v3446, %v3616
      %v3649 = vadd.f32 %v3447, %v3617
      %v3650 = vadd.f32 %v3448, %v3618
      %v3651 = vadd.f32 %v3449, %v3619
      %v3652 = vadd.f32 %v3450, %v3620
      %v3653 = vadd.f32 %v3451, %v3621
      %v3654 = vadd.f32 %v3452, %v3622
      %v3655 = vadd.f32 %v3453, %v3623
      %v3656 = vadd.f32 %v3454, %v3624
      %v3657 = vadd.f32 %v3455, %v3625
      %v3658 = vadd.f32 %v3456, %v3626
      %v3659 = vadd.f32 %v3457, %v3627
      %v3660 = vadd.f32 %v3458, %v3628
      %v3661 = vadd.f32 %v3459, %v3629
      %v3662 = vadd.f32 %v3460, %v3630
      %v3663 = vadd.f32 %v3461, %v3631
      %v3664 = vadd.f32 %v3462, %v3632
      %v3665 = vadd.f32 %v3463, %v3633
      %v3666 = vadd.f32 %v3464, %v3634
      %v3667 = vadd.f32 %v3465, %v3635
      %v3668 = vadd.f32 %v3466, %v3636
      %v3669 = vadd.f32 %v3467, %v3637
      %v3670 = vld [vmem:[%s3164 + $0x5] sm:$0xff]
      %v3671 = vld [vmem:[%s3164 + $0xd] sm:$0xff]
      %v3672 = vld [vmem:[%s3164 + $0x1d] sm:$0xff]
      %v3673 = vld [vmem:[%s3164 + $0x25] sm:$0xff]
      %v3674 = vld [vmem:[%s3164 + $0x35] sm:$0xff]
      %v3675 = vld [vmem:[%s3164 + $0x3d] sm:$0xff]
      %v3676 = vld [vmem:[%s3164 + $0x4d] sm:$0xff]
      %v3677 = vld [vmem:[%s3164 + $0x55] sm:$0xff]
      %v3678 = vld [vmem:[%s3164 + $0x65] sm:$0xff]
      %v3679 = vld [vmem:[%s3164 + $0x6d] sm:$0xff]
      %v3680 = vld [vmem:[%s3164 + $0x7d] sm:$0xff]
      %v3681 = vld [vmem:[%s3164 + $0x85] sm:$0xff]
      %v3682 = vld [vmem:[%s3164 + $0x95] sm:$0xff]
      %v3683 = vld [vmem:[%s3164 + $0x9d] sm:$0xff]
      %v3684 = vld [vmem:[%s3164 + $0xad] sm:$0xff]
      %v3685 = vld [vmem:[%s3164 + $0xb5] sm:$0xff]
      %v3686 = vld [vmem:[%s3164 + $0xc5] sm:$0xff]
      %v3687 = vld [vmem:[%s3164 + $0xcd] sm:$0xff]
      %v3688 = vld [vmem:[%s3164 + $0xdd] sm:$0xff]
      %v3689 = vld [vmem:[%s3164 + $0xe5] sm:$0xff]
      %v3690 = vld [vmem:[%s3164 + $0xf5] sm:$0xff]
      %v3691 = vld [vmem:[%s3164 + $0xfd] sm:$0xff]
      %v3692 = vld [vmem:[%s3164 + $0x10d] sm:$0xff]
      %v3693 = vld [vmem:[%s3164 + $0x115] sm:$0xff]
      %v3694 = vld [vmem:[%s3164 + $0x125] sm:$0xff]
      %v3695 = vld [vmem:[%s3164 + $0x12d] sm:$0xff]
      %v3696 = vld [vmem:[%s3164 + $0x13d] sm:$0xff]
      %v3697 = vld [vmem:[%s3164 + $0x145] sm:$0xff]
      %v3698 = vld [vmem:[%s3164 + $0x155] sm:$0xff]
      %v3699 = vld [vmem:[%s3164 + $0x15d] sm:$0xff]
      %v3700 = vld [vmem:[%s3164 + $0x16d] sm:$0xff]
      %v3701 = vld [vmem:[%s3164 + $0x175] sm:$0xff]
      %v3702 = vld [vmem:[%s1 + $0x21] sm:$0x1]
      %v3703 = vlaneseq
      %v3704 = vshrl.u32 %v3703, 7
      %v3705 = vsub.s32 0, %v3704
      %v3706 = vrot.slane %v3702, %v3705
      %v3707 = vmul.f32 %v3670, %v3706
      %v3708 = vmul.f32 %v3671, %v3706
      %v3709 = vmul.f32 %v3672, %v3706
      %v3710 = vmul.f32 %v3673, %v3706
      %v3711 = vmul.f32 %v3674, %v3706
      %v3712 = vmul.f32 %v3675, %v3706
      %v3713 = vmul.f32 %v3676, %v3706
      %v3714 = vmul.f32 %v3677, %v3706
      %v3715 = vmul.f32 %v3678, %v3706
      %v3716 = vmul.f32 %v3679, %v3706
      %v3717 = vmul.f32 %v3680, %v3706
      %v3718 = vmul.f32 %v3681, %v3706
      %v3719 = vmul.f32 %v3682, %v3706
      %v3720 = vmul.f32 %v3683, %v3706
      %v3721 = vmul.f32 %v3684, %v3706
      %v3722 = vmul.f32 %v3685, %v3706
      %v3723 = vmul.f32 %v3686, %v3706
      %v3724 = vmul.f32 %v3687, %v3706
      %v3725 = vmul.f32 %v3688, %v3706
      %v3726 = vmul.f32 %v3689, %v3706
      %v3727 = vmul.f32 %v3690, %v3706
      %v3728 = vmul.f32 %v3691, %v3706
      %v3729 = vmul.f32 %v3692, %v3706
      %v3730 = vmul.f32 %v3693, %v3706
      %v3731 = vmul.f32 %v3694, %v3706
      %v3732 = vmul.f32 %v3695, %v3706
      %v3733 = vmul.f32 %v3696, %v3706
      %v3734 = vmul.f32 %v3697, %v3706
      %v3735 = vmul.f32 %v3698, %v3706
      %v3736 = vmul.f32 %v3699, %v3706
      %v3737 = vmul.f32 %v3700, %v3706
      %v3738 = vmul.f32 %v3701, %v3706
      %v3739 = vadd.f32 %v3537, %v3707
      %v3740 = vadd.f32 %v3538, %v3708
      %v3741 = vadd.f32 %v3539, %v3709
      %v3742 = vadd.f32 %v3540, %v3710
      %v3743 = vadd.f32 %v3541, %v3711
      %v3744 = vadd.f32 %v3542, %v3712
      %v3745 = vadd.f32 %v3543, %v3713
      %v3746 = vadd.f32 %v3544, %v3714
      %v3747 = vadd.f32 %v3545, %v3715
      %v3748 = vadd.f32 %v3546, %v3716
      %v3749 = vadd.f32 %v3547, %v3717
      %v3750 = vadd.f32 %v3548, %v3718
      %v3751 = vadd.f32 %v3549, %v3719
      %v3752 = vadd.f32 %v3550, %v3720
      %v3753 = vadd.f32 %v3551, %v3721
      %v3754 = vadd.f32 %v3552, %v3722
      %v3755 = vadd.f32 %v3553, %v3723
      %v3756 = vadd.f32 %v3554, %v3724
      %v3757 = vadd.f32 %v3555, %v3725
      %v3758 = vadd.f32 %v3556, %v3726
      %v3759 = vadd.f32 %v3557, %v3727
      %v3760 = vadd.f32 %v3558, %v3728
      %v3761 = vadd.f32 %v3559, %v3729
      %v3762 = vadd.f32 %v3560, %v3730
      %v3763 = vadd.f32 %v3561, %v3731
      %v3764 = vadd.f32 %v3562, %v3732
      %v3765 = vadd.f32 %v3563, %v3733
      %v3766 = vadd.f32 %v3564, %v3734
      %v3767 = vadd.f32 %v3565, %v3735
      %v3768 = vadd.f32 %v3566, %v3736
      %v3769 = vadd.f32 %v3567, %v3737
      %v3770 = vadd.f32 %v3568, %v3738
      %v3771 = vld [vmem:[%s3164 + $0x6] sm:$0xff]
      %v3772 = vld [vmem:[%s3164 + $0xe] sm:$0xff]
      %v3773 = vld [vmem:[%s3164 + $0x1e] sm:$0xff]
      %v3774 = vld [vmem:[%s3164 + $0x26] sm:$0xff]
      %v3775 = vld [vmem:[%s3164 + $0x36] sm:$0xff]
      %v3776 = vld [vmem:[%s3164 + $0x3e] sm:$0xff]
      %v3777 = vld [vmem:[%s3164 + $0x4e] sm:$0xff]
      %v3778 = vld [vmem:[%s3164 + $0x56] sm:$0xff]
      %v3779 = vld [vmem:[%s3164 + $0x66] sm:$0xff]
      %v3780 = vld [vmem:[%s3164 + $0x6e] sm:$0xff]
      %v3781 = vld [vmem:[%s3164 + $0x7e] sm:$0xff]
      %v3782 = vld [vmem:[%s3164 + $0x86] sm:$0xff]
      %v3783 = vld [vmem:[%s3164 + $0x96] sm:$0xff]
      %v3784 = vld [vmem:[%s3164 + $0x9e] sm:$0xff]
      %v3785 = vld [vmem:[%s3164 + $0xae] sm:$0xff]
      %v3786 = vld [vmem:[%s3164 + $0xb6] sm:$0xff]
      %v3787 = vld [vmem:[%s3164 + $0xc6] sm:$0xff]
      %v3788 = vld [vmem:[%s3164 + $0xce] sm:$0xff]
      %v3789 = vld [vmem:[%s3164 + $0xde] sm:$0xff]
      %v3790 = vld [vmem:[%s3164 + $0xe6] sm:$0xff]
      %v3791 = vld [vmem:[%s3164 + $0xf6] sm:$0xff]
      %v3792 = vld [vmem:[%s3164 + $0xfe] sm:$0xff]
      %v3793 = vld [vmem:[%s3164 + $0x10e] sm:$0xff]
      %v3794 = vld [vmem:[%s3164 + $0x116] sm:$0xff]
      %v3795 = vld [vmem:[%s3164 + $0x126] sm:$0xff]
      %v3796 = vld [vmem:[%s3164 + $0x12e] sm:$0xff]
      %v3797 = vld [vmem:[%s3164 + $0x13e] sm:$0xff]
      %v3798 = vld [vmem:[%s3164 + $0x146] sm:$0xff]
      %v3799 = vld [vmem:[%s3164 + $0x156] sm:$0xff]
      %v3800 = vld [vmem:[%s3164 + $0x15e] sm:$0xff]
      %v3801 = vld [vmem:[%s3164 + $0x16e] sm:$0xff]
      %v3802 = vld [vmem:[%s3164 + $0x176] sm:$0xff]
      %v3803 = vld [vmem:[%s1 + $0x22] sm:$0x1]
      %v3804 = vlaneseq
      %v3805 = vshrl.u32 %v3804, 7
      %v3806 = vsub.s32 0, %v3805
      %v3807 = vrot.slane %v3803, %v3806
      %v3808 = vmul.f32 %v3771, %v3807
      %v3809 = vmul.f32 %v3772, %v3807
      %v3810 = vmul.f32 %v3773, %v3807
      %v3811 = vmul.f32 %v3774, %v3807
      %v3812 = vmul.f32 %v3775, %v3807
      %v3813 = vmul.f32 %v3776, %v3807
      %v3814 = vmul.f32 %v3777, %v3807
      %v3815 = vmul.f32 %v3778, %v3807
      %v3816 = vmul.f32 %v3779, %v3807
      %v3817 = vmul.f32 %v3780, %v3807
      %v3818 = vmul.f32 %v3781, %v3807
      %v3819 = vmul.f32 %v3782, %v3807
      %v3820 = vmul.f32 %v3783, %v3807
      %v3821 = vmul.f32 %v3784, %v3807
      %v3822 = vmul.f32 %v3785, %v3807
      %v3823 = vmul.f32 %v3786, %v3807
      %v3824 = vmul.f32 %v3787, %v3807
      %v3825 = vmul.f32 %v3788, %v3807
      %v3826 = vmul.f32 %v3789, %v3807
      %v3827 = vmul.f32 %v3790, %v3807
      %v3828 = vmul.f32 %v3791, %v3807
      %v3829 = vmul.f32 %v3792, %v3807
      %v3830 = vmul.f32 %v3793, %v3807
      %v3831 = vmul.f32 %v3794, %v3807
      %v3832 = vmul.f32 %v3795, %v3807
      %v3833 = vmul.f32 %v3796, %v3807
      %v3834 = vmul.f32 %v3797, %v3807
      %v3835 = vmul.f32 %v3798, %v3807
      %v3836 = vmul.f32 %v3799, %v3807
      %v3837 = vmul.f32 %v3800, %v3807
      %v3838 = vmul.f32 %v3801, %v3807
      %v3839 = vmul.f32 %v3802, %v3807
      %v3840 = vadd.f32 %v3638, %v3808
      %v3841 = vadd.f32 %v3639, %v3809
      %v3842 = vadd.f32 %v3640, %v3810
      %v3843 = vadd.f32 %v3641, %v3811
      %v3844 = vadd.f32 %v3642, %v3812
      %v3845 = vadd.f32 %v3643, %v3813
      %v3846 = vadd.f32 %v3644, %v3814
      %v3847 = vadd.f32 %v3645, %v3815
      %v3848 = vadd.f32 %v3646, %v3816
      %v3849 = vadd.f32 %v3647, %v3817
      %v3850 = vadd.f32 %v3648, %v3818
      %v3851 = vadd.f32 %v3649, %v3819
      %v3852 = vadd.f32 %v3650, %v3820
      %v3853 = vadd.f32 %v3651, %v3821
      %v3854 = vadd.f32 %v3652, %v3822
      %v3855 = vadd.f32 %v3653, %v3823
      %v3856 = vadd.f32 %v3654, %v3824
      %v3857 = vadd.f32 %v3655, %v3825
      %v3858 = vadd.f32 %v3656, %v3826
      %v3859 = vadd.f32 %v3657, %v3827
      %v3860 = vadd.f32 %v3658, %v3828
      %v3861 = vadd.f32 %v3659, %v3829
      %v3862 = vadd.f32 %v3660, %v3830
      %v3863 = vadd.f32 %v3661, %v3831
      %v3864 = vadd.f32 %v3662, %v3832
      %v3865 = vadd.f32 %v3663, %v3833
      %v3866 = vadd.f32 %v3664, %v3834
      %v3867 = vadd.f32 %v3665, %v3835
      %v3868 = vadd.f32 %v3666, %v3836
      %v3869 = vadd.f32 %v3667, %v3837
      %v3870 = vadd.f32 %v3668, %v3838
      %v3871 = vadd.f32 %v3669, %v3839
      %s3872 = sadd.s32 %s386, 5
      %s3873 = smul.u32 %s3872, 24
      %s3874 = scalar_lea.vmem %s373, %s3873
      %v3875 = vld [vmem:[%s3874] sm:$0xff]
      %v3876 = vld [vmem:[%s3874 + $0x8] sm:$0xff]
      %v3877 = vld [vmem:[%s3874 + $0x18] sm:$0xff]
      %v3878 = vld [vmem:[%s3874 + $0x20] sm:$0xff]
      %v3879 = vld [vmem:[%s3874 + $0x30] sm:$0xff]
      %v3880 = vld [vmem:[%s3874 + $0x38] sm:$0xff]
      %v3881 = vld [vmem:[%s3874 + $0x48] sm:$0xff]
      %v3882 = vld [vmem:[%s3874 + $0x50] sm:$0xff]
      %v3883 = vld [vmem:[%s3874 + $0x60] sm:$0xff]
      %v3884 = vld [vmem:[%s3874 + $0x68] sm:$0xff]
      %v3885 = vld [vmem:[%s3874 + $0x78] sm:$0xff]
      %v3886 = vld [vmem:[%s3874 + $0x80] sm:$0xff]
      %v3887 = vld [vmem:[%s3874 + $0x90] sm:$0xff]
      %v3888 = vld [vmem:[%s3874 + $0x98] sm:$0xff]
      %v3889 = vld [vmem:[%s3874 + $0xa8] sm:$0xff]
      %v3890 = vld [vmem:[%s3874 + $0xb0] sm:$0xff]
      %v3891 = vld [vmem:[%s3874 + $0xc0] sm:$0xff]
      %v3892 = vld [vmem:[%s3874 + $0xc8] sm:$0xff]
      %v3893 = vld [vmem:[%s3874 + $0xd8] sm:$0xff]
      %v3894 = vld [vmem:[%s3874 + $0xe0] sm:$0xff]
      %v3895 = vld [vmem:[%s3874 + $0xf0] sm:$0xff]
      %v3896 = vld [vmem:[%s3874 + $0xf8] sm:$0xff]
      %v3897 = vld [vmem:[%s3874 + $0x108] sm:$0xff]
      %v3898 = vld [vmem:[%s3874 + $0x110] sm:$0xff]
      %v3899 = vld [vmem:[%s3874 + $0x120] sm:$0xff]
      %v3900 = vld [vmem:[%s3874 + $0x128] sm:$0xff]
      %v3901 = vld [vmem:[%s3874 + $0x138] sm:$0xff]
      %v3902 = vld [vmem:[%s3874 + $0x140] sm:$0xff]
      %v3903 = vld [vmem:[%s3874 + $0x150] sm:$0xff]
      %v3904 = vld [vmem:[%s3874 + $0x158] sm:$0xff]
      %v3905 = vld [vmem:[%s3874 + $0x168] sm:$0xff]
      %v3906 = vld [vmem:[%s3874 + $0x170] sm:$0xff]
      %v3907 = vld [vmem:[%s1 + $0x23] sm:$0x1]
      %v3908 = vlaneseq
      %v3909 = vshrl.u32 %v3908, 7
      %v3910 = vsub.s32 0, %v3909
      %v3911 = vrot.slane %v3907, %v3910
      %v3912 = vmul.f32 %v3875, %v3911
      %v3913 = vmul.f32 %v3876, %v3911
      %v3914 = vmul.f32 %v3877, %v3911
      %v3915 = vmul.f32 %v3878, %v3911
      %v3916 = vmul.f32 %v3879, %v3911
      %v3917 = vmul.f32 %v3880, %v3911
      %v3918 = vmul.f32 %v3881, %v3911
      %v3919 = vmul.f32 %v3882, %v3911
      %v3920 = vmul.f32 %v3883, %v3911
      %v3921 = vmul.f32 %v3884, %v3911
      %v3922 = vmul.f32 %v3885, %v3911
      %v3923 = vmul.f32 %v3886, %v3911
      %v3924 = vmul.f32 %v3887, %v3911
      %v3925 = vmul.f32 %v3888, %v3911
      %v3926 = vmul.f32 %v3889, %v3911
      %v3927 = vmul.f32 %v3890, %v3911
      %v3928 = vmul.f32 %v3891, %v3911
      %v3929 = vmul.f32 %v3892, %v3911
      %v3930 = vmul.f32 %v3893, %v3911
      %v3931 = vmul.f32 %v3894, %v3911
      %v3932 = vmul.f32 %v3895, %v3911
      %v3933 = vmul.f32 %v3896, %v3911
      %v3934 = vmul.f32 %v3897, %v3911
      %v3935 = vmul.f32 %v3898, %v3911
      %v3936 = vmul.f32 %v3899, %v3911
      %v3937 = vmul.f32 %v3900, %v3911
      %v3938 = vmul.f32 %v3901, %v3911
      %v3939 = vmul.f32 %v3902, %v3911
      %v3940 = vmul.f32 %v3903, %v3911
      %v3941 = vmul.f32 %v3904, %v3911
      %v3942 = vmul.f32 %v3905, %v3911
      %v3943 = vmul.f32 %v3906, %v3911
      %v3944 = vadd.f32 %v3739, %v3912
      %v3945 = vadd.f32 %v3740, %v3913
      %v3946 = vadd.f32 %v3741, %v3914
      %v3947 = vadd.f32 %v3742, %v3915
      %v3948 = vadd.f32 %v3743, %v3916
      %v3949 = vadd.f32 %v3744, %v3917
      %v3950 = vadd.f32 %v3745, %v3918
      %v3951 = vadd.f32 %v3746, %v3919
      %v3952 = vadd.f32 %v3747, %v3920
      %v3953 = vadd.f32 %v3748, %v3921
      %v3954 = vadd.f32 %v3749, %v3922
      %v3955 = vadd.f32 %v3750, %v3923
      %v3956 = vadd.f32 %v3751, %v3924
      %v3957 = vadd.f32 %v3752, %v3925
      %v3958 = vadd.f32 %v3753, %v3926
      %v3959 = vadd.f32 %v3754, %v3927
      %v3960 = vadd.f32 %v3755, %v3928
      %v3961 = vadd.f32 %v3756, %v3929
      %v3962 = vadd.f32 %v3757, %v3930
      %v3963 = vadd.f32 %v3758, %v3931
      %v3964 = vadd.f32 %v3759, %v3932
      %v3965 = vadd.f32 %v3760, %v3933
      %v3966 = vadd.f32 %v3761, %v3934
      %v3967 = vadd.f32 %v3762, %v3935
      %v3968 = vadd.f32 %v3763, %v3936
      %v3969 = vadd.f32 %v3764, %v3937
      %v3970 = vadd.f32 %v3765, %v3938
      %v3971 = vadd.f32 %v3766, %v3939
      %v3972 = vadd.f32 %v3767, %v3940
      %v3973 = vadd.f32 %v3768, %v3941
      %v3974 = vadd.f32 %v3769, %v3942
      %v3975 = vadd.f32 %v3770, %v3943
      %v3976 = vld [vmem:[%s3874 + $0x1] sm:$0xff]
      %v3977 = vld [vmem:[%s3874 + $0x9] sm:$0xff]
      %v3978 = vld [vmem:[%s3874 + $0x19] sm:$0xff]
      %v3979 = vld [vmem:[%s3874 + $0x21] sm:$0xff]
      %v3980 = vld [vmem:[%s3874 + $0x31] sm:$0xff]
      %v3981 = vld [vmem:[%s3874 + $0x39] sm:$0xff]
      %v3982 = vld [vmem:[%s3874 + $0x49] sm:$0xff]
      %v3983 = vld [vmem:[%s3874 + $0x51] sm:$0xff]
      %v3984 = vld [vmem:[%s3874 + $0x61] sm:$0xff]
      %v3985 = vld [vmem:[%s3874 + $0x69] sm:$0xff]
      %v3986 = vld [vmem:[%s3874 + $0x79] sm:$0xff]
      %v3987 = vld [vmem:[%s3874 + $0x81] sm:$0xff]
      %v3988 = vld [vmem:[%s3874 + $0x91] sm:$0xff]
      %v3989 = vld [vmem:[%s3874 + $0x99] sm:$0xff]
      %v3990 = vld [vmem:[%s3874 + $0xa9] sm:$0xff]
      %v3991 = vld [vmem:[%s3874 + $0xb1] sm:$0xff]
      %v3992 = vld [vmem:[%s3874 + $0xc1] sm:$0xff]
      %v3993 = vld [vmem:[%s3874 + $0xc9] sm:$0xff]
      %v3994 = vld [vmem:[%s3874 + $0xd9] sm:$0xff]
      %v3995 = vld [vmem:[%s3874 + $0xe1] sm:$0xff]
      %v3996 = vld [vmem:[%s3874 + $0xf1] sm:$0xff]
      %v3997 = vld [vmem:[%s3874 + $0xf9] sm:$0xff]
      %v3998 = vld [vmem:[%s3874 + $0x109] sm:$0xff]
      %v3999 = vld [vmem:[%s3874 + $0x111] sm:$0xff]
      %v4000 = vld [vmem:[%s3874 + $0x121] sm:$0xff]
      %v4001 = vld [vmem:[%s3874 + $0x129] sm:$0xff]
      %v4002 = vld [vmem:[%s3874 + $0x139] sm:$0xff]
      %v4003 = vld [vmem:[%s3874 + $0x141] sm:$0xff]
      %v4004 = vld [vmem:[%s3874 + $0x151] sm:$0xff]
      %v4005 = vld [vmem:[%s3874 + $0x159] sm:$0xff]
      %v4006 = vld [vmem:[%s3874 + $0x169] sm:$0xff]
      %v4007 = vld [vmem:[%s3874 + $0x171] sm:$0xff]
      %v4008 = vld [vmem:[%s1 + $0x24] sm:$0x1]
      %v4009 = vlaneseq
      %v4010 = vshrl.u32 %v4009, 7
      %v4011 = vsub.s32 0, %v4010
      %v4012 = vrot.slane %v4008, %v4011
      %v4013 = vmul.f32 %v3976, %v4012
      %v4014 = vmul.f32 %v3977, %v4012
      %v4015 = vmul.f32 %v3978, %v4012
      %v4016 = vmul.f32 %v3979, %v4012
      %v4017 = vmul.f32 %v3980, %v4012
      %v4018 = vmul.f32 %v3981, %v4012
      %v4019 = vmul.f32 %v3982, %v4012
      %v4020 = vmul.f32 %v3983, %v4012
      %v4021 = vmul.f32 %v3984, %v4012
      %v4022 = vmul.f32 %v3985, %v4012
      %v4023 = vmul.f32 %v3986, %v4012
      %v4024 = vmul.f32 %v3987, %v4012
      %v4025 = vmul.f32 %v3988, %v4012
      %v4026 = vmul.f32 %v3989, %v4012
      %v4027 = vmul.f32 %v3990, %v4012
      %v4028 = vmul.f32 %v3991, %v4012
      %v4029 = vmul.f32 %v3992, %v4012
      %v4030 = vmul.f32 %v3993, %v4012
      %v4031 = vmul.f32 %v3994, %v4012
      %v4032 = vmul.f32 %v3995, %v4012
      %v4033 = vmul.f32 %v3996, %v4012
      %v4034 = vmul.f32 %v3997, %v4012
      %v4035 = vmul.f32 %v3998, %v4012
      %v4036 = vmul.f32 %v3999, %v4012
      %v4037 = vmul.f32 %v4000, %v4012
      %v4038 = vmul.f32 %v4001, %v4012
      %v4039 = vmul.f32 %v4002, %v4012
      %v4040 = vmul.f32 %v4003, %v4012
      %v4041 = vmul.f32 %v4004, %v4012
      %v4042 = vmul.f32 %v4005, %v4012
      %v4043 = vmul.f32 %v4006, %v4012
      %v4044 = vmul.f32 %v4007, %v4012
      %v4045 = vadd.f32 %v3840, %v4013
      %v4046 = vadd.f32 %v3841, %v4014
      %v4047 = vadd.f32 %v3842, %v4015
      %v4048 = vadd.f32 %v3843, %v4016
      %v4049 = vadd.f32 %v3844, %v4017
      %v4050 = vadd.f32 %v3845, %v4018
      %v4051 = vadd.f32 %v3846, %v4019
      %v4052 = vadd.f32 %v3847, %v4020
      %v4053 = vadd.f32 %v3848, %v4021
      %v4054 = vadd.f32 %v3849, %v4022
      %v4055 = vadd.f32 %v3850, %v4023
      %v4056 = vadd.f32 %v3851, %v4024
      %v4057 = vadd.f32 %v3852, %v4025
      %v4058 = vadd.f32 %v3853, %v4026
      %v4059 = vadd.f32 %v3854, %v4027
      %v4060 = vadd.f32 %v3855, %v4028
      %v4061 = vadd.f32 %v3856, %v4029
      %v4062 = vadd.f32 %v3857, %v4030
      %v4063 = vadd.f32 %v3858, %v4031
      %v4064 = vadd.f32 %v3859, %v4032
      %v4065 = vadd.f32 %v3860, %v4033
      %v4066 = vadd.f32 %v3861, %v4034
      %v4067 = vadd.f32 %v3862, %v4035
      %v4068 = vadd.f32 %v3863, %v4036
      %v4069 = vadd.f32 %v3864, %v4037
      %v4070 = vadd.f32 %v3865, %v4038
      %v4071 = vadd.f32 %v3866, %v4039
      %v4072 = vadd.f32 %v3867, %v4040
      %v4073 = vadd.f32 %v3868, %v4041
      %v4074 = vadd.f32 %v3869, %v4042
      %v4075 = vadd.f32 %v3870, %v4043
      %v4076 = vadd.f32 %v3871, %v4044
      %v4077 = vld [vmem:[%s3874 + $0x2] sm:$0xff]
      %v4078 = vld [vmem:[%s3874 + $0xa] sm:$0xff]
      %v4079 = vld [vmem:[%s3874 + $0x1a] sm:$0xff]
      %v4080 = vld [vmem:[%s3874 + $0x22] sm:$0xff]
      %v4081 = vld [vmem:[%s3874 + $0x32] sm:$0xff]
      %v4082 = vld [vmem:[%s3874 + $0x3a] sm:$0xff]
      %v4083 = vld [vmem:[%s3874 + $0x4a] sm:$0xff]
      %v4084 = vld [vmem:[%s3874 + $0x52] sm:$0xff]
      %v4085 = vld [vmem:[%s3874 + $0x62] sm:$0xff]
      %v4086 = vld [vmem:[%s3874 + $0x6a] sm:$0xff]
      %v4087 = vld [vmem:[%s3874 + $0x7a] sm:$0xff]
      %v4088 = vld [vmem:[%s3874 + $0x82] sm:$0xff]
      %v4089 = vld [vmem:[%s3874 + $0x92] sm:$0xff]
      %v4090 = vld [vmem:[%s3874 + $0x9a] sm:$0xff]
      %v4091 = vld [vmem:[%s3874 + $0xaa] sm:$0xff]
      %v4092 = vld [vmem:[%s3874 + $0xb2] sm:$0xff]
      %v4093 = vld [vmem:[%s3874 + $0xc2] sm:$0xff]
      %v4094 = vld [vmem:[%s3874 + $0xca] sm:$0xff]
      %v4095 = vld [vmem:[%s3874 + $0xda] sm:$0xff]
      %v4096 = vld [vmem:[%s3874 + $0xe2] sm:$0xff]
      %v4097 = vld [vmem:[%s3874 + $0xf2] sm:$0xff]
      %v4098 = vld [vmem:[%s3874 + $0xfa] sm:$0xff]
      %v4099 = vld [vmem:[%s3874 + $0x10a] sm:$0xff]
      %v4100 = vld [vmem:[%s3874 + $0x112] sm:$0xff]
      %v4101 = vld [vmem:[%s3874 + $0x122] sm:$0xff]
      %v4102 = vld [vmem:[%s3874 + $0x12a] sm:$0xff]
      %v4103 = vld [vmem:[%s3874 + $0x13a] sm:$0xff]
      %v4104 = vld [vmem:[%s3874 + $0x142] sm:$0xff]
      %v4105 = vld [vmem:[%s3874 + $0x152] sm:$0xff]
      %v4106 = vld [vmem:[%s3874 + $0x15a] sm:$0xff]
      %v4107 = vld [vmem:[%s3874 + $0x16a] sm:$0xff]
      %v4108 = vld [vmem:[%s3874 + $0x172] sm:$0xff]
      %v4109 = vld [vmem:[%s1 + $0x25] sm:$0x1]
      %v4110 = vlaneseq
      %v4111 = vshrl.u32 %v4110, 7
      %v4112 = vsub.s32 0, %v4111
      %v4113 = vrot.slane %v4109, %v4112
      %v4114 = vmul.f32 %v4077, %v4113
      %v4115 = vmul.f32 %v4078, %v4113
      %v4116 = vmul.f32 %v4079, %v4113
      %v4117 = vmul.f32 %v4080, %v4113
      %v4118 = vmul.f32 %v4081, %v4113
      %v4119 = vmul.f32 %v4082, %v4113
      %v4120 = vmul.f32 %v4083, %v4113
      %v4121 = vmul.f32 %v4084, %v4113
      %v4122 = vmul.f32 %v4085, %v4113
      %v4123 = vmul.f32 %v4086, %v4113
      %v4124 = vmul.f32 %v4087, %v4113
      %v4125 = vmul.f32 %v4088, %v4113
      %v4126 = vmul.f32 %v4089, %v4113
      %v4127 = vmul.f32 %v4090, %v4113
      %v4128 = vmul.f32 %v4091, %v4113
      %v4129 = vmul.f32 %v4092, %v4113
      %v4130 = vmul.f32 %v4093, %v4113
      %v4131 = vmul.f32 %v4094, %v4113
      %v4132 = vmul.f32 %v4095, %v4113
      %v4133 = vmul.f32 %v4096, %v4113
      %v4134 = vmul.f32 %v4097, %v4113
      %v4135 = vmul.f32 %v4098, %v4113
      %v4136 = vmul.f32 %v4099, %v4113
      %v4137 = vmul.f32 %v4100, %v4113
      %v4138 = vmul.f32 %v4101, %v4113
      %v4139 = vmul.f32 %v4102, %v4113
      %v4140 = vmul.f32 %v4103, %v4113
      %v4141 = vmul.f32 %v4104, %v4113
      %v4142 = vmul.f32 %v4105, %v4113
      %v4143 = vmul.f32 %v4106, %v4113
      %v4144 = vmul.f32 %v4107, %v4113
      %v4145 = vmul.f32 %v4108, %v4113
      %v4146 = vadd.f32 %v3944, %v4114
      %v4147 = vadd.f32 %v3945, %v4115
      %v4148 = vadd.f32 %v3946, %v4116
      %v4149 = vadd.f32 %v3947, %v4117
      %v4150 = vadd.f32 %v3948, %v4118
      %v4151 = vadd.f32 %v3949, %v4119
      %v4152 = vadd.f32 %v3950, %v4120
      %v4153 = vadd.f32 %v3951, %v4121
      %v4154 = vadd.f32 %v3952, %v4122
      %v4155 = vadd.f32 %v3953, %v4123
      %v4156 = vadd.f32 %v3954, %v4124
      %v4157 = vadd.f32 %v3955, %v4125
      %v4158 = vadd.f32 %v3956, %v4126
      %v4159 = vadd.f32 %v3957, %v4127
      %v4160 = vadd.f32 %v3958, %v4128
      %v4161 = vadd.f32 %v3959, %v4129
      %v4162 = vadd.f32 %v3960, %v4130
      %v4163 = vadd.f32 %v3961, %v4131
      %v4164 = vadd.f32 %v3962, %v4132
      %v4165 = vadd.f32 %v3963, %v4133
      %v4166 = vadd.f32 %v3964, %v4134
      %v4167 = vadd.f32 %v3965, %v4135
      %v4168 = vadd.f32 %v3966, %v4136
      %v4169 = vadd.f32 %v3967, %v4137
      %v4170 = vadd.f32 %v3968, %v4138
      %v4171 = vadd.f32 %v3969, %v4139
      %v4172 = vadd.f32 %v3970, %v4140
      %v4173 = vadd.f32 %v3971, %v4141
      %v4174 = vadd.f32 %v3972, %v4142
      %v4175 = vadd.f32 %v3973, %v4143
      %v4176 = vadd.f32 %v3974, %v4144
      %v4177 = vadd.f32 %v3975, %v4145
      %v4178 = vld [vmem:[%s3874 + $0x3] sm:$0xff]
      %v4179 = vld [vmem:[%s3874 + $0xb] sm:$0xff]
      %v4180 = vld [vmem:[%s3874 + $0x1b] sm:$0xff]
      %v4181 = vld [vmem:[%s3874 + $0x23] sm:$0xff]
      %v4182 = vld [vmem:[%s3874 + $0x33] sm:$0xff]
      %v4183 = vld [vmem:[%s3874 + $0x3b] sm:$0xff]
      %v4184 = vld [vmem:[%s3874 + $0x4b] sm:$0xff]
      %v4185 = vld [vmem:[%s3874 + $0x53] sm:$0xff]
      %v4186 = vld [vmem:[%s3874 + $0x63] sm:$0xff]
      %v4187 = vld [vmem:[%s3874 + $0x6b] sm:$0xff]
      %v4188 = vld [vmem:[%s3874 + $0x7b] sm:$0xff]
      %v4189 = vld [vmem:[%s3874 + $0x83] sm:$0xff]
      %v4190 = vld [vmem:[%s3874 + $0x93] sm:$0xff]
      %v4191 = vld [vmem:[%s3874 + $0x9b] sm:$0xff]
      %v4192 = vld [vmem:[%s3874 + $0xab] sm:$0xff]
      %v4193 = vld [vmem:[%s3874 + $0xb3] sm:$0xff]
      %v4194 = vld [vmem:[%s3874 + $0xc3] sm:$0xff]
      %v4195 = vld [vmem:[%s3874 + $0xcb] sm:$0xff]
      %v4196 = vld [vmem:[%s3874 + $0xdb] sm:$0xff]
      %v4197 = vld [vmem:[%s3874 + $0xe3] sm:$0xff]
      %v4198 = vld [vmem:[%s3874 + $0xf3] sm:$0xff]
      %v4199 = vld [vmem:[%s3874 + $0xfb] sm:$0xff]
      %v4200 = vld [vmem:[%s3874 + $0x10b] sm:$0xff]
      %v4201 = vld [vmem:[%s3874 + $0x113] sm:$0xff]
      %v4202 = vld [vmem:[%s3874 + $0x123] sm:$0xff]
      %v4203 = vld [vmem:[%s3874 + $0x12b] sm:$0xff]
      %v4204 = vld [vmem:[%s3874 + $0x13b] sm:$0xff]
      %v4205 = vld [vmem:[%s3874 + $0x143] sm:$0xff]
      %v4206 = vld [vmem:[%s3874 + $0x153] sm:$0xff]
      %v4207 = vld [vmem:[%s3874 + $0x15b] sm:$0xff]
      %v4208 = vld [vmem:[%s3874 + $0x16b] sm:$0xff]
      %v4209 = vld [vmem:[%s3874 + $0x173] sm:$0xff]
      %v4210 = vld [vmem:[%s1 + $0x26] sm:$0x1]
      %v4211 = vlaneseq
      %v4212 = vshrl.u32 %v4211, 7
      %v4213 = vsub.s32 0, %v4212
      %v4214 = vrot.slane %v4210, %v4213
      %v4215 = vmul.f32 %v4178, %v4214
      %v4216 = vmul.f32 %v4179, %v4214
      %v4217 = vmul.f32 %v4180, %v4214
      %v4218 = vmul.f32 %v4181, %v4214
      %v4219 = vmul.f32 %v4182, %v4214
      %v4220 = vmul.f32 %v4183, %v4214
      %v4221 = vmul.f32 %v4184, %v4214
      %v4222 = vmul.f32 %v4185, %v4214
      %v4223 = vmul.f32 %v4186, %v4214
      %v4224 = vmul.f32 %v4187, %v4214
      %v4225 = vmul.f32 %v4188, %v4214
      %v4226 = vmul.f32 %v4189, %v4214
      %v4227 = vmul.f32 %v4190, %v4214
      %v4228 = vmul.f32 %v4191, %v4214
      %v4229 = vmul.f32 %v4192, %v4214
      %v4230 = vmul.f32 %v4193, %v4214
      %v4231 = vmul.f32 %v4194, %v4214
      %v4232 = vmul.f32 %v4195, %v4214
      %v4233 = vmul.f32 %v4196, %v4214
      %v4234 = vmul.f32 %v4197, %v4214
      %v4235 = vmul.f32 %v4198, %v4214
      %v4236 = vmul.f32 %v4199, %v4214
      %v4237 = vmul.f32 %v4200, %v4214
      %v4238 = vmul.f32 %v4201, %v4214
      %v4239 = vmul.f32 %v4202, %v4214
      %v4240 = vmul.f32 %v4203, %v4214
      %v4241 = vmul.f32 %v4204, %v4214
      %v4242 = vmul.f32 %v4205, %v4214
      %v4243 = vmul.f32 %v4206, %v4214
      %v4244 = vmul.f32 %v4207, %v4214
      %v4245 = vmul.f32 %v4208, %v4214
      %v4246 = vmul.f32 %v4209, %v4214
      %v4247 = vadd.f32 %v4045, %v4215
      %v4248 = vadd.f32 %v4046, %v4216
      %v4249 = vadd.f32 %v4047, %v4217
      %v4250 = vadd.f32 %v4048, %v4218
      %v4251 = vadd.f32 %v4049, %v4219
      %v4252 = vadd.f32 %v4050, %v4220
      %v4253 = vadd.f32 %v4051, %v4221
      %v4254 = vadd.f32 %v4052, %v4222
      %v4255 = vadd.f32 %v4053, %v4223
      %v4256 = vadd.f32 %v4054, %v4224
      %v4257 = vadd.f32 %v4055, %v4225
      %v4258 = vadd.f32 %v4056, %v4226
      %v4259 = vadd.f32 %v4057, %v4227
      %v4260 = vadd.f32 %v4058, %v4228
      %v4261 = vadd.f32 %v4059, %v4229
      %v4262 = vadd.f32 %v4060, %v4230
      %v4263 = vadd.f32 %v4061, %v4231
      %v4264 = vadd.f32 %v4062, %v4232
      %v4265 = vadd.f32 %v4063, %v4233
      %v4266 = vadd.f32 %v4064, %v4234
      %v4267 = vadd.f32 %v4065, %v4235
      %v4268 = vadd.f32 %v4066, %v4236
      %v4269 = vadd.f32 %v4067, %v4237
      %v4270 = vadd.f32 %v4068, %v4238
      %v4271 = vadd.f32 %v4069, %v4239
      %v4272 = vadd.f32 %v4070, %v4240
      %v4273 = vadd.f32 %v4071, %v4241
      %v4274 = vadd.f32 %v4072, %v4242
      %v4275 = vadd.f32 %v4073, %v4243
      %v4276 = vadd.f32 %v4074, %v4244
      %v4277 = vadd.f32 %v4075, %v4245
      %v4278 = vadd.f32 %v4076, %v4246
      %v4279 = vld [vmem:[%s3874 + $0x4] sm:$0xff]
      %v4280 = vld [vmem:[%s3874 + $0xc] sm:$0xff]
      %v4281 = vld [vmem:[%s3874 + $0x1c] sm:$0xff]
      %v4282 = vld [vmem:[%s3874 + $0x24] sm:$0xff]
      %v4283 = vld [vmem:[%s3874 + $0x34] sm:$0xff]
      %v4284 = vld [vmem:[%s3874 + $0x3c] sm:$0xff]
      %v4285 = vld [vmem:[%s3874 + $0x4c] sm:$0xff]
      %v4286 = vld [vmem:[%s3874 + $0x54] sm:$0xff]
      %v4287 = vld [vmem:[%s3874 + $0x64] sm:$0xff]
      %v4288 = vld [vmem:[%s3874 + $0x6c] sm:$0xff]
      %v4289 = vld [vmem:[%s3874 + $0x7c] sm:$0xff]
      %v4290 = vld [vmem:[%s3874 + $0x84] sm:$0xff]
      %v4291 = vld [vmem:[%s3874 + $0x94] sm:$0xff]
      %v4292 = vld [vmem:[%s3874 + $0x9c] sm:$0xff]
      %v4293 = vld [vmem:[%s3874 + $0xac] sm:$0xff]
      %v4294 = vld [vmem:[%s3874 + $0xb4] sm:$0xff]
      %v4295 = vld [vmem:[%s3874 + $0xc4] sm:$0xff]
      %v4296 = vld [vmem:[%s3874 + $0xcc] sm:$0xff]
      %v4297 = vld [vmem:[%s3874 + $0xdc] sm:$0xff]
      %v4298 = vld [vmem:[%s3874 + $0xe4] sm:$0xff]
      %v4299 = vld [vmem:[%s3874 + $0xf4] sm:$0xff]
      %v4300 = vld [vmem:[%s3874 + $0xfc] sm:$0xff]
      %v4301 = vld [vmem:[%s3874 + $0x10c] sm:$0xff]
      %v4302 = vld [vmem:[%s3874 + $0x114] sm:$0xff]
      %v4303 = vld [vmem:[%s3874 + $0x124] sm:$0xff]
      %v4304 = vld [vmem:[%s3874 + $0x12c] sm:$0xff]
      %v4305 = vld [vmem:[%s3874 + $0x13c] sm:$0xff]
      %v4306 = vld [vmem:[%s3874 + $0x144] sm:$0xff]
      %v4307 = vld [vmem:[%s3874 + $0x154] sm:$0xff]
      %v4308 = vld [vmem:[%s3874 + $0x15c] sm:$0xff]
      %v4309 = vld [vmem:[%s3874 + $0x16c] sm:$0xff]
      %v4310 = vld [vmem:[%s3874 + $0x174] sm:$0xff]
      %v4311 = vld [vmem:[%s1 + $0x27] sm:$0x1]
      %v4312 = vlaneseq
      %v4313 = vshrl.u32 %v4312, 7
      %v4314 = vsub.s32 0, %v4313
      %v4315 = vrot.slane %v4311, %v4314
      %v4316 = vmul.f32 %v4279, %v4315
      %v4317 = vmul.f32 %v4280, %v4315
      %v4318 = vmul.f32 %v4281, %v4315
      %v4319 = vmul.f32 %v4282, %v4315
      %v4320 = vmul.f32 %v4283, %v4315
      %v4321 = vmul.f32 %v4284, %v4315
      %v4322 = vmul.f32 %v4285, %v4315
      %v4323 = vmul.f32 %v4286, %v4315
      %v4324 = vmul.f32 %v4287, %v4315
      %v4325 = vmul.f32 %v4288, %v4315
      %v4326 = vmul.f32 %v4289, %v4315
      %v4327 = vmul.f32 %v4290, %v4315
      %v4328 = vmul.f32 %v4291, %v4315
      %v4329 = vmul.f32 %v4292, %v4315
      %v4330 = vmul.f32 %v4293, %v4315
      %v4331 = vmul.f32 %v4294, %v4315
      %v4332 = vmul.f32 %v4295, %v4315
      %v4333 = vmul.f32 %v4296, %v4315
      %v4334 = vmul.f32 %v4297, %v4315
      %v4335 = vmul.f32 %v4298, %v4315
      %v4336 = vmul.f32 %v4299, %v4315
      %v4337 = vmul.f32 %v4300, %v4315
      %v4338 = vmul.f32 %v4301, %v4315
      %v4339 = vmul.f32 %v4302, %v4315
      %v4340 = vmul.f32 %v4303, %v4315
      %v4341 = vmul.f32 %v4304, %v4315
      %v4342 = vmul.f32 %v4305, %v4315
      %v4343 = vmul.f32 %v4306, %v4315
      %v4344 = vmul.f32 %v4307, %v4315
      %v4345 = vmul.f32 %v4308, %v4315
      %v4346 = vmul.f32 %v4309, %v4315
      %v4347 = vmul.f32 %v4310, %v4315
      %v4348 = vadd.f32 %v4146, %v4316
      %v4349 = vadd.f32 %v4147, %v4317
      %v4350 = vadd.f32 %v4148, %v4318
      %v4351 = vadd.f32 %v4149, %v4319
      %v4352 = vadd.f32 %v4150, %v4320
      %v4353 = vadd.f32 %v4151, %v4321
      %v4354 = vadd.f32 %v4152, %v4322
      %v4355 = vadd.f32 %v4153, %v4323
      %v4356 = vadd.f32 %v4154, %v4324
      %v4357 = vadd.f32 %v4155, %v4325
      %v4358 = vadd.f32 %v4156, %v4326
      %v4359 = vadd.f32 %v4157, %v4327
      %v4360 = vadd.f32 %v4158, %v4328
      %v4361 = vadd.f32 %v4159, %v4329
      %v4362 = vadd.f32 %v4160, %v4330
      %v4363 = vadd.f32 %v4161, %v4331
      %v4364 = vadd.f32 %v4162, %v4332
      %v4365 = vadd.f32 %v4163, %v4333
      %v4366 = vadd.f32 %v4164, %v4334
      %v4367 = vadd.f32 %v4165, %v4335
      %v4368 = vadd.f32 %v4166, %v4336
      %v4369 = vadd.f32 %v4167, %v4337
      %v4370 = vadd.f32 %v4168, %v4338
      %v4371 = vadd.f32 %v4169, %v4339
      %v4372 = vadd.f32 %v4170, %v4340
      %v4373 = vadd.f32 %v4171, %v4341
      %v4374 = vadd.f32 %v4172, %v4342
      %v4375 = vadd.f32 %v4173, %v4343
      %v4376 = vadd.f32 %v4174, %v4344
      %v4377 = vadd.f32 %v4175, %v4345
      %v4378 = vadd.f32 %v4176, %v4346
      %v4379 = vadd.f32 %v4177, %v4347
      %v4380 = vld [vmem:[%s3874 + $0x5] sm:$0xff]
      %v4381 = vld [vmem:[%s3874 + $0xd] sm:$0xff]
      %v4382 = vld [vmem:[%s3874 + $0x1d] sm:$0xff]
      %v4383 = vld [vmem:[%s3874 + $0x25] sm:$0xff]
      %v4384 = vld [vmem:[%s3874 + $0x35] sm:$0xff]
      %v4385 = vld [vmem:[%s3874 + $0x3d] sm:$0xff]
      %v4386 = vld [vmem:[%s3874 + $0x4d] sm:$0xff]
      %v4387 = vld [vmem:[%s3874 + $0x55] sm:$0xff]
      %v4388 = vld [vmem:[%s3874 + $0x65] sm:$0xff]
      %v4389 = vld [vmem:[%s3874 + $0x6d] sm:$0xff]
      %v4390 = vld [vmem:[%s3874 + $0x7d] sm:$0xff]
      %v4391 = vld [vmem:[%s3874 + $0x85] sm:$0xff]
      %v4392 = vld [vmem:[%s3874 + $0x95] sm:$0xff]
      %v4393 = vld [vmem:[%s3874 + $0x9d] sm:$0xff]
      %v4394 = vld [vmem:[%s3874 + $0xad] sm:$0xff]
      %v4395 = vld [vmem:[%s3874 + $0xb5] sm:$0xff]
      %v4396 = vld [vmem:[%s3874 + $0xc5] sm:$0xff]
      %v4397 = vld [vmem:[%s3874 + $0xcd] sm:$0xff]
      %v4398 = vld [vmem:[%s3874 + $0xdd] sm:$0xff]
      %v4399 = vld [vmem:[%s3874 + $0xe5] sm:$0xff]
      %v4400 = vld [vmem:[%s3874 + $0xf5] sm:$0xff]
      %v4401 = vld [vmem:[%s3874 + $0xfd] sm:$0xff]
      %v4402 = vld [vmem:[%s3874 + $0x10d] sm:$0xff]
      %v4403 = vld [vmem:[%s3874 + $0x115] sm:$0xff]
      %v4404 = vld [vmem:[%s3874 + $0x125] sm:$0xff]
      %v4405 = vld [vmem:[%s3874 + $0x12d] sm:$0xff]
      %v4406 = vld [vmem:[%s3874 + $0x13d] sm:$0xff]
      %v4407 = vld [vmem:[%s3874 + $0x145] sm:$0xff]
      %v4408 = vld [vmem:[%s3874 + $0x155] sm:$0xff]
      %v4409 = vld [vmem:[%s3874 + $0x15d] sm:$0xff]
      %v4410 = vld [vmem:[%s3874 + $0x16d] sm:$0xff]
      %v4411 = vld [vmem:[%s3874 + $0x175] sm:$0xff]
      %v4412 = vld [vmem:[%s1 + $0x28] sm:$0x1]
      %v4413 = vlaneseq
      %v4414 = vshrl.u32 %v4413, 7
      %v4415 = vsub.s32 0, %v4414
      %v4416 = vrot.slane %v4412, %v4415
      %v4417 = vmul.f32 %v4380, %v4416
      %v4418 = vmul.f32 %v4381, %v4416
      %v4419 = vmul.f32 %v4382, %v4416
      %v4420 = vmul.f32 %v4383, %v4416
      %v4421 = vmul.f32 %v4384, %v4416
      %v4422 = vmul.f32 %v4385, %v4416
      %v4423 = vmul.f32 %v4386, %v4416
      %v4424 = vmul.f32 %v4387, %v4416
      %v4425 = vmul.f32 %v4388, %v4416
      %v4426 = vmul.f32 %v4389, %v4416
      %v4427 = vmul.f32 %v4390, %v4416
      %v4428 = vmul.f32 %v4391, %v4416
      %v4429 = vmul.f32 %v4392, %v4416
      %v4430 = vmul.f32 %v4393, %v4416
      %v4431 = vmul.f32 %v4394, %v4416
      %v4432 = vmul.f32 %v4395, %v4416
      %v4433 = vmul.f32 %v4396, %v4416
      %v4434 = vmul.f32 %v4397, %v4416
      %v4435 = vmul.f32 %v4398, %v4416
      %v4436 = vmul.f32 %v4399, %v4416
      %v4437 = vmul.f32 %v4400, %v4416
      %v4438 = vmul.f32 %v4401, %v4416
      %v4439 = vmul.f32 %v4402, %v4416
      %v4440 = vmul.f32 %v4403, %v4416
      %v4441 = vmul.f32 %v4404, %v4416
      %v4442 = vmul.f32 %v4405, %v4416
      %v4443 = vmul.f32 %v4406, %v4416
      %v4444 = vmul.f32 %v4407, %v4416
      %v4445 = vmul.f32 %v4408, %v4416
      %v4446 = vmul.f32 %v4409, %v4416
      %v4447 = vmul.f32 %v4410, %v4416
      %v4448 = vmul.f32 %v4411, %v4416
      %v4449 = vadd.f32 %v4247, %v4417
      %v4450 = vadd.f32 %v4248, %v4418
      %v4451 = vadd.f32 %v4249, %v4419
      %v4452 = vadd.f32 %v4250, %v4420
      %v4453 = vadd.f32 %v4251, %v4421
      %v4454 = vadd.f32 %v4252, %v4422
      %v4455 = vadd.f32 %v4253, %v4423
      %v4456 = vadd.f32 %v4254, %v4424
      %v4457 = vadd.f32 %v4255, %v4425
      %v4458 = vadd.f32 %v4256, %v4426
      %v4459 = vadd.f32 %v4257, %v4427
      %v4460 = vadd.f32 %v4258, %v4428
      %v4461 = vadd.f32 %v4259, %v4429
      %v4462 = vadd.f32 %v4260, %v4430
      %v4463 = vadd.f32 %v4261, %v4431
      %v4464 = vadd.f32 %v4262, %v4432
      %v4465 = vadd.f32 %v4263, %v4433
      %v4466 = vadd.f32 %v4264, %v4434
      %v4467 = vadd.f32 %v4265, %v4435
      %v4468 = vadd.f32 %v4266, %v4436
      %v4469 = vadd.f32 %v4267, %v4437
      %v4470 = vadd.f32 %v4268, %v4438
      %v4471 = vadd.f32 %v4269, %v4439
      %v4472 = vadd.f32 %v4270, %v4440
      %v4473 = vadd.f32 %v4271, %v4441
      %v4474 = vadd.f32 %v4272, %v4442
      %v4475 = vadd.f32 %v4273, %v4443
      %v4476 = vadd.f32 %v4274, %v4444
      %v4477 = vadd.f32 %v4275, %v4445
      %v4478 = vadd.f32 %v4276, %v4446
      %v4479 = vadd.f32 %v4277, %v4447
      %v4480 = vadd.f32 %v4278, %v4448
      %v4481 = vld [vmem:[%s3874 + $0x6] sm:$0xff]
      %v4482 = vld [vmem:[%s3874 + $0xe] sm:$0xff]
      %v4483 = vld [vmem:[%s3874 + $0x1e] sm:$0xff]
      %v4484 = vld [vmem:[%s3874 + $0x26] sm:$0xff]
      %v4485 = vld [vmem:[%s3874 + $0x36] sm:$0xff]
      %v4486 = vld [vmem:[%s3874 + $0x3e] sm:$0xff]
      %v4487 = vld [vmem:[%s3874 + $0x4e] sm:$0xff]
      %v4488 = vld [vmem:[%s3874 + $0x56] sm:$0xff]
      %v4489 = vld [vmem:[%s3874 + $0x66] sm:$0xff]
      %v4490 = vld [vmem:[%s3874 + $0x6e] sm:$0xff]
      %v4491 = vld [vmem:[%s3874 + $0x7e] sm:$0xff]
      %v4492 = vld [vmem:[%s3874 + $0x86] sm:$0xff]
      %v4493 = vld [vmem:[%s3874 + $0x96] sm:$0xff]
      %v4494 = vld [vmem:[%s3874 + $0x9e] sm:$0xff]
      %v4495 = vld [vmem:[%s3874 + $0xae] sm:$0xff]
      %v4496 = vld [vmem:[%s3874 + $0xb6] sm:$0xff]
      %v4497 = vld [vmem:[%s3874 + $0xc6] sm:$0xff]
      %v4498 = vld [vmem:[%s3874 + $0xce] sm:$0xff]
      %v4499 = vld [vmem:[%s3874 + $0xde] sm:$0xff]
      %v4500 = vld [vmem:[%s3874 + $0xe6] sm:$0xff]
      %v4501 = vld [vmem:[%s3874 + $0xf6] sm:$0xff]
      %v4502 = vld [vmem:[%s3874 + $0xfe] sm:$0xff]
      %v4503 = vld [vmem:[%s3874 + $0x10e] sm:$0xff]
      %v4504 = vld [vmem:[%s3874 + $0x116] sm:$0xff]
      %v4505 = vld [vmem:[%s3874 + $0x126] sm:$0xff]
      %v4506 = vld [vmem:[%s3874 + $0x12e] sm:$0xff]
      %v4507 = vld [vmem:[%s3874 + $0x13e] sm:$0xff]
      %v4508 = vld [vmem:[%s3874 + $0x146] sm:$0xff]
      %v4509 = vld [vmem:[%s3874 + $0x156] sm:$0xff]
      %v4510 = vld [vmem:[%s3874 + $0x15e] sm:$0xff]
      %v4511 = vld [vmem:[%s3874 + $0x16e] sm:$0xff]
      %v4512 = vld [vmem:[%s3874 + $0x176] sm:$0xff]
      %v4513 = vld [vmem:[%s1 + $0x29] sm:$0x1]
      %v4514 = vlaneseq
      %v4515 = vshrl.u32 %v4514, 7
      %v4516 = vsub.s32 0, %v4515
      %v4517 = vrot.slane %v4513, %v4516
      %v4518 = vmul.f32 %v4481, %v4517
      %v4519 = vmul.f32 %v4482, %v4517
      %v4520 = vmul.f32 %v4483, %v4517
      %v4521 = vmul.f32 %v4484, %v4517
      %v4522 = vmul.f32 %v4485, %v4517
      %v4523 = vmul.f32 %v4486, %v4517
      %v4524 = vmul.f32 %v4487, %v4517
      %v4525 = vmul.f32 %v4488, %v4517
      %v4526 = vmul.f32 %v4489, %v4517
      %v4527 = vmul.f32 %v4490, %v4517
      %v4528 = vmul.f32 %v4491, %v4517
      %v4529 = vmul.f32 %v4492, %v4517
      %v4530 = vmul.f32 %v4493, %v4517
      %v4531 = vmul.f32 %v4494, %v4517
      %v4532 = vmul.f32 %v4495, %v4517
      %v4533 = vmul.f32 %v4496, %v4517
      %v4534 = vmul.f32 %v4497, %v4517
      %v4535 = vmul.f32 %v4498, %v4517
      %v4536 = vmul.f32 %v4499, %v4517
      %v4537 = vmul.f32 %v4500, %v4517
      %v4538 = vmul.f32 %v4501, %v4517
      %v4539 = vmul.f32 %v4502, %v4517
      %v4540 = vmul.f32 %v4503, %v4517
      %v4541 = vmul.f32 %v4504, %v4517
      %v4542 = vmul.f32 %v4505, %v4517
      %v4543 = vmul.f32 %v4506, %v4517
      %v4544 = vmul.f32 %v4507, %v4517
      %v4545 = vmul.f32 %v4508, %v4517
      %v4546 = vmul.f32 %v4509, %v4517
      %v4547 = vmul.f32 %v4510, %v4517
      %v4548 = vmul.f32 %v4511, %v4517
      %v4549 = vmul.f32 %v4512, %v4517
      %v4550 = vadd.f32 %v4348, %v4518
      %v4551 = vadd.f32 %v4349, %v4519
      %v4552 = vadd.f32 %v4350, %v4520
      %v4553 = vadd.f32 %v4351, %v4521
      %v4554 = vadd.f32 %v4352, %v4522
      %v4555 = vadd.f32 %v4353, %v4523
      %v4556 = vadd.f32 %v4354, %v4524
      %v4557 = vadd.f32 %v4355, %v4525
      %v4558 = vadd.f32 %v4356, %v4526
      %v4559 = vadd.f32 %v4357, %v4527
      %v4560 = vadd.f32 %v4358, %v4528
      %v4561 = vadd.f32 %v4359, %v4529
      %v4562 = vadd.f32 %v4360, %v4530
      %v4563 = vadd.f32 %v4361, %v4531
      %v4564 = vadd.f32 %v4362, %v4532
      %v4565 = vadd.f32 %v4363, %v4533
      %v4566 = vadd.f32 %v4364, %v4534
      %v4567 = vadd.f32 %v4365, %v4535
      %v4568 = vadd.f32 %v4366, %v4536
      %v4569 = vadd.f32 %v4367, %v4537
      %v4570 = vadd.f32 %v4368, %v4538
      %v4571 = vadd.f32 %v4369, %v4539
      %v4572 = vadd.f32 %v4370, %v4540
      %v4573 = vadd.f32 %v4371, %v4541
      %v4574 = vadd.f32 %v4372, %v4542
      %v4575 = vadd.f32 %v4373, %v4543
      %v4576 = vadd.f32 %v4374, %v4544
      %v4577 = vadd.f32 %v4375, %v4545
      %v4578 = vadd.f32 %v4376, %v4546
      %v4579 = vadd.f32 %v4377, %v4547
      %v4580 = vadd.f32 %v4378, %v4548
      %v4581 = vadd.f32 %v4379, %v4549
      %s4582 = sadd.s32 %s386, 6
      %s4583 = smul.u32 %s4582, 24
      %s4584 = scalar_lea.vmem %s373, %s4583
      %v4585 = vld [vmem:[%s4584] sm:$0xff]
      %v4586 = vld [vmem:[%s4584 + $0x8] sm:$0xff]
      %v4587 = vld [vmem:[%s4584 + $0x18] sm:$0xff]
      %v4588 = vld [vmem:[%s4584 + $0x20] sm:$0xff]
      %v4589 = vld [vmem:[%s4584 + $0x30] sm:$0xff]
      %v4590 = vld [vmem:[%s4584 + $0x38] sm:$0xff]
      %v4591 = vld [vmem:[%s4584 + $0x48] sm:$0xff]
      %v4592 = vld [vmem:[%s4584 + $0x50] sm:$0xff]
      %v4593 = vld [vmem:[%s4584 + $0x60] sm:$0xff]
      %v4594 = vld [vmem:[%s4584 + $0x68] sm:$0xff]
      %v4595 = vld [vmem:[%s4584 + $0x78] sm:$0xff]
      %v4596 = vld [vmem:[%s4584 + $0x80] sm:$0xff]
      %v4597 = vld [vmem:[%s4584 + $0x90] sm:$0xff]
      %v4598 = vld [vmem:[%s4584 + $0x98] sm:$0xff]
      %v4599 = vld [vmem:[%s4584 + $0xa8] sm:$0xff]
      %v4600 = vld [vmem:[%s4584 + $0xb0] sm:$0xff]
      %v4601 = vld [vmem:[%s4584 + $0xc0] sm:$0xff]
      %v4602 = vld [vmem:[%s4584 + $0xc8] sm:$0xff]
      %v4603 = vld [vmem:[%s4584 + $0xd8] sm:$0xff]
      %v4604 = vld [vmem:[%s4584 + $0xe0] sm:$0xff]
      %v4605 = vld [vmem:[%s4584 + $0xf0] sm:$0xff]
      %v4606 = vld [vmem:[%s4584 + $0xf8] sm:$0xff]
      %v4607 = vld [vmem:[%s4584 + $0x108] sm:$0xff]
      %v4608 = vld [vmem:[%s4584 + $0x110] sm:$0xff]
      %v4609 = vld [vmem:[%s4584 + $0x120] sm:$0xff]
      %v4610 = vld [vmem:[%s4584 + $0x128] sm:$0xff]
      %v4611 = vld [vmem:[%s4584 + $0x138] sm:$0xff]
      %v4612 = vld [vmem:[%s4584 + $0x140] sm:$0xff]
      %v4613 = vld [vmem:[%s4584 + $0x150] sm:$0xff]
      %v4614 = vld [vmem:[%s4584 + $0x158] sm:$0xff]
      %v4615 = vld [vmem:[%s4584 + $0x168] sm:$0xff]
      %v4616 = vld [vmem:[%s4584 + $0x170] sm:$0xff]
      %v4617 = vld [vmem:[%s1 + $0x2a] sm:$0x1]
      %v4618 = vlaneseq
      %v4619 = vshrl.u32 %v4618, 7
      %v4620 = vsub.s32 0, %v4619
      %v4621 = vrot.slane %v4617, %v4620
      %v4622 = vmul.f32 %v4585, %v4621
      %v4623 = vmul.f32 %v4586, %v4621
      %v4624 = vmul.f32 %v4587, %v4621
      %v4625 = vmul.f32 %v4588, %v4621
      %v4626 = vmul.f32 %v4589, %v4621
      %v4627 = vmul.f32 %v4590, %v4621
      %v4628 = vmul.f32 %v4591, %v4621
      %v4629 = vmul.f32 %v4592, %v4621
      %v4630 = vmul.f32 %v4593, %v4621
      %v4631 = vmul.f32 %v4594, %v4621
      %v4632 = vmul.f32 %v4595, %v4621
      %v4633 = vmul.f32 %v4596, %v4621
      %v4634 = vmul.f32 %v4597, %v4621
      %v4635 = vmul.f32 %v4598, %v4621
      %v4636 = vmul.f32 %v4599, %v4621
      %v4637 = vmul.f32 %v4600, %v4621
      %v4638 = vmul.f32 %v4601, %v4621
      %v4639 = vmul.f32 %v4602, %v4621
      %v4640 = vmul.f32 %v4603, %v4621
      %v4641 = vmul.f32 %v4604, %v4621
      %v4642 = vmul.f32 %v4605, %v4621
      %v4643 = vmul.f32 %v4606, %v4621
      %v4644 = vmul.f32 %v4607, %v4621
      %v4645 = vmul.f32 %v4608, %v4621
      %v4646 = vmul.f32 %v4609, %v4621
      %v4647 = vmul.f32 %v4610, %v4621
      %v4648 = vmul.f32 %v4611, %v4621
      %v4649 = vmul.f32 %v4612, %v4621
      %v4650 = vmul.f32 %v4613, %v4621
      %v4651 = vmul.f32 %v4614, %v4621
      %v4652 = vmul.f32 %v4615, %v4621
      %v4653 = vmul.f32 %v4616, %v4621
      %v4654 = vadd.f32 %v4449, %v4622
      %v4655 = vadd.f32 %v4450, %v4623
      %v4656 = vadd.f32 %v4451, %v4624
      %v4657 = vadd.f32 %v4452, %v4625
      %v4658 = vadd.f32 %v4453, %v4626
      %v4659 = vadd.f32 %v4454, %v4627
      %v4660 = vadd.f32 %v4455, %v4628
      %v4661 = vadd.f32 %v4456, %v4629
      %v4662 = vadd.f32 %v4457, %v4630
      %v4663 = vadd.f32 %v4458, %v4631
      %v4664 = vadd.f32 %v4459, %v4632
      %v4665 = vadd.f32 %v4460, %v4633
      %v4666 = vadd.f32 %v4461, %v4634
      %v4667 = vadd.f32 %v4462, %v4635
      %v4668 = vadd.f32 %v4463, %v4636
      %v4669 = vadd.f32 %v4464, %v4637
      %v4670 = vadd.f32 %v4465, %v4638
      %v4671 = vadd.f32 %v4466, %v4639
      %v4672 = vadd.f32 %v4467, %v4640
      %v4673 = vadd.f32 %v4468, %v4641
      %v4674 = vadd.f32 %v4469, %v4642
      %v4675 = vadd.f32 %v4470, %v4643
      %v4676 = vadd.f32 %v4471, %v4644
      %v4677 = vadd.f32 %v4472, %v4645
      %v4678 = vadd.f32 %v4473, %v4646
      %v4679 = vadd.f32 %v4474, %v4647
      %v4680 = vadd.f32 %v4475, %v4648
      %v4681 = vadd.f32 %v4476, %v4649
      %v4682 = vadd.f32 %v4477, %v4650
      %v4683 = vadd.f32 %v4478, %v4651
      %v4684 = vadd.f32 %v4479, %v4652
      %v4685 = vadd.f32 %v4480, %v4653
      %v4686 = vld [vmem:[%s4584 + $0x1] sm:$0xff]
      %v4687 = vld [vmem:[%s4584 + $0x9] sm:$0xff]
      %v4688 = vld [vmem:[%s4584 + $0x19] sm:$0xff]
      %v4689 = vld [vmem:[%s4584 + $0x21] sm:$0xff]
      %v4690 = vld [vmem:[%s4584 + $0x31] sm:$0xff]
      %v4691 = vld [vmem:[%s4584 + $0x39] sm:$0xff]
      %v4692 = vld [vmem:[%s4584 + $0x49] sm:$0xff]
      %v4693 = vld [vmem:[%s4584 + $0x51] sm:$0xff]
      %v4694 = vld [vmem:[%s4584 + $0x61] sm:$0xff]
      %v4695 = vld [vmem:[%s4584 + $0x69] sm:$0xff]
      %v4696 = vld [vmem:[%s4584 + $0x79] sm:$0xff]
      %v4697 = vld [vmem:[%s4584 + $0x81] sm:$0xff]
      %v4698 = vld [vmem:[%s4584 + $0x91] sm:$0xff]
      %v4699 = vld [vmem:[%s4584 + $0x99] sm:$0xff]
      %v4700 = vld [vmem:[%s4584 + $0xa9] sm:$0xff]
      %v4701 = vld [vmem:[%s4584 + $0xb1] sm:$0xff]
      %v4702 = vld [vmem:[%s4584 + $0xc1] sm:$0xff]
      %v4703 = vld [vmem:[%s4584 + $0xc9] sm:$0xff]
      %v4704 = vld [vmem:[%s4584 + $0xd9] sm:$0xff]
      %v4705 = vld [vmem:[%s4584 + $0xe1] sm:$0xff]
      %v4706 = vld [vmem:[%s4584 + $0xf1] sm:$0xff]
      %v4707 = vld [vmem:[%s4584 + $0xf9] sm:$0xff]
      %v4708 = vld [vmem:[%s4584 + $0x109] sm:$0xff]
      %v4709 = vld [vmem:[%s4584 + $0x111] sm:$0xff]
      %v4710 = vld [vmem:[%s4584 + $0x121] sm:$0xff]
      %v4711 = vld [vmem:[%s4584 + $0x129] sm:$0xff]
      %v4712 = vld [vmem:[%s4584 + $0x139] sm:$0xff]
      %v4713 = vld [vmem:[%s4584 + $0x141] sm:$0xff]
      %v4714 = vld [vmem:[%s4584 + $0x151] sm:$0xff]
      %v4715 = vld [vmem:[%s4584 + $0x159] sm:$0xff]
      %v4716 = vld [vmem:[%s4584 + $0x169] sm:$0xff]
      %v4717 = vld [vmem:[%s4584 + $0x171] sm:$0xff]
      %v4718 = vld [vmem:[%s1 + $0x2b] sm:$0x1]
      %v4719 = vlaneseq
      %v4720 = vshrl.u32 %v4719, 7
      %v4721 = vsub.s32 0, %v4720
      %v4722 = vrot.slane %v4718, %v4721
      %v4723 = vmul.f32 %v4686, %v4722
      %v4724 = vmul.f32 %v4687, %v4722
      %v4725 = vmul.f32 %v4688, %v4722
      %v4726 = vmul.f32 %v4689, %v4722
      %v4727 = vmul.f32 %v4690, %v4722
      %v4728 = vmul.f32 %v4691, %v4722
      %v4729 = vmul.f32 %v4692, %v4722
      %v4730 = vmul.f32 %v4693, %v4722
      %v4731 = vmul.f32 %v4694, %v4722
      %v4732 = vmul.f32 %v4695, %v4722
      %v4733 = vmul.f32 %v4696, %v4722
      %v4734 = vmul.f32 %v4697, %v4722
      %v4735 = vmul.f32 %v4698, %v4722
      %v4736 = vmul.f32 %v4699, %v4722
      %v4737 = vmul.f32 %v4700, %v4722
      %v4738 = vmul.f32 %v4701, %v4722
      %v4739 = vmul.f32 %v4702, %v4722
      %v4740 = vmul.f32 %v4703, %v4722
      %v4741 = vmul.f32 %v4704, %v4722
      %v4742 = vmul.f32 %v4705, %v4722
      %v4743 = vmul.f32 %v4706, %v4722
      %v4744 = vmul.f32 %v4707, %v4722
      %v4745 = vmul.f32 %v4708, %v4722
      %v4746 = vmul.f32 %v4709, %v4722
      %v4747 = vmul.f32 %v4710, %v4722
      %v4748 = vmul.f32 %v4711, %v4722
      %v4749 = vmul.f32 %v4712, %v4722
      %v4750 = vmul.f32 %v4713, %v4722
      %v4751 = vmul.f32 %v4714, %v4722
      %v4752 = vmul.f32 %v4715, %v4722
      %v4753 = vmul.f32 %v4716, %v4722
      %v4754 = vmul.f32 %v4717, %v4722
      %v4755 = vadd.f32 %v4550, %v4723
      %v4756 = vadd.f32 %v4551, %v4724
      %v4757 = vadd.f32 %v4552, %v4725
      %v4758 = vadd.f32 %v4553, %v4726
      %v4759 = vadd.f32 %v4554, %v4727
      %v4760 = vadd.f32 %v4555, %v4728
      %v4761 = vadd.f32 %v4556, %v4729
      %v4762 = vadd.f32 %v4557, %v4730
      %v4763 = vadd.f32 %v4558, %v4731
      %v4764 = vadd.f32 %v4559, %v4732
      %v4765 = vadd.f32 %v4560, %v4733
      %v4766 = vadd.f32 %v4561, %v4734
      %v4767 = vadd.f32 %v4562, %v4735
      %v4768 = vadd.f32 %v4563, %v4736
      %v4769 = vadd.f32 %v4564, %v4737
      %v4770 = vadd.f32 %v4565, %v4738
      %v4771 = vadd.f32 %v4566, %v4739
      %v4772 = vadd.f32 %v4567, %v4740
      %v4773 = vadd.f32 %v4568, %v4741
      %v4774 = vadd.f32 %v4569, %v4742
      %v4775 = vadd.f32 %v4570, %v4743
      %v4776 = vadd.f32 %v4571, %v4744
      %v4777 = vadd.f32 %v4572, %v4745
      %v4778 = vadd.f32 %v4573, %v4746
      %v4779 = vadd.f32 %v4574, %v4747
      %v4780 = vadd.f32 %v4575, %v4748
      %v4781 = vadd.f32 %v4576, %v4749
      %v4782 = vadd.f32 %v4577, %v4750
      %v4783 = vadd.f32 %v4578, %v4751
      %v4784 = vadd.f32 %v4579, %v4752
      %v4785 = vadd.f32 %v4580, %v4753
      %v4786 = vadd.f32 %v4581, %v4754
      %v4787 = vld [vmem:[%s4584 + $0x2] sm:$0xff]
      %v4788 = vld [vmem:[%s4584 + $0xa] sm:$0xff]
      %v4789 = vld [vmem:[%s4584 + $0x1a] sm:$0xff]
      %v4790 = vld [vmem:[%s4584 + $0x22] sm:$0xff]
      %v4791 = vld [vmem:[%s4584 + $0x32] sm:$0xff]
      %v4792 = vld [vmem:[%s4584 + $0x3a] sm:$0xff]
      %v4793 = vld [vmem:[%s4584 + $0x4a] sm:$0xff]
      %v4794 = vld [vmem:[%s4584 + $0x52] sm:$0xff]
      %v4795 = vld [vmem:[%s4584 + $0x62] sm:$0xff]
      %v4796 = vld [vmem:[%s4584 + $0x6a] sm:$0xff]
      %v4797 = vld [vmem:[%s4584 + $0x7a] sm:$0xff]
      %v4798 = vld [vmem:[%s4584 + $0x82] sm:$0xff]
      %v4799 = vld [vmem:[%s4584 + $0x92] sm:$0xff]
      %v4800 = vld [vmem:[%s4584 + $0x9a] sm:$0xff]
      %v4801 = vld [vmem:[%s4584 + $0xaa] sm:$0xff]
      %v4802 = vld [vmem:[%s4584 + $0xb2] sm:$0xff]
      %v4803 = vld [vmem:[%s4584 + $0xc2] sm:$0xff]
      %v4804 = vld [vmem:[%s4584 + $0xca] sm:$0xff]
      %v4805 = vld [vmem:[%s4584 + $0xda] sm:$0xff]
      %v4806 = vld [vmem:[%s4584 + $0xe2] sm:$0xff]
      %v4807 = vld [vmem:[%s4584 + $0xf2] sm:$0xff]
      %v4808 = vld [vmem:[%s4584 + $0xfa] sm:$0xff]
      %v4809 = vld [vmem:[%s4584 + $0x10a] sm:$0xff]
      %v4810 = vld [vmem:[%s4584 + $0x112] sm:$0xff]
      %v4811 = vld [vmem:[%s4584 + $0x122] sm:$0xff]
      %v4812 = vld [vmem:[%s4584 + $0x12a] sm:$0xff]
      %v4813 = vld [vmem:[%s4584 + $0x13a] sm:$0xff]
      %v4814 = vld [vmem:[%s4584 + $0x142] sm:$0xff]
      %v4815 = vld [vmem:[%s4584 + $0x152] sm:$0xff]
      %v4816 = vld [vmem:[%s4584 + $0x15a] sm:$0xff]
      %v4817 = vld [vmem:[%s4584 + $0x16a] sm:$0xff]
      %v4818 = vld [vmem:[%s4584 + $0x172] sm:$0xff]
      %v4819 = vld [vmem:[%s1 + $0x2c] sm:$0x1]
      %v4820 = vlaneseq
      %v4821 = vshrl.u32 %v4820, 7
      %v4822 = vsub.s32 0, %v4821
      %v4823 = vrot.slane %v4819, %v4822
      %v4824 = vmul.f32 %v4787, %v4823
      %v4825 = vmul.f32 %v4788, %v4823
      %v4826 = vmul.f32 %v4789, %v4823
      %v4827 = vmul.f32 %v4790, %v4823
      %v4828 = vmul.f32 %v4791, %v4823
      %v4829 = vmul.f32 %v4792, %v4823
      %v4830 = vmul.f32 %v4793, %v4823
      %v4831 = vmul.f32 %v4794, %v4823
      %v4832 = vmul.f32 %v4795, %v4823
      %v4833 = vmul.f32 %v4796, %v4823
      %v4834 = vmul.f32 %v4797, %v4823
      %v4835 = vmul.f32 %v4798, %v4823
      %v4836 = vmul.f32 %v4799, %v4823
      %v4837 = vmul.f32 %v4800, %v4823
      %v4838 = vmul.f32 %v4801, %v4823
      %v4839 = vmul.f32 %v4802, %v4823
      %v4840 = vmul.f32 %v4803, %v4823
      %v4841 = vmul.f32 %v4804, %v4823
      %v4842 = vmul.f32 %v4805, %v4823
      %v4843 = vmul.f32 %v4806, %v4823
      %v4844 = vmul.f32 %v4807, %v4823
      %v4845 = vmul.f32 %v4808, %v4823
      %v4846 = vmul.f32 %v4809, %v4823
      %v4847 = vmul.f32 %v4810, %v4823
      %v4848 = vmul.f32 %v4811, %v4823
      %v4849 = vmul.f32 %v4812, %v4823
      %v4850 = vmul.f32 %v4813, %v4823
      %v4851 = vmul.f32 %v4814, %v4823
      %v4852 = vmul.f32 %v4815, %v4823
      %v4853 = vmul.f32 %v4816, %v4823
      %v4854 = vmul.f32 %v4817, %v4823
      %v4855 = vmul.f32 %v4818, %v4823
      %v4856 = vadd.f32 %v4654, %v4824
      %v4857 = vadd.f32 %v4655, %v4825
      %v4858 = vadd.f32 %v4656, %v4826
      %v4859 = vadd.f32 %v4657, %v4827
      %v4860 = vadd.f32 %v4658, %v4828
      %v4861 = vadd.f32 %v4659, %v4829
      %v4862 = vadd.f32 %v4660, %v4830
      %v4863 = vadd.f32 %v4661, %v4831
      %v4864 = vadd.f32 %v4662, %v4832
      %v4865 = vadd.f32 %v4663, %v4833
      %v4866 = vadd.f32 %v4664, %v4834
      %v4867 = vadd.f32 %v4665, %v4835
      %v4868 = vadd.f32 %v4666, %v4836
      %v4869 = vadd.f32 %v4667, %v4837
      %v4870 = vadd.f32 %v4668, %v4838
      %v4871 = vadd.f32 %v4669, %v4839
      %v4872 = vadd.f32 %v4670, %v4840
      %v4873 = vadd.f32 %v4671, %v4841
      %v4874 = vadd.f32 %v4672, %v4842
      %v4875 = vadd.f32 %v4673, %v4843
      %v4876 = vadd.f32 %v4674, %v4844
      %v4877 = vadd.f32 %v4675, %v4845
      %v4878 = vadd.f32 %v4676, %v4846
      %v4879 = vadd.f32 %v4677, %v4847
      %v4880 = vadd.f32 %v4678, %v4848
      %v4881 = vadd.f32 %v4679, %v4849
      %v4882 = vadd.f32 %v4680, %v4850
      %v4883 = vadd.f32 %v4681, %v4851
      %v4884 = vadd.f32 %v4682, %v4852
      %v4885 = vadd.f32 %v4683, %v4853
      %v4886 = vadd.f32 %v4684, %v4854
      %v4887 = vadd.f32 %v4685, %v4855
      %v4888 = vld [vmem:[%s4584 + $0x3] sm:$0xff]
      %v4889 = vld [vmem:[%s4584 + $0xb] sm:$0xff]
      %v4890 = vld [vmem:[%s4584 + $0x1b] sm:$0xff]
      %v4891 = vld [vmem:[%s4584 + $0x23] sm:$0xff]
      %v4892 = vld [vmem:[%s4584 + $0x33] sm:$0xff]
      %v4893 = vld [vmem:[%s4584 + $0x3b] sm:$0xff]
      %v4894 = vld [vmem:[%s4584 + $0x4b] sm:$0xff]
      %v4895 = vld [vmem:[%s4584 + $0x53] sm:$0xff]
      %v4896 = vld [vmem:[%s4584 + $0x63] sm:$0xff]
      %v4897 = vld [vmem:[%s4584 + $0x6b] sm:$0xff]
      %v4898 = vld [vmem:[%s4584 + $0x7b] sm:$0xff]
      %v4899 = vld [vmem:[%s4584 + $0x83] sm:$0xff]
      %v4900 = vld [vmem:[%s4584 + $0x93] sm:$0xff]
      %v4901 = vld [vmem:[%s4584 + $0x9b] sm:$0xff]
      %v4902 = vld [vmem:[%s4584 + $0xab] sm:$0xff]
      %v4903 = vld [vmem:[%s4584 + $0xb3] sm:$0xff]
      %v4904 = vld [vmem:[%s4584 + $0xc3] sm:$0xff]
      %v4905 = vld [vmem:[%s4584 + $0xcb] sm:$0xff]
      %v4906 = vld [vmem:[%s4584 + $0xdb] sm:$0xff]
      %v4907 = vld [vmem:[%s4584 + $0xe3] sm:$0xff]
      %v4908 = vld [vmem:[%s4584 + $0xf3] sm:$0xff]
      %v4909 = vld [vmem:[%s4584 + $0xfb] sm:$0xff]
      %v4910 = vld [vmem:[%s4584 + $0x10b] sm:$0xff]
      %v4911 = vld [vmem:[%s4584 + $0x113] sm:$0xff]
      %v4912 = vld [vmem:[%s4584 + $0x123] sm:$0xff]
      %v4913 = vld [vmem:[%s4584 + $0x12b] sm:$0xff]
      %v4914 = vld [vmem:[%s4584 + $0x13b] sm:$0xff]
      %v4915 = vld [vmem:[%s4584 + $0x143] sm:$0xff]
      %v4916 = vld [vmem:[%s4584 + $0x153] sm:$0xff]
      %v4917 = vld [vmem:[%s4584 + $0x15b] sm:$0xff]
      %v4918 = vld [vmem:[%s4584 + $0x16b] sm:$0xff]
      %v4919 = vld [vmem:[%s4584 + $0x173] sm:$0xff]
      %v4920 = vld [vmem:[%s1 + $0x2d] sm:$0x1]
      %v4921 = vlaneseq
      %v4922 = vshrl.u32 %v4921, 7
      %v4923 = vsub.s32 0, %v4922
      %v4924 = vrot.slane %v4920, %v4923
      %v4925 = vmul.f32 %v4888, %v4924
      %v4926 = vmul.f32 %v4889, %v4924
      %v4927 = vmul.f32 %v4890, %v4924
      %v4928 = vmul.f32 %v4891, %v4924
      %v4929 = vmul.f32 %v4892, %v4924
      %v4930 = vmul.f32 %v4893, %v4924
      %v4931 = vmul.f32 %v4894, %v4924
      %v4932 = vmul.f32 %v4895, %v4924
      %v4933 = vmul.f32 %v4896, %v4924
      %v4934 = vmul.f32 %v4897, %v4924
      %v4935 = vmul.f32 %v4898, %v4924
      %v4936 = vmul.f32 %v4899, %v4924
      %v4937 = vmul.f32 %v4900, %v4924
      %v4938 = vmul.f32 %v4901, %v4924
      %v4939 = vmul.f32 %v4902, %v4924
      %v4940 = vmul.f32 %v4903, %v4924
      %v4941 = vmul.f32 %v4904, %v4924
      %v4942 = vmul.f32 %v4905, %v4924
      %v4943 = vmul.f32 %v4906, %v4924
      %v4944 = vmul.f32 %v4907, %v4924
      %v4945 = vmul.f32 %v4908, %v4924
      %v4946 = vmul.f32 %v4909, %v4924
      %v4947 = vmul.f32 %v4910, %v4924
      %v4948 = vmul.f32 %v4911, %v4924
      %v4949 = vmul.f32 %v4912, %v4924
      %v4950 = vmul.f32 %v4913, %v4924
      %v4951 = vmul.f32 %v4914, %v4924
      %v4952 = vmul.f32 %v4915, %v4924
      %v4953 = vmul.f32 %v4916, %v4924
      %v4954 = vmul.f32 %v4917, %v4924
      %v4955 = vmul.f32 %v4918, %v4924
      %v4956 = vmul.f32 %v4919, %v4924
      %v4957 = vadd.f32 %v4755, %v4925
      %v4958 = vadd.f32 %v4756, %v4926
      %v4959 = vadd.f32 %v4757, %v4927
      %v4960 = vadd.f32 %v4758, %v4928
      %v4961 = vadd.f32 %v4759, %v4929
      %v4962 = vadd.f32 %v4760, %v4930
      %v4963 = vadd.f32 %v4761, %v4931
      %v4964 = vadd.f32 %v4762, %v4932
      %v4965 = vadd.f32 %v4763, %v4933
      %v4966 = vadd.f32 %v4764, %v4934
      %v4967 = vadd.f32 %v4765, %v4935
      %v4968 = vadd.f32 %v4766, %v4936
      %v4969 = vadd.f32 %v4767, %v4937
      %v4970 = vadd.f32 %v4768, %v4938
      %v4971 = vadd.f32 %v4769, %v4939
      %v4972 = vadd.f32 %v4770, %v4940
      %v4973 = vadd.f32 %v4771, %v4941
      %v4974 = vadd.f32 %v4772, %v4942
      %v4975 = vadd.f32 %v4773, %v4943
      %v4976 = vadd.f32 %v4774, %v4944
      %v4977 = vadd.f32 %v4775, %v4945
      %v4978 = vadd.f32 %v4776, %v4946
      %v4979 = vadd.f32 %v4777, %v4947
      %v4980 = vadd.f32 %v4778, %v4948
      %v4981 = vadd.f32 %v4779, %v4949
      %v4982 = vadd.f32 %v4780, %v4950
      %v4983 = vadd.f32 %v4781, %v4951
      %v4984 = vadd.f32 %v4782, %v4952
      %v4985 = vadd.f32 %v4783, %v4953
      %v4986 = vadd.f32 %v4784, %v4954
      %v4987 = vadd.f32 %v4785, %v4955
      %v4988 = vadd.f32 %v4786, %v4956
      %v4989 = vld [vmem:[%s4584 + $0x4] sm:$0xff]
      %v4990 = vld [vmem:[%s4584 + $0xc] sm:$0xff]
      %v4991 = vld [vmem:[%s4584 + $0x1c] sm:$0xff]
      %v4992 = vld [vmem:[%s4584 + $0x24] sm:$0xff]
      %v4993 = vld [vmem:[%s4584 + $0x34] sm:$0xff]
      %v4994 = vld [vmem:[%s4584 + $0x3c] sm:$0xff]
      %v4995 = vld [vmem:[%s4584 + $0x4c] sm:$0xff]
      %v4996 = vld [vmem:[%s4584 + $0x54] sm:$0xff]
      %v4997 = vld [vmem:[%s4584 + $0x64] sm:$0xff]
      %v4998 = vld [vmem:[%s4584 + $0x6c] sm:$0xff]
      %v4999 = vld [vmem:[%s4584 + $0x7c] sm:$0xff]
      %v5000 = vld [vmem:[%s4584 + $0x84] sm:$0xff]
      %v5001 = vld [vmem:[%s4584 + $0x94] sm:$0xff]
      %v5002 = vld [vmem:[%s4584 + $0x9c] sm:$0xff]
      %v5003 = vld [vmem:[%s4584 + $0xac] sm:$0xff]
      %v5004 = vld [vmem:[%s4584 + $0xb4] sm:$0xff]
      %v5005 = vld [vmem:[%s4584 + $0xc4] sm:$0xff]
      %v5006 = vld [vmem:[%s4584 + $0xcc] sm:$0xff]
      %v5007 = vld [vmem:[%s4584 + $0xdc] sm:$0xff]
      %v5008 = vld [vmem:[%s4584 + $0xe4] sm:$0xff]
      %v5009 = vld [vmem:[%s4584 + $0xf4] sm:$0xff]
      %v5010 = vld [vmem:[%s4584 + $0xfc] sm:$0xff]
      %v5011 = vld [vmem:[%s4584 + $0x10c] sm:$0xff]
      %v5012 = vld [vmem:[%s4584 + $0x114] sm:$0xff]
      %v5013 = vld [vmem:[%s4584 + $0x124] sm:$0xff]
      %v5014 = vld [vmem:[%s4584 + $0x12c] sm:$0xff]
      %v5015 = vld [vmem:[%s4584 + $0x13c] sm:$0xff]
      %v5016 = vld [vmem:[%s4584 + $0x144] sm:$0xff]
      %v5017 = vld [vmem:[%s4584 + $0x154] sm:$0xff]
      %v5018 = vld [vmem:[%s4584 + $0x15c] sm:$0xff]
      %v5019 = vld [vmem:[%s4584 + $0x16c] sm:$0xff]
      %v5020 = vld [vmem:[%s4584 + $0x174] sm:$0xff]
      %v5021 = vld [vmem:[%s1 + $0x2e] sm:$0x1]
      %v5022 = vlaneseq
      %v5023 = vshrl.u32 %v5022, 7
      %v5024 = vsub.s32 0, %v5023
      %v5025 = vrot.slane %v5021, %v5024
      %v5026 = vmul.f32 %v4989, %v5025
      %v5027 = vmul.f32 %v4990, %v5025
      %v5028 = vmul.f32 %v4991, %v5025
      %v5029 = vmul.f32 %v4992, %v5025
      %v5030 = vmul.f32 %v4993, %v5025
      %v5031 = vmul.f32 %v4994, %v5025
      %v5032 = vmul.f32 %v4995, %v5025
      %v5033 = vmul.f32 %v4996, %v5025
      %v5034 = vmul.f32 %v4997, %v5025
      %v5035 = vmul.f32 %v4998, %v5025
      %v5036 = vmul.f32 %v4999, %v5025
      %v5037 = vmul.f32 %v5000, %v5025
      %v5038 = vmul.f32 %v5001, %v5025
      %v5039 = vmul.f32 %v5002, %v5025
      %v5040 = vmul.f32 %v5003, %v5025
      %v5041 = vmul.f32 %v5004, %v5025
      %v5042 = vmul.f32 %v5005, %v5025
      %v5043 = vmul.f32 %v5006, %v5025
      %v5044 = vmul.f32 %v5007, %v5025
      %v5045 = vmul.f32 %v5008, %v5025
      %v5046 = vmul.f32 %v5009, %v5025
      %v5047 = vmul.f32 %v5010, %v5025
      %v5048 = vmul.f32 %v5011, %v5025
      %v5049 = vmul.f32 %v5012, %v5025
      %v5050 = vmul.f32 %v5013, %v5025
      %v5051 = vmul.f32 %v5014, %v5025
      %v5052 = vmul.f32 %v5015, %v5025
      %v5053 = vmul.f32 %v5016, %v5025
      %v5054 = vmul.f32 %v5017, %v5025
      %v5055 = vmul.f32 %v5018, %v5025
      %v5056 = vmul.f32 %v5019, %v5025
      %v5057 = vmul.f32 %v5020, %v5025
      %v5058 = vadd.f32 %v4856, %v5026
      %v5059 = vadd.f32 %v4857, %v5027
      %v5060 = vadd.f32 %v4858, %v5028
      %v5061 = vadd.f32 %v4859, %v5029
      %v5062 = vadd.f32 %v4860, %v5030
      %v5063 = vadd.f32 %v4861, %v5031
      %v5064 = vadd.f32 %v4862, %v5032
      %v5065 = vadd.f32 %v4863, %v5033
      %v5066 = vadd.f32 %v4864, %v5034
      %v5067 = vadd.f32 %v4865, %v5035
      %v5068 = vadd.f32 %v4866, %v5036
      %v5069 = vadd.f32 %v4867, %v5037
      %v5070 = vadd.f32 %v4868, %v5038
      %v5071 = vadd.f32 %v4869, %v5039
      %v5072 = vadd.f32 %v4870, %v5040
      %v5073 = vadd.f32 %v4871, %v5041
      %v5074 = vadd.f32 %v4872, %v5042
      %v5075 = vadd.f32 %v4873, %v5043
      %v5076 = vadd.f32 %v4874, %v5044
      %v5077 = vadd.f32 %v4875, %v5045
      %v5078 = vadd.f32 %v4876, %v5046
      %v5079 = vadd.f32 %v4877, %v5047
      %v5080 = vadd.f32 %v4878, %v5048
      %v5081 = vadd.f32 %v4879, %v5049
      %v5082 = vadd.f32 %v4880, %v5050
      %v5083 = vadd.f32 %v4881, %v5051
      %v5084 = vadd.f32 %v4882, %v5052
      %v5085 = vadd.f32 %v4883, %v5053
      %v5086 = vadd.f32 %v4884, %v5054
      %v5087 = vadd.f32 %v4885, %v5055
      %v5088 = vadd.f32 %v4886, %v5056
      %v5089 = vadd.f32 %v4887, %v5057
      %v5090 = vld [vmem:[%s4584 + $0x5] sm:$0xff]
      %v5091 = vld [vmem:[%s4584 + $0xd] sm:$0xff]
      %v5092 = vld [vmem:[%s4584 + $0x1d] sm:$0xff]
      %v5093 = vld [vmem:[%s4584 + $0x25] sm:$0xff]
      %v5094 = vld [vmem:[%s4584 + $0x35] sm:$0xff]
      %v5095 = vld [vmem:[%s4584 + $0x3d] sm:$0xff]
      %v5096 = vld [vmem:[%s4584 + $0x4d] sm:$0xff]
      %v5097 = vld [vmem:[%s4584 + $0x55] sm:$0xff]
      %v5098 = vld [vmem:[%s4584 + $0x65] sm:$0xff]
      %v5099 = vld [vmem:[%s4584 + $0x6d] sm:$0xff]
      %v5100 = vld [vmem:[%s4584 + $0x7d] sm:$0xff]
      %v5101 = vld [vmem:[%s4584 + $0x85] sm:$0xff]
      %v5102 = vld [vmem:[%s4584 + $0x95] sm:$0xff]
      %v5103 = vld [vmem:[%s4584 + $0x9d] sm:$0xff]
      %v5104 = vld [vmem:[%s4584 + $0xad] sm:$0xff]
      %v5105 = vld [vmem:[%s4584 + $0xb5] sm:$0xff]
      %v5106 = vld [vmem:[%s4584 + $0xc5] sm:$0xff]
      %v5107 = vld [vmem:[%s4584 + $0xcd] sm:$0xff]
      %v5108 = vld [vmem:[%s4584 + $0xdd] sm:$0xff]
      %v5109 = vld [vmem:[%s4584 + $0xe5] sm:$0xff]
      %v5110 = vld [vmem:[%s4584 + $0xf5] sm:$0xff]
      %v5111 = vld [vmem:[%s4584 + $0xfd] sm:$0xff]
      %v5112 = vld [vmem:[%s4584 + $0x10d] sm:$0xff]
      %v5113 = vld [vmem:[%s4584 + $0x115] sm:$0xff]
      %v5114 = vld [vmem:[%s4584 + $0x125] sm:$0xff]
      %v5115 = vld [vmem:[%s4584 + $0x12d] sm:$0xff]
      %v5116 = vld [vmem:[%s4584 + $0x13d] sm:$0xff]
      %v5117 = vld [vmem:[%s4584 + $0x145] sm:$0xff]
      %v5118 = vld [vmem:[%s4584 + $0x155] sm:$0xff]
      %v5119 = vld [vmem:[%s4584 + $0x15d] sm:$0xff]
      %v5120 = vld [vmem:[%s4584 + $0x16d] sm:$0xff]
      %v5121 = vld [vmem:[%s4584 + $0x175] sm:$0xff]
      %v5122 = vld [vmem:[%s1 + $0x2f] sm:$0x1]
      %v5123 = vlaneseq
      %v5124 = vshrl.u32 %v5123, 7
      %v5125 = vsub.s32 0, %v5124
      %v5126 = vrot.slane %v5122, %v5125
      %v5127 = vmul.f32 %v5090, %v5126
      %v5128 = vmul.f32 %v5091, %v5126
      %v5129 = vmul.f32 %v5092, %v5126
      %v5130 = vmul.f32 %v5093, %v5126
      %v5131 = vmul.f32 %v5094, %v5126
      %v5132 = vmul.f32 %v5095, %v5126
      %v5133 = vmul.f32 %v5096, %v5126
      %v5134 = vmul.f32 %v5097, %v5126
      %v5135 = vmul.f32 %v5098, %v5126
      %v5136 = vmul.f32 %v5099, %v5126
      %v5137 = vmul.f32 %v5100, %v5126
      %v5138 = vmul.f32 %v5101, %v5126
      %v5139 = vmul.f32 %v5102, %v5126
      %v5140 = vmul.f32 %v5103, %v5126
      %v5141 = vmul.f32 %v5104, %v5126
      %v5142 = vmul.f32 %v5105, %v5126
      %v5143 = vmul.f32 %v5106, %v5126
      %v5144 = vmul.f32 %v5107, %v5126
      %v5145 = vmul.f32 %v5108, %v5126
      %v5146 = vmul.f32 %v5109, %v5126
      %v5147 = vmul.f32 %v5110, %v5126
      %v5148 = vmul.f32 %v5111, %v5126
      %v5149 = vmul.f32 %v5112, %v5126
      %v5150 = vmul.f32 %v5113, %v5126
      %v5151 = vmul.f32 %v5114, %v5126
      %v5152 = vmul.f32 %v5115, %v5126
      %v5153 = vmul.f32 %v5116, %v5126
      %v5154 = vmul.f32 %v5117, %v5126
      %v5155 = vmul.f32 %v5118, %v5126
      %v5156 = vmul.f32 %v5119, %v5126
      %v5157 = vmul.f32 %v5120, %v5126
      %v5158 = vmul.f32 %v5121, %v5126
      %v5159 = vadd.f32 %v4957, %v5127
      %v5160 = vadd.f32 %v4958, %v5128
      %v5161 = vadd.f32 %v4959, %v5129
      %v5162 = vadd.f32 %v4960, %v5130
      %v5163 = vadd.f32 %v4961, %v5131
      %v5164 = vadd.f32 %v4962, %v5132
      %v5165 = vadd.f32 %v4963, %v5133
      %v5166 = vadd.f32 %v4964, %v5134
      %v5167 = vadd.f32 %v4965, %v5135
      %v5168 = vadd.f32 %v4966, %v5136
      %v5169 = vadd.f32 %v4967, %v5137
      %v5170 = vadd.f32 %v4968, %v5138
      %v5171 = vadd.f32 %v4969, %v5139
      %v5172 = vadd.f32 %v4970, %v5140
      %v5173 = vadd.f32 %v4971, %v5141
      %v5174 = vadd.f32 %v4972, %v5142
      %v5175 = vadd.f32 %v4973, %v5143
      %v5176 = vadd.f32 %v4974, %v5144
      %v5177 = vadd.f32 %v4975, %v5145
      %v5178 = vadd.f32 %v4976, %v5146
      %v5179 = vadd.f32 %v4977, %v5147
      %v5180 = vadd.f32 %v4978, %v5148
      %v5181 = vadd.f32 %v4979, %v5149
      %v5182 = vadd.f32 %v4980, %v5150
      %v5183 = vadd.f32 %v4981, %v5151
      %v5184 = vadd.f32 %v4982, %v5152
      %v5185 = vadd.f32 %v4983, %v5153
      %v5186 = vadd.f32 %v4984, %v5154
      %v5187 = vadd.f32 %v4985, %v5155
      %v5188 = vadd.f32 %v4986, %v5156
      %v5189 = vadd.f32 %v4987, %v5157
      %v5190 = vadd.f32 %v4988, %v5158
      %v5191 = vld [vmem:[%s4584 + $0x6] sm:$0xff]
      %v5192 = vld [vmem:[%s4584 + $0xe] sm:$0xff]
      %v5193 = vld [vmem:[%s4584 + $0x1e] sm:$0xff]
      %v5194 = vld [vmem:[%s4584 + $0x26] sm:$0xff]
      %v5195 = vld [vmem:[%s4584 + $0x36] sm:$0xff]
      %v5196 = vld [vmem:[%s4584 + $0x3e] sm:$0xff]
      %v5197 = vld [vmem:[%s4584 + $0x4e] sm:$0xff]
      %v5198 = vld [vmem:[%s4584 + $0x56] sm:$0xff]
      %v5199 = vld [vmem:[%s4584 + $0x66] sm:$0xff]
      %v5200 = vld [vmem:[%s4584 + $0x6e] sm:$0xff]
      %v5201 = vld [vmem:[%s4584 + $0x7e] sm:$0xff]
      %v5202 = vld [vmem:[%s4584 + $0x86] sm:$0xff]
      %v5203 = vld [vmem:[%s4584 + $0x96] sm:$0xff]
      %v5204 = vld [vmem:[%s4584 + $0x9e] sm:$0xff]
      %v5205 = vld [vmem:[%s4584 + $0xae] sm:$0xff]
      %v5206 = vld [vmem:[%s4584 + $0xb6] sm:$0xff]
      %v5207 = vld [vmem:[%s4584 + $0xc6] sm:$0xff]
      %v5208 = vld [vmem:[%s4584 + $0xce] sm:$0xff]
      %v5209 = vld [vmem:[%s4584 + $0xde] sm:$0xff]
      %v5210 = vld [vmem:[%s4584 + $0xe6] sm:$0xff]
      %v5211 = vld [vmem:[%s4584 + $0xf6] sm:$0xff]
      %v5212 = vld [vmem:[%s4584 + $0xfe] sm:$0xff]
      %v5213 = vld [vmem:[%s4584 + $0x10e] sm:$0xff]
      %v5214 = vld [vmem:[%s4584 + $0x116] sm:$0xff]
      %v5215 = vld [vmem:[%s4584 + $0x126] sm:$0xff]
      %v5216 = vld [vmem:[%s4584 + $0x12e] sm:$0xff]
      %v5217 = vld [vmem:[%s4584 + $0x13e] sm:$0xff]
      %v5218 = vld [vmem:[%s4584 + $0x146] sm:$0xff]
      %v5219 = vld [vmem:[%s4584 + $0x156] sm:$0xff]
      %v5220 = vld [vmem:[%s4584 + $0x15e] sm:$0xff]
      %v5221 = vld [vmem:[%s4584 + $0x16e] sm:$0xff]
      %v5222 = vld [vmem:[%s4584 + $0x176] sm:$0xff]
      %v5223 = vld [vmem:[%s1 + $0x30] sm:$0x1]
      %v5224 = vlaneseq
      %v5225 = vshrl.u32 %v5224, 7
      %v5226 = vsub.s32 0, %v5225
      %v5227 = vrot.slane %v5223, %v5226
      %v5228 = vmul.f32 %v5191, %v5227
      %v5229 = vmul.f32 %v5192, %v5227
      %v5230 = vmul.f32 %v5193, %v5227
      %v5231 = vmul.f32 %v5194, %v5227
      %v5232 = vmul.f32 %v5195, %v5227
      %v5233 = vmul.f32 %v5196, %v5227
      %v5234 = vmul.f32 %v5197, %v5227
      %v5235 = vmul.f32 %v5198, %v5227
      %v5236 = vmul.f32 %v5199, %v5227
      %v5237 = vmul.f32 %v5200, %v5227
      %v5238 = vmul.f32 %v5201, %v5227
      %v5239 = vmul.f32 %v5202, %v5227
      %v5240 = vmul.f32 %v5203, %v5227
      %v5241 = vmul.f32 %v5204, %v5227
      %v5242 = vmul.f32 %v5205, %v5227
      %v5243 = vmul.f32 %v5206, %v5227
      %v5244 = vmul.f32 %v5207, %v5227
      %v5245 = vmul.f32 %v5208, %v5227
      %v5246 = vmul.f32 %v5209, %v5227
      %v5247 = vmul.f32 %v5210, %v5227
      %v5248 = vmul.f32 %v5211, %v5227
      %v5249 = vmul.f32 %v5212, %v5227
      %v5250 = vmul.f32 %v5213, %v5227
      %v5251 = vmul.f32 %v5214, %v5227
      %v5252 = vmul.f32 %v5215, %v5227
      %v5253 = vmul.f32 %v5216, %v5227
      %v5254 = vmul.f32 %v5217, %v5227
      %v5255 = vmul.f32 %v5218, %v5227
      %v5256 = vmul.f32 %v5219, %v5227
      %v5257 = vmul.f32 %v5220, %v5227
      %v5258 = vmul.f32 %v5221, %v5227
      %v5259 = vmul.f32 %v5222, %v5227
      %v5260 = vadd.f32 %v5058, %v5228
      %v5261 = vadd.f32 %v5059, %v5229
      %v5262 = vadd.f32 %v5060, %v5230
      %v5263 = vadd.f32 %v5061, %v5231
      %v5264 = vadd.f32 %v5062, %v5232
      %v5265 = vadd.f32 %v5063, %v5233
      %v5266 = vadd.f32 %v5064, %v5234
      %v5267 = vadd.f32 %v5065, %v5235
      %v5268 = vadd.f32 %v5066, %v5236
      %v5269 = vadd.f32 %v5067, %v5237
      %v5270 = vadd.f32 %v5068, %v5238
      %v5271 = vadd.f32 %v5069, %v5239
      %v5272 = vadd.f32 %v5070, %v5240
      %v5273 = vadd.f32 %v5071, %v5241
      %v5274 = vadd.f32 %v5072, %v5242
      %v5275 = vadd.f32 %v5073, %v5243
      %v5276 = vadd.f32 %v5074, %v5244
      %v5277 = vadd.f32 %v5075, %v5245
      %v5278 = vadd.f32 %v5076, %v5246
      %v5279 = vadd.f32 %v5077, %v5247
      %v5280 = vadd.f32 %v5078, %v5248
      %v5281 = vadd.f32 %v5079, %v5249
      %v5282 = vadd.f32 %v5080, %v5250
      %v5283 = vadd.f32 %v5081, %v5251
      %v5284 = vadd.f32 %v5082, %v5252
      %v5285 = vadd.f32 %v5083, %v5253
      %v5286 = vadd.f32 %v5084, %v5254
      %v5287 = vadd.f32 %v5085, %v5255
      %v5288 = vadd.f32 %v5086, %v5256
      %v5289 = vadd.f32 %v5087, %v5257
      %v5290 = vadd.f32 %v5088, %v5258
      %v5291 = vadd.f32 %v5089, %v5259
      %v5292 = vadd.f32 %v5260, %v5159
      %v5293 = vadd.f32 %v5261, %v5160
      %v5294 = vadd.f32 %v5262, %v5161
      %v5295 = vadd.f32 %v5263, %v5162
      %v5296 = vadd.f32 %v5264, %v5163
      %v5297 = vadd.f32 %v5265, %v5164
      %v5298 = vadd.f32 %v5266, %v5165
      %v5299 = vadd.f32 %v5267, %v5166
      %v5300 = vadd.f32 %v5268, %v5167
      %v5301 = vadd.f32 %v5269, %v5168
      %v5302 = vadd.f32 %v5270, %v5169
      %v5303 = vadd.f32 %v5271, %v5170
      %v5304 = vadd.f32 %v5272, %v5171
      %v5305 = vadd.f32 %v5273, %v5172
      %v5306 = vadd.f32 %v5274, %v5173
      %v5307 = vadd.f32 %v5275, %v5174
      %v5308 = vadd.f32 %v5276, %v5175
      %v5309 = vadd.f32 %v5277, %v5176
      %v5310 = vadd.f32 %v5278, %v5177
      %v5311 = vadd.f32 %v5279, %v5178
      %v5312 = vadd.f32 %v5280, %v5179
      %v5313 = vadd.f32 %v5281, %v5180
      %v5314 = vadd.f32 %v5282, %v5181
      %v5315 = vadd.f32 %v5283, %v5182
      %v5316 = vadd.f32 %v5284, %v5183
      %v5317 = vadd.f32 %v5285, %v5184
      %v5318 = vadd.f32 %v5286, %v5185
      %v5319 = vadd.f32 %v5287, %v5186
      %v5320 = vadd.f32 %v5288, %v5187
      %v5321 = vadd.f32 %v5289, %v5188
      %v5322 = vadd.f32 %v5290, %v5189
      %v5323 = vadd.f32 %v5291, %v5190
      %v5324 = vld [vmem:[%s2] sm:$0x1]
      %v5326 = vlaneseq
      %v5327 = vshrl.u32 %v5326, 7
      %v5328 = vsub.s32 0, %v5327
      %v5329 = vrot.slane %v5324, %v5328
      %v5331 = vadd.f32 %v5292, %v5329
      %v5332 = vadd.f32 %v5293, %v5329
      %v5333 = vadd.f32 %v5294, %v5329
      %v5334 = vadd.f32 %v5295, %v5329
      %v5335 = vadd.f32 %v5296, %v5329
      %v5336 = vadd.f32 %v5297, %v5329
      %v5337 = vadd.f32 %v5298, %v5329
      %v5338 = vadd.f32 %v5299, %v5329
      %v5339 = vadd.f32 %v5300, %v5329
      %v5340 = vadd.f32 %v5301, %v5329
      %v5341 = vadd.f32 %v5302, %v5329
      %v5342 = vadd.f32 %v5303, %v5329
      %v5343 = vadd.f32 %v5304, %v5329
      %v5344 = vadd.f32 %v5305, %v5329
      %v5345 = vadd.f32 %v5306, %v5329
      %v5346 = vadd.f32 %v5307, %v5329
      %v5347 = vadd.f32 %v5308, %v5329
      %v5348 = vadd.f32 %v5309, %v5329
      %v5349 = vadd.f32 %v5310, %v5329
      %v5350 = vadd.f32 %v5311, %v5329
      %v5351 = vadd.f32 %v5312, %v5329
      %v5352 = vadd.f32 %v5313, %v5329
      %v5353 = vadd.f32 %v5314, %v5329
      %v5354 = vadd.f32 %v5315, %v5329
      %v5355 = vadd.f32 %v5316, %v5329
      %v5356 = vadd.f32 %v5317, %v5329
      %v5357 = vadd.f32 %v5318, %v5329
      %v5358 = vadd.f32 %v5319, %v5329
      %v5359 = vadd.f32 %v5320, %v5329
      %v5360 = vadd.f32 %v5321, %v5329
      %v5361 = vadd.f32 %v5322, %v5329
      %v5362 = vadd.f32 %v5323, %v5329
      %5363 = vadd.xlane.f32.xlu0 %v5331
      %v5364 = vpop.xlane.xlu0 %5363
      %5365 = vadd.xlane.f32.xlu0 %v5332
      %v5366 = vpop.xlane.xlu0 %5365
      %5367 = vadd.xlane.f32.xlu0 %v5333
      %v5368 = vpop.xlane.xlu0 %5367
      %5369 = vadd.xlane.f32.xlu0 %v5334
      %v5370 = vpop.xlane.xlu0 %5369
      %5371 = vadd.xlane.f32.xlu0 %v5335
      %v5372 = vpop.xlane.xlu0 %5371
      %5373 = vadd.xlane.f32.xlu0 %v5336
      %v5374 = vpop.xlane.xlu0 %5373
      %5375 = vadd.xlane.f32.xlu0 %v5337
      %v5376 = vpop.xlane.xlu0 %5375
      %5377 = vadd.xlane.f32.xlu0 %v5338
      %v5378 = vpop.xlane.xlu0 %5377
      %5379 = vadd.xlane.f32.xlu0 %v5339
      %v5380 = vpop.xlane.xlu0 %5379
      %5381 = vadd.xlane.f32.xlu0 %v5340
      %v5382 = vpop.xlane.xlu0 %5381
      %5383 = vadd.xlane.f32.xlu0 %v5341
      %v5384 = vpop.xlane.xlu0 %5383
      %5385 = vadd.xlane.f32.xlu0 %v5342
      %v5386 = vpop.xlane.xlu0 %5385
      %5387 = vadd.xlane.f32.xlu0 %v5343
      %v5388 = vpop.xlane.xlu0 %5387
      %5389 = vadd.xlane.f32.xlu0 %v5344
      %v5390 = vpop.xlane.xlu0 %5389
      %5391 = vadd.xlane.f32.xlu0 %v5345
      %v5392 = vpop.xlane.xlu0 %5391
      %5393 = vadd.xlane.f32.xlu0 %v5346
      %v5394 = vpop.xlane.xlu0 %5393
      %5395 = vadd.xlane.f32.xlu0 %v5347
      %v5396 = vpop.xlane.xlu0 %5395
      %5397 = vadd.xlane.f32.xlu0 %v5348
      %v5398 = vpop.xlane.xlu0 %5397
      %5399 = vadd.xlane.f32.xlu0 %v5349
      %v5400 = vpop.xlane.xlu0 %5399
      %5401 = vadd.xlane.f32.xlu0 %v5350
      %v5402 = vpop.xlane.xlu0 %5401
      %5403 = vadd.xlane.f32.xlu0 %v5351
      %v5404 = vpop.xlane.xlu0 %5403
      %5405 = vadd.xlane.f32.xlu0 %v5352
      %v5406 = vpop.xlane.xlu0 %5405
      %5407 = vadd.xlane.f32.xlu0 %v5353
      %v5408 = vpop.xlane.xlu0 %5407
      %5409 = vadd.xlane.f32.xlu0 %v5354
      %v5410 = vpop.xlane.xlu0 %5409
      %5411 = vadd.xlane.f32.xlu0 %v5355
      %v5412 = vpop.xlane.xlu0 %5411
      %5413 = vadd.xlane.f32.xlu0 %v5356
      %v5414 = vpop.xlane.xlu0 %5413
      %5415 = vadd.xlane.f32.xlu0 %v5357
      %v5416 = vpop.xlane.xlu0 %5415
      %5417 = vadd.xlane.f32.xlu0 %v5358
      %v5418 = vpop.xlane.xlu0 %5417
      %5419 = vadd.xlane.f32.xlu0 %v5359
      %v5420 = vpop.xlane.xlu0 %5419
      %5421 = vadd.xlane.f32.xlu0 %v5360
      %v5422 = vpop.xlane.xlu0 %5421
      %5423 = vadd.xlane.f32.xlu0 %v5361
      %v5424 = vpop.xlane.xlu0 %5423
      %5425 = vadd.xlane.f32.xlu0 %v5362
      %v5426 = vpop.xlane.xlu0 %5425
      %v5427 = vmul.f32 %v5364, 0.03125
      %v5428 = vmul.f32 %v5366, 0.03125
      %v5429 = vmul.f32 %v5368, 0.03125
      %v5430 = vmul.f32 %v5370, 0.03125
      %v5431 = vmul.f32 %v5372, 0.03125
      %v5432 = vmul.f32 %v5374, 0.03125
      %v5433 = vmul.f32 %v5376, 0.03125
      %v5434 = vmul.f32 %v5378, 0.03125
      %v5435 = vmul.f32 %v5380, 0.03125
      %v5436 = vmul.f32 %v5382, 0.03125
      %v5437 = vmul.f32 %v5384, 0.03125
      %v5438 = vmul.f32 %v5386, 0.03125
      %v5439 = vmul.f32 %v5388, 0.03125
      %v5440 = vmul.f32 %v5390, 0.03125
      %v5441 = vmul.f32 %v5392, 0.03125
      %v5442 = vmul.f32 %v5394, 0.03125
      %v5443 = vmul.f32 %v5396, 0.03125
      %v5444 = vmul.f32 %v5398, 0.03125
      %v5445 = vmul.f32 %v5400, 0.03125
      %v5446 = vmul.f32 %v5402, 0.03125
      %v5447 = vmul.f32 %v5404, 0.03125
      %v5448 = vmul.f32 %v5406, 0.03125
      %v5449 = vmul.f32 %v5408, 0.03125
      %v5450 = vmul.f32 %v5410, 0.03125
      %v5451 = vmul.f32 %v5412, 0.03125
      %v5452 = vmul.f32 %v5414, 0.03125
      %v5453 = vmul.f32 %v5416, 0.03125
      %v5454 = vmul.f32 %v5418, 0.03125
      %v5455 = vmul.f32 %v5420, 0.03125
      %v5456 = vmul.f32 %v5422, 0.03125
      %v5457 = vmul.f32 %v5424, 0.03125
      %v5458 = vmul.f32 %v5426, 0.03125
      %v5459 = vsub.f32 %v5331, %v5427
      %v5460 = vsub.f32 %v5332, %v5428
      %v5461 = vsub.f32 %v5333, %v5429
      %v5462 = vsub.f32 %v5334, %v5430
      %v5463 = vsub.f32 %v5335, %v5431
      %v5464 = vsub.f32 %v5336, %v5432
      %v5465 = vsub.f32 %v5337, %v5433
      %v5466 = vsub.f32 %v5338, %v5434
      %v5467 = vsub.f32 %v5339, %v5435
      %v5468 = vsub.f32 %v5340, %v5436
      %v5469 = vsub.f32 %v5341, %v5437
      %v5470 = vsub.f32 %v5342, %v5438
      %v5471 = vsub.f32 %v5343, %v5439
      %v5472 = vsub.f32 %v5344, %v5440
      %v5473 = vsub.f32 %v5345, %v5441
      %v5474 = vsub.f32 %v5346, %v5442
      %v5475 = vsub.f32 %v5347, %v5443
      %v5476 = vsub.f32 %v5348, %v5444
      %v5477 = vsub.f32 %v5349, %v5445
      %v5478 = vsub.f32 %v5350, %v5446
      %v5479 = vsub.f32 %v5351, %v5447
      %v5480 = vsub.f32 %v5352, %v5448
      %v5481 = vsub.f32 %v5353, %v5449
      %v5482 = vsub.f32 %v5354, %v5450
      %v5483 = vsub.f32 %v5355, %v5451
      %v5484 = vsub.f32 %v5356, %v5452
      %v5485 = vsub.f32 %v5357, %v5453
      %v5486 = vsub.f32 %v5358, %v5454
      %v5487 = vsub.f32 %v5359, %v5455
      %v5488 = vsub.f32 %v5360, %v5456
      %v5489 = vsub.f32 %v5361, %v5457
      %v5490 = vsub.f32 %v5362, %v5458
      %v5491 = vmul.f32 %v5459, %v5459
      %v5492 = vmul.f32 %v5460, %v5460
      %v5493 = vmul.f32 %v5461, %v5461
      %v5494 = vmul.f32 %v5462, %v5462
      %v5495 = vmul.f32 %v5463, %v5463
      %v5496 = vmul.f32 %v5464, %v5464
      %v5497 = vmul.f32 %v5465, %v5465
      %v5498 = vmul.f32 %v5466, %v5466
      %v5499 = vmul.f32 %v5467, %v5467
      %v5500 = vmul.f32 %v5468, %v5468
      %v5501 = vmul.f32 %v5469, %v5469
      %v5502 = vmul.f32 %v5470, %v5470
      %v5503 = vmul.f32 %v5471, %v5471
      %v5504 = vmul.f32 %v5472, %v5472
      %v5505 = vmul.f32 %v5473, %v5473
      %v5506 = vmul.f32 %v5474, %v5474
      %v5507 = vmul.f32 %v5475, %v5475
      %v5508 = vmul.f32 %v5476, %v5476
      %v5509 = vmul.f32 %v5477, %v5477
      %v5510 = vmul.f32 %v5478, %v5478
      %v5511 = vmul.f32 %v5479, %v5479
      %v5512 = vmul.f32 %v5480, %v5480
      %v5513 = vmul.f32 %v5481, %v5481
      %v5514 = vmul.f32 %v5482, %v5482
      %v5515 = vmul.f32 %v5483, %v5483
      %v5516 = vmul.f32 %v5484, %v5484
      %v5517 = vmul.f32 %v5485, %v5485
      %v5518 = vmul.f32 %v5486, %v5486
      %v5519 = vmul.f32 %v5487, %v5487
      %v5520 = vmul.f32 %v5488, %v5488
      %v5521 = vmul.f32 %v5489, %v5489
      %v5522 = vmul.f32 %v5490, %v5490
      %5523 = vadd.xlane.f32.xlu0 %v5491
      %v5524 = vpop.xlane.xlu0 %5523
      %5525 = vadd.xlane.f32.xlu0 %v5492
      %v5526 = vpop.xlane.xlu0 %5525
      %5527 = vadd.xlane.f32.xlu0 %v5493
      %v5528 = vpop.xlane.xlu0 %5527
      %5529 = vadd.xlane.f32.xlu0 %v5494
      %v5530 = vpop.xlane.xlu0 %5529
      %5531 = vadd.xlane.f32.xlu0 %v5495
      %v5532 = vpop.xlane.xlu0 %5531
      %5533 = vadd.xlane.f32.xlu0 %v5496
      %v5534 = vpop.xlane.xlu0 %5533
      %5535 = vadd.xlane.f32.xlu0 %v5497
      %v5536 = vpop.xlane.xlu0 %5535
      %5537 = vadd.xlane.f32.xlu0 %v5498
      %v5538 = vpop.xlane.xlu0 %5537
      %5539 = vadd.xlane.f32.xlu0 %v5499
      %v5540 = vpop.xlane.xlu0 %5539
      %5541 = vadd.xlane.f32.xlu0 %v5500
      %v5542 = vpop.xlane.xlu0 %5541
      %5543 = vadd.xlane.f32.xlu0 %v5501
      %v5544 = vpop.xlane.xlu0 %5543
      %5545 = vadd.xlane.f32.xlu0 %v5502
      %v5546 = vpop.xlane.xlu0 %5545
      %5547 = vadd.xlane.f32.xlu0 %v5503
      %v5548 = vpop.xlane.xlu0 %5547
      %5549 = vadd.xlane.f32.xlu0 %v5504
      %v5550 = vpop.xlane.xlu0 %5549
      %5551 = vadd.xlane.f32.xlu0 %v5505
      %v5552 = vpop.xlane.xlu0 %5551
      %5553 = vadd.xlane.f32.xlu0 %v5506
      %v5554 = vpop.xlane.xlu0 %5553
      %5555 = vadd.xlane.f32.xlu0 %v5507
      %v5556 = vpop.xlane.xlu0 %5555
      %5557 = vadd.xlane.f32.xlu0 %v5508
      %v5558 = vpop.xlane.xlu0 %5557
      %5559 = vadd.xlane.f32.xlu0 %v5509
      %v5560 = vpop.xlane.xlu0 %5559
      %5561 = vadd.xlane.f32.xlu0 %v5510
      %v5562 = vpop.xlane.xlu0 %5561
      %5563 = vadd.xlane.f32.xlu0 %v5511
      %v5564 = vpop.xlane.xlu0 %5563
      %5565 = vadd.xlane.f32.xlu0 %v5512
      %v5566 = vpop.xlane.xlu0 %5565
      %5567 = vadd.xlane.f32.xlu0 %v5513
      %v5568 = vpop.xlane.xlu0 %5567
      %5569 = vadd.xlane.f32.xlu0 %v5514
      %v5570 = vpop.xlane.xlu0 %5569
      %5571 = vadd.xlane.f32.xlu0 %v5515
      %v5572 = vpop.xlane.xlu0 %5571
      %5573 = vadd.xlane.f32.xlu0 %v5516
      %v5574 = vpop.xlane.xlu0 %5573
      %5575 = vadd.xlane.f32.xlu0 %v5517
      %v5576 = vpop.xlane.xlu0 %5575
      %5577 = vadd.xlane.f32.xlu0 %v5518
      %v5578 = vpop.xlane.xlu0 %5577
      %5579 = vadd.xlane.f32.xlu0 %v5519
      %v5580 = vpop.xlane.xlu0 %5579
      %5581 = vadd.xlane.f32.xlu0 %v5520
      %v5582 = vpop.xlane.xlu0 %5581
      %5583 = vadd.xlane.f32.xlu0 %v5521
      %v5584 = vpop.xlane.xlu0 %5583
      %5585 = vadd.xlane.f32.xlu0 %v5522
      %v5586 = vpop.xlane.xlu0 %5585
      %v5587 = vmul.f32 %v5427, %v5427
      %v5588 = vmul.f32 %v5428, %v5428
      %v5589 = vmul.f32 %v5429, %v5429
      %v5590 = vmul.f32 %v5430, %v5430
      %v5591 = vmul.f32 %v5431, %v5431
      %v5592 = vmul.f32 %v5432, %v5432
      %v5593 = vmul.f32 %v5433, %v5433
      %v5594 = vmul.f32 %v5434, %v5434
      %v5595 = vmul.f32 %v5435, %v5435
      %v5596 = vmul.f32 %v5436, %v5436
      %v5597 = vmul.f32 %v5437, %v5437
      %v5598 = vmul.f32 %v5438, %v5438
      %v5599 = vmul.f32 %v5439, %v5439
      %v5600 = vmul.f32 %v5440, %v5440
      %v5601 = vmul.f32 %v5441, %v5441
      %v5602 = vmul.f32 %v5442, %v5442
      %v5603 = vmul.f32 %v5443, %v5443
      %v5604 = vmul.f32 %v5444, %v5444
      %v5605 = vmul.f32 %v5445, %v5445
      %v5606 = vmul.f32 %v5446, %v5446
      %v5607 = vmul.f32 %v5447, %v5447
      %v5608 = vmul.f32 %v5448, %v5448
      %v5609 = vmul.f32 %v5449, %v5449
      %v5610 = vmul.f32 %v5450, %v5450
      %v5611 = vmul.f32 %v5451, %v5451
      %v5612 = vmul.f32 %v5452, %v5452
      %v5613 = vmul.f32 %v5453, %v5453
      %v5614 = vmul.f32 %v5454, %v5454
      %v5615 = vmul.f32 %v5455, %v5455
      %v5616 = vmul.f32 %v5456, %v5456
      %v5617 = vmul.f32 %v5457, %v5457
      %v5618 = vmul.f32 %v5458, %v5458
      %v5619 = vmul.f32 %v5587, 96.0
      %v5620 = vmul.f32 %v5588, 96.0
      %v5621 = vmul.f32 %v5589, 96.0
      %v5622 = vmul.f32 %v5590, 96.0
      %v5623 = vmul.f32 %v5591, 96.0
      %v5624 = vmul.f32 %v5592, 96.0
      %v5625 = vmul.f32 %v5593, 96.0
      %v5626 = vmul.f32 %v5594, 96.0
      %v5627 = vmul.f32 %v5595, 96.0
      %v5628 = vmul.f32 %v5596, 96.0
      %v5629 = vmul.f32 %v5597, 96.0
      %v5630 = vmul.f32 %v5598, 96.0
      %v5631 = vmul.f32 %v5599, 96.0
      %v5632 = vmul.f32 %v5600, 96.0
      %v5633 = vmul.f32 %v5601, 96.0
      %v5634 = vmul.f32 %v5602, 96.0
      %v5635 = vmul.f32 %v5603, 96.0
      %v5636 = vmul.f32 %v5604, 96.0
      %v5637 = vmul.f32 %v5605, 96.0
      %v5638 = vmul.f32 %v5606, 96.0
      %v5639 = vmul.f32 %v5607, 96.0
      %v5640 = vmul.f32 %v5608, 96.0
      %v5641 = vmul.f32 %v5609, 96.0
      %v5642 = vmul.f32 %v5610, 96.0
      %v5643 = vmul.f32 %v5611, 96.0
      %v5644 = vmul.f32 %v5612, 96.0
      %v5645 = vmul.f32 %v5613, 96.0
      %v5646 = vmul.f32 %v5614, 96.0
      %v5647 = vmul.f32 %v5615, 96.0
      %v5648 = vmul.f32 %v5616, 96.0
      %v5649 = vmul.f32 %v5617, 96.0
      %v5650 = vmul.f32 %v5618, 96.0
      %v5651 = vsub.f32 %v5524, %v5619
      %v5652 = vsub.f32 %v5526, %v5620
      %v5653 = vsub.f32 %v5528, %v5621
      %v5654 = vsub.f32 %v5530, %v5622
      %v5655 = vsub.f32 %v5532, %v5623
      %v5656 = vsub.f32 %v5534, %v5624
      %v5657 = vsub.f32 %v5536, %v5625
      %v5658 = vsub.f32 %v5538, %v5626
      %v5659 = vsub.f32 %v5540, %v5627
      %v5660 = vsub.f32 %v5542, %v5628
      %v5661 = vsub.f32 %v5544, %v5629
      %v5662 = vsub.f32 %v5546, %v5630
      %v5663 = vsub.f32 %v5548, %v5631
      %v5664 = vsub.f32 %v5550, %v5632
      %v5665 = vsub.f32 %v5552, %v5633
      %v5666 = vsub.f32 %v5554, %v5634
      %v5667 = vsub.f32 %v5556, %v5635
      %v5668 = vsub.f32 %v5558, %v5636
      %v5669 = vsub.f32 %v5560, %v5637
      %v5670 = vsub.f32 %v5562, %v5638
      %v5671 = vsub.f32 %v5564, %v5639
      %v5672 = vsub.f32 %v5566, %v5640
      %v5673 = vsub.f32 %v5568, %v5641
      %v5674 = vsub.f32 %v5570, %v5642
      %v5675 = vsub.f32 %v5572, %v5643
      %v5676 = vsub.f32 %v5574, %v5644
      %v5677 = vsub.f32 %v5576, %v5645
      %v5678 = vsub.f32 %v5578, %v5646
      %v5679 = vsub.f32 %v5580, %v5647
      %v5680 = vsub.f32 %v5582, %v5648
      %v5681 = vsub.f32 %v5584, %v5649
      %v5682 = vsub.f32 %v5586, %v5650
      %v5683 = vmul.f32 %v5651, 0.03125
      %v5684 = vmul.f32 %v5652, 0.03125
      %v5685 = vmul.f32 %v5653, 0.03125
      %v5686 = vmul.f32 %v5654, 0.03125
      %v5687 = vmul.f32 %v5655, 0.03125
      %v5688 = vmul.f32 %v5656, 0.03125
      %v5689 = vmul.f32 %v5657, 0.03125
      %v5690 = vmul.f32 %v5658, 0.03125
      %v5691 = vmul.f32 %v5659, 0.03125
      %v5692 = vmul.f32 %v5660, 0.03125
      %v5693 = vmul.f32 %v5661, 0.03125
      %v5694 = vmul.f32 %v5662, 0.03125
      %v5695 = vmul.f32 %v5663, 0.03125
      %v5696 = vmul.f32 %v5664, 0.03125
      %v5697 = vmul.f32 %v5665, 0.03125
      %v5698 = vmul.f32 %v5666, 0.03125
      %v5699 = vmul.f32 %v5667, 0.03125
      %v5700 = vmul.f32 %v5668, 0.03125
      %v5701 = vmul.f32 %v5669, 0.03125
      %v5702 = vmul.f32 %v5670, 0.03125
      %v5703 = vmul.f32 %v5671, 0.03125
      %v5704 = vmul.f32 %v5672, 0.03125
      %v5705 = vmul.f32 %v5673, 0.03125
      %v5706 = vmul.f32 %v5674, 0.03125
      %v5707 = vmul.f32 %v5675, 0.03125
      %v5708 = vmul.f32 %v5676, 0.03125
      %v5709 = vmul.f32 %v5677, 0.03125
      %v5710 = vmul.f32 %v5678, 0.03125
      %v5711 = vmul.f32 %v5679, 0.03125
      %v5712 = vmul.f32 %v5680, 0.03125
      %v5713 = vmul.f32 %v5681, 0.03125
      %v5714 = vmul.f32 %v5682, 0.03125
      %v5715 = vadd.f32 %v5683, 1e-06
      %v5716 = vadd.f32 %v5684, 1e-06
      %v5717 = vadd.f32 %v5685, 1e-06
      %v5718 = vadd.f32 %v5686, 1e-06
      %v5719 = vadd.f32 %v5687, 1e-06
      %v5720 = vadd.f32 %v5688, 1e-06
      %v5721 = vadd.f32 %v5689, 1e-06
      %v5722 = vadd.f32 %v5690, 1e-06
      %v5723 = vadd.f32 %v5691, 1e-06
      %v5724 = vadd.f32 %v5692, 1e-06
      %v5725 = vadd.f32 %v5693, 1e-06
      %v5726 = vadd.f32 %v5694, 1e-06
      %v5727 = vadd.f32 %v5695, 1e-06
      %v5728 = vadd.f32 %v5696, 1e-06
      %v5729 = vadd.f32 %v5697, 1e-06
      %v5730 = vadd.f32 %v5698, 1e-06
      %v5731 = vadd.f32 %v5699, 1e-06
      %v5732 = vadd.f32 %v5700, 1e-06
      %v5733 = vadd.f32 %v5701, 1e-06
      %v5734 = vadd.f32 %v5702, 1e-06
      %v5735 = vadd.f32 %v5703, 1e-06
      %v5736 = vadd.f32 %v5704, 1e-06
      %v5737 = vadd.f32 %v5705, 1e-06
      %v5738 = vadd.f32 %v5706, 1e-06
      %v5739 = vadd.f32 %v5707, 1e-06
      %v5740 = vadd.f32 %v5708, 1e-06
      %v5741 = vadd.f32 %v5709, 1e-06
      %v5742 = vadd.f32 %v5710, 1e-06
      %v5743 = vadd.f32 %v5711, 1e-06
      %v5744 = vadd.f32 %v5712, 1e-06
      %v5745 = vadd.f32 %v5713, 1e-06
      %v5746 = vadd.f32 %v5714, 1e-06
      %v5747 = vrsqrt.pop %v5715
      %v5748 = vrsqrt.pop %v5716
      %v5749 = vrsqrt.pop %v5717
      %v5750 = vrsqrt.pop %v5718
      %v5751 = vrsqrt.pop %v5719
      %v5752 = vrsqrt.pop %v5720
      %v5753 = vrsqrt.pop %v5721
      %v5754 = vrsqrt.pop %v5722
      %v5755 = vrsqrt.pop %v5723
      %v5756 = vrsqrt.pop %v5724
      %v5757 = vrsqrt.pop %v5725
      %v5758 = vrsqrt.pop %v5726
      %v5759 = vrsqrt.pop %v5727
      %v5760 = vrsqrt.pop %v5728
      %v5761 = vrsqrt.pop %v5729
      %v5762 = vrsqrt.pop %v5730
      %v5763 = vrsqrt.pop %v5731
      %v5764 = vrsqrt.pop %v5732
      %v5765 = vrsqrt.pop %v5733
      %v5766 = vrsqrt.pop %v5734
      %v5767 = vrsqrt.pop %v5735
      %v5768 = vrsqrt.pop %v5736
      %v5769 = vrsqrt.pop %v5737
      %v5770 = vrsqrt.pop %v5738
      %v5771 = vrsqrt.pop %v5739
      %v5772 = vrsqrt.pop %v5740
      %v5773 = vrsqrt.pop %v5741
      %v5774 = vrsqrt.pop %v5742
      %v5775 = vrsqrt.pop %v5743
      %v5776 = vrsqrt.pop %v5744
      %v5777 = vrsqrt.pop %v5745
      %v5778 = vrsqrt.pop %v5746
      %v5779 = vmul.f32 %v5459, %v5747
      %v5780 = vmul.f32 %v5460, %v5748
      %v5781 = vmul.f32 %v5461, %v5749
      %v5782 = vmul.f32 %v5462, %v5750
      %v5783 = vmul.f32 %v5463, %v5751
      %v5784 = vmul.f32 %v5464, %v5752
      %v5785 = vmul.f32 %v5465, %v5753
      %v5786 = vmul.f32 %v5466, %v5754
      %v5787 = vmul.f32 %v5467, %v5755
      %v5788 = vmul.f32 %v5468, %v5756
      %v5789 = vmul.f32 %v5469, %v5757
      %v5790 = vmul.f32 %v5470, %v5758
      %v5791 = vmul.f32 %v5471, %v5759
      %v5792 = vmul.f32 %v5472, %v5760
      %v5793 = vmul.f32 %v5473, %v5761
      %v5794 = vmul.f32 %v5474, %v5762
      %v5795 = vmul.f32 %v5475, %v5763
      %v5796 = vmul.f32 %v5476, %v5764
      %v5797 = vmul.f32 %v5477, %v5765
      %v5798 = vmul.f32 %v5478, %v5766
      %v5799 = vmul.f32 %v5479, %v5767
      %v5800 = vmul.f32 %v5480, %v5768
      %v5801 = vmul.f32 %v5481, %v5769
      %v5802 = vmul.f32 %v5482, %v5770
      %v5803 = vmul.f32 %v5483, %v5771
      %v5804 = vmul.f32 %v5484, %v5772
      %v5805 = vmul.f32 %v5485, %v5773
      %v5806 = vmul.f32 %v5486, %v5774
      %v5807 = vmul.f32 %v5487, %v5775
      %v5808 = vmul.f32 %v5488, %v5776
      %v5809 = vmul.f32 %v5489, %v5777
      %v5810 = vmul.f32 %v5490, %v5778
      %v5811 = vld [vmem:[%s3] sm:$0x1]
      %v5813 = vlaneseq
      %v5814 = vshrl.u32 %v5813, 7
      %v5815 = vsub.s32 0, %v5814
      %v5816 = vrot.slane %v5811, %v5815
      %v5818 = vmul.f32 %v5779, %v5816
      %v5819 = vmul.f32 %v5780, %v5816
      %v5820 = vmul.f32 %v5781, %v5816
      %v5821 = vmul.f32 %v5782, %v5816
      %v5822 = vmul.f32 %v5783, %v5816
      %v5823 = vmul.f32 %v5784, %v5816
      %v5824 = vmul.f32 %v5785, %v5816
      %v5825 = vmul.f32 %v5786, %v5816
      %v5826 = vmul.f32 %v5787, %v5816
      %v5827 = vmul.f32 %v5788, %v5816
      %v5828 = vmul.f32 %v5789, %v5816
      %v5829 = vmul.f32 %v5790, %v5816
      %v5830 = vmul.f32 %v5791, %v5816
      %v5831 = vmul.f32 %v5792, %v5816
      %v5832 = vmul.f32 %v5793, %v5816
      %v5833 = vmul.f32 %v5794, %v5816
      %v5834 = vmul.f32 %v5795, %v5816
      %v5835 = vmul.f32 %v5796, %v5816
      %v5836 = vmul.f32 %v5797, %v5816
      %v5837 = vmul.f32 %v5798, %v5816
      %v5838 = vmul.f32 %v5799, %v5816
      %v5839 = vmul.f32 %v5800, %v5816
      %v5840 = vmul.f32 %v5801, %v5816
      %v5841 = vmul.f32 %v5802, %v5816
      %v5842 = vmul.f32 %v5803, %v5816
      %v5843 = vmul.f32 %v5804, %v5816
      %v5844 = vmul.f32 %v5805, %v5816
      %v5845 = vmul.f32 %v5806, %v5816
      %v5846 = vmul.f32 %v5807, %v5816
      %v5847 = vmul.f32 %v5808, %v5816
      %v5848 = vmul.f32 %v5809, %v5816
      %v5849 = vmul.f32 %v5810, %v5816
      %v5850 = vld [vmem:[%s4] sm:$0x1]
      %v5852 = vlaneseq
      %v5853 = vshrl.u32 %v5852, 7
      %v5854 = vsub.s32 0, %v5853
      %v5855 = vrot.slane %v5850, %v5854
      %v5857 = vadd.f32 %v5818, %v5855
      %v5858 = vadd.f32 %v5819, %v5855
      %v5859 = vadd.f32 %v5820, %v5855
      %v5860 = vadd.f32 %v5821, %v5855
      %v5861 = vadd.f32 %v5822, %v5855
      %v5862 = vadd.f32 %v5823, %v5855
      %v5863 = vadd.f32 %v5824, %v5855
      %v5864 = vadd.f32 %v5825, %v5855
      %v5865 = vadd.f32 %v5826, %v5855
      %v5866 = vadd.f32 %v5827, %v5855
      %v5867 = vadd.f32 %v5828, %v5855
      %v5868 = vadd.f32 %v5829, %v5855
      %v5869 = vadd.f32 %v5830, %v5855
      %v5870 = vadd.f32 %v5831, %v5855
      %v5871 = vadd.f32 %v5832, %v5855
      %v5872 = vadd.f32 %v5833, %v5855
      %v5873 = vadd.f32 %v5834, %v5855
      %v5874 = vadd.f32 %v5835, %v5855
      %v5875 = vadd.f32 %v5836, %v5855
      %v5876 = vadd.f32 %v5837, %v5855
      %v5877 = vadd.f32 %v5838, %v5855
      %v5878 = vadd.f32 %v5839, %v5855
      %v5879 = vadd.f32 %v5840, %v5855
      %v5880 = vadd.f32 %v5841, %v5855
      %v5881 = vadd.f32 %v5842, %v5855
      %v5882 = vadd.f32 %v5843, %v5855
      %v5883 = vadd.f32 %v5844, %v5855
      %v5884 = vadd.f32 %v5845, %v5855
      %v5885 = vadd.f32 %v5846, %v5855
      %v5886 = vadd.f32 %v5847, %v5855
      %v5887 = vadd.f32 %v5848, %v5855
      %v5888 = vadd.f32 %v5849, %v5855
      %v5889 = vpack.c.bf16 %v5858, %v5857
      %v5890 = vpack.c.bf16 %v5860, %v5859
      %v5891 = vpack.c.bf16 %v5862, %v5861
      %v5892 = vpack.c.bf16 %v5864, %v5863
      %v5893 = vpack.c.bf16 %v5866, %v5865
      %v5894 = vpack.c.bf16 %v5868, %v5867
      %v5895 = vpack.c.bf16 %v5870, %v5869
      %v5896 = vpack.c.bf16 %v5872, %v5871
      %v5897 = vpack.c.bf16 %v5874, %v5873
      %v5898 = vpack.c.bf16 %v5876, %v5875
      %v5899 = vpack.c.bf16 %v5878, %v5877
      %v5900 = vpack.c.bf16 %v5880, %v5879
      %v5901 = vpack.c.bf16 %v5882, %v5881
      %v5902 = vpack.c.bf16 %v5884, %v5883
      %v5903 = vpack.c.bf16 %v5886, %v5885
      %v5904 = vpack.c.bf16 %v5888, %v5887
      %v5905 = vld [vmem:[%s5] sm:$0xf]
      %v5906 = vld [vmem:[%s5 + $0x4] sm:$0xf]
      %v5907 = vld [vmem:[%s5 + $0x8] sm:$0xf]
      %v5908 = vld [vmem:[%s5 + $0xc] sm:$0xf]
      %v5909 = vld [vmem:[%s5 + $0x10] sm:$0xf]
      %v5910 = vld [vmem:[%s5 + $0x14] sm:$0xf]
      %v5911 = vld [vmem:[%s5 + $0x18] sm:$0xf]
      %v5912 = vld [vmem:[%s5 + $0x1c] sm:$0xf]
      %v5913 = vld [vmem:[%s5 + $0x20] sm:$0xf]
      %v5914 = vld [vmem:[%s5 + $0x24] sm:$0xf]
      %v5915 = vld [vmem:[%s5 + $0x28] sm:$0xf]
      %v5916 = vld [vmem:[%s5 + $0x2c] sm:$0xf]
      %v5917 = vld [vmem:[%s5 + $0x30] sm:$0xf]
      %v5918 = vld [vmem:[%s5 + $0x34] sm:$0xf]
      %v5919 = vld [vmem:[%s5 + $0x38] sm:$0xf]
      %v5920 = vld [vmem:[%s5 + $0x3c] sm:$0xf]
      %v5921 = vld [vmem:[%s6] sm:$0x1]
      %v5923 = vlaneseq
      %v5924 = vshrl.u32 %v5923, 7
      %v5925 = vsub.s32 0, %v5924
      %v5926 = vrot.slane %v5921, %v5925
      %v5944 = vunpack.c.l.b16 %v5905
      %v5945 = vunpack.c.l.b16 %v5906
      %v5946 = vunpack.c.l.b16 %v5907
      %v5947 = vunpack.c.l.b16 %v5908
      %v5948 = vunpack.c.l.b16 %v5909
      %v5949 = vunpack.c.l.b16 %v5910
      %v5950 = vunpack.c.l.b16 %v5911
      %v5951 = vunpack.c.l.b16 %v5912
      %v5952 = vunpack.c.l.b16 %v5913
      %v5953 = vunpack.c.l.b16 %v5914
      %v5954 = vunpack.c.l.b16 %v5915
      %v5955 = vunpack.c.l.b16 %v5916
      %v5956 = vunpack.c.l.b16 %v5917
      %v5957 = vunpack.c.l.b16 %v5918
      %v5958 = vunpack.c.l.b16 %v5919
      %v5959 = vunpack.c.l.b16 %v5920
      %v5960 = vpack.c.b16 %v5945, %v5944
      %v5961 = vpack.c.b16 %v5947, %v5946
      %v5962 = vpack.c.b16 %v5949, %v5948
      %v5963 = vpack.c.b16 %v5951, %v5950
      %v5964 = vpack.c.b16 %v5953, %v5952
      %v5965 = vpack.c.b16 %v5955, %v5954
      %v5966 = vpack.c.b16 %v5957, %v5956
      %v5967 = vpack.c.b16 %v5959, %v5958
      %5976 = vmatprep.subr.bf16.mxu0 0
      %5977 = vmatpush1.bf16.msra.mxu0 %v5960
      %5978 = vmatprep.subr.bf16.mxu0 0
      %5979 = vmatpush1.bf16.msra.mxu0 %v5961
      %5980 = vmatprep.subr.bf16.mxu0 0
      %5981 = vmatpush1.bf16.msra.mxu0 %v5962
      %5982 = vmatprep.subr.bf16.mxu0 0
      %5983 = vmatpush1.bf16.msra.mxu0 %v5963
      %5984 = vmatprep.subr.bf16.mxu0 0
      %5985 = vmatpush1.bf16.msra.mxu0 %v5964
      %5986 = vmatprep.subr.bf16.mxu0 0
      %5987 = vmatpush1.bf16.msra.mxu0 %v5965
      %5988 = vmatprep.subr.bf16.mxu0 0
      %5989 = vmatpush1.bf16.msra.mxu0 %v5966
      %5990 = vmatprep.subr.bf16.mxu0 0
      %5991 = vmatpush1.bf16.msra.mxu0 %v5967
      %5992 = vmatprep.subr.bf16.mxu0 0
      %5993 = vmatpush1.bf16.msra.mxu0 0
      %5994 = vmatprep.subr.bf16.mxu0 0
      %5995 = vmatpush1.bf16.msra.mxu0 0
      %5996 = vmatprep.subr.bf16.mxu0 0
      %5997 = vmatpush1.bf16.msra.mxu0 0
      %5998 = vmatprep.subr.bf16.mxu0 0
      %5999 = vmatpush1.bf16.msra.mxu0 0
      %6000 = vmatprep.subr.bf16.mxu0 0
      %6001 = vmatpush1.bf16.msra.mxu0 0
      %6002 = vmatprep.subr.bf16.mxu0 0
      %6003 = vmatpush1.bf16.msra.mxu0 0
      %6004 = vmatprep.subr.bf16.mxu0 0
      %6005 = vmatpush1.bf16.msra.mxu0 0
      %6006 = vmatprep.subr.bf16.mxu0 0
      %6007 = vmatpush1.bf16.msra.mxu0 0
      %6008 = vmatprep.mubr.bf16.mxu0 0
      %6009 = vmatmul.mubr.bf16.gmra.mrb[0].mxu0 %v5889
      %v6010 = vpop.f32.mrb[0].mxu0
      %v6011 = vadd.f32 %v5926, %v6010
      %v6012 = vpop.f32.mrb[0].mxu0
      %v6013 = vpop.f32.mrb[0].mxu0
      %v6014 = vadd.f32 %v5926, %v6013
      %v6015 = vpop.f32.mrb[0].mxu0
      %6016 = vmatprep.mubr.bf16.mxu0 0
      %6017 = vmatmul.mubr.bf16.gmra.mrb[0].mxu0 %v5890
      %v6018 = vpop.f32.mrb[0].mxu0
      %v6019 = vadd.f32 %v5926, %v6018
      %v6020 = vpop.f32.mrb[0].mxu0
      %v6021 = vpop.f32.mrb[0].mxu0
      %v6022 = vadd.f32 %v5926, %v6021
      %v6023 = vpop.f32.mrb[0].mxu0
      %6024 = vmatprep.mubr.bf16.mxu0 0
      %6025 = vmatmul.mubr.bf16.gmra.mrb[0].mxu0 %v5891
      %v6026 = vpop.f32.mrb[0].mxu0
      %v6027 = vadd.f32 %v5926, %v6026
      %v6028 = vpop.f32.mrb[0].mxu0
      %v6029 = vpop.f32.mrb[0].mxu0
      %v6030 = vadd.f32 %v5926, %v6029
      %v6031 = vpop.f32.mrb[0].mxu0
      %6032 = vmatprep.mubr.bf16.mxu0 0
      %6033 = vmatmul.mubr.bf16.gmra.mrb[0].mxu0 %v5892
      %v6034 = vpop.f32.mrb[0].mxu0
      %v6035 = vadd.f32 %v5926, %v6034
      %v6036 = vpop.f32.mrb[0].mxu0
      %v6037 = vpop.f32.mrb[0].mxu0
      %v6038 = vadd.f32 %v5926, %v6037
      %v6039 = vpop.f32.mrb[0].mxu0
      %6040 = vmatprep.mubr.bf16.mxu0 0
      %6041 = vmatmul.mubr.bf16.gmra.mrb[0].mxu0 %v5893
      %v6042 = vpop.f32.mrb[0].mxu0
      %v6043 = vadd.f32 %v5926, %v6042
      %v6044 = vpop.f32.mrb[0].mxu0
      %v6045 = vpop.f32.mrb[0].mxu0
      %v6046 = vadd.f32 %v5926, %v6045
      %v6047 = vpop.f32.mrb[0].mxu0
      %6048 = vmatprep.mubr.bf16.mxu0 0
      %6049 = vmatmul.mubr.bf16.gmra.mrb[0].mxu0 %v5894
      %v6050 = vpop.f32.mrb[0].mxu0
      %v6051 = vadd.f32 %v5926, %v6050
      %v6052 = vpop.f32.mrb[0].mxu0
      %v6053 = vpop.f32.mrb[0].mxu0
      %v6054 = vadd.f32 %v5926, %v6053
      %v6055 = vpop.f32.mrb[0].mxu0
      %6056 = vmatprep.mubr.bf16.mxu0 0
      %6057 = vmatmul.mubr.bf16.gmra.mrb[0].mxu0 %v5895
      %v6058 = vpop.f32.mrb[0].mxu0
      %v6059 = vadd.f32 %v5926, %v6058
      %v6060 = vpop.f32.mrb[0].mxu0
      %v6061 = vpop.f32.mrb[0].mxu0
      %v6062 = vadd.f32 %v5926, %v6061
      %v6063 = vpop.f32.mrb[0].mxu0
      %6064 = vmatprep.mubr.bf16.mxu0 0
      %6065 = vmatmul.mubr.bf16.gmra.mrb[0].mxu0 %v5896
      %v6066 = vpop.f32.mrb[0].mxu0
      %v6067 = vadd.f32 %v5926, %v6066
      %v6068 = vpop.f32.mrb[0].mxu0
      %v6069 = vpop.f32.mrb[0].mxu0
      %v6070 = vadd.f32 %v5926, %v6069
      %v6071 = vpop.f32.mrb[0].mxu0
      %6072 = vmatprep.mubr.bf16.mxu0 0
      %6073 = vmatmul.mubr.bf16.gmra.mrb[0].mxu0 %v5897
      %v6074 = vpop.f32.mrb[0].mxu0
      %v6075 = vadd.f32 %v5926, %v6074
      %v6076 = vpop.f32.mrb[0].mxu0
      %v6077 = vpop.f32.mrb[0].mxu0
      %v6078 = vadd.f32 %v5926, %v6077
      %v6079 = vpop.f32.mrb[0].mxu0
      %6080 = vmatprep.mubr.bf16.mxu0 0
      %6081 = vmatmul.mubr.bf16.gmra.mrb[0].mxu0 %v5898
      %v6082 = vpop.f32.mrb[0].mxu0
      %v6083 = vadd.f32 %v5926, %v6082
      %v6084 = vpop.f32.mrb[0].mxu0
      %v6085 = vpop.f32.mrb[0].mxu0
      %v6086 = vadd.f32 %v5926, %v6085
      %v6087 = vpop.f32.mrb[0].mxu0
      %6088 = vmatprep.mubr.bf16.mxu0 0
      %6089 = vmatmul.mubr.bf16.gmra.mrb[0].mxu0 %v5899
      %v6090 = vpop.f32.mrb[0].mxu0
      %v6091 = vadd.f32 %v5926, %v6090
      %v6092 = vpop.f32.mrb[0].mxu0
      %v6093 = vpop.f32.mrb[0].mxu0
      %v6094 = vadd.f32 %v5926, %v6093
      %v6095 = vpop.f32.mrb[0].mxu0
      %6096 = vmatprep.mubr.bf16.mxu0 0
      %6097 = vmatmul.mubr.bf16.gmra.mrb[0].mxu0 %v5900
      %v6098 = vpop.f32.mrb[0].mxu0
      %v6099 = vadd.f32 %v5926, %v6098
      %v6100 = vpop.f32.mrb[0].mxu0
      %v6101 = vpop.f32.mrb[0].mxu0
      %v6102 = vadd.f32 %v5926, %v6101
      %v6103 = vpop.f32.mrb[0].mxu0
      %6104 = vmatprep.mubr.bf16.mxu0 0
      %6105 = vmatmul.mubr.bf16.gmra.mrb[0].mxu0 %v5901
      %v6106 = vpop.f32.mrb[0].mxu0
      %v6107 = vadd.f32 %v5926, %v6106
      %v6108 = vpop.f32.mrb[0].mxu0
      %v6109 = vpop.f32.mrb[0].mxu0
      %v6110 = vadd.f32 %v5926, %v6109
      %v6111 = vpop.f32.mrb[0].mxu0
      %6112 = vmatprep.mubr.bf16.mxu0 0
      %6113 = vmatmul.mubr.bf16.gmra.mrb[0].mxu0 %v5902
      %v6114 = vpop.f32.mrb[0].mxu0
      %v6115 = vadd.f32 %v5926, %v6114
      %v6116 = vpop.f32.mrb[0].mxu0
      %v6117 = vpop.f32.mrb[0].mxu0
      %v6118 = vadd.f32 %v5926, %v6117
      %v6119 = vpop.f32.mrb[0].mxu0
      %6120 = vmatprep.mubr.bf16.mxu0 0
      %6121 = vmatmul.mubr.bf16.gmra.mrb[0].mxu0 %v5903
      %v6122 = vpop.f32.mrb[0].mxu0
      %v6123 = vadd.f32 %v5926, %v6122
      %v6124 = vpop.f32.mrb[0].mxu0
      %v6125 = vpop.f32.mrb[0].mxu0
      %v6126 = vadd.f32 %v5926, %v6125
      %v6127 = vpop.f32.mrb[0].mxu0
      %6128 = vmatprep.mubr.bf16.mxu0 0
      %6129 = vmatmul.mubr.bf16.gmra.mrb[0].mxu0 %v5904
      %v6130 = vpop.f32.mrb[0].mxu0
      %v6131 = vadd.f32 %v5926, %v6130
      %v6132 = vpop.f32.mrb[0].mxu0
      %v6133 = vpop.f32.mrb[0].mxu0
      %v6134 = vadd.f32 %v5926, %v6133
      %v6135 = vpop.f32.mrb[0].mxu0
      %6136 = vdwg.mxu0
      %v6137 = vmul.f32 %v6011, 0.5
      %v6138 = vmul.f32 %v6014, 0.5
      %v6139 = vmul.f32 %v6019, 0.5
      %v6140 = vmul.f32 %v6022, 0.5
      %v6141 = vmul.f32 %v6027, 0.5
      %v6142 = vmul.f32 %v6030, 0.5
      %v6143 = vmul.f32 %v6035, 0.5
      %v6144 = vmul.f32 %v6038, 0.5
      %v6145 = vmul.f32 %v6043, 0.5
      %v6146 = vmul.f32 %v6046, 0.5
      %v6147 = vmul.f32 %v6051, 0.5
      %v6148 = vmul.f32 %v6054, 0.5
      %v6149 = vmul.f32 %v6059, 0.5
      %v6150 = vmul.f32 %v6062, 0.5
      %v6151 = vmul.f32 %v6067, 0.5
      %v6152 = vmul.f32 %v6070, 0.5
      %v6153 = vmul.f32 %v6075, 0.5
      %v6154 = vmul.f32 %v6078, 0.5
      %v6155 = vmul.f32 %v6083, 0.5
      %v6156 = vmul.f32 %v6086, 0.5
      %v6157 = vmul.f32 %v6091, 0.5
      %v6158 = vmul.f32 %v6094, 0.5
      %v6159 = vmul.f32 %v6099, 0.5
      %v6160 = vmul.f32 %v6102, 0.5
      %v6161 = vmul.f32 %v6107, 0.5
      %v6162 = vmul.f32 %v6110, 0.5
      %v6163 = vmul.f32 %v6115, 0.5
      %v6164 = vmul.f32 %v6118, 0.5
      %v6165 = vmul.f32 %v6123, 0.5
      %v6166 = vmul.f32 %v6126, 0.5
      %v6167 = vmul.f32 %v6131, 0.5
      %v6168 = vmul.f32 %v6134, 0.5
      %v6169 = vmul.f32 %v6011, %v6011
      %v6170 = vmul.f32 %v6014, %v6014
      %v6171 = vmul.f32 %v6019, %v6019
      %v6172 = vmul.f32 %v6022, %v6022
      %v6173 = vmul.f32 %v6027, %v6027
      %v6174 = vmul.f32 %v6030, %v6030
      %v6175 = vmul.f32 %v6035, %v6035
      %v6176 = vmul.f32 %v6038, %v6038
      %v6177 = vmul.f32 %v6043, %v6043
      %v6178 = vmul.f32 %v6046, %v6046
      %v6179 = vmul.f32 %v6051, %v6051
      %v6180 = vmul.f32 %v6054, %v6054
      %v6181 = vmul.f32 %v6059, %v6059
      %v6182 = vmul.f32 %v6062, %v6062
      %v6183 = vmul.f32 %v6067, %v6067
      %v6184 = vmul.f32 %v6070, %v6070
      %v6185 = vmul.f32 %v6075, %v6075
      %v6186 = vmul.f32 %v6078, %v6078
      %v6187 = vmul.f32 %v6083, %v6083
      %v6188 = vmul.f32 %v6086, %v6086
      %v6189 = vmul.f32 %v6091, %v6091
      %v6190 = vmul.f32 %v6094, %v6094
      %v6191 = vmul.f32 %v6099, %v6099
      %v6192 = vmul.f32 %v6102, %v6102
      %v6193 = vmul.f32 %v6107, %v6107
      %v6194 = vmul.f32 %v6110, %v6110
      %v6195 = vmul.f32 %v6115, %v6115
      %v6196 = vmul.f32 %v6118, %v6118
      %v6197 = vmul.f32 %v6123, %v6123
      %v6198 = vmul.f32 %v6126, %v6126
      %v6199 = vmul.f32 %v6131, %v6131
      %v6200 = vmul.f32 %v6134, %v6134
      %v6201 = vmul.f32 %v6169, %v6011
      %v6202 = vmul.f32 %v6170, %v6014
      %v6203 = vmul.f32 %v6171, %v6019
      %v6204 = vmul.f32 %v6172, %v6022
      %v6205 = vmul.f32 %v6173, %v6027
      %v6206 = vmul.f32 %v6174, %v6030
      %v6207 = vmul.f32 %v6175, %v6035
      %v6208 = vmul.f32 %v6176, %v6038
      %v6209 = vmul.f32 %v6177, %v6043
      %v6210 = vmul.f32 %v6178, %v6046
      %v6211 = vmul.f32 %v6179, %v6051
      %v6212 = vmul.f32 %v6180, %v6054
      %v6213 = vmul.f32 %v6181, %v6059
      %v6214 = vmul.f32 %v6182, %v6062
      %v6215 = vmul.f32 %v6183, %v6067
      %v6216 = vmul.f32 %v6184, %v6070
      %v6217 = vmul.f32 %v6185, %v6075
      %v6218 = vmul.f32 %v6186, %v6078
      %v6219 = vmul.f32 %v6187, %v6083
      %v6220 = vmul.f32 %v6188, %v6086
      %v6221 = vmul.f32 %v6189, %v6091
      %v6222 = vmul.f32 %v6190, %v6094
      %v6223 = vmul.f32 %v6191, %v6099
      %v6224 = vmul.f32 %v6192, %v6102
      %v6225 = vmul.f32 %v6193, %v6107
      %v6226 = vmul.f32 %v6194, %v6110
      %v6227 = vmul.f32 %v6195, %v6115
      %v6228 = vmul.f32 %v6196, %v6118
      %v6229 = vmul.f32 %v6197, %v6123
      %v6230 = vmul.f32 %v6198, %v6126
      %v6231 = vmul.f32 %v6199, %v6131
      %v6232 = vmul.f32 %v6200, %v6134
      %v6233 = vmul.f32 %v6201, 0.044715
      %v6234 = vmul.f32 %v6202, 0.044715
      %v6235 = vmul.f32 %v6203, 0.044715
      %v6236 = vmul.f32 %v6204, 0.044715
      %v6237 = vmul.f32 %v6205, 0.044715
      %v6238 = vmul.f32 %v6206, 0.044715
      %v6239 = vmul.f32 %v6207, 0.044715
      %v6240 = vmul.f32 %v6208, 0.044715
      %v6241 = vmul.f32 %v6209, 0.044715
      %v6242 = vmul.f32 %v6210, 0.044715
      %v6243 = vmul.f32 %v6211, 0.044715
      %v6244 = vmul.f32 %v6212, 0.044715
      %v6245 = vmul.f32 %v6213, 0.044715
      %v6246 = vmul.f32 %v6214, 0.044715
      %v6247 = vmul.f32 %v6215, 0.044715
      %v6248 = vmul.f32 %v6216, 0.044715
      %v6249 = vmul.f32 %v6217, 0.044715
      %v6250 = vmul.f32 %v6218, 0.044715
      %v6251 = vmul.f32 %v6219, 0.044715
      %v6252 = vmul.f32 %v6220, 0.044715
      %v6253 = vmul.f32 %v6221, 0.044715
      %v6254 = vmul.f32 %v6222, 0.044715
      %v6255 = vmul.f32 %v6223, 0.044715
      %v6256 = vmul.f32 %v6224, 0.044715
      %v6257 = vmul.f32 %v6225, 0.044715
      %v6258 = vmul.f32 %v6226, 0.044715
      %v6259 = vmul.f32 %v6227, 0.044715
      %v6260 = vmul.f32 %v6228, 0.044715
      %v6261 = vmul.f32 %v6229, 0.044715
      %v6262 = vmul.f32 %v6230, 0.044715
      %v6263 = vmul.f32 %v6231, 0.044715
      %v6264 = vmul.f32 %v6232, 0.044715
      %v6265 = vadd.f32 %v6011, %v6233
      %v6266 = vadd.f32 %v6014, %v6234
      %v6267 = vadd.f32 %v6019, %v6235
      %v6268 = vadd.f32 %v6022, %v6236
      %v6269 = vadd.f32 %v6027, %v6237
      %v6270 = vadd.f32 %v6030, %v6238
      %v6271 = vadd.f32 %v6035, %v6239
      %v6272 = vadd.f32 %v6038, %v6240
      %v6273 = vadd.f32 %v6043, %v6241
      %v6274 = vadd.f32 %v6046, %v6242
      %v6275 = vadd.f32 %v6051, %v6243
      %v6276 = vadd.f32 %v6054, %v6244
      %v6277 = vadd.f32 %v6059, %v6245
      %v6278 = vadd.f32 %v6062, %v6246
      %v6279 = vadd.f32 %v6067, %v6247
      %v6280 = vadd.f32 %v6070, %v6248
      %v6281 = vadd.f32 %v6075, %v6249
      %v6282 = vadd.f32 %v6078, %v6250
      %v6283 = vadd.f32 %v6083, %v6251
      %v6284 = vadd.f32 %v6086, %v6252
      %v6285 = vadd.f32 %v6091, %v6253
      %v6286 = vadd.f32 %v6094, %v6254
      %v6287 = vadd.f32 %v6099, %v6255
      %v6288 = vadd.f32 %v6102, %v6256
      %v6289 = vadd.f32 %v6107, %v6257
      %v6290 = vadd.f32 %v6110, %v6258
      %v6291 = vadd.f32 %v6115, %v6259
      %v6292 = vadd.f32 %v6118, %v6260
      %v6293 = vadd.f32 %v6123, %v6261
      %v6294 = vadd.f32 %v6126, %v6262
      %v6295 = vadd.f32 %v6131, %v6263
      %v6296 = vadd.f32 %v6134, %v6264
      %v6297 = vmul.f32 %v6265, 0.7978846
      %v6298 = vmul.f32 %v6266, 0.7978846
      %v6299 = vmul.f32 %v6267, 0.7978846
      %v6300 = vmul.f32 %v6268, 0.7978846
      %v6301 = vmul.f32 %v6269, 0.7978846
      %v6302 = vmul.f32 %v6270, 0.7978846
      %v6303 = vmul.f32 %v6271, 0.7978846
      %v6304 = vmul.f32 %v6272, 0.7978846
      %v6305 = vmul.f32 %v6273, 0.7978846
      %v6306 = vmul.f32 %v6274, 0.7978846
      %v6307 = vmul.f32 %v6275, 0.7978846
      %v6308 = vmul.f32 %v6276, 0.7978846
      %v6309 = vmul.f32 %v6277, 0.7978846
      %v6310 = vmul.f32 %v6278, 0.7978846
      %v6311 = vmul.f32 %v6279, 0.7978846
      %v6312 = vmul.f32 %v6280, 0.7978846
      %v6313 = vmul.f32 %v6281, 0.7978846
      %v6314 = vmul.f32 %v6282, 0.7978846
      %v6315 = vmul.f32 %v6283, 0.7978846
      %v6316 = vmul.f32 %v6284, 0.7978846
      %v6317 = vmul.f32 %v6285, 0.7978846
      %v6318 = vmul.f32 %v6286, 0.7978846
      %v6319 = vmul.f32 %v6287, 0.7978846
      %v6320 = vmul.f32 %v6288, 0.7978846
      %v6321 = vmul.f32 %v6289, 0.7978846
      %v6322 = vmul.f32 %v6290, 0.7978846
      %v6323 = vmul.f32 %v6291, 0.7978846
      %v6324 = vmul.f32 %v6292, 0.7978846
      %v6325 = vmul.f32 %v6293, 0.7978846
      %v6326 = vmul.f32 %v6294, 0.7978846
      %v6327 = vmul.f32 %v6295, 0.7978846
      %v6328 = vmul.f32 %v6296, 0.7978846
      %v6329 = vtanh.pop %v6297
      %v6330 = vtanh.pop %v6298
      %v6331 = vtanh.pop %v6299
      %v6332 = vtanh.pop %v6300
      %v6333 = vtanh.pop %v6301
      %v6334 = vtanh.pop %v6302
      %v6335 = vtanh.pop %v6303
      %v6336 = vtanh.pop %v6304
      %v6337 = vtanh.pop %v6305
      %v6338 = vtanh.pop %v6306
      %v6339 = vtanh.pop %v6307
      %v6340 = vtanh.pop %v6308
      %v6341 = vtanh.pop %v6309
      %v6342 = vtanh.pop %v6310
      %v6343 = vtanh.pop %v6311
      %v6344 = vtanh.pop %v6312
      %v6345 = vtanh.pop %v6313
      %v6346 = vtanh.pop %v6314
      %v6347 = vtanh.pop %v6315
      %v6348 = vtanh.pop %v6316
      %v6349 = vtanh.pop %v6317
      %v6350 = vtanh.pop %v6318
      %v6351 = vtanh.pop %v6319
      %v6352 = vtanh.pop %v6320
      %v6353 = vtanh.pop %v6321
      %v6354 = vtanh.pop %v6322
      %v6355 = vtanh.pop %v6323
      %v6356 = vtanh.pop %v6324
      %v6357 = vtanh.pop %v6325
      %v6358 = vtanh.pop %v6326
      %v6359 = vtanh.pop %v6327
      %v6360 = vtanh.pop %v6328
      %v6361 = vadd.f32 %v6329, 1.0
      %v6362 = vadd.f32 %v6330, 1.0
      %v6363 = vadd.f32 %v6331, 1.0
      %v6364 = vadd.f32 %v6332, 1.0
      %v6365 = vadd.f32 %v6333, 1.0
      %v6366 = vadd.f32 %v6334, 1.0
      %v6367 = vadd.f32 %v6335, 1.0
      %v6368 = vadd.f32 %v6336, 1.0
      %v6369 = vadd.f32 %v6337, 1.0
      %v6370 = vadd.f32 %v6338, 1.0
      %v6371 = vadd.f32 %v6339, 1.0
      %v6372 = vadd.f32 %v6340, 1.0
      %v6373 = vadd.f32 %v6341, 1.0
      %v6374 = vadd.f32 %v6342, 1.0
      %v6375 = vadd.f32 %v6343, 1.0
      %v6376 = vadd.f32 %v6344, 1.0
      %v6377 = vadd.f32 %v6345, 1.0
      %v6378 = vadd.f32 %v6346, 1.0
      %v6379 = vadd.f32 %v6347, 1.0
      %v6380 = vadd.f32 %v6348, 1.0
      %v6381 = vadd.f32 %v6349, 1.0
      %v6382 = vadd.f32 %v6350, 1.0
      %v6383 = vadd.f32 %v6351, 1.0
      %v6384 = vadd.f32 %v6352, 1.0
      %v6385 = vadd.f32 %v6353, 1.0
      %v6386 = vadd.f32 %v6354, 1.0
      %v6387 = vadd.f32 %v6355, 1.0
      %v6388 = vadd.f32 %v6356, 1.0
      %v6389 = vadd.f32 %v6357, 1.0
      %v6390 = vadd.f32 %v6358, 1.0
      %v6391 = vadd.f32 %v6359, 1.0
      %v6392 = vadd.f32 %v6360, 1.0
      %v6393 = vmul.f32 %v6137, %v6361
      %v6394 = vmul.f32 %v6138, %v6362
      %v6395 = vmul.f32 %v6139, %v6363
      %v6396 = vmul.f32 %v6140, %v6364
      %v6397 = vmul.f32 %v6141, %v6365
      %v6398 = vmul.f32 %v6142, %v6366
      %v6399 = vmul.f32 %v6143, %v6367
      %v6400 = vmul.f32 %v6144, %v6368
      %v6401 = vmul.f32 %v6145, %v6369
      %v6402 = vmul.f32 %v6146, %v6370
      %v6403 = vmul.f32 %v6147, %v6371
      %v6404 = vmul.f32 %v6148, %v6372
      %v6405 = vmul.f32 %v6149, %v6373
      %v6406 = vmul.f32 %v6150, %v6374
      %v6407 = vmul.f32 %v6151, %v6375
      %v6408 = vmul.f32 %v6152, %v6376
      %v6409 = vmul.f32 %v6153, %v6377
      %v6410 = vmul.f32 %v6154, %v6378
      %v6411 = vmul.f32 %v6155, %v6379
      %v6412 = vmul.f32 %v6156, %v6380
      %v6413 = vmul.f32 %v6157, %v6381
      %v6414 = vmul.f32 %v6158, %v6382
      %v6415 = vmul.f32 %v6159, %v6383
      %v6416 = vmul.f32 %v6160, %v6384
      %v6417 = vmul.f32 %v6161, %v6385
      %v6418 = vmul.f32 %v6162, %v6386
      %v6419 = vmul.f32 %v6163, %v6387
      %v6420 = vmul.f32 %v6164, %v6388
      %v6421 = vmul.f32 %v6165, %v6389
      %v6422 = vmul.f32 %v6166, %v6390
      %v6423 = vmul.f32 %v6167, %v6391
      %v6424 = vmul.f32 %v6168, %v6392
      %v6425 = vpack.c.bf16 %v6394, %v6393
      %v6426 = vpack.c.bf16 %v6396, %v6395
      %v6427 = vpack.c.bf16 %v6398, %v6397
      %v6428 = vpack.c.bf16 %v6400, %v6399
      %v6429 = vpack.c.bf16 %v6402, %v6401
      %v6430 = vpack.c.bf16 %v6404, %v6403
      %v6431 = vpack.c.bf16 %v6406, %v6405
      %v6432 = vpack.c.bf16 %v6408, %v6407
      %v6433 = vpack.c.bf16 %v6410, %v6409
      %v6434 = vpack.c.bf16 %v6412, %v6411
      %v6435 = vpack.c.bf16 %v6414, %v6413
      %v6436 = vpack.c.bf16 %v6416, %v6415
      %v6437 = vpack.c.bf16 %v6418, %v6417
      %v6438 = vpack.c.bf16 %v6420, %v6419
      %v6439 = vpack.c.bf16 %v6422, %v6421
      %v6440 = vpack.c.bf16 %v6424, %v6423
      %v6441 = vld [vmem:[%s7] sm:$0xf]
      %v6442 = vld [vmem:[%s7 + $0x4] sm:$0xf]
      %v6443 = vld [vmem:[%s7 + $0x8] sm:$0xf]
      %v6444 = vld [vmem:[%s7 + $0xc] sm:$0xf]
      %v6445 = vld [vmem:[%s7 + $0x10] sm:$0xf]
      %v6446 = vld [vmem:[%s7 + $0x14] sm:$0xf]
      %v6447 = vld [vmem:[%s7 + $0x18] sm:$0xf]
      %v6448 = vld [vmem:[%s7 + $0x1c] sm:$0xf]
      %v6449 = vld [vmem:[%s7 + $0x20] sm:$0xf]
      %v6450 = vld [vmem:[%s7 + $0x24] sm:$0xf]
      %v6451 = vld [vmem:[%s7 + $0x28] sm:$0xf]
      %v6452 = vld [vmem:[%s7 + $0x2c] sm:$0xf]
      %v6453 = vld [vmem:[%s7 + $0x30] sm:$0xf]
      %v6454 = vld [vmem:[%s7 + $0x34] sm:$0xf]
      %v6455 = vld [vmem:[%s7 + $0x38] sm:$0xf]
      %v6456 = vld [vmem:[%s7 + $0x3c] sm:$0xf]
      %v6457 = vld [vmem:[%s8] sm:$0x1]
      %v6459 = vlaneseq
      %v6460 = vshrl.u32 %v6459, 7
      %v6461 = vsub.s32 0, %v6460
      %v6462 = vrot.slane %v6457, %v6461
      %v6480 = vunpack.c.l.b16 %v6441
      %v6481 = vunpack.c.l.b16 %v6442
      %v6482 = vunpack.c.l.b16 %v6443
      %v6483 = vunpack.c.l.b16 %v6444
      %v6484 = vunpack.c.l.b16 %v6445
      %v6485 = vunpack.c.l.b16 %v6446
      %v6486 = vunpack.c.l.b16 %v6447
      %v6487 = vunpack.c.l.b16 %v6448
      %v6488 = vunpack.c.l.b16 %v6449
      %v6489 = vunpack.c.l.b16 %v6450
      %v6490 = vunpack.c.l.b16 %v6451
      %v6491 = vunpack.c.l.b16 %v6452
      %v6492 = vunpack.c.l.b16 %v6453
      %v6493 = vunpack.c.l.b16 %v6454
      %v6494 = vunpack.c.l.b16 %v6455
      %v6495 = vunpack.c.l.b16 %v6456
      %v6496 = vpack.c.b16 %v6481, %v6480
      %v6497 = vpack.c.b16 %v6483, %v6482
      %v6498 = vpack.c.b16 %v6485, %v6484
      %v6499 = vpack.c.b16 %v6487, %v6486
      %v6500 = vpack.c.b16 %v6489, %v6488
      %v6501 = vpack.c.b16 %v6491, %v6490
      %v6502 = vpack.c.b16 %v6493, %v6492
      %v6503 = vpack.c.b16 %v6495, %v6494
      %6512 = vmatprep.subr.bf16.mxu0 0
      %6513 = vmatpush1.bf16.msra.mxu0 %v6496
      %6514 = vmatprep.subr.bf16.mxu0 0
      %6515 = vmatpush1.bf16.msra.mxu0 %v6497
      %6516 = vmatprep.subr.bf16.mxu0 0
      %6517 = vmatpush1.bf16.msra.mxu0 %v6498
      %6518 = vmatprep.subr.bf16.mxu0 0
      %6519 = vmatpush1.bf16.msra.mxu0 %v6499
      %6520 = vmatprep.subr.bf16.mxu0 0
      %6521 = vmatpush1.bf16.msra.mxu0 %v6500
      %6522 = vmatprep.subr.bf16.mxu0 0
      %6523 = vmatpush1.bf16.msra.mxu0 %v6501
      %6524 = vmatprep.subr.bf16.mxu0 0
      %6525 = vmatpush1.bf16.msra.mxu0 %v6502
      %6526 = vmatprep.subr.bf16.mxu0 0
      %6527 = vmatpush1.bf16.msra.mxu0 %v6503
      %6528 = vmatprep.subr.bf16.mxu0 0
      %6529 = vmatpush1.bf16.msra.mxu0 0
      %6530 = vmatprep.subr.bf16.mxu0 0
      %6531 = vmatpush1.bf16.msra.mxu0 0
      %6532 = vmatprep.subr.bf16.mxu0 0
      %6533 = vmatpush1.bf16.msra.mxu0 0
      %6534 = vmatprep.subr.bf16.mxu0 0
      %6535 = vmatpush1.bf16.msra.mxu0 0
      %6536 = vmatprep.subr.bf16.mxu0 0
      %6537 = vmatpush1.bf16.msra.mxu0 0
      %6538 = vmatprep.subr.bf16.mxu0 0
      %6539 = vmatpush1.bf16.msra.mxu0 0
      %6540 = vmatprep.subr.bf16.mxu0 0
      %6541 = vmatpush1.bf16.msra.mxu0 0
      %6542 = vmatprep.subr.bf16.mxu0 0
      %6543 = vmatpush1.bf16.msra.mxu0 0
      %6544 = vmatprep.mubr.bf16.mxu0 0
      %6545 = vmatmul.mubr.bf16.gmra.mrb[0].mxu0 %v6425
      %v6546 = vpop.f32.mrb[0].mxu0
      %v6547 = vadd.f32 %v6462, %v6546
      %v6548 = vpop.f32.mrb[0].mxu0
      %v6549 = vpop.f32.mrb[0].mxu0
      %v6550 = vadd.f32 %v6462, %v6549
      %v6551 = vpop.f32.mrb[0].mxu0
      %6552 = vmatprep.mubr.bf16.mxu0 0
      %6553 = vmatmul.mubr.bf16.gmra.mrb[0].mxu0 %v6426
      %v6554 = vpop.f32.mrb[0].mxu0
      %v6555 = vadd.f32 %v6462, %v6554
      %v6556 = vpop.f32.mrb[0].mxu0
      %v6557 = vpop.f32.mrb[0].mxu0
      %v6558 = vadd.f32 %v6462, %v6557
      %v6559 = vpop.f32.mrb[0].mxu0
      %6560 = vmatprep.mubr.bf16.mxu0 0
      %6561 = vmatmul.mubr.bf16.gmra.mrb[0].mxu0 %v6427
      %v6562 = vpop.f32.mrb[0].mxu0
      %v6563 = vadd.f32 %v6462, %v6562
      %v6564 = vpop.f32.mrb[0].mxu0
      %v6565 = vpop.f32.mrb[0].mxu0
      %v6566 = vadd.f32 %v6462, %v6565
      %v6567 = vpop.f32.mrb[0].mxu0
      %6568 = vmatprep.mubr.bf16.mxu0 0
      %6569 = vmatmul.mubr.bf16.gmra.mrb[0].mxu0 %v6428
      %v6570 = vpop.f32.mrb[0].mxu0
      %v6571 = vadd.f32 %v6462, %v6570
      %v6572 = vpop.f32.mrb[0].mxu0
      %v6573 = vpop.f32.mrb[0].mxu0
      %v6574 = vadd.f32 %v6462, %v6573
      %v6575 = vpop.f32.mrb[0].mxu0
      %6576 = vmatprep.mubr.bf16.mxu0 0
      %6577 = vmatmul.mubr.bf16.gmra.mrb[0].mxu0 %v6429
      %v6578 = vpop.f32.mrb[0].mxu0
      %v6579 = vadd.f32 %v6462, %v6578
      %v6580 = vpop.f32.mrb[0].mxu0
      %v6581 = vpop.f32.mrb[0].mxu0
      %v6582 = vadd.f32 %v6462, %v6581
      %v6583 = vpop.f32.mrb[0].mxu0
      %6584 = vmatprep.mubr.bf16.mxu0 0
      %6585 = vmatmul.mubr.bf16.gmra.mrb[0].mxu0 %v6430
      %v6586 = vpop.f32.mrb[0].mxu0
      %v6587 = vadd.f32 %v6462, %v6586
      %v6588 = vpop.f32.mrb[0].mxu0
      %v6589 = vpop.f32.mrb[0].mxu0
      %v6590 = vadd.f32 %v6462, %v6589
      %v6591 = vpop.f32.mrb[0].mxu0
      %6592 = vmatprep.mubr.bf16.mxu0 0
      %6593 = vmatmul.mubr.bf16.gmra.mrb[0].mxu0 %v6431
      %v6594 = vpop.f32.mrb[0].mxu0
      %v6595 = vadd.f32 %v6462, %v6594
      %v6596 = vpop.f32.mrb[0].mxu0
      %v6597 = vpop.f32.mrb[0].mxu0
      %v6598 = vadd.f32 %v6462, %v6597
      %v6599 = vpop.f32.mrb[0].mxu0
      %6600 = vmatprep.mubr.bf16.mxu0 0
      %6601 = vmatmul.mubr.bf16.gmra.mrb[0].mxu0 %v6432
      %v6602 = vpop.f32.mrb[0].mxu0
      %v6603 = vadd.f32 %v6462, %v6602
      %v6604 = vpop.f32.mrb[0].mxu0
      %v6605 = vpop.f32.mrb[0].mxu0
      %v6606 = vadd.f32 %v6462, %v6605
      %v6607 = vpop.f32.mrb[0].mxu0
      %6608 = vmatprep.mubr.bf16.mxu0 0
      %6609 = vmatmul.mubr.bf16.gmra.mrb[0].mxu0 %v6433
      %v6610 = vpop.f32.mrb[0].mxu0
      %v6611 = vadd.f32 %v6462, %v6610
      %v6612 = vpop.f32.mrb[0].mxu0
      %v6613 = vpop.f32.mrb[0].mxu0
      %v6614 = vadd.f32 %v6462, %v6613
      %v6615 = vpop.f32.mrb[0].mxu0
      %6616 = vmatprep.mubr.bf16.mxu0 0
      %6617 = vmatmul.mubr.bf16.gmra.mrb[0].mxu0 %v6434
      %v6618 = vpop.f32.mrb[0].mxu0
      %v6619 = vadd.f32 %v6462, %v6618
      %v6620 = vpop.f32.mrb[0].mxu0
      %v6621 = vpop.f32.mrb[0].mxu0
      %v6622 = vadd.f32 %v6462, %v6621
      %v6623 = vpop.f32.mrb[0].mxu0
      %6624 = vmatprep.mubr.bf16.mxu0 0
      %6625 = vmatmul.mubr.bf16.gmra.mrb[0].mxu0 %v6435
      %v6626 = vpop.f32.mrb[0].mxu0
      %v6627 = vadd.f32 %v6462, %v6626
      %v6628 = vpop.f32.mrb[0].mxu0
      %v6629 = vpop.f32.mrb[0].mxu0
      %v6630 = vadd.f32 %v6462, %v6629
      %v6631 = vpop.f32.mrb[0].mxu0
      %6632 = vmatprep.mubr.bf16.mxu0 0
      %6633 = vmatmul.mubr.bf16.gmra.mrb[0].mxu0 %v6436
      %v6634 = vpop.f32.mrb[0].mxu0
      %v6635 = vadd.f32 %v6462, %v6634
      %v6636 = vpop.f32.mrb[0].mxu0
      %v6637 = vpop.f32.mrb[0].mxu0
      %v6638 = vadd.f32 %v6462, %v6637
      %v6639 = vpop.f32.mrb[0].mxu0
      %6640 = vmatprep.mubr.bf16.mxu0 0
      %6641 = vmatmul.mubr.bf16.gmra.mrb[0].mxu0 %v6437
      %v6642 = vpop.f32.mrb[0].mxu0
      %v6643 = vadd.f32 %v6462, %v6642
      %v6644 = vpop.f32.mrb[0].mxu0
      %v6645 = vpop.f32.mrb[0].mxu0
      %v6646 = vadd.f32 %v6462, %v6645
      %v6647 = vpop.f32.mrb[0].mxu0
      %6648 = vmatprep.mubr.bf16.mxu0 0
      %6649 = vmatmul.mubr.bf16.gmra.mrb[0].mxu0 %v6438
      %v6650 = vpop.f32.mrb[0].mxu0
      %v6651 = vadd.f32 %v6462, %v6650
      %v6652 = vpop.f32.mrb[0].mxu0
      %v6653 = vpop.f32.mrb[0].mxu0
      %v6654 = vadd.f32 %v6462, %v6653
      %v6655 = vpop.f32.mrb[0].mxu0
      %6656 = vmatprep.mubr.bf16.mxu0 0
      %6657 = vmatmul.mubr.bf16.gmra.mrb[0].mxu0 %v6439
      %v6658 = vpop.f32.mrb[0].mxu0
      %v6659 = vadd.f32 %v6462, %v6658
      %v6660 = vpop.f32.mrb[0].mxu0
      %v6661 = vpop.f32.mrb[0].mxu0
      %v6662 = vadd.f32 %v6462, %v6661
      %v6663 = vpop.f32.mrb[0].mxu0
      %6664 = vmatprep.mubr.bf16.mxu0 0
      %6665 = vmatmul.mubr.bf16.gmra.mrb[0].mxu0 %v6440
      %v6666 = vpop.f32.mrb[0].mxu0
      %v6667 = vadd.f32 %v6462, %v6666
      %v6668 = vpop.f32.mrb[0].mxu0
      %v6669 = vpop.f32.mrb[0].mxu0
      %v6670 = vadd.f32 %v6462, %v6669
      %v6671 = vpop.f32.mrb[0].mxu0
      %6672 = vdwg.mxu0
      %v6673 = vld [vmem:[%s9] sm:$0x1]
      %v6675 = vlaneseq
      %v6676 = vshrl.u32 %v6675, 7
      %v6677 = vsub.s32 0, %v6676
      %v6678 = vrot.slane %v6673, %v6677
      %v6680 = vmul.f32 %v6547, %v6678
      %v6681 = vmul.f32 %v6550, %v6678
      %v6682 = vmul.f32 %v6555, %v6678
      %v6683 = vmul.f32 %v6558, %v6678
      %v6684 = vmul.f32 %v6563, %v6678
      %v6685 = vmul.f32 %v6566, %v6678
      %v6686 = vmul.f32 %v6571, %v6678
      %v6687 = vmul.f32 %v6574, %v6678
      %v6688 = vmul.f32 %v6579, %v6678
      %v6689 = vmul.f32 %v6582, %v6678
      %v6690 = vmul.f32 %v6587, %v6678
      %v6691 = vmul.f32 %v6590, %v6678
      %v6692 = vmul.f32 %v6595, %v6678
      %v6693 = vmul.f32 %v6598, %v6678
      %v6694 = vmul.f32 %v6603, %v6678
      %v6695 = vmul.f32 %v6606, %v6678
      %v6696 = vmul.f32 %v6611, %v6678
      %v6697 = vmul.f32 %v6614, %v6678
      %v6698 = vmul.f32 %v6619, %v6678
      %v6699 = vmul.f32 %v6622, %v6678
      %v6700 = vmul.f32 %v6627, %v6678
      %v6701 = vmul.f32 %v6630, %v6678
      %v6702 = vmul.f32 %v6635, %v6678
      %v6703 = vmul.f32 %v6638, %v6678
      %v6704 = vmul.f32 %v6643, %v6678
      %v6705 = vmul.f32 %v6646, %v6678
      %v6706 = vmul.f32 %v6651, %v6678
      %v6707 = vmul.f32 %v6654, %v6678
      %v6708 = vmul.f32 %v6659, %v6678
      %v6709 = vmul.f32 %v6662, %v6678
      %v6710 = vmul.f32 %v6667, %v6678
      %v6711 = vmul.f32 %v6670, %v6678
      %v6712 = vadd.f32 %v2758, %v6680
      %v6713 = vadd.f32 %v2759, %v6681
      %v6714 = vadd.f32 %v2760, %v6682
      %v6715 = vadd.f32 %v2761, %v6683
      %v6716 = vadd.f32 %v2762, %v6684
      %v6717 = vadd.f32 %v2763, %v6685
      %v6718 = vadd.f32 %v2764, %v6686
      %v6719 = vadd.f32 %v2765, %v6687
      %v6720 = vadd.f32 %v2766, %v6688
      %v6721 = vadd.f32 %v2767, %v6689
      %v6722 = vadd.f32 %v2768, %v6690
      %v6723 = vadd.f32 %v2769, %v6691
      %v6724 = vadd.f32 %v2770, %v6692
      %v6725 = vadd.f32 %v2771, %v6693
      %v6726 = vadd.f32 %v2772, %v6694
      %v6727 = vadd.f32 %v2773, %v6695
      %v6728 = vadd.f32 %v2774, %v6696
      %v6729 = vadd.f32 %v2775, %v6697
      %v6730 = vadd.f32 %v2776, %v6698
      %v6731 = vadd.f32 %v2777, %v6699
      %v6732 = vadd.f32 %v2778, %v6700
      %v6733 = vadd.f32 %v2779, %v6701
      %v6734 = vadd.f32 %v2780, %v6702
      %v6735 = vadd.f32 %v2781, %v6703
      %v6736 = vadd.f32 %v2782, %v6704
      %v6737 = vadd.f32 %v2783, %v6705
      %v6738 = vadd.f32 %v2784, %v6706
      %v6739 = vadd.f32 %v2785, %v6707
      %v6740 = vadd.f32 %v2786, %v6708
      %v6741 = vadd.f32 %v2787, %v6709
      %v6742 = vadd.f32 %v2788, %v6710
      %v6743 = vadd.f32 %v2789, %v6711
      %6744 = vst [vmem:[%s383] sm:$0xff] %v6712
      %6745 = vst [vmem:[%s383 + $0x8] sm:$0xff] %v6713
      %6746 = vst [vmem:[%s383 + $0x10] sm:$0xff] %v6714
      %6747 = vst [vmem:[%s383 + $0x18] sm:$0xff] %v6715
      %6748 = vst [vmem:[%s383 + $0x20] sm:$0xff] %v6716
      %6749 = vst [vmem:[%s383 + $0x28] sm:$0xff] %v6717
      %6750 = vst [vmem:[%s383 + $0x30] sm:$0xff] %v6718
      %6751 = vst [vmem:[%s383 + $0x38] sm:$0xff] %v6719
      %6752 = vst [vmem:[%s383 + $0x40] sm:$0xff] %v6720
      %6753 = vst [vmem:[%s383 + $0x48] sm:$0xff] %v6721
      %6754 = vst [vmem:[%s383 + $0x50] sm:$0xff] %v6722
      %6755 = vst [vmem:[%s383 + $0x58] sm:$0xff] %v6723
      %6756 = vst [vmem:[%s383 + $0x60] sm:$0xff] %v6724
      %6757 = vst [vmem:[%s383 + $0x68] sm:$0xff] %v6725
      %6758 = vst [vmem:[%s383 + $0x70] sm:$0xff] %v6726
      %6759 = vst [vmem:[%s383 + $0x78] sm:$0xff] %v6727
      %6760 = vst [vmem:[%s383 + $0x80] sm:$0xff] %v6728
      %6761 = vst [vmem:[%s383 + $0x88] sm:$0xff] %v6729
      %6762 = vst [vmem:[%s383 + $0x90] sm:$0xff] %v6730
      %6763 = vst [vmem:[%s383 + $0x98] sm:$0xff] %v6731
      %6764 = vst [vmem:[%s383 + $0xa0] sm:$0xff] %v6732
      %6765 = vst [vmem:[%s383 + $0xa8] sm:$0xff] %v6733
      %6766 = vst [vmem:[%s383 + $0xb0] sm:$0xff] %v6734
      %6767 = vst [vmem:[%s383 + $0xb8] sm:$0xff] %v6735
      %6768 = vst [vmem:[%s383 + $0xc0] sm:$0xff] %v6736
      %6769 = vst [vmem:[%s383 + $0xc8] sm:$0xff] %v6737
      %6770 = vst [vmem:[%s383 + $0xd0] sm:$0xff] %v6738
      %6771 = vst [vmem:[%s383 + $0xd8] sm:$0xff] %v6739
      %6772 = vst [vmem:[%s383 + $0xe0] sm:$0xff] %v6740
      %6773 = vst [vmem:[%s383 + $0xe8] sm:$0xff] %v6741
      %6774 = vst [vmem:[%s383 + $0xf0] sm:$0xff] %v6742
      %6775 = vst [vmem:[%s383 + $0xf8] sm:$0xff] %v6743
      %s6776 = smul.u32 16, %s26
      %p6777 = scmp.lt.s32.totalorder %s25, 1
      %s6778 = scalar_select %p6777, %s25, 1
      %p6779 = scmp.lt.s32.totalorder %s6776, 31
      %s6780 = scalar_select %p6779, %s6776, 31
      %s6781 = smul.addr %s6780, 2
      %s6782 = smul.addr %s6778, 64
      %s6783 = sadd.s32 %s6781, %s6782
      %s6784 = smul.addr %s6783, 8
      %s6785 = scalar_lea.vmem %s10, %s6784
      // Predicated region
      $region61: #{_convnext_block_impl.1} parent=59 // pred_check
        %p6786 = pneg %p268
      $region62: #{_convnext_block_impl.1} parent=59 // pred_check_branch
        %6788 = sbr.rel (%p6786) target = $region64
      $region63: #{_convnext_block_impl.1} parent=59 // pred_region
        %s6789 = smul.u32 16, %s26
      $region64: #{_convnext_block_impl.1} parent=59 // pred_fallthru
        _
    $region60: #{_convnext_block_impl.1} parent=5 // pred_fallthru
      _
    %p6790 = scmp.le.s32.totalorder 2, %s16
    // Predicated region
    $region65: #{_convnext_block_impl.1} parent=5 // pred_check
      %p6791 = pneg %p6790
    $region66: #{_convnext_block_impl.1} parent=5 // pred_check_branch
      %6793 = sbr.rel (%p6791) target = $region68
    $region67: #{_convnext_block_impl.1} parent=5 // pred_region
      %s6794 = ssub.s32 %s16, 2
      // Predicated region
      $region69: #{_convnext_block_impl.1} parent=67 // pred_check
        %p6795 = pneg %p274
      $region70: #{_convnext_block_impl.1} parent=67 // pred_check_branch
        %6797 = sbr.rel (%p6795) target = $region72
      $region71: #{_convnext_block_impl.1} parent=67 // pred_region
        %s6798 = smul.u32 16, %s28
        %p6799 = scmp.lt.s32.totalorder %s27, 1
        %s6800 = scalar_select %p6799, %s27, 1
        %p6801 = scmp.lt.s32.totalorder %s6798, 31
        %s6802 = scalar_select %p6801, %s6798, 31
        %s6803 = smul.addr %s6802, 2
        %s6804 = smul.addr %s6800, 64
        %s6805 = sadd.s32 %s6803, %s6804
        %s6806 = smul.addr %s6805, 8
        %s6807 = scalar_lea.vmem %s10, %s6806
      $region72: #{_convnext_block_impl.1} parent=67 // pred_fallthru
        _
    $region68: #{_convnext_block_impl.1} parent=5 // pred_fallthru
      _
  $region6: #{_convnext_block_impl.1} parent=0 // loop_footer
    %s20 = sadd.s32 1, %s16
  $region7: #{_convnext_block_impl.1} parent=0 // loop_footer_branch
    %15 = sbr.rel target = $region3
  $region8: #{_convnext_block_impl.1} parent=0 // loop_exit
    _

</llo_original>
